<compile_context>
chip_gen: v6e
topology: v6e:2x2x1
jax: 0.10.0
libtpu: 0.0.40
codegen_flags: <defaults>
</compile_context>

<pallas_src>
import functools

import jax
import jax.numpy as jnp
from jax.experimental import pallas as pl
from jax.experimental.pallas import tpu as pltpu


# ----------------------------------------------------------------------------
# small helpers
# ----------------------------------------------------------------------------
def _fs(shape):
    """Full-array BlockSpec for a 1-axis grid (block index is always 0...)."""
    zeros = (0,) * len(shape)
    return pl.BlockSpec(shape, lambda i, _z=zeros: _z)


def _row_tile(m, target=512):
    """Largest row tile <= target that divides m (multiple of 8 when tiling)."""
    if m <= target:
        return m
    for t in range(target, 7, -8):
        if m % t == 0:
            return t
    return m


_PIX_CPARAMS = pltpu.CompilerParams(
    dimension_semantics=("parallel",), vmem_limit_bytes=32 * 1024 * 1024)
_SEQ_CPARAMS = pltpu.CompilerParams(
    dimension_semantics=("arbitrary",), vmem_limit_bytes=32 * 1024 * 1024)


# ----------------------------------------------------------------------------
# 1) head kernel: batched 1x1 conv == per-pixel linear over [x, x_be, x_af]
#    (K = c is tiny, MXU is underfilled anyway -> keep f32 operands here)
# ----------------------------------------------------------------------------
def _head_kernel(x_ref, w_ref, b_ref, o_ref):
    y = jnp.dot(x_ref[...], w_ref[...], preferred_element_type=jnp.float32)
    o_ref[...] = y + b_ref[...]


def pallas_head(x2d, w, b):
    M, K = x2d.shape
    N = w.shape[1]
    tm = _row_tile(M)
    return pl.pallas_call(
        _head_kernel,
        out_shape=jax.ShapeDtypeStruct((M, N), jnp.float32),
        grid=(M // tm,),
        in_specs=[pl.BlockSpec((tm, K), lambda i: (i, 0)),
                  _fs((K, N)), _fs((1, N))],
        out_specs=pl.BlockSpec((tm, N), lambda i: (i, 0)),
        compiler_params=_PIX_CPARAMS,
    )(x2d, w, b)


# ----------------------------------------------------------------------------
# 2) fused node-level kernel:
#    pooling + myGCN + embedding + attention + transformer FFN (all f32,
#    everything is (n,128)/(n,n) so it lives entirely in VMEM/vregs)
# ----------------------------------------------------------------------------
def _node_kernel(shat_ref, f3_ref, a_ref, lam_ref,
                 gw0_ref, gb0_ref, gw1_ref, gb1_ref,
                 enw_ref, enb_ref, eew_ref, eeb_ref,
                 qw_ref, qb_ref, kw_ref, kb_ref, vw_ref, vb_ref,
                 pew_ref, peb_ref, egw_ref, egb_ref,
                 l0w_ref, l0b_ref, l1w_ref, l1b_ref, l2w_ref, l2b_ref,
                 bnsc_ref, bnsh_ref, o_ref):
    f32 = jnp.float32

    def mm(a, b):
        return jnp.dot(a, b, preferred_element_type=f32)

    def mm_t(a, b):  # a @ b.T without materializing the transpose (MXU trans_b)
        return jax.lax.dot_general(a, b, (((1,), (1,)), ((), ())),
                                   preferred_element_type=f32)

    def softmax_rows(x):
        x = x - jnp.max(x, axis=1, keepdims=True)
        p = jnp.exp(x)
        return p * pl.reciprocal(jnp.sum(p, axis=1, keepdims=True), approx=True)

    def leaky(x):  # nn.LeakyReLU default slope 0.01
        return jnp.where(x >= 0.0, x, 0.01 * x)

    # --- graph pooling: H_i = S_hat^T @ F3 ----------------------------------
    Hp = mm(shat_ref[...], f3_ref[...])                           # (n, 128)

    # --- myGCN (gcn BatchNorm folded into gw0 / gw1) ------------------------
    Hx = mm(Hp, gw0_ref[...]) + gb0_ref[...]
    es = softmax_rows(mm_t(Hx, Hx))                               # (n, n)
    n = es.shape[0]
    rows = jax.lax.broadcasted_iota(jnp.int32, (n, n), 0)
    cols = jax.lax.broadcasted_iota(jnp.int32, (n, n), 1)
    eye = (rows == cols).astype(f32)
    # Reference myGCN aggregates with e_softmax; A (=es*A_in+lambda*I) only
    # feeds the edge-embedding path.
    A = es * a_ref[...] + lam_ref[0, 0] * eye
    Hg = leaky(mm(es, mm(Hp, gw1_ref[...]) + gb1_ref[...]))       # (n, 128)

    # --- embedding (bn_node / bn_edge folded into enw / eew) ----------------
    node = leaky(mm(Hg, enw_ref[...]) + enb_ref[...])
    edge = leaky(mm(A, eew_ref[...]) + eeb_ref[...])

    # --- attention -----------------------------------------------------------
    Q = mm(node, qw_ref[...]) + qb_ref[...]
    K = mm(node, kw_ref[...]) + kb_ref[...]
    V = mm(node, vw_ref[...]) + vb_ref[...]
    e_gate = jax.nn.sigmoid(mm(edge, egw_ref[...]) + egb_ref[...])
    proj_e = mm(edge, pew_ref[...]) + peb_ref[...]
    inv_dk = 1.0 / (float(Q.shape[1]) ** 0.5)
    attm = softmax_rows(mm_t(Q, K) * inv_dk + proj_e)
    # TODO(synk): F.dropout(attm, 0.2) (always-on in the reference) is random;
    # implemented as identity.
    h_attn = mm(e_gate * attm, V)                                 # (n, 128)

    # --- transformer FFN (same bn_h applied twice, as in the reference) -----
    hh = h_attn + (mm(h_attn, l0w_ref[...]) + l0b_ref[...])
    hh = hh * bnsc_ref[...] + bnsh_ref[...]
    h_res = hh
    hh = jnp.maximum(mm(hh, l1w_ref[...]) + l1b_ref[...], 0.0)
    hh = mm(hh, l2w_ref[...]) + l2b_ref[...]
    hh = h_res + hh
    o_ref[...] = hh * bnsc_ref[...] + bnsh_ref[...]


def pallas_node_block(s_hat_t, f3, a_mat, p):
    n = s_hat_t.shape[0]
    args = [s_hat_t, f3, a_mat, p["gcn_lambda"],
            p["gw0"], p["gb0"], p["gw1"], p["gb1"],
            p["enw"], p["enb"], p["eew"], p["eeb"],
            p["qw"], p["qb"], p["kw"], p["kb"], p["vw"], p["vb"],
            p["pew"], p["peb"], p["egw"], p["egb"],
            p["l0w"], p["l0b"], p["l1w"], p["l1b"], p["l2w"], p["l2b"],
            p["bnh_sc"], p["bnh_sh"]]
    return pl.pallas_call(
        _node_kernel,
        out_shape=jax.ShapeDtypeStruct((n, 128), jnp.float32),
        grid=(1,),
        in_specs=[_fs(a.shape) for a in args],
        out_specs=_fs((n, 128)),
        compiler_params=_SEQ_CPARAMS,
    )(*args)


# ----------------------------------------------------------------------------
# 3) fused GCF kernel (conv-GRU with 1x1 convs); back-projection S @ H_node
#    is fused in and the (hw,256) concats are replaced by per-half dots.
#    bf16 operands at the MXU, f32 accumulation / elementwise.
# ----------------------------------------------------------------------------
def _gcf_kernel(s_ref, f3_ref, haf_ref, hbe_ref, hn_ref,
                wg_ref, bg_ref, wc_ref, bc_ref, o_ref):
    bf = jnp.bfloat16
    f32 = jnp.float32

    def mm(a, w):  # weights are already bf16
        return jnp.dot(a.astype(bf), w, preferred_element_type=f32)

    f3 = f3_ref[...]
    haf = haf_ref[...]
    hbe = hbe_ref[...]
    hup = mm(s_ref[...], hn_ref[...].astype(bf))                  # S @ H_node

    # input channel order matches torch: [H_up | F3 | H0_af | H0_be]
    gates = (mm(hup, wg_ref[0:128, :]) + mm(f3, wg_ref[128:256, :]) +
             mm(haf, wg_ref[256:384, :]) + mm(hbe, wg_ref[384:512, :]) +
             bg_ref[...])                                         # (tm, 512)
    reset = jax.nn.sigmoid(gates[:, 0:256])
    update = jax.nn.sigmoid(gates[:, 256:512])

    cand = (mm(hup, wc_ref[0:128, :]) + mm(f3, wc_ref[128:256, :]) +
            mm(reset[:, 0:128] * haf, wc_ref[256:384, :]) +
            mm(reset[:, 128:256] * hbe, wc_ref[384:512, :]) +
            bc_ref[...])                                          # (tm, 256)
    cnm = jnp.tanh(cand)

    u1 = update[:, 0:128]
    u2 = update[:, 128:256]
    o_ref[:, 0:128] = (1.0 - u1) * haf + u1 * cnm[:, 0:128]
    o_ref[:, 128:256] = (1.0 - u2) * hbe + u2 * cnm[:, 128:256]


def pallas_gcf(s_mat, f3, h0_af, h0_be, h_node, wg, bg, wc, bc):
    P, n = s_mat.shape
    tm = _row_tile(P)
    return pl.pallas_call(
        _gcf_kernel,
        out_shape=jax.ShapeDtypeStruct((P, 256), jnp.float32),
        grid=(P // tm,),
        in_specs=[pl.BlockSpec((tm, n), lambda i: (i, 0)),
                  pl.BlockSpec((tm, 128), lambda i: (i, 0)),
                  pl.BlockSpec((tm, 128), lambda i: (i, 0)),
                  pl.BlockSpec((tm, 128), lambda i: (i, 0)),
                  _fs((n, 128)),
                  _fs((512, 512)), _fs((1, 512)),
                  _fs((512, 256)), _fs((1, 256))],
        out_specs=pl.BlockSpec((tm, 256), lambda i: (i, 0)),
        compiler_params=_PIX_CPARAMS,
    )(s_mat, f3, h0_af, h0_be, h_node, wg, bg, wc, bc)


# ----------------------------------------------------------------------------
# 4) fused tail kernel: 3x3 conv (9 shifted matmuls) + ReLU + ch_ln +
#    classifier + softmax.  Inputs are 3 column-shifted slabs of the padded
#    activation ((h+2)*w, 256) so every tap is a sublane-aligned 2D slice; the
#    (hw, 2304) im2col buffer is never materialized in HBM.
# ----------------------------------------------------------------------------
def _tail_kernel(s0_ref, s1_ref, s2_ref, w3_ref, b3_ref,
                 wl_ref, bl_ref, wc_ref, bc_ref, o_ref, *, h, w):
    bf = jnp.bfloat16
    f32 = jnp.float32
    hw = h * w
    slabs = (s0_ref, s1_ref, s2_ref)

    acc = jnp.zeros((hw, 64), f32)
    for k in range(9):                                # unrolled 3x3 taps
        ky, kx = k // 3, k % 3
        win = slabs[kx][pl.ds(ky * w, hw), :]         # (hw, 256), aligned
        wk = w3_ref[pl.ds(k * 256, 256), :]           # (256, 64) bf16
        acc = acc + jnp.dot(win.astype(bf), wk, preferred_element_type=f32)

    t = jnp.maximum(acc + b3_ref[...], 0.0)           # conv bias + ReLU
    f = jnp.dot(t.astype(bf), wl_ref[...], preferred_element_type=f32) + bl_ref[...]
    y = jnp.dot(f.astype(bf), wc_ref[...], preferred_element_type=f32) + bc_ref[...]
    y = y - jnp.max(y, axis=1, keepdims=True)
    p = jnp.exp(y)
    o_ref[...] = p * pl.reciprocal(jnp.sum(p, axis=1, keepdims=True), approx=True)


def pallas_tail(slab0, slab1, slab2, w3, b3, wl, bl, wcls, bcls, *, h, w):
    # TODO(synk): at large image sizes tile the hw axis with a halo'd manual
    # DMA (memory_space=pl.ANY) instead of a single full-array block.
    hw = h * w
    P = (h + 2) * w
    ncls = bcls.shape[1]
    return pl.pallas_call(
        functools.partial(_tail_kernel, h=h, w=w),
        out_shape=jax.ShapeDtypeStruct((hw, ncls), jnp.float32),
        grid=(1,),
        in_specs=[_fs((P, 256)), _fs((P, 256)), _fs((P, 256)),
                  _fs((9 * 256, 64)), _fs((1, 64)),
                  _fs((64, 16)), _fs((1, 16)),
                  _fs((16, ncls)), _fs((1, ncls))],
        out_specs=_fs((hw, ncls)),
        compiler_params=_SEQ_CPARAMS,
    )(slab0, slab1, slab2, w3, b3, wl, bl, wcls, bcls)


# ----------------------------------------------------------------------------
# parameters (torch-default init) + BatchNorm folding
# ----------------------------------------------------------------------------
def init_linear(key, fan_in, fan_out):
    k1, k2 = jax.random.split(key)
    bound = 1.0 / (fan_in ** 0.5)
    w = jax.random.uniform(k1, (fan_in, fan_out), jnp.float32, -bound, bound)
    b = jax.random.uniform(k2, (fan_out,), jnp.float32, -bound, bound)
    return w, b


def bn_init(dim):
    # torch defaults: gamma=1, beta=0, running_mean=0, running_var=1
    return (jnp.ones((dim,), jnp.float32), jnp.zeros((dim,), jnp.float32),
            jnp.zeros((dim,), jnp.float32), jnp.ones((dim,), jnp.float32))


def bn_scale_shift(bn, eps=1e-5):
    # TODO(synk): BatchNorm1d training-mode batch statistics replaced by
    # eval-mode running stats (deterministic forward).
    gamma, beta, mean, var = bn
    sc = gamma / jnp.sqrt(var + eps)
    return sc, beta - mean * sc


def fold_bn_pre(sc, sh, w, b):
    # y = BN(x) @ w + b  ==  x @ (sc[:,None]*w) + (sh @ w + b)
    return sc[:, None] * w, sh @ w + b


def fold_bn_post(w, b, sc, sh):
    # y = BN(x @ w + b)  ==  x @ (w*sc[None,:]) + (b*sc + sh)
    return w * sc[None, :], b * sc + sh


def make_params(key, c, n_nodes, class_count, layer_channels=128):
    keys = jax.random.split(key, 20)
    r = {}
    r["head_w"], r["head_b"] = init_linear(keys[0], c, layer_channels)
    r["gcn_lg0_w"], r["gcn_lg0_b"] = init_linear(keys[1], layer_channels, 128)
    r["gcn_lg1_w"], r["gcn_lg1_b"] = init_linear(keys[2], layer_channels, layer_channels)
    r["gcn_lambda"] = jnp.zeros((1,), jnp.float32)
    r["gcn_bn"] = bn_init(layer_channels)
    r["emb_node_w"], r["emb_node_b"] = init_linear(keys[3], layer_channels, layer_channels)
    r["emb_edge_w"], r["emb_edge_b"] = init_linear(keys[4], n_nodes, n_nodes)
    r["emb_bn_node"] = bn_init(layer_channels)
    r["emb_bn_edge"] = bn_init(n_nodes)
    r["att_q_w"], r["att_q_b"] = init_linear(keys[5], layer_channels, layer_channels)
    r["att_k_w"], r["att_k_b"] = init_linear(keys[6], layer_channels, layer_channels)
    r["att_v_w"], r["att_v_b"] = init_linear(keys[7], layer_channels, layer_channels)
    r["att_proj_e_w"], r["att_proj_e_b"] = init_linear(keys[8], n_nodes, n_nodes)
    r["att_e_gate_w"], r["att_e_gate_b"] = init_linear(keys[9], n_nodes, n_nodes)
    r["lh0_w"], r["lh0_b"] = init_linear(keys[10], layer_channels, layer_channels)
    r["lh1_w"], r["lh1_b"] = init_linear(keys[11], layer_channels, 2 * layer_channels)
    r["lh2_w"], r["lh2_b"] = init_linear(keys[12], 2 * layer_channels, layer_channels)
    r["trans_bn_h"] = bn_init(layer_channels)
    r["gcf_wg"], r["gcf_bg"] = init_linear(keys[13], 512, 512)   # conv_gates 1x1
    r["gcf_wc"], r["gcf_bc"] = init_linear(keys[14], 512, 256)   # conv_can 1x1
    r["tail_w"], r["tail_b"] = init_linear(keys[15], 256 * 9, 64)  # 3x3 conv
    r["ch_ln_w"], r["ch_ln_b"] = init_linear(keys[16], 64, 16)
    r["cls_w"], r["cls_b"] = init_linear(keys[17], 16, class_count)
    return r


def prepare_params(r):
    """Fold eval-mode BN into adjacent linears, lay biases out as (1,N),
    pre-cast the big pixel-major weights to bf16 for the MXU."""
    bf = jnp.bfloat16
    p = {}
    # head
    p["head_w"] = r["head_w"]
    p["head_b"] = r["head_b"].reshape(1, -1)
    # node block (f32)
    sc, sh = bn_scale_shift(r["gcn_bn"])
    p["gw0"], gb0 = fold_bn_pre(sc, sh, r["gcn_lg0_w"], r["gcn_lg0_b"])
    p["gw1"], gb1 = fold_bn_pre(sc, sh, r["gcn_lg1_w"], r["gcn_lg1_b"])
    p["gb0"], p["gb1"] = gb0.reshape(1, -1), gb1.reshape(1, -1)
    p["gcn_lambda"] = r["gcn_lambda"].reshape(1, 1)
    sc, sh = bn_scale_shift(r["emb_bn_node"])
    p["enw"], enb = fold_bn_post(r["emb_node_w"], r["emb_node_b"], sc, sh)
    p["enb"] = enb.reshape(1, -1)
    sc, sh = bn_scale_shift(r["emb_bn_edge"])
    p["eew"], eeb = fold_bn_post(r["emb_edge_w"], r["emb_edge_b"], sc, sh)
    p["eeb"] = eeb.reshape(1, -1)
    for src, kw, kb in [("att_q", "qw", "qb"), ("att_k", "kw", "kb"),
                        ("att_v", "vw", "vb"), ("att_proj_e", "pew", "peb"),
                        ("att_e_gate", "egw", "egb"), ("lh0", "l0w", "l0b"),
                        ("lh1", "l1w", "l1b"), ("lh2", "l2w", "l2b")]:
        p[kw] = r[src + "_w"]
        p[kb] = r[src + "_b"].reshape(1, -1)
    sc, sh = bn_scale_shift(r["trans_bn_h"])
    p["bnh_sc"], p["bnh_sh"] = sc.reshape(1, -1), sh.reshape(1, -1)
    # GCF
    p["gcf_wg"] = r["gcf_wg"].astype(bf)
    p["gcf_bg"] = r["gcf_bg"].reshape(1, -1)
    p["gcf_wc"] = r["gcf_wc"].astype(bf)
    p["gcf_bc"] = r["gcf_bc"].reshape(1, -1)
    # tail
    p["tail_w"] = r["tail_w"].astype(bf)
    p["tail_b"] = r["tail_b"].reshape(1, -1)
    p["ch_ln_w"] = r["ch_ln_w"].astype(bf)
    p["ch_ln_b"] = r["ch_ln_b"].reshape(1, -1)
    p["cls_w"] = r["cls_w"].astype(bf)
    p["cls_b"] = r["cls_b"].reshape(1, -1)
    return p


# ----------------------------------------------------------------------------
# gtrans forward
# ----------------------------------------------------------------------------
def gtrans_forward(params, x, x_be, x_af, S_mat, A_mat):
    p = params
    h, w, c = x.shape
    hw = h * w

    # --- CNN head: one batched 1x1-conv matmul for all three inputs ---------
    x_all = jnp.concatenate([x.reshape(hw, c), x_be.reshape(hw, c),
                             x_af.reshape(hw, c)], axis=0)        # (3*hw, c)
    h_all = pallas_head(x_all, p["head_w"], p["head_b"])          # (3*hw, 128)
    F3, H0_be, H0_af = h_all[:hw], h_all[hw:2 * hw], h_all[2 * hw:]

    # --- fused node-level pipeline (pooling + GCN + embedding + trans) ------
    S_hat_T = (S_mat / jnp.sum(S_mat, axis=0, keepdims=True)).T   # (n, hw)
    H_node = pallas_node_block(S_hat_T, F3, A_mat, p)             # (n, 128)

    # --- fused GCF (back-projection S @ H_node fused in, no HBM concats) ----
    h_next = pallas_gcf(S_mat, F3, H0_af, H0_be, H_node,
                        p["gcf_wg"], p["gcf_bg"],
                        p["gcf_wc"], p["gcf_bc"])                 # (hw, 256)

    # --- fused tail: 3x3 conv + ReLU + ch_ln + classifier + softmax ---------
    xp = jnp.pad(h_next.reshape(h, w, 256), ((1, 1), (1, 1), (0, 0)))
    slabs = [xp[:, kx:kx + w, :].reshape((h + 2) * w, 256) for kx in range(3)]
    Y = pallas_tail(slabs[0], slabs[1], slabs[2],
                    p["tail_w"], p["tail_b"],
                    p["ch_ln_w"], p["ch_ln_b"],
                    p["cls_w"], p["cls_b"], h=h, w=w)             # (hw, classes)
    return Y


# ----------------------------------------------------------------------------
if __name__ == "__main__":
    h, w, c = 8, 8, 4
    n_nodes = 16
    class_count = 5

    key = jax.random.PRNGKey(0)
    kx, kbe, kaf, kA, kp = jax.random.split(key, 5)

    x = jax.random.normal(kx, (h, w, c), jnp.float32)
    x_be = jax.random.normal(kbe, (h, w, c), jnp.float32)
    x_af = jax.random.normal(kaf, (h, w, c), jnp.float32)

    # hierarchy matrix S (hw x n_nodes): hard pixel -> node assignment
    assign = jnp.arange(h * w) % n_nodes
    S_mat = jax.nn.one_hot(assign, n_nodes, dtype=jnp.float32)
    # adjacency (n x n): symmetric 0/1 with self loops
    A_r = (jax.random.uniform(kA, (n_nodes, n_nodes)) > 0.5).astype(jnp.float32)
    A_mat = jnp.clip(A_r + A_r.T + jnp.eye(n_nodes, dtype=jnp.float32), 0.0, 1.0)

    params = prepare_params(make_params(kp, c, n_nodes, class_count))

    fwd = jax.jit(gtrans_forward)
    Y = fwd(params, x, x_be, x_af, S_mat, A_mat)
    Y = jax.block_until_ready(Y)

    assert Y.shape == (h * w, class_count)
    assert bool(jnp.all(jnp.isfinite(Y)))
    row_sums = jnp.sum(Y, axis=-1)
    assert bool(jnp.all(jnp.abs(row_sums - 1.0) < 5e-2))  # softmax sanity
    print("KERNEL_OK")
</pallas_src>

<mosaic_0001>
module attributes {stable_mosaic.version = 11 : i64} {
  func.func @_head_kernel(%arg0: i32, %arg1: memref<192x4xf32, #tpu.memory_space<vmem>>, %arg2: memref<4x128xf32, #tpu.memory_space<vmem>>, %arg3: memref<1x128xf32, #tpu.memory_space<vmem>>, %arg4: memref<192x128xf32, #tpu.memory_space<vmem>>) attributes {dimension_semantics = [#tpu.dimension_semantics<parallel>], iteration_bounds = array<i64: 1>, scalar_prefetch = 0 : i64, scratch_operands = 0 : i64, tpu.core_type = #tpu.core_type<tc>, window_params = [{transform_indices = @transform_0, window_bounds = array<i64: 192, 4>}, {pipeline_mode = #tpu.pipeline_mode<synchronous>, transform_indices = @transform_1, window_bounds = array<i64: 4, 128>}, {pipeline_mode = #tpu.pipeline_mode<synchronous>, transform_indices = @transform_2, window_bounds = array<i64: 1, 128>}, {transform_indices = @transform_3, window_bounds = array<i64: 192, 128>}]} {
    %c0 = arith.constant 0 : index
    %c0_0 = arith.constant 0 : index
    %0 = vector.load %arg1[%c0, %c0_0] : memref<192x4xf32, #tpu.memory_space<vmem>>, vector<192x4xf32>
    %c0_1 = arith.constant 0 : index
    %c0_2 = arith.constant 0 : index
    %1 = vector.load %arg2[%c0_1, %c0_2] : memref<4x128xf32, #tpu.memory_space<vmem>>, vector<4x128xf32>
    %cst = arith.constant dense<0.000000e+00> : vector<192x128xf32>
    %2 = tpu.matmul %0, %1, %cst {dimension_numbers = #tpu.dot_dimension_numbers<[1], [0], [0], [1], [0, 0, 1, 1], [], []>} : vector<192x4xf32>, vector<4x128xf32>, vector<192x128xf32> -> vector<192x128xf32>
    %c0_3 = arith.constant 0 : index
    %c0_4 = arith.constant 0 : index
    %3 = vector.load %arg3[%c0_3, %c0_4] : memref<1x128xf32, #tpu.memory_space<vmem>>, vector<1x128xf32>
    %4 = vector.broadcast %3 : vector<1x128xf32> to vector<192x128xf32>
    %5 = arith.addf %2, %4 : vector<192x128xf32>
    %c0_5 = arith.constant 0 : index
    %c0_6 = arith.constant 0 : index
    %6 = vector.load %arg4[%c0_5, %c0_6] : memref<192x128xf32, #tpu.memory_space<vmem>>, vector<192x128xf32>
    tpu.vector_store %arg4[%c0_5, %c0_6], %5 {strides = array<i32>} : memref<192x128xf32, #tpu.memory_space<vmem>>, vector<192x128xf32>,
    return
  }
  func.func @transform_0(%arg0: i32) -> (i32, i32) {
    %c0_i32 = arith.constant 0 : i32
    %c0_i32_0 = arith.constant 0 : i32
    return %arg0, %c0_i32 : i32, i32
  }
  func.func @transform_1(%arg0: i32) -> (i32, i32) {
    %c0_i32 = arith.constant 0 : i32
    %c0_i32_0 = arith.constant 0 : i32
    %c0_i32_1 = arith.constant 0 : i32
    return %c0_i32, %c0_i32_0 : i32, i32
  }
  func.func @transform_2(%arg0: i32) -> (i32, i32) {
    %c0_i32 = arith.constant 0 : i32
    %c0_i32_0 = arith.constant 0 : i32
    %c0_i32_1 = arith.constant 0 : i32
    return %c0_i32, %c0_i32_0 : i32, i32
  }
  func.func @transform_3(%arg0: i32) -> (i32, i32) {
    %c0_i32 = arith.constant 0 : i32
    %c0_i32_0 = arith.constant 0 : i32
    return %arg0, %c0_i32 : i32, i32
  }
}

module attributes {stable_mosaic.version = 11 : i64} {
  func.func @_gcf_kernel(%arg0: i32, %arg1: memref<64x16xf32, #tpu.memory_space<vmem>>, %arg2: memref<64x128xf32, #tpu.memory_space<vmem>>, %arg3: memref<64x128xf32, #tpu.memory_space<vmem>>, %arg4: memref<64x128xf32, #tpu.memory_space<vmem>>, %arg5: memref<16x128xf32, #tpu.memory_space<vmem>>, %arg6: memref<512x512xbf16, #tpu.memory_space<vmem>>, %arg7: memref<1x512xf32, #tpu.memory_space<vmem>>, %arg8: memref<512x256xbf16, #tpu.memory_space<vmem>>, %arg9: memref<1x256xf32, #tpu.memory_space<vmem>>, %arg10: memref<64x256xf32, #tpu.memory_space<vmem>>) attributes {dimension_semantics = [#tpu.dimension_semantics<parallel>], iteration_bounds = array<i64: 1>, scalar_prefetch = 0 : i64, scratch_operands = 0 : i64, tpu.core_type = #tpu.core_type<tc>, window_params = [{transform_indices = @transform_0, window_bounds = array<i64: 64, 16>}, {transform_indices = @transform_1, window_bounds = array<i64: 64, 128>}, {transform_indices = @transform_2, window_bounds = array<i64: 64, 128>}, {transform_indices = @transform_3, window_bounds = array<i64: 64, 128>}, {pipeline_mode = #tpu.pipeline_mode<synchronous>, transform_indices = @transform_4, window_bounds = array<i64: 16, 128>}, {pipeline_mode = #tpu.pipeline_mode<synchronous>, transform_indices = @transform_5, window_bounds = array<i64: 512, 512>}, {pipeline_mode = #tpu.pipeline_mode<synchronous>, transform_indices = @transform_6, window_bounds = array<i64: 1, 512>}, {pipeline_mode = #tpu.pipeline_mode<synchronous>, transform_indices = @transform_7, window_bounds = array<i64: 512, 256>}, {pipeline_mode = #tpu.pipeline_mode<synchronous>, transform_indices = @transform_8, window_bounds = array<i64: 1, 256>}, {transform_indices = @transform_9, window_bounds = array<i64: 64, 256>}]} {
    %c0 = arith.constant 0 : index
    %c0_0 = arith.constant 0 : index
    %0 = vector.load %arg2[%c0, %c0_0] : memref<64x128xf32, #tpu.memory_space<vmem>>, vector<64x128xf32>
    %c0_1 = arith.constant 0 : index
    %c0_2 = arith.constant 0 : index
    %1 = vector.load %arg3[%c0_1, %c0_2] : memref<64x128xf32, #tpu.memory_space<vmem>>, vector<64x128xf32>
    %c0_3 = arith.constant 0 : index
    %c0_4 = arith.constant 0 : index
    %2 = vector.load %arg4[%c0_3, %c0_4] : memref<64x128xf32, #tpu.memory_space<vmem>>, vector<64x128xf32>
    %c0_5 = arith.constant 0 : index
    %c0_6 = arith.constant 0 : index
    %3 = vector.load %arg1[%c0_5, %c0_6] : memref<64x16xf32, #tpu.memory_space<vmem>>, vector<64x16xf32>
    %c0_7 = arith.constant 0 : index
    %c0_8 = arith.constant 0 : index
    %4 = vector.load %arg5[%c0_7, %c0_8] : memref<16x128xf32, #tpu.memory_space<vmem>>, vector<16x128xf32>
    %5 = arith.truncf %4 : vector<16x128xf32> to vector<16x128xbf16>
    %6 = arith.truncf %3 : vector<64x16xf32> to vector<64x16xbf16>
    %cst = arith.constant dense<0.000000e+00> : vector<64x128xf32>
    %7 = tpu.matmul %6, %5, %cst {dimension_numbers = #tpu.dot_dimension_numbers<[1], [0], [0], [1], [0, 0, 1, 1], [], []>} : vector<64x16xbf16>, vector<16x128xbf16>, vector<64x128xf32> -> vector<64x128xf32>
    %c0_9 = arith.constant 0 : index
    %c0_10 = arith.constant 0 : index
    %8 = vector.load %arg6[%c0_9, %c0_10] : memref<512x512xbf16, #tpu.memory_space<vmem>>, vector<128x512xbf16>
    %9 = arith.truncf %7 : vector<64x128xf32> to vector<64x128xbf16>
    %cst_11 = arith.constant dense<0.000000e+00> : vector<64x512xf32>
    %10 = tpu.matmul %9, %8, %cst_11 {dimension_numbers = #tpu.dot_dimension_numbers<[1], [0], [0], [1], [0, 0, 1, 1], [], []>} : vector<64x128xbf16>, vector<128x512xbf16>, vector<64x512xf32> -> vector<64x512xf32>
    %c128 = arith.constant 128 : index
    %c0_12 = arith.constant 0 : index
    %11 = vector.load %arg6[%c128, %c0_12] : memref<512x512xbf16, #tpu.memory_space<vmem>>, vector<128x512xbf16>
    %12 = arith.truncf %0 : vector<64x128xf32> to vector<64x128xbf16>
    %cst_13 = arith.constant dense<0.000000e+00> : vector<64x512xf32>
    %13 = tpu.matmul %12, %11, %cst_13 {dimension_numbers = #tpu.dot_dimension_numbers<[1], [0], [0], [1], [0, 0, 1, 1], [], []>} : vector<64x128xbf16>, vector<128x512xbf16>, vector<64x512xf32> -> vector<64x512xf32>
    %14 = arith.addf %10, %13 : vector<64x512xf32>
    %c256 = arith.constant 256 : index
    %c0_14 = arith.constant 0 : index
    %15 = vector.load %arg6[%c256, %c0_14] : memref<512x512xbf16, #tpu.memory_space<vmem>>, vector<128x512xbf16>
    %16 = arith.truncf %1 : vector<64x128xf32> to vector<64x128xbf16>
    %cst_15 = arith.constant dense<0.000000e+00> : vector<64x512xf32>
    %17 = tpu.matmul %16, %15, %cst_15 {dimension_numbers = #tpu.dot_dimension_numbers<[1], [0], [0], [1], [0, 0, 1, 1], [], []>} : vector<64x128xbf16>, vector<128x512xbf16>, vector<64x512xf32> -> vector<64x512xf32>
    %18 = arith.addf %14, %17 : vector<64x512xf32>
    %c384 = arith.constant 384 : index
    %c0_16 = arith.constant 0 : index
    %19 = vector.load %arg6[%c384, %c0_16] : memref<512x512xbf16, #tpu.memory_space<vmem>>, vector<128x512xbf16>
    %20 = arith.truncf %2 : vector<64x128xf32> to vector<64x128xbf16>
    %cst_17 = arith.constant dense<0.000000e+00> : vector<64x512xf32>
    %21 = tpu.matmul %20, %19, %cst_17 {dimension_numbers = #tpu.dot_dimension_numbers<[1], [0], [0], [1], [0, 0, 1, 1], [], []>} : vector<64x128xbf16>, vector<128x512xbf16>, vector<64x512xf32> -> vector<64x512xf32>
    %22 = arith.addf %18, %21 : vector<64x512xf32>
    %c0_18 = arith.constant 0 : index
    %c0_19 = arith.constant 0 : index
    %23 = vector.load %arg7[%c0_18, %c0_19] : memref<1x512xf32, #tpu.memory_space<vmem>>, vector<1x512xf32>
    %24 = vector.broadcast %23 : vector<1x512xf32> to vector<64x512xf32>
    %25 = arith.addf %22, %24 : vector<64x512xf32>
    %26 = vector.extract_strided_slice %25 {offsets = [0, 0], sizes = [64, 256], strides = [1, 1]} : vector<64x512xf32> to vector<64x256xf32>
    %27 = arith.negf %26 : vector<64x256xf32>
    %28 = math.exp %27 : vector<64x256xf32>
    %cst_20 = arith.constant 1.000000e+00 : f32
    %29 = vector.broadcast %cst_20 : f32 to vector<64x256xf32>
    %30 = arith.addf %29, %28 : vector<64x256xf32>
    %31 = arith.divf %29, %30 : vector<64x256xf32>
    %32 = vector.extract_strided_slice %25 {offsets = [0, 256], sizes = [64, 256], strides = [1, 1]} : vector<64x512xf32> to vector<64x256xf32>
    %33 = arith.negf %32 : vector<64x256xf32>
    %34 = math.exp %33 : vector<64x256xf32>
    %cst_21 = arith.constant 1.000000e+00 : f32
    %35 = vector.broadcast %cst_21 : f32 to vector<64x256xf32>
    %36 = arith.addf %35, %34 : vector<64x256xf32>
    %37 = arith.divf %35, %36 : vector<64x256xf32>
    %c0_22 = arith.constant 0 : index
    %c0_23 = arith.constant 0 : index
    %38 = vector.load %arg8[%c0_22, %c0_23] : memref<512x256xbf16, #tpu.memory_space<vmem>>, vector<128x256xbf16>
    %39 = arith.truncf %7 : vector<64x128xf32> to vector<64x128xbf16>
    %cst_24 = arith.constant dense<0.000000e+00> : vector<64x256xf32>
    %40 = tpu.matmul %39, %38, %cst_24 {dimension_numbers = #tpu.dot_dimension_numbers<[1], [0], [0], [1], [0, 0, 1, 1], [], []>} : vector<64x128xbf16>, vector<128x256xbf16>, vector<64x256xf32> -> vector<64x256xf32>
    %c128_25 = arith.constant 128 : index
    %c0_26 = arith.constant 0 : index
    %41 = vector.load %arg8[%c128_25, %c0_26] : memref<512x256xbf16, #tpu.memory_space<vmem>>, vector<128x256xbf16>
    %42 = arith.truncf %0 : vector<64x128xf32> to vector<64x128xbf16>
    %cst_27 = arith.constant dense<0.000000e+00> : vector<64x256xf32>
    %43 = tpu.matmul %42, %41, %cst_27 {dimension_numbers = #tpu.dot_dimension_numbers<[1], [0], [0], [1], [0, 0, 1, 1], [], []>} : vector<64x128xbf16>, vector<128x256xbf16>, vector<64x256xf32> -> vector<64x256xf32>
    %44 = arith.addf %40, %43 : vector<64x256xf32>
    %45 = vector.extract_strided_slice %31 {offsets = [0, 0], sizes = [64, 128], strides = [1, 1]} : vector<64x256xf32> to vector<64x128xf32>
    %46 = arith.mulf %45, %1 : vector<64x128xf32>
    %c256_28 = arith.constant 256 : index
    %c0_29 = arith.constant 0 : index
    %47 = vector.load %arg8[%c256_28, %c0_29] : memref<512x256xbf16, #tpu.memory_space<vmem>>, vector<128x256xbf16>
    %48 = arith.truncf %46 : vector<64x128xf32> to vector<64x128xbf16>
    %cst_30 = arith.constant dense<0.000000e+00> : vector<64x256xf32>
    %49 = tpu.matmul %48, %47, %cst_30 {dimension_numbers = #tpu.dot_dimension_numbers<[1], [0], [0], [1], [0, 0, 1, 1], [], []>} : vector<64x128xbf16>, vector<128x256xbf16>, vector<64x256xf32> -> vector<64x256xf32>
    %50 = arith.addf %44, %49 : vector<64x256xf32>
    %51 = vector.extract_strided_slice %31 {offsets = [0, 128], sizes = [64, 128], strides = [1, 1]} : vector<64x256xf32> to vector<64x128xf32>
    %52 = arith.mulf %51, %2 : vector<64x128xf32>
    %c384_31 = arith.constant 384 : index
    %c0_32 = arith.constant 0 : index
    %53 = vector.load %arg8[%c384_31, %c0_32] : memref<512x256xbf16, #tpu.memory_space<vmem>>, vector<128x256xbf16>
    %54 = arith.truncf %52 : vector<64x128xf32> to vector<64x128xbf16>
    %cst_33 = arith.constant dense<0.000000e+00> : vector<64x256xf32>
    %55 = tpu.matmul %54, %53, %cst_33 {dimension_numbers = #tpu.dot_dimension_numbers<[1], [0], [0], [1], [0, 0, 1, 1], [], []>} : vector<64x128xbf16>, vector<128x256xbf16>, vector<64x256xf32> -> vector<64x256xf32>
    %56 = arith.addf %50, %55 : vector<64x256xf32>
    %c0_34 = arith.constant 0 : index
    %c0_35 = arith.constant 0 : index
    %57 = vector.load %arg9[%c0_34, %c0_35] : memref<1x256xf32, #tpu.memory_space<vmem>>, vector<1x256xf32>
    %58 = vector.broadcast %57 : vector<1x256xf32> to vector<64x256xf32>
    %59 = arith.addf %56, %58 : vector<64x256xf32>
    %60 = math.tanh %59 : vector<64x256xf32>
    %61 = vector.extract_strided_slice %37 {offsets = [0, 0], sizes = [64, 128], strides = [1, 1]} : vector<64x256xf32> to vector<64x128xf32>
    %62 = vector.extract_strided_slice %37 {offsets = [0, 128], sizes = [64, 128], strides = [1, 1]} : vector<64x256xf32> to vector<64x128xf32>
    %cst_36 = arith.constant 1.000000e+00 : f32
    %63 = vector.broadcast %cst_36 : f32 to vector<64x128xf32>
    %64 = arith.subf %63, %61 : vector<64x128xf32>
    %65 = arith.mulf %64, %1 : vector<64x128xf32>
    %66 = vector.extract_strided_slice %60 {offsets = [0, 0], sizes = [64, 128], strides = [1, 1]} : vector<64x256xf32> to vector<64x128xf32>
    %67 = arith.mulf %61, %66 : vector<64x128xf32>
    %68 = arith.addf %65, %67 : vector<64x128xf32>
    %c0_37 = arith.constant 0 : index
    %c0_38 = arith.constant 0 : index
    %69 = vector.load %arg10[%c0_37, %c0_38] : memref<64x256xf32, #tpu.memory_space<vmem>>, vector<64x128xf32>
    tpu.vector_store %arg10[%c0_37, %c0_38], %68 {strides = array<i32>} : memref<64x256xf32, #tpu.memory_space<vmem>>, vector<64x128xf32>,
    %cst_39 = arith.constant 1.000000e+00 : f32
    %70 = vector.broadcast %cst_39 : f32 to vector<64x128xf32>
    %71 = arith.subf %70, %62 : vector<64x128xf32>
    %72 = arith.mulf %71, %2 : vector<64x128xf32>
    %73 = vector.extract_strided_slice %60 {offsets = [0, 128], sizes = [64, 128], strides = [1, 1]} : vector<64x256xf32> to vector<64x128xf32>
    %74 = arith.mulf %62, %73 : vector<64x128xf32>
    %75 = arith.addf %72, %74 : vector<64x128xf32>
    %c0_40 = arith.constant 0 : index
    %c128_41 = arith.constant 128 : index
    %76 = vector.load %arg10[%c0_40, %c128_41] : memref<64x256xf32, #tpu.memory_space<vmem>>, vector<64x128xf32>
    tpu.vector_store %arg10[%c0_40, %c128_41], %75 {strides = array<i32>} : memref<64x256xf32, #tpu.memory_space<vmem>>, vector<64x128xf32>,
    return
  }
  func.func @transform_0(%arg0: i32) -> (i32, i32) {
    %c0_i32 = arith.constant 0 : i32
    %c0_i32_0 = arith.constant 0 : i32
    return %arg0, %c0_i32 : i32, i32
  }
  func.func @transform_1(%arg0: i32) -> (i32, i32) {
    %c0_i32 = arith.constant 0 : i32
    %c0_i32_0 = arith.constant 0 : i32
    return %arg0, %c0_i32 : i32, i32
  }
  func.func @transform_2(%arg0: i32) -> (i32, i32) {
    %c0_i32 = arith.constant 0 : i32
    %c0_i32_0 = arith.constant 0 : i32
    return %arg0, %c0_i32 : i32, i32
  }
  func.func @transform_3(%arg0: i32) -> (i32, i32) {
    %c0_i32 = arith.constant 0 : i32
    %c0_i32_0 = arith.constant 0 : i32
    return %arg0, %c0_i32 : i32, i32
  }
  func.func @transform_4(%arg0: i32) -> (i32, i32) {
    %c0_i32 = arith.constant 0 : i32
    %c0_i32_0 = arith.constant 0 : i32
    %c0_i32_1 = arith.constant 0 : i32
    return %c0_i32, %c0_i32_0 : i32, i32
  }
  func.func @transform_5(%arg0: i32) -> (i32, i32) {
    %c0_i32 = arith.constant 0 : i32
    %c0_i32_0 = arith.constant 0 : i32
    %c0_i32_1 = arith.constant 0 : i32
    return %c0_i32, %c0_i32_0 : i32, i32
  }
  func.func @transform_6(%arg0: i32) -> (i32, i32) {
    %c0_i32 = arith.constant 0 : i32
    %c0_i32_0 = arith.constant 0 : i32
    %c0_i32_1 = arith.constant 0 : i32
    return %c0_i32, %c0_i32_0 : i32, i32
  }
  func.func @transform_7(%arg0: i32) -> (i32, i32) {
    %c0_i32 = arith.constant 0 : i32
    %c0_i32_0 = arith.constant 0 : i32
    %c0_i32_1 = arith.constant 0 : i32
    return %c0_i32, %c0_i32_0 : i32, i32
  }
  func.func @transform_8(%arg0: i32) -> (i32, i32) {
    %c0_i32 = arith.constant 0 : i32
    %c0_i32_0 = arith.constant 0 : i32
    %c0_i32_1 = arith.constant 0 : i32
    return %c0_i32, %c0_i32_0 : i32, i32
  }
  func.func @transform_9(%arg0: i32) -> (i32, i32) {
    %c0_i32 = arith.constant 0 : i32
    %c0_i32_0 = arith.constant 0 : i32
    return %arg0, %c0_i32 : i32, i32
  }
}

module attributes {stable_mosaic.version = 11 : i64} {
  func.func @_node_kernel(%arg0: i32, %arg1: memref<16x64xf32, #tpu.memory_space<vmem>>, %arg2: memref<64x128xf32, #tpu.memory_space<vmem>>, %arg3: memref<16x16xf32, #tpu.memory_space<vmem>>, %arg4: memref<1x1xf32, #tpu.memory_space<vmem>>, %arg5: memref<128x128xf32, #tpu.memory_space<vmem>>, %arg6: memref<1x128xf32, #tpu.memory_space<vmem>>, %arg7: memref<128x128xf32, #tpu.memory_space<vmem>>, %arg8: memref<1x128xf32, #tpu.memory_space<vmem>>, %arg9: memref<128x128xf32, #tpu.memory_space<vmem>>, %arg10: memref<1x128xf32, #tpu.memory_space<vmem>>, %arg11: memref<16x16xf32, #tpu.memory_space<vmem>>, %arg12: memref<1x16xf32, #tpu.memory_space<vmem>>, %arg13: memref<128x128xf32, #tpu.memory_space<vmem>>, %arg14: memref<1x128xf32, #tpu.memory_space<vmem>>, %arg15: memref<128x128xf32, #tpu.memory_space<vmem>>, %arg16: memref<1x128xf32, #tpu.memory_space<vmem>>, %arg17: memref<128x128xf32, #tpu.memory_space<vmem>>, %arg18: memref<1x128xf32, #tpu.memory_space<vmem>>, %arg19: memref<16x16xf32, #tpu.memory_space<vmem>>, %arg20: memref<1x16xf32, #tpu.memory_space<vmem>>, %arg21: memref<16x16xf32, #tpu.memory_space<vmem>>, %arg22: memref<1x16xf32, #tpu.memory_space<vmem>>, %arg23: memref<128x128xf32, #tpu.memory_space<vmem>>, %arg24: memref<1x128xf32, #tpu.memory_space<vmem>>, %arg25: memref<128x256xf32, #tpu.memory_space<vmem>>, %arg26: memref<1x256xf32, #tpu.memory_space<vmem>>, %arg27: memref<256x128xf32, #tpu.memory_space<vmem>>, %arg28: memref<1x128xf32, #tpu.memory_space<vmem>>, %arg29: memref<1x128xf32, #tpu.memory_space<vmem>>, %arg30: memref<1x128xf32, #tpu.memory_space<vmem>>, %arg31: memref<16x128xf32, #tpu.memory_space<vmem>>) attributes {dimension_semantics = [#tpu.dimension_semantics<arbitrary>], iteration_bounds = array<i64: 1>, scalar_prefetch = 0 : i64, scratch_operands = 0 : i64, tpu.core_type = #tpu.core_type<tc>, window_params = [{pipeline_mode = #tpu.pipeline_mode<synchronous>, transform_indices = @transform_0, window_bounds = array<i64: 16, 64>}, {pipeline_mode = #tpu.pipeline_mode<synchronous>, transform_indices = @transform_1, window_bounds = array<i64: 64, 128>}, {pipeline_mode = #tpu.pipeline_mode<synchronous>, transform_indices = @transform_2, window_bounds = array<i64: 16, 16>}, {pipeline_mode = #tpu.pipeline_mode<synchronous>, transform_indices = @transform_3, window_bounds = array<i64: 1, 1>}, {pipeline_mode = #tpu.pipeline_mode<synchronous>, transform_indices = @transform_4, window_bounds = array<i64: 128, 128>}, {pipeline_mode = #tpu.pipeline_mode<synchronous>, transform_indices = @transform_5, window_bounds = array<i64: 1, 128>}, {pipeline_mode = #tpu.pipeline_mode<synchronous>, transform_indices = @transform_6, window_bounds = array<i64: 128, 128>}, {pipeline_mode = #tpu.pipeline_mode<synchronous>, transform_indices = @transform_7, window_bounds = array<i64: 1, 128>}, {pipeline_mode = #tpu.pipeline_mode<synchronous>, transform_indices = @transform_8, window_bounds = array<i64: 128, 128>}, {pipeline_mode = #tpu.pipeline_mode<synchronous>, transform_indices = @transform_9, window_bounds = array<i64: 1, 128>}, {pipeline_mode = #tpu.pipeline_mode<synchronous>, transform_indices = @transform_10, window_bounds = array<i64: 16, 16>}, {pipeline_mode = #tpu.pipeline_mode<synchronous>, transform_indices = @transform_11, window_bounds = array<i64: 1, 16>}, {pipeline_mode = #tpu.pipeline_mode<synchronous>, transform_indices = @transform_12, window_bounds = array<i64: 128, 128>}, {pipeline_mode = #tpu.pipeline_mode<synchronous>, transform_indices = @transform_13, window_bounds = array<i64: 1, 128>}, {pipeline_mode = #tpu.pipeline_mode<synchronous>, transform_indices = @transform_14, window_bounds = array<i64: 128, 128>}, {pipeline_mode = #tpu.pipeline_mode<synchronous>, transform_indices = @transform_15, window_bounds = array<i64: 1, 128>}, {pipeline_mode = #tpu.pipeline_mode<synchronous>, transform_indices = @transform_16, window_bounds = array<i64: 128, 128>}, {pipeline_mode = #tpu.pipeline_mode<synchronous>, transform_indices = @transform_17, window_bounds = array<i64: 1, 128>}, {pipeline_mode = #tpu.pipeline_mode<synchronous>, transform_indices = @transform_18, window_bounds = array<i64: 16, 16>}, {pipeline_mode = #tpu.pipeline_mode<synchronous>, transform_indices = @transform_19, window_bounds = array<i64: 1, 16>}, {pipeline_mode = #tpu.pipeline_mode<synchronous>, transform_indices = @transform_20, window_bounds = array<i64: 16, 16>}, {pipeline_mode = #tpu.pipeline_mode<synchronous>, transform_indices = @transform_21, window_bounds = array<i64: 1, 16>}, {pipeline_mode = #tpu.pipeline_mode<synchronous>, transform_indices = @transform_22, window_bounds = array<i64: 128, 128>}, {pipeline_mode = #tpu.pipeline_mode<synchronous>, transform_indices = @transform_23, window_bounds = array<i64: 1, 128>}, {pipeline_mode = #tpu.pipeline_mode<synchronous>, transform_indices = @transform_24, window_bounds = array<i64: 128, 256>}, {pipeline_mode = #tpu.pipeline_mode<synchronous>, transform_indices = @transform_25, window_bounds = array<i64: 1, 256>}, {pipeline_mode = #tpu.pipeline_mode<synchronous>, transform_indices = @transform_26, window_bounds = array<i64: 256, 128>}, {pipeline_mode = #tpu.pipeline_mode<synchronous>, transform_indices = @transform_27, window_bounds = array<i64: 1, 128>}, {pipeline_mode = #tpu.pipeline_mode<synchronous>, transform_indices = @transform_28, window_bounds = array<i64: 1, 128>}, {pipeline_mode = #tpu.pipeline_mode<synchronous>, transform_indices = @transform_29, window_bounds = array<i64: 1, 128>}, {pipeline_mode = #tpu.pipeline_mode<synchronous>, transform_indices = @transform_30, window_bounds = array<i64: 16, 128>}]} {
    %c0 = arith.constant 0 : index
    %c0_0 = arith.constant 0 : index
    %0 = vector.load %arg1[%c0, %c0_0] : memref<16x64xf32, #tpu.memory_space<vmem>>, vector<16x64xf32>
    %c0_1 = arith.constant 0 : index
    %c0_2 = arith.constant 0 : index
    %1 = vector.load %arg2[%c0_1, %c0_2] : memref<64x128xf32, #tpu.memory_space<vmem>>, vector<64x128xf32>
    %cst = arith.constant dense<0.000000e+00> : vector<16x128xf32>
    %2 = tpu.matmul %0, %1, %cst {dimension_numbers = #tpu.dot_dimension_numbers<[1], [0], [0], [1], [0, 0, 1, 1], [], []>} : vector<16x64xf32>, vector<64x128xf32>, vector<16x128xf32> -> vector<16x128xf32>
    %c0_3 = arith.constant 0 : index
    %c0_4 = arith.constant 0 : index
    %3 = vector.load %arg5[%c0_3, %c0_4] : memref<128x128xf32, #tpu.memory_space<vmem>>, vector<128x128xf32>
    %cst_5 = arith.constant dense<0.000000e+00> : vector<16x128xf32>
    %4 = tpu.matmul %2, %3, %cst_5 {dimension_numbers = #tpu.dot_dimension_numbers<[1], [0], [0], [1], [0, 0, 1, 1], [], []>} : vector<16x128xf32>, vector<128x128xf32>, vector<16x128xf32> -> vector<16x128xf32>
    %c0_6 = arith.constant 0 : index
    %c0_7 = arith.constant 0 : index
    %5 = vector.load %arg6[%c0_6, %c0_7] : memref<1x128xf32, #tpu.memory_space<vmem>>, vector<1x128xf32>
    %6 = vector.broadcast %5 : vector<1x128xf32> to vector<16x128xf32>
    %7 = arith.addf %4, %6 : vector<16x128xf32>
    %cst_8 = arith.constant dense<0.000000e+00> : vector<16x16xf32>
    %8 = tpu.matmul %7, %7, %cst_8 {dimension_numbers = #tpu.dot_dimension_numbers<[1], [1], [0], [0], [0, 0, 1, 0], [], []>} : vector<16x128xf32>, vector<16x128xf32>, vector<16x16xf32> -> vector<16x16xf32>
    %cst_9 = arith.constant dense<0xFF800000> : vector<16xf32>
    %9 = vector.multi_reduction <maximumf>, %8, %cst_9 [1] : vector<16x16xf32> to vector<16xf32>
    %10 = vector.shape_cast %9 : vector<16xf32> to vector<16x1xf32>
    %11 = vector.broadcast %10 : vector<16x1xf32> to vector<16x16xf32>
    %12 = arith.subf %8, %11 : vector<16x16xf32>
    %13 = math.exp %12 : vector<16x16xf32>
    %cst_10 = arith.constant dense<0.000000e+00> : vector<16xf32>
    %14 = vector.multi_reduction <add>, %13, %cst_10 [1] : vector<16x16xf32> to vector<16xf32>
    %15 = vector.shape_cast %14 : vector<16xf32> to vector<16x1xf32>
    %16 = tpu.reciprocal %15 {approx = true} : vector<16x1xf32> -> vector<16x1xf32>
    %17 = vector.broadcast %16 : vector<16x1xf32> to vector<16x16xf32>
    %18 = arith.mulf %13, %17 : vector<16x16xf32>
    %19 = tpu.iota {dimensions = array<i32: 0>} : vector<16x16xi32>
    %20 = tpu.iota {dimensions = array<i32: 1>} : vector<16x16xi32>
    %21 = arith.cmpi eq, %19, %20 : vector<16x16xi32>
    %22 = arith.extui %21 : vector<16x16xi1> to vector<16x16xi32>
    %23 = arith.sitofp %22 : vector<16x16xi32> to vector<16x16xf32>
    %c0_11 = arith.constant 0 : index
    %c0_12 = arith.constant 0 : index
    %24 = vector.load %arg3[%c0_11, %c0_12] : memref<16x16xf32, #tpu.memory_space<vmem>>, vector<16x16xf32>
    %25 = arith.mulf %18, %24 : vector<16x16xf32>
    %c0_13 = arith.constant 0 : index
    %c0_14 = arith.constant 0 : index
    %26 = vector.load %arg4[%c0_13, %c0_14] : memref<1x1xf32, #tpu.memory_space<vmem>>, vector<1x1xf32>
    %27 = vector.extract %26[0, 0] : f32 from vector<1x1xf32>
    %28 = vector.broadcast %27 : f32 to vector<16x16xf32>
    %29 = arith.mulf %28, %23 : vector<16x16xf32>
    %30 = arith.addf %25, %29 : vector<16x16xf32>
    %c0_15 = arith.constant 0 : index
    %c0_16 = arith.constant 0 : index
    %31 = vector.load %arg7[%c0_15, %c0_16] : memref<128x128xf32, #tpu.memory_space<vmem>>, vector<128x128xf32>
    %cst_17 = arith.constant dense<0.000000e+00> : vector<16x128xf32>
    %32 = tpu.matmul %2, %31, %cst_17 {dimension_numbers = #tpu.dot_dimension_numbers<[1], [0], [0], [1], [0, 0, 1, 1], [], []>} : vector<16x128xf32>, vector<128x128xf32>, vector<16x128xf32> -> vector<16x128xf32>
    %c0_18 = arith.constant 0 : index
    %c0_19 = arith.constant 0 : index
    %33 = vector.load %arg8[%c0_18, %c0_19] : memref<1x128xf32, #tpu.memory_space<vmem>>, vector<1x128xf32>
    %34 = vector.broadcast %33 : vector<1x128xf32> to vector<16x128xf32>
    %35 = arith.addf %32, %34 : vector<16x128xf32>
    %cst_20 = arith.constant dense<0.000000e+00> : vector<16x128xf32>
    %36 = tpu.matmul %18, %35, %cst_20 {dimension_numbers = #tpu.dot_dimension_numbers<[1], [0], [0], [1], [0, 0, 1, 1], [], []>} : vector<16x16xf32>, vector<16x128xf32>, vector<16x128xf32> -> vector<16x128xf32>
    %cst_21 = arith.constant 0.000000e+00 : f32
    %37 = vector.broadcast %cst_21 : f32 to vector<16x128xf32>
    %38 = arith.cmpf oge, %36, %37 : vector<16x128xf32>
    %cst_22 = arith.constant 0.00999999977 : f32
    %39 = vector.broadcast %cst_22 : f32 to vector<16x128xf32>
    %40 = arith.mulf %39, %36 : vector<16x128xf32>
    %41 = arith.select %38, %36, %40 : vector<16x128xi1>, vector<16x128xf32>
    %c0_23 = arith.constant 0 : index
    %c0_24 = arith.constant 0 : index
    %42 = vector.load %arg9[%c0_23, %c0_24] : memref<128x128xf32, #tpu.memory_space<vmem>>, vector<128x128xf32>
    %cst_25 = arith.constant dense<0.000000e+00> : vector<16x128xf32>
    %43 = tpu.matmul %41, %42, %cst_25 {dimension_numbers = #tpu.dot_dimension_numbers<[1], [0], [0], [1], [0, 0, 1, 1], [], []>} : vector<16x128xf32>, vector<128x128xf32>, vector<16x128xf32> -> vector<16x128xf32>
    %c0_26 = arith.constant 0 : index
    %c0_27 = arith.constant 0 : index
    %44 = vector.load %arg10[%c0_26, %c0_27] : memref<1x128xf32, #tpu.memory_space<vmem>>, vector<1x128xf32>
    %45 = vector.broadcast %44 : vector<1x128xf32> to vector<16x128xf32>
    %46 = arith.addf %43, %45 : vector<16x128xf32>
    %cst_28 = arith.constant 0.000000e+00 : f32
    %47 = vector.broadcast %cst_28 : f32 to vector<16x128xf32>
    %48 = arith.cmpf oge, %46, %47 : vector<16x128xf32>
    %cst_29 = arith.constant 0.00999999977 : f32
    %49 = vector.broadcast %cst_29 : f32 to vector<16x128xf32>
    %50 = arith.mulf %49, %46 : vector<16x128xf32>
    %51 = arith.select %48, %46, %50 : vector<16x128xi1>, vector<16x128xf32>
    %c0_30 = arith.constant 0 : index
    %c0_31 = arith.constant 0 : index
    %52 = vector.load %arg11[%c0_30, %c0_31] : memref<16x16xf32, #tpu.memory_space<vmem>>, vector<16x16xf32>
    %cst_32 = arith.constant dense<0.000000e+00> : vector<16x16xf32>
    %53 = tpu.matmul %30, %52, %cst_32 {dimension_numbers = #tpu.dot_dimension_numbers<[1], [0], [0], [1], [0, 0, 1, 1], [], []>} : vector<16x16xf32>, vector<16x16xf32>, vector<16x16xf32> -> vector<16x16xf32>
    %c0_33 = arith.constant 0 : index
    %c0_34 = arith.constant 0 : index
    %54 = vector.load %arg12[%c0_33, %c0_34] : memref<1x16xf32, #tpu.memory_space<vmem>>, vector<1x16xf32>
    %55 = vector.broadcast %54 : vector<1x16xf32> to vector<16x16xf32>
    %56 = arith.addf %53, %55 : vector<16x16xf32>
    %cst_35 = arith.constant 0.000000e+00 : f32
    %57 = vector.broadcast %cst_35 : f32 to vector<16x16xf32>
    %58 = arith.cmpf oge, %56, %57 : vector<16x16xf32>
    %cst_36 = arith.constant 0.00999999977 : f32
    %59 = vector.broadcast %cst_36 : f32 to vector<16x16xf32>
    %60 = arith.mulf %59, %56 : vector<16x16xf32>
    %61 = arith.select %58, %56, %60 : vector<16x16xi1>, vector<16x16xf32>
    %c0_37 = arith.constant 0 : index
    %c0_38 = arith.constant 0 : index
    %62 = vector.load %arg13[%c0_37, %c0_38] : memref<128x128xf32, #tpu.memory_space<vmem>>, vector<128x128xf32>
    %cst_39 = arith.constant dense<0.000000e+00> : vector<16x128xf32>
    %63 = tpu.matmul %51, %62, %cst_39 {dimension_numbers = #tpu.dot_dimension_numbers<[1], [0], [0], [1], [0, 0, 1, 1], [], []>} : vector<16x128xf32>, vector<128x128xf32>, vector<16x128xf32> -> vector<16x128xf32>
    %c0_40 = arith.constant 0 : index
    %c0_41 = arith.constant 0 : index
    %64 = vector.load %arg14[%c0_40, %c0_41] : memref<1x128xf32, #tpu.memory_space<vmem>>, vector<1x128xf32>
    %65 = vector.broadcast %64 : vector<1x128xf32> to vector<16x128xf32>
    %66 = arith.addf %63, %65 : vector<16x128xf32>
    %c0_42 = arith.constant 0 : index
    %c0_43 = arith.constant 0 : index
    %67 = vector.load %arg15[%c0_42, %c0_43] : memref<128x128xf32, #tpu.memory_space<vmem>>, vector<128x128xf32>
    %cst_44 = arith.constant dense<0.000000e+00> : vector<16x128xf32>
    %68 = tpu.matmul %51, %67, %cst_44 {dimension_numbers = #tpu.dot_dimension_numbers<[1], [0], [0], [1], [0, 0, 1, 1], [], []>} : vector<16x128xf32>, vector<128x128xf32>, vector<16x128xf32> -> vector<16x128xf32>
    %c0_45 = arith.constant 0 : index
    %c0_46 = arith.constant 0 : index
    %69 = vector.load %arg16[%c0_45, %c0_46] : memref<1x128xf32, #tpu.memory_space<vmem>>, vector<1x128xf32>
    %70 = vector.broadcast %69 : vector<1x128xf32> to vector<16x128xf32>
    %71 = arith.addf %68, %70 : vector<16x128xf32>
    %c0_47 = arith.constant 0 : index
    %c0_48 = arith.constant 0 : index
    %72 = vector.load %arg17[%c0_47, %c0_48] : memref<128x128xf32, #tpu.memory_space<vmem>>, vector<128x128xf32>
    %cst_49 = arith.constant dense<0.000000e+00> : vector<16x128xf32>
    %73 = tpu.matmul %51, %72, %cst_49 {dimension_numbers = #tpu.dot_dimension_numbers<[1], [0], [0], [1], [0, 0, 1, 1], [], []>} : vector<16x128xf32>, vector<128x128xf32>, vector<16x128xf32> -> vector<16x128xf32>
    %c0_50 = arith.constant 0 : index
    %c0_51 = arith.constant 0 : index
    %74 = vector.load %arg18[%c0_50, %c0_51] : memref<1x128xf32, #tpu.memory_space<vmem>>, vector<1x128xf32>
    %75 = vector.broadcast %74 : vector<1x128xf32> to vector<16x128xf32>
    %76 = arith.addf %73, %75 : vector<16x128xf32>
    %c0_52 = arith.constant 0 : index
    %c0_53 = arith.constant 0 : index
    %77 = vector.load %arg21[%c0_52, %c0_53] : memref<16x16xf32, #tpu.memory_space<vmem>>, vector<16x16xf32>
    %cst_54 = arith.constant dense<0.000000e+00> : vector<16x16xf32>
    %78 = tpu.matmul %61, %77, %cst_54 {dimension_numbers = #tpu.dot_dimension_numbers<[1], [0], [0], [1], [0, 0, 1, 1], [], []>} : vector<16x16xf32>, vector<16x16xf32>, vector<16x16xf32> -> vector<16x16xf32>
    %c0_55 = arith.constant 0 : index
    %c0_56 = arith.constant 0 : index
    %79 = vector.load %arg22[%c0_55, %c0_56] : memref<1x16xf32, #tpu.memory_space<vmem>>, vector<1x16xf32>
    %80 = vector.broadcast %79 : vector<1x16xf32> to vector<16x16xf32>
    %81 = arith.addf %78, %80 : vector<16x16xf32>
    %82 = arith.negf %81 : vector<16x16xf32>
    %83 = math.exp %82 : vector<16x16xf32>
    %cst_57 = arith.constant 1.000000e+00 : f32
    %84 = vector.broadcast %cst_57 : f32 to vector<16x16xf32>
    %85 = arith.addf %84, %83 : vector<16x16xf32>
    %86 = arith.divf %84, %85 : vector<16x16xf32>
    %c0_58 = arith.constant 0 : index
    %c0_59 = arith.constant 0 : index
    %87 = vector.load %arg19[%c0_58, %c0_59] : memref<16x16xf32, #tpu.memory_space<vmem>>, vector<16x16xf32>
    %cst_60 = arith.constant dense<0.000000e+00> : vector<16x16xf32>
    %88 = tpu.matmul %61, %87, %cst_60 {dimension_numbers = #tpu.dot_dimension_numbers<[1], [0], [0], [1], [0, 0, 1, 1], [], []>} : vector<16x16xf32>, vector<16x16xf32>, vector<16x16xf32> -> vector<16x16xf32>
    %c0_61 = arith.constant 0 : index
    %c0_62 = arith.constant 0 : index
    %89 = vector.load %arg20[%c0_61, %c0_62] : memref<1x16xf32, #tpu.memory_space<vmem>>, vector<1x16xf32>
    %90 = vector.broadcast %89 : vector<1x16xf32> to vector<16x16xf32>
    %91 = arith.addf %88, %90 : vector<16x16xf32>
    %cst_63 = arith.constant dense<0.000000e+00> : vector<16x16xf32>
    %92 = tpu.matmul %66, %71, %cst_63 {dimension_numbers = #tpu.dot_dimension_numbers<[1], [1], [0], [0], [0, 0, 1, 0], [], []>} : vector<16x128xf32>, vector<16x128xf32>, vector<16x16xf32> -> vector<16x16xf32>
    %cst_64 = arith.constant 0.0883883461 : f32
    %93 = vector.broadcast %cst_64 : f32 to vector<16x16xf32>
    %94 = arith.mulf %92, %93 : vector<16x16xf32>
    %95 = arith.addf %94, %91 : vector<16x16xf32>
    %cst_65 = arith.constant dense<0xFF800000> : vector<16xf32>
    %96 = vector.multi_reduction <maximumf>, %95, %cst_65 [1] : vector<16x16xf32> to vector<16xf32>
    %97 = vector.shape_cast %96 : vector<16xf32> to vector<16x1xf32>
    %98 = vector.broadcast %97 : vector<16x1xf32> to vector<16x16xf32>
    %99 = arith.subf %95, %98 : vector<16x16xf32>
    %100 = math.exp %99 : vector<16x16xf32>
    %cst_66 = arith.constant dense<0.000000e+00> : vector<16xf32>
    %101 = vector.multi_reduction <add>, %100, %cst_66 [1] : vector<16x16xf32> to vector<16xf32>
    %102 = vector.shape_cast %101 : vector<16xf32> to vector<16x1xf32>
    %103 = tpu.reciprocal %102 {approx = true} : vector<16x1xf32> -> vector<16x1xf32>
    %104 = vector.broadcast %103 : vector<16x1xf32> to vector<16x16xf32>
    %105 = arith.mulf %100, %104 : vector<16x16xf32>
    %106 = arith.mulf %86, %105 : vector<16x16xf32>
    %cst_67 = arith.constant dense<0.000000e+00> : vector<16x128xf32>
    %107 = tpu.matmul %106, %76, %cst_67 {dimension_numbers = #tpu.dot_dimension_numbers<[1], [0], [0], [1], [0, 0, 1, 1], [], []>} : vector<16x16xf32>, vector<16x128xf32>, vector<16x128xf32> -> vector<16x128xf32>
    %c0_68 = arith.constant 0 : index
    %c0_69 = arith.constant 0 : index
    %108 = vector.load %arg23[%c0_68, %c0_69] : memref<128x128xf32, #tpu.memory_space<vmem>>, vector<128x128xf32>
    %cst_70 = arith.constant dense<0.000000e+00> : vector<16x128xf32>
    %109 = tpu.matmul %107, %108, %cst_70 {dimension_numbers = #tpu.dot_dimension_numbers<[1], [0], [0], [1], [0, 0, 1, 1], [], []>} : vector<16x128xf32>, vector<128x128xf32>, vector<16x128xf32> -> vector<16x128xf32>
    %c0_71 = arith.constant 0 : index
    %c0_72 = arith.constant 0 : index
    %110 = vector.load %arg24[%c0_71, %c0_72] : memref<1x128xf32, #tpu.memory_space<vmem>>, vector<1x128xf32>
    %111 = vector.broadcast %110 : vector<1x128xf32> to vector<16x128xf32>
    %112 = arith.addf %109, %111 : vector<16x128xf32>
    %113 = arith.addf %107, %112 : vector<16x128xf32>
    %c0_73 = arith.constant 0 : index
    %c0_74 = arith.constant 0 : index
    %114 = vector.load %arg29[%c0_73, %c0_74] : memref<1x128xf32, #tpu.memory_space<vmem>>, vector<1x128xf32>
    %115 = vector.broadcast %114 : vector<1x128xf32> to vector<16x128xf32>
    %116 = arith.mulf %113, %115 : vector<16x128xf32>
    %c0_75 = arith.constant 0 : index
    %c0_76 = arith.constant 0 : index
    %117 = vector.load %arg30[%c0_75, %c0_76] : memref<1x128xf32, #tpu.memory_space<vmem>>, vector<1x128xf32>
    %118 = vector.broadcast %117 : vector<1x128xf32> to vector<16x128xf32>
    %119 = arith.addf %116, %118 : vector<16x128xf32>
    %c0_77 = arith.constant 0 : index
    %c0_78 = arith.constant 0 : index
    %120 = vector.load %arg25[%c0_77, %c0_78] : memref<128x256xf32, #tpu.memory_space<vmem>>, vector<128x256xf32>
    %cst_79 = arith.constant dense<0.000000e+00> : vector<16x256xf32>
    %121 = tpu.matmul %119, %120, %cst_79 {dimension_numbers = #tpu.dot_dimension_numbers<[1], [0], [0], [1], [0, 0, 1, 1], [], []>} : vector<16x128xf32>, vector<128x256xf32>, vector<16x256xf32> -> vector<16x256xf32>
    %c0_80 = arith.constant 0 : index
    %c0_81 = arith.constant 0 : index
    %122 = vector.load %arg26[%c0_80, %c0_81] : memref<1x256xf32, #tpu.memory_space<vmem>>, vector<1x256xf32>
    %123 = vector.broadcast %122 : vector<1x256xf32> to vector<16x256xf32>
    %124 = arith.addf %121, %123 : vector<16x256xf32>
    %cst_82 = arith.constant 0.000000e+00 : f32
    %125 = vector.broadcast %cst_82 : f32 to vector<16x256xf32>
    %126 = arith.maximumf %124, %125 : vector<16x256xf32>
    %c0_83 = arith.constant 0 : index
    %c0_84 = arith.constant 0 : index
    %127 = vector.load %arg27[%c0_83, %c0_84] : memref<256x128xf32, #tpu.memory_space<vmem>>, vector<256x128xf32>
    %cst_85 = arith.constant dense<0.000000e+00> : vector<16x128xf32>
    %128 = tpu.matmul %126, %127, %cst_85 {dimension_numbers = #tpu.dot_dimension_numbers<[1], [0], [0], [1], [0, 0, 1, 1], [], []>} : vector<16x256xf32>, vector<256x128xf32>, vector<16x128xf32> -> vector<16x128xf32>
    %c0_86 = arith.constant 0 : index
    %c0_87 = arith.constant 0 : index
    %129 = vector.load %arg28[%c0_86, %c0_87] : memref<1x128xf32, #tpu.memory_space<vmem>>, vector<1x128xf32>
    %130 = vector.broadcast %129 : vector<1x128xf32> to vector<16x128xf32>
    %131 = arith.addf %128, %130 : vector<16x128xf32>
    %132 = arith.addf %119, %131 : vector<16x128xf32>
    %c0_88 = arith.constant 0 : index
    %c0_89 = arith.constant 0 : index
    %133 = vector.load %arg29[%c0_88, %c0_89] : memref<1x128xf32, #tpu.memory_space<vmem>>, vector<1x128xf32>
    %134 = vector.broadcast %133 : vector<1x128xf32> to vector<16x128xf32>
    %135 = arith.mulf %132, %134 : vector<16x128xf32>
    %c0_90 = arith.constant 0 : index
    %c0_91 = arith.constant 0 : index
    %136 = vector.load %arg30[%c0_90, %c0_91] : memref<1x128xf32, #tpu.memory_space<vmem>>, vector<1x128xf32>
    %137 = vector.broadcast %136 : vector<1x128xf32> to vector<16x128xf32>
    %138 = arith.addf %135, %137 : vector<16x128xf32>
    %c0_92 = arith.constant 0 : index
    %c0_93 = arith.constant 0 : index
    %139 = vector.load %arg31[%c0_92, %c0_93] : memref<16x128xf32, #tpu.memory_space<vmem>>, vector<16x128xf32>
    tpu.vector_store %arg31[%c0_92, %c0_93], %138 {strides = array<i32>} : memref<16x128xf32, #tpu.memory_space<vmem>>, vector<16x128xf32>,
    return
  }
  func.func @transform_0(%arg0: i32) -> (i32, i32) {
    %c0_i32 = arith.constant 0 : i32
    %c0_i32_0 = arith.constant 0 : i32
    %c0_i32_1 = arith.constant 0 : i32
    return %c0_i32, %c0_i32_0 : i32, i32
  }
  func.func @transform_1(%arg0: i32) -> (i32, i32) {
    %c0_i32 = arith.constant 0 : i32
    %c0_i32_0 = arith.constant 0 : i32
    %c0_i32_1 = arith.constant 0 : i32
    return %c0_i32, %c0_i32_0 : i32, i32
  }
  func.func @transform_2(%arg0: i32) -> (i32, i32) {
    %c0_i32 = arith.constant 0 : i32
    %c0_i32_0 = arith.constant 0 : i32
    %c0_i32_1 = arith.constant 0 : i32
    return %c0_i32, %c0_i32_0 : i32, i32
  }
  func.func @transform_3(%arg0: i32) -> (i32, i32) {
    %c0_i32 = arith.constant 0 : i32
    %c0_i32_0 = arith.constant 0 : i32
    %c0_i32_1 = arith.constant 0 : i32
    return %c0_i32, %c0_i32_0 : i32, i32
  }
  func.func @transform_4(%arg0: i32) -> (i32, i32) {
    %c0_i32 = arith.constant 0 : i32
    %c0_i32_0 = arith.constant 0 : i32
    %c0_i32_1 = arith.constant 0 : i32
    return %c0_i32, %c0_i32_0 : i32, i32
  }
  func.func @transform_5(%arg0: i32) -> (i32, i32) {
    %c0_i32 = arith.constant 0 : i32
    %c0_i32_0 = arith.constant 0 : i32
    %c0_i32_1 = arith.constant 0 : i32
    return %c0_i32, %c0_i32_0 : i32, i32
  }
  func.func @transform_6(%arg0: i32) -> (i32, i32) {
    %c0_i32 = arith.constant 0 : i32
    %c0_i32_0 = arith.constant 0 : i32
    %c0_i32_1 = arith.constant 0 : i32
    return %c0_i32, %c0_i32_0 : i32, i32
  }
  func.func @transform_7(%arg0: i32) -> (i32, i32) {
    %c0_i32 = arith.constant 0 : i32
    %c0_i32_0 = arith.constant 0 : i32
    %c0_i32_1 = arith.constant 0 : i32
    return %c0_i32, %c0_i32_0 : i32, i32
  }
  func.func @transform_8(%arg0: i32) -> (i32, i32) {
    %c0_i32 = arith.constant 0 : i32
    %c0_i32_0 = arith.constant 0 : i32
    %c0_i32_1 = arith.constant 0 : i32
    return %c0_i32, %c0_i32_0 : i32, i32
  }
  func.func @transform_9(%arg0: i32) -> (i32, i32) {
    %c0_i32 = arith.constant 0 : i32
    %c0_i32_0 = arith.constant 0 : i32
    %c0_i32_1 = arith.constant 0 : i32
    return %c0_i32, %c0_i32_0 : i32, i32
  }
  func.func @transform_10(%arg0: i32) -> (i32, i32) {
    %c0_i32 = arith.constant 0 : i32
    %c0_i32_0 = arith.constant 0 : i32
    %c0_i32_1 = arith.constant 0 : i32
    return %c0_i32, %c0_i32_0 : i32, i32
  }
  func.func @transform_11(%arg0: i32) -> (i32, i32) {
    %c0_i32 = arith.constant 0 : i32
    %c0_i32_0 = arith.constant 0 : i32
    %c0_i32_1 = arith.constant 0 : i32
    return %c0_i32, %c0_i32_0 : i32, i32
  }
  func.func @transform_12(%arg0: i32) -> (i32, i32) {
    %c0_i32 = arith.constant 0 : i32
    %c0_i32_0 = arith.constant 0 : i32
    %c0_i32_1 = arith.constant 0 : i32
    return %c0_i32, %c0_i32_0 : i32, i32
  }
  func.func @transform_13(%arg0: i32) -> (i32, i32) {
    %c0_i32 = arith.constant 0 : i32
    %c0_i32_0 = arith.constant 0 : i32
    %c0_i32_1 = arith.constant 0 : i32
    return %c0_i32, %c0_i32_0 : i32, i32
  }
  func.func @transform_14(%arg0: i32) -> (i32, i32) {
    %c0_i32 = arith.constant 0 : i32
    %c0_i32_0 = arith.constant 0 : i32
    %c0_i32_1 = arith.constant 0 : i32
    return %c0_i32, %c0_i32_0 : i32, i32
  }
  func.func @transform_15(%arg0: i32) -> (i32, i32) {
    %c0_i32 = arith.constant 0 : i32
    %c0_i32_0 = arith.constant 0 : i32
    %c0_i32_1 = arith.constant 0 : i32
    return %c0_i32, %c0_i32_0 : i32, i32
  }
  func.func @transform_16(%arg0: i32) -> (i32, i32) {
    %c0_i32 = arith.constant 0 : i32
    %c0_i32_0 = arith.constant 0 : i32
    %c0_i32_1 = arith.constant 0 : i32
    return %c0_i32, %c0_i32_0 : i32, i32
  }
  func.func @transform_17(%arg0: i32) -> (i32, i32) {
    %c0_i32 = arith.constant 0 : i32
    %c0_i32_0 = arith.constant 0 : i32
    %c0_i32_1 = arith.constant 0 : i32
    return %c0_i32, %c0_i32_0 : i32, i32
  }
  func.func @transform_18(%arg0: i32) -> (i32, i32) {
    %c0_i32 = arith.constant 0 : i32
    %c0_i32_0 = arith.constant 0 : i32
    %c0_i32_1 = arith.constant 0 : i32
    return %c0_i32, %c0_i32_0 : i32, i32
  }
  func.func @transform_19(%arg0: i32) -> (i32, i32) {
    %c0_i32 = arith.constant 0 : i32
    %c0_i32_0 = arith.constant 0 : i32
    %c0_i32_1 = arith.constant 0 : i32
    return %c0_i32, %c0_i32_0 : i32, i32
  }
  func.func @transform_20(%arg0: i32) -> (i32, i32) {
    %c0_i32 = arith.constant 0 : i32
    %c0_i32_0 = arith.constant 0 : i32
    %c0_i32_1 = arith.constant 0 : i32
    return %c0_i32, %c0_i32_0 : i32, i32
  }
  func.func @transform_21(%arg0: i32) -> (i32, i32) {
    %c0_i32 = arith.constant 0 : i32
    %c0_i32_0 = arith.constant 0 : i32
    %c0_i32_1 = arith.constant 0 : i32
    return %c0_i32, %c0_i32_0 : i32, i32
  }
  func.func @transform_22(%arg0: i32) -> (i32, i32) {
    %c0_i32 = arith.constant 0 : i32
    %c0_i32_0 = arith.constant 0 : i32
    %c0_i32_1 = arith.constant 0 : i32
    return %c0_i32, %c0_i32_0 : i32, i32
  }
  func.func @transform_23(%arg0: i32) -> (i32, i32) {
    %c0_i32 = arith.constant 0 : i32
    %c0_i32_0 = arith.constant 0 : i32
    %c0_i32_1 = arith.constant 0 : i32
    return %c0_i32, %c0_i32_0 : i32, i32
  }
  func.func @transform_24(%arg0: i32) -> (i32, i32) {
    %c0_i32 = arith.constant 0 : i32
    %c0_i32_0 = arith.constant 0 : i32
    %c0_i32_1 = arith.constant 0 : i32
    return %c0_i32, %c0_i32_0 : i32, i32
  }
  func.func @transform_25(%arg0: i32) -> (i32, i32) {
    %c0_i32 = arith.constant 0 : i32
    %c0_i32_0 = arith.constant 0 : i32
    %c0_i32_1 = arith.constant 0 : i32
    return %c0_i32, %c0_i32_0 : i32, i32
  }
  func.func @transform_26(%arg0: i32) -> (i32, i32) {
    %c0_i32 = arith.constant 0 : i32
    %c0_i32_0 = arith.constant 0 : i32
    %c0_i32_1 = arith.constant 0 : i32
    return %c0_i32, %c0_i32_0 : i32, i32
  }
  func.func @transform_27(%arg0: i32) -> (i32, i32) {
    %c0_i32 = arith.constant 0 : i32
    %c0_i32_0 = arith.constant 0 : i32
    %c0_i32_1 = arith.constant 0 : i32
    return %c0_i32, %c0_i32_0 : i32, i32
  }
  func.func @transform_28(%arg0: i32) -> (i32, i32) {
    %c0_i32 = arith.constant 0 : i32
    %c0_i32_0 = arith.constant 0 : i32
    %c0_i32_1 = arith.constant 0 : i32
    return %c0_i32, %c0_i32_0 : i32, i32
  }
  func.func @transform_29(%arg0: i32) -> (i32, i32) {
    %c0_i32 = arith.constant 0 : i32
    %c0_i32_0 = arith.constant 0 : i32
    %c0_i32_1 = arith.constant 0 : i32
    return %c0_i32, %c0_i32_0 : i32, i32
  }
  func.func @transform_30(%arg0: i32) -> (i32, i32) {
    %c0_i32 = arith.constant 0 : i32
    %c0_i32_0 = arith.constant 0 : i32
    %c0_i32_1 = arith.constant 0 : i32
    return %c0_i32, %c0_i32_0 : i32, i32
  }
}

module attributes {stable_mosaic.version = 11 : i64} {
  func.func @_tail_kernel(%arg0: i32, %arg1: memref<80x256xf32, #tpu.memory_space<vmem>>, %arg2: memref<80x256xf32, #tpu.memory_space<vmem>>, %arg3: memref<80x256xf32, #tpu.memory_space<vmem>>, %arg4: memref<2304x64xbf16, #tpu.memory_space<vmem>>, %arg5: memref<1x64xf32, #tpu.memory_space<vmem>>, %arg6: memref<64x16xbf16, #tpu.memory_space<vmem>>, %arg7: memref<1x16xf32, #tpu.memory_space<vmem>>, %arg8: memref<16x5xbf16, #tpu.memory_space<vmem>>, %arg9: memref<1x5xf32, #tpu.memory_space<vmem>>, %arg10: memref<64x5xf32, #tpu.memory_space<vmem>>) attributes {dimension_semantics = [#tpu.dimension_semantics<arbitrary>], iteration_bounds = array<i64: 1>, scalar_prefetch = 0 : i64, scratch_operands = 0 : i64, tpu.core_type = #tpu.core_type<tc>, window_params = [{pipeline_mode = #tpu.pipeline_mode<synchronous>, transform_indices = @transform_0, window_bounds = array<i64: 80, 256>}, {pipeline_mode = #tpu.pipeline_mode<synchronous>, transform_indices = @transform_1, window_bounds = array<i64: 80, 256>}, {pipeline_mode = #tpu.pipeline_mode<synchronous>, transform_indices = @transform_2, window_bounds = array<i64: 80, 256>}, {pipeline_mode = #tpu.pipeline_mode<synchronous>, transform_indices = @transform_3, window_bounds = array<i64: 2304, 64>}, {pipeline_mode = #tpu.pipeline_mode<synchronous>, transform_indices = @transform_4, window_bounds = array<i64: 1, 64>}, {pipeline_mode = #tpu.pipeline_mode<synchronous>, transform_indices = @transform_5, window_bounds = array<i64: 64, 16>}, {pipeline_mode = #tpu.pipeline_mode<synchronous>, transform_indices = @transform_6, window_bounds = array<i64: 1, 16>}, {pipeline_mode = #tpu.pipeline_mode<synchronous>, transform_indices = @transform_7, window_bounds = array<i64: 16, 5>}, {pipeline_mode = #tpu.pipeline_mode<synchronous>, transform_indices = @transform_8, window_bounds = array<i64: 1, 5>}, {pipeline_mode = #tpu.pipeline_mode<synchronous>, transform_indices = @transform_9, window_bounds = array<i64: 64, 5>}]} {
    %cst = arith.constant 0.000000e+00 : f32
    %0 = vector.broadcast %cst : f32 to vector<64x64xf32>
    %c0 = arith.constant 0 : index
    %c0_0 = arith.constant 0 : index
    %1 = vector.load %arg1[%c0, %c0_0] : memref<80x256xf32, #tpu.memory_space<vmem>>, vector<64x256xf32>
    %c0_1 = arith.constant 0 : index
    %c0_2 = arith.constant 0 : index
    %2 = vector.load %arg4[%c0_1, %c0_2] : memref<2304x64xbf16, #tpu.memory_space<vmem>>, vector<256x64xbf16>
    %3 = arith.truncf %1 : vector<64x256xf32> to vector<64x256xbf16>
    %cst_3 = arith.constant dense<0.000000e+00> : vector<64x64xf32>
    %4 = tpu.matmul %3, %2, %cst_3 {dimension_numbers = #tpu.dot_dimension_numbers<[1], [0], [0], [1], [0, 0, 1, 1], [], []>} : vector<64x256xbf16>, vector<256x64xbf16>, vector<64x64xf32> -> vector<64x64xf32>
    %5 = arith.addf %0, %4 : vector<64x64xf32>
    %c0_4 = arith.constant 0 : index
    %c0_5 = arith.constant 0 : index
    %6 = vector.load %arg2[%c0_4, %c0_5] : memref<80x256xf32, #tpu.memory_space<vmem>>, vector<64x256xf32>
    %c256 = arith.constant 256 : index
    %c0_6 = arith.constant 0 : index
    %7 = vector.load %arg4[%c256, %c0_6] : memref<2304x64xbf16, #tpu.memory_space<vmem>>, vector<256x64xbf16>
    %8 = arith.truncf %6 : vector<64x256xf32> to vector<64x256xbf16>
    %cst_7 = arith.constant dense<0.000000e+00> : vector<64x64xf32>
    %9 = tpu.matmul %8, %7, %cst_7 {dimension_numbers = #tpu.dot_dimension_numbers<[1], [0], [0], [1], [0, 0, 1, 1], [], []>} : vector<64x256xbf16>, vector<256x64xbf16>, vector<64x64xf32> -> vector<64x64xf32>
    %10 = arith.addf %5, %9 : vector<64x64xf32>
    %c0_8 = arith.constant 0 : index
    %c0_9 = arith.constant 0 : index
    %11 = vector.load %arg3[%c0_8, %c0_9] : memref<80x256xf32, #tpu.memory_space<vmem>>, vector<64x256xf32>
    %c512 = arith.constant 512 : index
    %c0_10 = arith.constant 0 : index
    %12 = vector.load %arg4[%c512, %c0_10] : memref<2304x64xbf16, #tpu.memory_space<vmem>>, vector<256x64xbf16>
    %13 = arith.truncf %11 : vector<64x256xf32> to vector<64x256xbf16>
    %cst_11 = arith.constant dense<0.000000e+00> : vector<64x64xf32>
    %14 = tpu.matmul %13, %12, %cst_11 {dimension_numbers = #tpu.dot_dimension_numbers<[1], [0], [0], [1], [0, 0, 1, 1], [], []>} : vector<64x256xbf16>, vector<256x64xbf16>, vector<64x64xf32> -> vector<64x64xf32>
    %15 = arith.addf %10, %14 : vector<64x64xf32>
    %c8 = arith.constant 8 : index
    %c0_12 = arith.constant 0 : index
    %16 = vector.load %arg1[%c8, %c0_12] : memref<80x256xf32, #tpu.memory_space<vmem>>, vector<64x256xf32>
    %c768 = arith.constant 768 : index
    %c0_13 = arith.constant 0 : index
    %17 = vector.load %arg4[%c768, %c0_13] : memref<2304x64xbf16, #tpu.memory_space<vmem>>, vector<256x64xbf16>
    %18 = arith.truncf %16 : vector<64x256xf32> to vector<64x256xbf16>
    %cst_14 = arith.constant dense<0.000000e+00> : vector<64x64xf32>
    %19 = tpu.matmul %18, %17, %cst_14 {dimension_numbers = #tpu.dot_dimension_numbers<[1], [0], [0], [1], [0, 0, 1, 1], [], []>} : vector<64x256xbf16>, vector<256x64xbf16>, vector<64x64xf32> -> vector<64x64xf32>
    %20 = arith.addf %15, %19 : vector<64x64xf32>
    %c8_15 = arith.constant 8 : index
    %c0_16 = arith.constant 0 : index
    %21 = vector.load %arg2[%c8_15, %c0_16] : memref<80x256xf32, #tpu.memory_space<vmem>>, vector<64x256xf32>
    %c1024 = arith.constant 1024 : index
    %c0_17 = arith.constant 0 : index
    %22 = vector.load %arg4[%c1024, %c0_17] : memref<2304x64xbf16, #tpu.memory_space<vmem>>, vector<256x64xbf16>
    %23 = arith.truncf %21 : vector<64x256xf32> to vector<64x256xbf16>
    %cst_18 = arith.constant dense<0.000000e+00> : vector<64x64xf32>
    %24 = tpu.matmul %23, %22, %cst_18 {dimension_numbers = #tpu.dot_dimension_numbers<[1], [0], [0], [1], [0, 0, 1, 1], [], []>} : vector<64x256xbf16>, vector<256x64xbf16>, vector<64x64xf32> -> vector<64x64xf32>
    %25 = arith.addf %20, %24 : vector<64x64xf32>
    %c8_19 = arith.constant 8 : index
    %c0_20 = arith.constant 0 : index
    %26 = vector.load %arg3[%c8_19, %c0_20] : memref<80x256xf32, #tpu.memory_space<vmem>>, vector<64x256xf32>
    %c1280 = arith.constant 1280 : index
    %c0_21 = arith.constant 0 : index
    %27 = vector.load %arg4[%c1280, %c0_21] : memref<2304x64xbf16, #tpu.memory_space<vmem>>, vector<256x64xbf16>
    %28 = arith.truncf %26 : vector<64x256xf32> to vector<64x256xbf16>
    %cst_22 = arith.constant dense<0.000000e+00> : vector<64x64xf32>
    %29 = tpu.matmul %28, %27, %cst_22 {dimension_numbers = #tpu.dot_dimension_numbers<[1], [0], [0], [1], [0, 0, 1, 1], [], []>} : vector<64x256xbf16>, vector<256x64xbf16>, vector<64x64xf32> -> vector<64x64xf32>
    %30 = arith.addf %25, %29 : vector<64x64xf32>
    %c16 = arith.constant 16 : index
    %c0_23 = arith.constant 0 : index
    %31 = vector.load %arg1[%c16, %c0_23] : memref<80x256xf32, #tpu.memory_space<vmem>>, vector<64x256xf32>
    %c1536 = arith.constant 1536 : index
    %c0_24 = arith.constant 0 : index
    %32 = vector.load %arg4[%c1536, %c0_24] : memref<2304x64xbf16, #tpu.memory_space<vmem>>, vector<256x64xbf16>
    %33 = arith.truncf %31 : vector<64x256xf32> to vector<64x256xbf16>
    %cst_25 = arith.constant dense<0.000000e+00> : vector<64x64xf32>
    %34 = tpu.matmul %33, %32, %cst_25 {dimension_numbers = #tpu.dot_dimension_numbers<[1], [0], [0], [1], [0, 0, 1, 1], [], []>} : vector<64x256xbf16>, vector<256x64xbf16>, vector<64x64xf32> -> vector<64x64xf32>
    %35 = arith.addf %30, %34 : vector<64x64xf32>
    %c16_26 = arith.constant 16 : index
    %c0_27 = arith.constant 0 : index
    %36 = vector.load %arg2[%c16_26, %c0_27] : memref<80x256xf32, #tpu.memory_space<vmem>>, vector<64x256xf32>
    %c1792 = arith.constant 1792 : index
    %c0_28 = arith.constant 0 : index
    %37 = vector.load %arg4[%c1792, %c0_28] : memref<2304x64xbf16, #tpu.memory_space<vmem>>, vector<256x64xbf16>
    %38 = arith.truncf %36 : vector<64x256xf32> to vector<64x256xbf16>
    %cst_29 = arith.constant dense<0.000000e+00> : vector<64x64xf32>
    %39 = tpu.matmul %38, %37, %cst_29 {dimension_numbers = #tpu.dot_dimension_numbers<[1], [0], [0], [1], [0, 0, 1, 1], [], []>} : vector<64x256xbf16>, vector<256x64xbf16>, vector<64x64xf32> -> vector<64x64xf32>
    %40 = arith.addf %35, %39 : vector<64x64xf32>
    %c16_30 = arith.constant 16 : index
    %c0_31 = arith.constant 0 : index
    %41 = vector.load %arg3[%c16_30, %c0_31] : memref<80x256xf32, #tpu.memory_space<vmem>>, vector<64x256xf32>
    %c2048 = arith.constant 2048 : index
    %c0_32 = arith.constant 0 : index
    %42 = vector.load %arg4[%c2048, %c0_32] : memref<2304x64xbf16, #tpu.memory_space<vmem>>, vector<256x64xbf16>
    %43 = arith.truncf %41 : vector<64x256xf32> to vector<64x256xbf16>
    %cst_33 = arith.constant dense<0.000000e+00> : vector<64x64xf32>
    %44 = tpu.matmul %43, %42, %cst_33 {dimension_numbers = #tpu.dot_dimension_numbers<[1], [0], [0], [1], [0, 0, 1, 1], [], []>} : vector<64x256xbf16>, vector<256x64xbf16>, vector<64x64xf32> -> vector<64x64xf32>
    %45 = arith.addf %40, %44 : vector<64x64xf32>
    %c0_34 = arith.constant 0 : index
    %c0_35 = arith.constant 0 : index
    %46 = vector.load %arg5[%c0_34, %c0_35] : memref<1x64xf32, #tpu.memory_space<vmem>>, vector<1x64xf32>
    %47 = vector.broadcast %46 : vector<1x64xf32> to vector<64x64xf32>
    %48 = arith.addf %45, %47 : vector<64x64xf32>
    %cst_36 = arith.constant 0.000000e+00 : f32
    %49 = vector.broadcast %cst_36 : f32 to vector<64x64xf32>
    %50 = arith.maximumf %48, %49 : vector<64x64xf32>
    %51 = arith.truncf %50 : vector<64x64xf32> to vector<64x64xbf16>
    %c0_37 = arith.constant 0 : index
    %c0_38 = arith.constant 0 : index
    %52 = vector.load %arg6[%c0_37, %c0_38] : memref<64x16xbf16, #tpu.memory_space<vmem>>, vector<64x16xbf16>
    %cst_39 = arith.constant dense<0.000000e+00> : vector<64x16xf32>
    %53 = tpu.matmul %51, %52, %cst_39 {dimension_numbers = #tpu.dot_dimension_numbers<[1], [0], [0], [1], [0, 0, 1, 1], [], []>} : vector<64x64xbf16>, vector<64x16xbf16>, vector<64x16xf32> -> vector<64x16xf32>
    %c0_40 = arith.constant 0 : index
    %c0_41 = arith.constant 0 : index
    %54 = vector.load %arg7[%c0_40, %c0_41] : memref<1x16xf32, #tpu.memory_space<vmem>>, vector<1x16xf32>
    %55 = vector.broadcast %54 : vector<1x16xf32> to vector<64x16xf32>
    %56 = arith.addf %53, %55 : vector<64x16xf32>
    %57 = arith.truncf %56 : vector<64x16xf32> to vector<64x16xbf16>
    %c0_42 = arith.constant 0 : index
    %c0_43 = arith.constant 0 : index
    %58 = vector.load %arg8[%c0_42, %c0_43] : memref<16x5xbf16, #tpu.memory_space<vmem>>, vector<16x5xbf16>
    %cst_44 = arith.constant dense<0.000000e+00> : vector<64x5xf32>
    %59 = tpu.matmul %57, %58, %cst_44 {dimension_numbers = #tpu.dot_dimension_numbers<[1], [0], [0], [1], [0, 0, 1, 1], [], []>} : vector<64x16xbf16>, vector<16x5xbf16>, vector<64x5xf32> -> vector<64x5xf32>
    %c0_45 = arith.constant 0 : index
    %c0_46 = arith.constant 0 : index
    %60 = vector.load %arg9[%c0_45, %c0_46] : memref<1x5xf32, #tpu.memory_space<vmem>>, vector<1x5xf32>
    %61 = vector.broadcast %60 : vector<1x5xf32> to vector<64x5xf32>
    %62 = arith.addf %59, %61 : vector<64x5xf32>
    %cst_47 = arith.constant dense<0xFF800000> : vector<64xf32>
    %63 = vector.multi_reduction <maximumf>, %62, %cst_47 [1] : vector<64x5xf32> to vector<64xf32>
    %64 = vector.shape_cast %63 : vector<64xf32> to vector<64x1xf32>
    %65 = vector.broadcast %64 : vector<64x1xf32> to vector<64x5xf32>
    %66 = arith.subf %62, %65 : vector<64x5xf32>
    %67 = math.exp %66 : vector<64x5xf32>
    %cst_48 = arith.constant dense<0.000000e+00> : vector<64xf32>
    %68 = vector.multi_reduction <add>, %67, %cst_48 [1] : vector<64x5xf32> to vector<64xf32>
    %69 = vector.shape_cast %68 : vector<64xf32> to vector<64x1xf32>
    %70 = tpu.reciprocal %69 {approx = true} : vector<64x1xf32> -> vector<64x1xf32>
    %71 = vector.broadcast %70 : vector<64x1xf32> to vector<64x5xf32>
    %72 = arith.mulf %67, %71 : vector<64x5xf32>
    %c0_49 = arith.constant 0 : index
    %c0_50 = arith.constant 0 : index
    %73 = vector.load %arg10[%c0_49, %c0_50] : memref<64x5xf32, #tpu.memory_space<vmem>>, vector<64x5xf32>
    tpu.vector_store %arg10[%c0_49, %c0_50], %72 {strides = array<i32>} : memref<64x5xf32, #tpu.memory_space<vmem>>, vector<64x5xf32>,
    return
  }
  func.func @transform_0(%arg0: i32) -> (i32, i32) {
    %c0_i32 = arith.constant 0 : i32
    %c0_i32_0 = arith.constant 0 : i32
    %c0_i32_1 = arith.constant 0 : i32
    return %c0_i32, %c0_i32_0 : i32, i32
  }
  func.func @transform_1(%arg0: i32) -> (i32, i32) {
    %c0_i32 = arith.constant 0 : i32
    %c0_i32_0 = arith.constant 0 : i32
    %c0_i32_1 = arith.constant 0 : i32
    return %c0_i32, %c0_i32_0 : i32, i32
  }
  func.func @transform_2(%arg0: i32) -> (i32, i32) {
    %c0_i32 = arith.constant 0 : i32
    %c0_i32_0 = arith.constant 0 : i32
    %c0_i32_1 = arith.constant 0 : i32
    return %c0_i32, %c0_i32_0 : i32, i32
  }
  func.func @transform_3(%arg0: i32) -> (i32, i32) {
    %c0_i32 = arith.constant 0 : i32
    %c0_i32_0 = arith.constant 0 : i32
    %c0_i32_1 = arith.constant 0 : i32
    return %c0_i32, %c0_i32_0 : i32, i32
  }
  func.func @transform_4(%arg0: i32) -> (i32, i32) {
    %c0_i32 = arith.constant 0 : i32
    %c0_i32_0 = arith.constant 0 : i32
    %c0_i32_1 = arith.constant 0 : i32
    return %c0_i32, %c0_i32_0 : i32, i32
  }
  func.func @transform_5(%arg0: i32) -> (i32, i32) {
    %c0_i32 = arith.constant 0 : i32
    %c0_i32_0 = arith.constant 0 : i32
    %c0_i32_1 = arith.constant 0 : i32
    return %c0_i32, %c0_i32_0 : i32, i32
  }
  func.func @transform_6(%arg0: i32) -> (i32, i32) {
    %c0_i32 = arith.constant 0 : i32
    %c0_i32_0 = arith.constant 0 : i32
    %c0_i32_1 = arith.constant 0 : i32
    return %c0_i32, %c0_i32_0 : i32, i32
  }
  func.func @transform_7(%arg0: i32) -> (i32, i32) {
    %c0_i32 = arith.constant 0 : i32
    %c0_i32_0 = arith.constant 0 : i32
    %c0_i32_1 = arith.constant 0 : i32
    return %c0_i32, %c0_i32_0 : i32, i32
  }
  func.func @transform_8(%arg0: i32) -> (i32, i32) {
    %c0_i32 = arith.constant 0 : i32
    %c0_i32_0 = arith.constant 0 : i32
    %c0_i32_1 = arith.constant 0 : i32
    return %c0_i32, %c0_i32_0 : i32, i32
  }
  func.func @transform_9(%arg0: i32) -> (i32, i32) {
    %c0_i32 = arith.constant 0 : i32
    %c0_i32_0 = arith.constant 0 : i32
    %c0_i32_1 = arith.constant 0 : i32
    return %c0_i32, %c0_i32_0 : i32, i32
  }
}

</mosaic_0001>

<llo_original>
// kernel: gtrans_forward.4
$region0: #{gtrans_forward.4}
  #allocation0 [shape = 'u32[]', space=smem, size = 0x4, offset = 0x4, fixed_abs, tag = 'smem constant byte address 0x4 - core index']
  #allocation1 [shape = 'u32[144,128]{1,0:T(1,128)}', space=vmem, size = 0x12000, scoped, tag = 'internal scratch']
  %s0 = inlined_call_operand.vmem [shape: f32[192,4], index: 0, kind: input, shape index: {}]
  %s1 = inlined_call_operand.hbm [shape: f32[4,128], index: 1, kind: input, shape index: {}]
  %s2 = inlined_call_operand.hbm [shape: f32[1,128], index: 2, kind: input, shape index: {}]
  %s3 = inlined_call_operand.vmem [shape: f32[192,128], index: 3, kind: output, shape index: {}]
  %s4 = sld [smem:[#allocation0]]
  $region30: #{gtrans_forward.4} parent=0
    _
  %s6 = ssub.s32 1, %s4
  %s7 = scalar_select 0, %s6, %s4
  $region1: #{gtrans_forward.4} parent=0
    #allocation2 [shape = 'u8[2048]{0}', space=vmem, size = 0x800, scoped, tag = 'input window, operand 1, single buffered']
    #allocation3 [shape = 's32[1]{0}', space=sflag, size = 0x4, scoped, tag = 'scoped memory for gtrans_forward.4']
    #allocation4 [shape = 'u8[512]{0}', space=vmem, size = 0x400, scoped, tag = 'input window, operand 2, single buffered']
    #allocation5 [shape = 's32[1]{0}', space=sflag, size = 0x4, scoped, tag = 'scoped memory for gtrans_forward.4']
    %8 = vsyncpa [#allocation3], 0
    %9 = vsyncpa [#allocation5], 0
    // Predicated region
    $region2: #{gtrans_forward.4} parent=1 // pred_check
      _
    $region3: #{gtrans_forward.4} parent=1 // pred_check_branch
      %11 = sbr.rel (0) target = $region5
    $region4: #{gtrans_forward.4} parent=1 // pred_region
      _
    $region5: #{gtrans_forward.4} parent=1 // pred_fallthru
      _
    // Predicated region
    $region6: #{gtrans_forward.4} parent=1 // pred_check
      _
    $region7: #{gtrans_forward.4} parent=1 // pred_check_branch
      %13 = sbr.rel (0) target = $region9
    $region8: #{gtrans_forward.4} parent=1 // pred_region
      %s15 = ssub.s32 64, 64
      %16 = vsyncadd [#allocation3], %s15
      %s18 = sshll.u32 [#allocation2], 4
      %s19 = int_to_ptr.vmem [resolvable:$true] %s18
      %21 = dma.hbm_to_vmem [thread:$0]  %s1, 64, %s19, [#allocation3]
    $region9: #{gtrans_forward.4} parent=1 // pred_fallthru
      _
    // Predicated region
    $region10: #{gtrans_forward.4} parent=1 // pred_check
      _
    $region11: #{gtrans_forward.4} parent=1 // pred_check_branch
      %23 = sbr.rel (0) target = $region13
    $region12: #{gtrans_forward.4} parent=1 // pred_region
      %s25 = ssub.s32 16, 16
      %26 = vsyncadd [#allocation5], %s25
      %s28 = sshll.u32 [#allocation4], 4
      %s29 = int_to_ptr.vmem [resolvable:$true] %s28
      %31 = dma.hbm_to_vmem [thread:$0]  %s2, 16, %s29, [#allocation5]
    $region13: #{gtrans_forward.4} parent=1 // pred_fallthru
      _
    // Predicated region
    $region14: #{gtrans_forward.4} parent=1 // pred_check
      _
    $region15: #{gtrans_forward.4} parent=1 // pred_check_branch
      %33 = sbr.rel (0) target = $region17
    $region16: #{gtrans_forward.4} parent=1 // pred_region
      %34 = dma.done [#allocation3], 64
    $region17: #{gtrans_forward.4} parent=1 // pred_fallthru
      _
    // Predicated region
    $region18: #{gtrans_forward.4} parent=1 // pred_check
      _
    $region19: #{gtrans_forward.4} parent=1 // pred_check_branch
      %36 = sbr.rel (0) target = $region21
    $region20: #{gtrans_forward.4} parent=1 // pred_region
      %37 = dma.done [#allocation5], 16
    $region21: #{gtrans_forward.4} parent=1 // pred_fallthru
      _
    %v38 = vld [vmem:[%s0] sm:$0xff]
    %v39 = vld [vmem:[%s0 + $0x8] sm:$0xff]
    %v40 = vld [vmem:[%s0 + $0x10] sm:$0xff]
    %v41 = vld [vmem:[%s0 + $0x18] sm:$0xff]
    %v42 = vld [vmem:[%s0 + $0x20] sm:$0xff]
    %v43 = vld [vmem:[%s0 + $0x28] sm:$0xff]
    %v44 = vld [vmem:[%s0 + $0x30] sm:$0xff]
    %v45 = vld [vmem:[%s0 + $0x38] sm:$0xff]
    %v46 = vld [vmem:[%s0 + $0x40] sm:$0xff]
    %v47 = vld [vmem:[%s0 + $0x48] sm:$0xff]
    %v48 = vld [vmem:[%s0 + $0x50] sm:$0xff]
    %v49 = vld [vmem:[%s0 + $0x58] sm:$0xff]
    %v50 = vld [vmem:[%s0 + $0x60] sm:$0xff]
    %v51 = vld [vmem:[%s0 + $0x68] sm:$0xff]
    %v52 = vld [vmem:[%s0 + $0x70] sm:$0xff]
    %v53 = vld [vmem:[%s0 + $0x78] sm:$0xff]
    %v54 = vld [vmem:[%s0 + $0x80] sm:$0xff]
    %v55 = vld [vmem:[%s0 + $0x88] sm:$0xff]
    %v56 = vld [vmem:[%s0 + $0x90] sm:$0xff]
    %v57 = vld [vmem:[%s0 + $0x98] sm:$0xff]
    %v58 = vld [vmem:[%s0 + $0xa0] sm:$0xff]
    %v59 = vld [vmem:[%s0 + $0xa8] sm:$0xff]
    %v60 = vld [vmem:[%s0 + $0xb0] sm:$0xff]
    %v61 = vld [vmem:[%s0 + $0xb8] sm:$0xff]
    %v62 = vld [vmem:[#allocation2] sm:$0xf]
    %v63 = vld [vmem:[#allocation4] sm:$0x1]
    %v65 = vlaneseq
    %v66 = vshrl.u32 %v65, 7
    %v67 = vsub.s32 0, %v66
    %v68 = vrot.slane %v63, %v67
    %vm70 = vcmask 31744
    %v72 = vsel %vm70, %v38, 0
    %v75 = vsel %vm70, %v39, 0
    %v78 = vsel %vm70, %v40, 0
    %v81 = vsel %vm70, %v41, 0
    %v84 = vsel %vm70, %v42, 0
    %v87 = vsel %vm70, %v43, 0
    %v90 = vsel %vm70, %v44, 0
    %v93 = vsel %vm70, %v45, 0
    %v96 = vsel %vm70, %v46, 0
    %v99 = vsel %vm70, %v47, 0
    %v102 = vsel %vm70, %v48, 0
    %v105 = vsel %vm70, %v49, 0
    %v108 = vsel %vm70, %v50, 0
    %v111 = vsel %vm70, %v51, 0
    %v114 = vsel %vm70, %v52, 0
    %v117 = vsel %vm70, %v53, 0
    %v120 = vsel %vm70, %v54, 0
    %v123 = vsel %vm70, %v55, 0
    %v126 = vsel %vm70, %v56, 0
    %v129 = vsel %vm70, %v57, 0
    %v132 = vsel %vm70, %v58, 0
    %v135 = vsel %vm70, %v59, 0
    %v138 = vsel %vm70, %v60, 0
    %v141 = vsel %vm70, %v61, 0
    %vm143 = vcmask 1043456
    %v145 = vsel %vm143, %v62, 0
    %147 = vmatprep.subr.mxu0 0.0
    %148 = vmatpush1.msra.mxu0 0.0
    %149 = vmatprep.subr.mxu0 0.0
    %150 = vmatpush1.msra.mxu0 0.0
    %151 = vmatprep.subr.mxu0 0.0
    %152 = vmatpush1.msra.mxu0 0.0
    %153 = vmatprep.subr.mxu0 0.0
    %154 = vmatpush1.msra.mxu0 0.0
    %155 = vmatprep.subr.mxu0 0.0
    %156 = vmatpush1.msra.mxu0 0.0
    %157 = vmatprep.subr.mxu0 0.0
    %158 = vmatpush1.msra.mxu0 0.0
    %159 = vmatprep.subr.mxu0 0.0
    %160 = vmatpush1.msra.mxu0 0.0
    %161 = vmatprep.subr.mxu0 0.0
    %162 = vmatpush1.msra.mxu0 0.0
    %163 = vmatprep.subr.mxu0 0.0
    %164 = vmatpush1.msra.mxu0 0.0
    %165 = vmatprep.subr.mxu0 0.0
    %166 = vmatpush1.msra.mxu0 0.0
    %167 = vmatprep.subr.mxu0 0.0
    %168 = vmatpush1.msra.mxu0 0.0
    %169 = vmatprep.subr.mxu0 0.0
    %170 = vmatpush1.msra.mxu0 0.0
    %171 = vmatprep.subr.mxu0 0.0
    %172 = vmatpush1.msra.mxu0 0.0
    %173 = vmatprep.subr.mxu0 0.0
    %174 = vmatpush1.msra.mxu0 0.0
    %175 = vmatprep.subr.mxu0 0.0
    %176 = vmatpush1.msra.mxu0 0.0
    %177 = vmatprep.subr.mxu0 0.0
    %178 = vmatpush1.msra.mxu0 %v145
    %179 = vmatprep.subr.mxu0 0.0
    %180 = vmatpush2.msra.mxu0 0.0
    %181 = vmatprep.subr.mxu0 0.0
    %182 = vmatpush2.msra.mxu0 0.0
    %183 = vmatprep.subr.mxu0 0.0
    %184 = vmatpush2.msra.mxu0 0.0
    %185 = vmatprep.subr.mxu0 0.0
    %186 = vmatpush2.msra.mxu0 0.0
    %187 = vmatprep.subr.mxu0 0.0
    %188 = vmatpush2.msra.mxu0 0.0
    %189 = vmatprep.subr.mxu0 0.0
    %190 = vmatpush2.msra.mxu0 0.0
    %191 = vmatprep.subr.mxu0 0.0
    %192 = vmatpush2.msra.mxu0 0.0
    %193 = vmatprep.subr.mxu0 0.0
    %194 = vmatpush2.msra.mxu0 0.0
    %195 = vmatprep.subr.mxu0 0.0
    %196 = vmatpush2.msra.mxu0 0.0
    %197 = vmatprep.subr.mxu0 0.0
    %198 = vmatpush2.msra.mxu0 0.0
    %199 = vmatprep.subr.mxu0 0.0
    %200 = vmatpush2.msra.mxu0 0.0
    %201 = vmatprep.subr.mxu0 0.0
    %202 = vmatpush2.msra.mxu0 0.0
    %203 = vmatprep.subr.mxu0 0.0
    %204 = vmatpush2.msra.mxu0 0.0
    %205 = vmatprep.subr.mxu0 0.0
    %206 = vmatpush2.msra.mxu0 0.0
    %207 = vmatprep.subr.mxu0 0.0
    %208 = vmatpush2.msra.mxu0 0.0
    %209 = vmatprep.subr.mxu0 0.0
    %210 = vmatpush2.msra.mxu0 0.0
    %211 = vmatprep.mubr.f32.mxu0 0.0
    %212 = vmatmul.mubr.f32.gmra.mxu0 %v72
    %v213 = vpop.f32.mrf.mxu0
    %v214 = vadd.f32 %v68, %v213
    %v215 = vpop.f32.mrf.mxu0
    %216 = vmatprep.mubr.f32.mxu0 0.0
    %217 = vmatmul.mubr.f32.gmra.mxu0 %v75
    %v218 = vpop.f32.mrf.mxu0
    %v219 = vadd.f32 %v68, %v218
    %v220 = vpop.f32.mrf.mxu0
    %221 = vmatprep.mubr.f32.mxu0 0.0
    %222 = vmatmul.mubr.f32.gmra.mxu0 %v78
    %v223 = vpop.f32.mrf.mxu0
    %v224 = vadd.f32 %v68, %v223
    %v225 = vpop.f32.mrf.mxu0
    %226 = vmatprep.mubr.f32.mxu0 0.0
    %227 = vmatmul.mubr.f32.gmra.mxu0 %v81
    %v228 = vpop.f32.mrf.mxu0
    %v229 = vadd.f32 %v68, %v228
    %v230 = vpop.f32.mrf.mxu0
    %231 = vmatprep.mubr.f32.mxu0 0.0
    %232 = vmatmul.mubr.f32.gmra.mxu0 %v84
    %v233 = vpop.f32.mrf.mxu0
    %v234 = vadd.f32 %v68, %v233
    %v235 = vpop.f32.mrf.mxu0
    %236 = vmatprep.mubr.f32.mxu0 0.0
    %237 = vmatmul.mubr.f32.gmra.mxu0 %v87
    %v238 = vpop.f32.mrf.mxu0
    %v239 = vadd.f32 %v68, %v238
    %v240 = vpop.f32.mrf.mxu0
    %241 = vmatprep.mubr.f32.mxu0 0.0
    %242 = vmatmul.mubr.f32.gmra.mxu0 %v90
    %v243 = vpop.f32.mrf.mxu0
    %v244 = vadd.f32 %v68, %v243
    %v245 = vpop.f32.mrf.mxu0
    %246 = vmatprep.mubr.f32.mxu0 0.0
    %247 = vmatmul.mubr.f32.gmra.mxu0 %v93
    %v248 = vpop.f32.mrf.mxu0
    %v249 = vadd.f32 %v68, %v248
    %v250 = vpop.f32.mrf.mxu0
    %251 = vmatprep.mubr.f32.mxu0 0.0
    %252 = vmatmul.mubr.f32.gmra.mxu0 %v96
    %v253 = vpop.f32.mrf.mxu0
    %v254 = vadd.f32 %v68, %v253
    %v255 = vpop.f32.mrf.mxu0
    %256 = vmatprep.mubr.f32.mxu0 0.0
    %257 = vmatmul.mubr.f32.gmra.mxu0 %v99
    %v258 = vpop.f32.mrf.mxu0
    %v259 = vadd.f32 %v68, %v258
    %v260 = vpop.f32.mrf.mxu0
    %261 = vmatprep.mubr.f32.mxu0 0.0
    %262 = vmatmul.mubr.f32.gmra.mxu0 %v102
    %v263 = vpop.f32.mrf.mxu0
    %v264 = vadd.f32 %v68, %v263
    %v265 = vpop.f32.mrf.mxu0
    %266 = vmatprep.mubr.f32.mxu0 0.0
    %267 = vmatmul.mubr.f32.gmra.mxu0 %v105
    %v268 = vpop.f32.mrf.mxu0
    %v269 = vadd.f32 %v68, %v268
    %v270 = vpop.f32.mrf.mxu0
    %271 = vmatprep.mubr.f32.mxu0 0.0
    %272 = vmatmul.mubr.f32.gmra.mxu0 %v108
    %v273 = vpop.f32.mrf.mxu0
    %v274 = vadd.f32 %v68, %v273
    %v275 = vpop.f32.mrf.mxu0
    %276 = vmatprep.mubr.f32.mxu0 0.0
    %277 = vmatmul.mubr.f32.gmra.mxu0 %v111
    %v278 = vpop.f32.mrf.mxu0
    %v279 = vadd.f32 %v68, %v278
    %v280 = vpop.f32.mrf.mxu0
    %281 = vmatprep.mubr.f32.mxu0 0.0
    %282 = vmatmul.mubr.f32.gmra.mxu0 %v114
    %v283 = vpop.f32.mrf.mxu0
    %v284 = vadd.f32 %v68, %v283
    %v285 = vpop.f32.mrf.mxu0
    %286 = vmatprep.mubr.f32.mxu0 0.0
    %287 = vmatmul.mubr.f32.gmra.mxu0 %v117
    %v288 = vpop.f32.mrf.mxu0
    %v289 = vadd.f32 %v68, %v288
    %v290 = vpop.f32.mrf.mxu0
    %291 = vmatprep.mubr.f32.mxu0 0.0
    %292 = vmatmul.mubr.f32.gmra.mxu0 %v120
    %v293 = vpop.f32.mrf.mxu0
    %v294 = vadd.f32 %v68, %v293
    %v295 = vpop.f32.mrf.mxu0
    %296 = vmatprep.mubr.f32.mxu0 0.0
    %297 = vmatmul.mubr.f32.gmra.mxu0 %v123
    %v298 = vpop.f32.mrf.mxu0
    %v299 = vadd.f32 %v68, %v298
    %v300 = vpop.f32.mrf.mxu0
    %301 = vmatprep.mubr.f32.mxu0 0.0
    %302 = vmatmul.mubr.f32.gmra.mxu0 %v126
    %v303 = vpop.f32.mrf.mxu0
    %v304 = vadd.f32 %v68, %v303
    %v305 = vpop.f32.mrf.mxu0
    %306 = vmatprep.mubr.f32.mxu0 0.0
    %307 = vmatmul.mubr.f32.gmra.mxu0 %v129
    %v308 = vpop.f32.mrf.mxu0
    %v309 = vadd.f32 %v68, %v308
    %v310 = vpop.f32.mrf.mxu0
    %311 = vmatprep.mubr.f32.mxu0 0.0
    %312 = vmatmul.mubr.f32.gmra.mxu0 %v132
    %v313 = vpop.f32.mrf.mxu0
    %v314 = vadd.f32 %v68, %v313
    %v315 = vpop.f32.mrf.mxu0
    %316 = vmatprep.mubr.f32.mxu0 0.0
    %317 = vmatmul.mubr.f32.gmra.mxu0 %v135
    %v318 = vpop.f32.mrf.mxu0
    %v319 = vadd.f32 %v68, %v318
    %v320 = vpop.f32.mrf.mxu0
    %321 = vmatprep.mubr.f32.mxu0 0.0
    %322 = vmatmul.mubr.f32.gmra.mxu0 %v138
    %v323 = vpop.f32.mrf.mxu0
    %v324 = vadd.f32 %v68, %v323
    %v325 = vpop.f32.mrf.mxu0
    %326 = vmatprep.mubr.f32.mxu0 0.0
    %327 = vmatmul.mubr.f32.gmra.mxu0 %v141
    %v328 = vpop.f32.mrf.mxu0
    %v329 = vadd.f32 %v68, %v328
    %v330 = vpop.f32.mrf.mxu0
    %331 = vdwg.mxu0
    %332 = vst [vmem:[%s3] sm:$0xff] %v214
    %333 = vst [vmem:[%s3 + $0x8] sm:$0xff] %v219
    %334 = vst [vmem:[%s3 + $0x10] sm:$0xff] %v224
    %335 = vst [vmem:[%s3 + $0x18] sm:$0xff] %v229
    %336 = vst [vmem:[%s3 + $0x20] sm:$0xff] %v234
    %337 = vst [vmem:[%s3 + $0x28] sm:$0xff] %v239
    %338 = vst [vmem:[%s3 + $0x30] sm:$0xff] %v244
    %339 = vst [vmem:[%s3 + $0x38] sm:$0xff] %v249
    %340 = vst [vmem:[%s3 + $0x40] sm:$0xff] %v254
    %341 = vst [vmem:[%s3 + $0x48] sm:$0xff] %v259
    %342 = vst [vmem:[%s3 + $0x50] sm:$0xff] %v264
    %343 = vst [vmem:[%s3 + $0x58] sm:$0xff] %v269
    %344 = vst [vmem:[%s3 + $0x60] sm:$0xff] %v274
    %345 = vst [vmem:[%s3 + $0x68] sm:$0xff] %v279
    %346 = vst [vmem:[%s3 + $0x70] sm:$0xff] %v284
    %347 = vst [vmem:[%s3 + $0x78] sm:$0xff] %v289
    %348 = vst [vmem:[%s3 + $0x80] sm:$0xff] %v294
    %349 = vst [vmem:[%s3 + $0x88] sm:$0xff] %v299
    %350 = vst [vmem:[%s3 + $0x90] sm:$0xff] %v304
    %351 = vst [vmem:[%s3 + $0x98] sm:$0xff] %v309
    %352 = vst [vmem:[%s3 + $0xa0] sm:$0xff] %v314
    %353 = vst [vmem:[%s3 + $0xa8] sm:$0xff] %v319
    %354 = vst [vmem:[%s3 + $0xb0] sm:$0xff] %v324
    %355 = vst [vmem:[%s3 + $0xb8] sm:$0xff] %v329
    // Predicated region
    $region22: #{gtrans_forward.4} parent=1 // pred_check
      _
    $region23: #{gtrans_forward.4} parent=1 // pred_check_branch
      %357 = sbr.rel (0) target = $region25
    $region24: #{gtrans_forward.4} parent=1 // pred_region
      _
    $region25: #{gtrans_forward.4} parent=1 // pred_fallthru
      _
    // Predicated region
    $region26: #{gtrans_forward.4} parent=1 // pred_check
      _
    $region27: #{gtrans_forward.4} parent=1 // pred_check_branch
      %359 = sbr.rel (0) target = $region29
    $region28: #{gtrans_forward.4} parent=1 // pred_region
      _
    $region29: #{gtrans_forward.4} parent=1 // pred_fallthru
      _
    %360 = vsyncpa [#allocation3], 1
    %361 = vsyncpa [#allocation5], 1

// kernel: gtrans_forward.5
$region0: #{gtrans_forward.5}
  #allocation0 [shape = 'u32[]', space=smem, size = 0x4, offset = 0x4, fixed_abs, tag = 'smem constant byte address 0x4 - core index']
  #allocation1 [shape = 'u32[144,128]{1,0:T(1,128)}', space=vmem, size = 0x12000, scoped, tag = 'internal scratch']
  #allocation2 [shape = 'f32[1,1]{1,0:T(1,128)S(1)}', space=vmem, size = 0x200, scoped, tag = 'scoped memory for gtrans_forward.5']
  %s0 = inlined_call_operand.smem [shape: u32[31], index: -1, kind: input, shape index: {}]
  %s1 = sld [smem:[%s0]]
  %s2 = scalar_lea.smem %s0, 1
  %s3 = sld [smem:[%s2]]
  %s4 = scalar_lea.smem %s0, 2
  %s5 = sld [smem:[%s4]]
  %s6 = scalar_lea.smem %s0, 3
  %s7 = sld [smem:[%s6]]
  %s8 = scalar_lea.smem %s0, 4
  %s9 = sld [smem:[%s8]]
  %s10 = scalar_lea.smem %s0, 5
  %s11 = sld [smem:[%s10]]
  %s12 = scalar_lea.smem %s0, 6
  %s13 = sld [smem:[%s12]]
  %s14 = scalar_lea.smem %s0, 7
  %s15 = sld [smem:[%s14]]
  %s16 = scalar_lea.smem %s0, 8
  %s17 = sld [smem:[%s16]]
  %s18 = scalar_lea.smem %s0, 9
  %s19 = sld [smem:[%s18]]
  %s20 = scalar_lea.smem %s0, 10
  %s21 = sld [smem:[%s20]]
  %s22 = scalar_lea.smem %s0, 11
  %s23 = sld [smem:[%s22]]
  %s24 = scalar_lea.smem %s0, 12
  %s25 = sld [smem:[%s24]]
  %s26 = scalar_lea.smem %s0, 13
  %s27 = sld [smem:[%s26]]
  %s28 = scalar_lea.smem %s0, 14
  %s29 = sld [smem:[%s28]]
  %s30 = scalar_lea.smem %s0, 15
  %s31 = sld [smem:[%s30]]
  %s32 = scalar_lea.smem %s0, 16
  %s33 = sld [smem:[%s32]]
  %s34 = scalar_lea.smem %s0, 17
  %s35 = sld [smem:[%s34]]
  %s36 = scalar_lea.smem %s0, 18
  %s37 = sld [smem:[%s36]]
  %s38 = scalar_lea.smem %s0, 19
  %s39 = sld [smem:[%s38]]
  %s40 = scalar_lea.smem %s0, 20
  %s41 = sld [smem:[%s40]]
  %s42 = scalar_lea.smem %s0, 21
  %s43 = sld [smem:[%s42]]
  %s44 = scalar_lea.smem %s0, 22
  %s45 = sld [smem:[%s44]]
  %s46 = scalar_lea.smem %s0, 23
  %s47 = sld [smem:[%s46]]
  %s48 = scalar_lea.smem %s0, 24
  %s49 = sld [smem:[%s48]]
  %s50 = scalar_lea.smem %s0, 25
  %s51 = sld [smem:[%s50]]
  %s52 = scalar_lea.smem %s0, 26
  %s53 = sld [smem:[%s52]]
  %s54 = scalar_lea.smem %s0, 27
  %s55 = sld [smem:[%s54]]
  %s56 = scalar_lea.smem %s0, 28
  %s57 = sld [smem:[%s56]]
  %s58 = scalar_lea.smem %s0, 29
  %s59 = sld [smem:[%s58]]
  %s60 = scalar_lea.smem %s0, 30
  %s61 = sld [smem:[%s60]]
  %s62 = sld [smem:[#allocation0]]
  $region190: #{gtrans_forward.5} parent=0
    _
  %s64 = ssub.s32 1, %s62
  %s65 = scalar_select 0, %s64, %s62
  %v66 = vstv %s7
  %67 = vst [vmem:[#allocation2] sm:$0x1] %v66
  $region1: #{gtrans_forward.5} parent=0
    #allocation3 [shape = 'u8[512]{0}', space=vmem, size = 0x400, scoped, tag = 'input window, operand 7, single buffered']
    #allocation4 [shape = 's32[1]{0}', space=sflag, size = 0x4, scoped, tag = 'scoped memory for gtrans_forward.5']
    #allocation5 [shape = 'u8[512]{0}', space=vmem, size = 0x400, scoped, tag = 'input window, operand 9, single buffered']
    #allocation6 [shape = 's32[1]{0}', space=sflag, size = 0x4, scoped, tag = 'scoped memory for gtrans_forward.5']
    #allocation7 [shape = 'u8[8192]{0}', space=vmem, size = 0x2000, scoped, tag = 'input window, operand 10, single buffered']
    #allocation8 [shape = 'u8[512]{0}', space=vmem, size = 0x400, scoped, tag = 'input window, operand 11, single buffered']
    #allocation9 [shape = 's32[1]{0}', space=sflag, size = 0x4, scoped, tag = 'scoped memory for gtrans_forward.5']
    #allocation10 [shape = 'u8[512]{0}', space=vmem, size = 0x400, scoped, tag = 'input window, operand 13, single buffered']
    #allocation11 [shape = 'u8[512]{0}', space=vmem, size = 0x400, scoped, tag = 'input window, operand 15, single buffered']
    #allocation12 [shape = 's32[1]{0}', space=sflag, size = 0x4, scoped, tag = 'scoped memory for gtrans_forward.5']
    #allocation13 [shape = 'u8[512]{0}', space=vmem, size = 0x400, scoped, tag = 'input window, operand 17, single buffered']
    #allocation14 [shape = 'u8[8192]{0}', space=vmem, size = 0x2000, scoped, tag = 'input window, operand 18, single buffered']
    #allocation15 [shape = 's32[1]{0}', space=sflag, size = 0x4, scoped, tag = 'scoped memory for gtrans_forward.5']
    #allocation16 [shape = 'u8[512]{0}', space=vmem, size = 0x400, scoped, tag = 'input window, operand 19, single buffered']
    #allocation17 [shape = 'u8[8192]{0}', space=vmem, size = 0x2000, scoped, tag = 'input window, operand 20, single buffered']
    #allocation18 [shape = 's32[1]{0}', space=sflag, size = 0x4, scoped, tag = 'scoped memory for gtrans_forward.5']
    #allocation19 [shape = 'u8[512]{0}', space=vmem, size = 0x400, scoped, tag = 'input window, operand 21, single buffered']
    #allocation20 [shape = 'u8[512]{0}', space=vmem, size = 0x400, scoped, tag = 'input window, operand 23, single buffered']
    #allocation21 [shape = 's32[1]{0}', space=sflag, size = 0x4, scoped, tag = 'scoped memory for gtrans_forward.5']
    #allocation22 [shape = 'u8[512]{0}', space=vmem, size = 0x400, scoped, tag = 'input window, operand 27, single buffered']
    #allocation23 [shape = 'u8[512]{0}', space=vmem, size = 0x400, scoped, tag = 'input window, operand 28, single buffered']
    #allocation24 [shape = 's32[1]{0}', space=sflag, size = 0x4, scoped, tag = 'scoped memory for gtrans_forward.5']
    #allocation25 [shape = 'u8[512]{0}', space=vmem, size = 0x400, scoped, tag = 'input window, operand 29, single buffered']
    %68 = vsyncpa [#allocation4], 0
    %69 = vsyncpa [#allocation6], 0
    %70 = vsyncpa [#allocation9], 0
    %71 = vsyncpa [#allocation12], 0
    %72 = vsyncpa [#allocation15], 0
    %73 = vsyncpa [#allocation18], 0
    %74 = vsyncpa [#allocation21], 0
    %75 = vsyncpa [#allocation24], 0
    // Predicated region
    $region2: #{gtrans_forward.5} parent=1 // pred_check
      _
    $region3: #{gtrans_forward.5} parent=1 // pred_check_branch
      %77 = sbr.rel (0) target = $region5
    $region4: #{gtrans_forward.5} parent=1 // pred_region
      _
    $region5: #{gtrans_forward.5} parent=1 // pred_fallthru
      _
    // Predicated region
    $region6: #{gtrans_forward.5} parent=1 // pred_check
      _
    $region7: #{gtrans_forward.5} parent=1 // pred_check_branch
      %79 = sbr.rel (0) target = $region9
    $region8: #{gtrans_forward.5} parent=1 // pred_region
      _
    $region9: #{gtrans_forward.5} parent=1 // pred_fallthru
      _
    // Predicated region
    $region10: #{gtrans_forward.5} parent=1 // pred_check
      _
    $region11: #{gtrans_forward.5} parent=1 // pred_check_branch
      %81 = sbr.rel (0) target = $region13
    $region12: #{gtrans_forward.5} parent=1 // pred_region
      _
    $region13: #{gtrans_forward.5} parent=1 // pred_fallthru
      _
    // Predicated region
    $region14: #{gtrans_forward.5} parent=1 // pred_check
      _
    $region15: #{gtrans_forward.5} parent=1 // pred_check_branch
      %83 = sbr.rel (0) target = $region17
    $region16: #{gtrans_forward.5} parent=1 // pred_region
      _
    $region17: #{gtrans_forward.5} parent=1 // pred_fallthru
      _
    // Predicated region
    $region18: #{gtrans_forward.5} parent=1 // pred_check
      _
    $region19: #{gtrans_forward.5} parent=1 // pred_check_branch
      %85 = sbr.rel (0) target = $region21
    $region20: #{gtrans_forward.5} parent=1 // pred_region
      _
    $region21: #{gtrans_forward.5} parent=1 // pred_fallthru
      _
    // Predicated region
    $region22: #{gtrans_forward.5} parent=1 // pred_check
      _
    $region23: #{gtrans_forward.5} parent=1 // pred_check_branch
      %87 = sbr.rel (0) target = $region25
    $region24: #{gtrans_forward.5} parent=1 // pred_region
      _
    $region25: #{gtrans_forward.5} parent=1 // pred_fallthru
      _
    // Predicated region
    $region26: #{gtrans_forward.5} parent=1 // pred_check
      _
    $region27: #{gtrans_forward.5} parent=1 // pred_check_branch
      %89 = sbr.rel (0) target = $region29
    $region28: #{gtrans_forward.5} parent=1 // pred_region
      _
    $region29: #{gtrans_forward.5} parent=1 // pred_fallthru
      _
    // Predicated region
    $region30: #{gtrans_forward.5} parent=1 // pred_check
      _
    $region31: #{gtrans_forward.5} parent=1 // pred_check_branch
      %91 = sbr.rel (0) target = $region33
    $region32: #{gtrans_forward.5} parent=1 // pred_region
      %s93 = ssub.s32 16, 16
      %94 = vsyncadd [#allocation4], %s93
      %s96 = sshll.u32 [#allocation3], 4
      %s97 = int_to_ptr.vmem [resolvable:$true] %s96
      %99 = dma.hbm_to_vmem [thread:$0]  %s15, 16, %s97, [#allocation4]
    $region33: #{gtrans_forward.5} parent=1 // pred_fallthru
      _
    // Predicated region
    $region34: #{gtrans_forward.5} parent=1 // pred_check
      _
    $region35: #{gtrans_forward.5} parent=1 // pred_check_branch
      %101 = sbr.rel (0) target = $region37
    $region36: #{gtrans_forward.5} parent=1 // pred_region
      _
    $region37: #{gtrans_forward.5} parent=1 // pred_fallthru
      _
    // Predicated region
    $region38: #{gtrans_forward.5} parent=1 // pred_check
      _
    $region39: #{gtrans_forward.5} parent=1 // pred_check_branch
      %103 = sbr.rel (0) target = $region41
    $region40: #{gtrans_forward.5} parent=1 // pred_region
      %s105 = ssub.s32 16, 16
      %106 = vsyncadd [#allocation6], %s105
      %s108 = sshll.u32 [#allocation5], 4
      %s109 = int_to_ptr.vmem [resolvable:$true] %s108
      %111 = dma.hbm_to_vmem [thread:$0]  %s19, 16, %s109, [#allocation6]
    $region41: #{gtrans_forward.5} parent=1 // pred_fallthru
      _
    // Predicated region
    $region42: #{gtrans_forward.5} parent=1 // pred_check
      _
    $region43: #{gtrans_forward.5} parent=1 // pred_check_branch
      %113 = sbr.rel (0) target = $region45
    $region44: #{gtrans_forward.5} parent=1 // pred_region
      %s115 = ssub.s32 256, 256
      %116 = vsyncadd [#allocation6], %s115
      %s117 = sshll.u32 [#allocation7], 4
      %s118 = int_to_ptr.vmem [resolvable:$true] %s117
      %123 = dma.hbm_to_vmem [thread:$0]  %s21, 256, %s118, [#allocation6], 128, 128, 8
    $region45: #{gtrans_forward.5} parent=1 // pred_fallthru
      _
    // Predicated region
    $region46: #{gtrans_forward.5} parent=1 // pred_check
      _
    $region47: #{gtrans_forward.5} parent=1 // pred_check_branch
      %125 = sbr.rel (0) target = $region49
    $region48: #{gtrans_forward.5} parent=1 // pred_region
      %s127 = ssub.s32 16, 16
      %128 = vsyncadd [#allocation9], %s127
      %s130 = sshll.u32 [#allocation8], 4
      %s131 = int_to_ptr.vmem [resolvable:$true] %s130
      %133 = dma.hbm_to_vmem [thread:$0]  %s23, 16, %s131, [#allocation9]
    $region49: #{gtrans_forward.5} parent=1 // pred_fallthru
      _
    // Predicated region
    $region50: #{gtrans_forward.5} parent=1 // pred_check
      _
    $region51: #{gtrans_forward.5} parent=1 // pred_check_branch
      %135 = sbr.rel (0) target = $region53
    $region52: #{gtrans_forward.5} parent=1 // pred_region
      _
    $region53: #{gtrans_forward.5} parent=1 // pred_fallthru
      _
    // Predicated region
    $region54: #{gtrans_forward.5} parent=1 // pred_check
      _
    $region55: #{gtrans_forward.5} parent=1 // pred_check_branch
      %137 = sbr.rel (0) target = $region57
    $region56: #{gtrans_forward.5} parent=1 // pred_region
      %s139 = ssub.s32 16, 16
      %140 = vsyncadd [#allocation9], %s139
      %s142 = sshll.u32 [#allocation10], 4
      %s143 = int_to_ptr.vmem [resolvable:$true] %s142
      %145 = dma.hbm_to_vmem [thread:$0]  %s27, 16, %s143, [#allocation9]
    $region57: #{gtrans_forward.5} parent=1 // pred_fallthru
      _
    // Predicated region
    $region58: #{gtrans_forward.5} parent=1 // pred_check
      _
    $region59: #{gtrans_forward.5} parent=1 // pred_check_branch
      %147 = sbr.rel (0) target = $region61
    $region60: #{gtrans_forward.5} parent=1 // pred_region
      _
    $region61: #{gtrans_forward.5} parent=1 // pred_fallthru
      _
    // Predicated region
    $region62: #{gtrans_forward.5} parent=1 // pred_check
      _
    $region63: #{gtrans_forward.5} parent=1 // pred_check_branch
      %149 = sbr.rel (0) target = $region65
    $region64: #{gtrans_forward.5} parent=1 // pred_region
      %s151 = ssub.s32 16, 16
      %152 = vsyncadd [#allocation12], %s151
      %s154 = sshll.u32 [#allocation11], 4
      %s155 = int_to_ptr.vmem [resolvable:$true] %s154
      %157 = dma.hbm_to_vmem [thread:$0]  %s31, 16, %s155, [#allocation12]
    $region65: #{gtrans_forward.5} parent=1 // pred_fallthru
      _
    // Predicated region
    $region66: #{gtrans_forward.5} parent=1 // pred_check
      _
    $region67: #{gtrans_forward.5} parent=1 // pred_check_branch
      %159 = sbr.rel (0) target = $region69
    $region68: #{gtrans_forward.5} parent=1 // pred_region
      _
    $region69: #{gtrans_forward.5} parent=1 // pred_fallthru
      _
    // Predicated region
    $region70: #{gtrans_forward.5} parent=1 // pred_check
      _
    $region71: #{gtrans_forward.5} parent=1 // pred_check_branch
      %161 = sbr.rel (0) target = $region73
    $region72: #{gtrans_forward.5} parent=1 // pred_region
      %s163 = ssub.s32 16, 16
      %164 = vsyncadd [#allocation12], %s163
      %s166 = sshll.u32 [#allocation13], 4
      %s167 = int_to_ptr.vmem [resolvable:$true] %s166
      %169 = dma.hbm_to_vmem [thread:$0]  %s35, 16, %s167, [#allocation12]
    $region73: #{gtrans_forward.5} parent=1 // pred_fallthru
      _
    // Predicated region
    $region74: #{gtrans_forward.5} parent=1 // pred_check
      _
    $region75: #{gtrans_forward.5} parent=1 // pred_check_branch
      %171 = sbr.rel (0) target = $region77
    $region76: #{gtrans_forward.5} parent=1 // pred_region
      %s173 = ssub.s32 256, 256
      %174 = vsyncadd [#allocation15], %s173
      %s175 = sshll.u32 [#allocation14], 4
      %s176 = int_to_ptr.vmem [resolvable:$true] %s175
      %181 = dma.hbm_to_vmem [thread:$0]  %s37, 256, %s176, [#allocation15], 128, 128, 8
    $region77: #{gtrans_forward.5} parent=1 // pred_fallthru
      _
    // Predicated region
    $region78: #{gtrans_forward.5} parent=1 // pred_check
      _
    $region79: #{gtrans_forward.5} parent=1 // pred_check_branch
      %183 = sbr.rel (0) target = $region81
    $region80: #{gtrans_forward.5} parent=1 // pred_region
      %s185 = ssub.s32 16, 16
      %186 = vsyncadd [#allocation15], %s185
      %s188 = sshll.u32 [#allocation16], 4
      %s189 = int_to_ptr.vmem [resolvable:$true] %s188
      %191 = dma.hbm_to_vmem [thread:$0]  %s39, 16, %s189, [#allocation15]
    $region81: #{gtrans_forward.5} parent=1 // pred_fallthru
      _
    // Predicated region
    $region82: #{gtrans_forward.5} parent=1 // pred_check
      _
    $region83: #{gtrans_forward.5} parent=1 // pred_check_branch
      %193 = sbr.rel (0) target = $region85
    $region84: #{gtrans_forward.5} parent=1 // pred_region
      %s195 = ssub.s32 256, 256
      %196 = vsyncadd [#allocation18], %s195
      %s197 = sshll.u32 [#allocation17], 4
      %s198 = int_to_ptr.vmem [resolvable:$true] %s197
      %203 = dma.hbm_to_vmem [thread:$0]  %s41, 256, %s198, [#allocation18], 128, 128, 8
    $region85: #{gtrans_forward.5} parent=1 // pred_fallthru
      _
    // Predicated region
    $region86: #{gtrans_forward.5} parent=1 // pred_check
      _
    $region87: #{gtrans_forward.5} parent=1 // pred_check_branch
      %205 = sbr.rel (0) target = $region89
    $region88: #{gtrans_forward.5} parent=1 // pred_region
      %s207 = ssub.s32 16, 16
      %208 = vsyncadd [#allocation18], %s207
      %s210 = sshll.u32 [#allocation19], 4
      %s211 = int_to_ptr.vmem [resolvable:$true] %s210
      %213 = dma.hbm_to_vmem [thread:$0]  %s43, 16, %s211, [#allocation18]
    $region89: #{gtrans_forward.5} parent=1 // pred_fallthru
      _
    // Predicated region
    $region90: #{gtrans_forward.5} parent=1 // pred_check
      _
    $region91: #{gtrans_forward.5} parent=1 // pred_check_branch
      %215 = sbr.rel (0) target = $region93
    $region92: #{gtrans_forward.5} parent=1 // pred_region
      _
    $region93: #{gtrans_forward.5} parent=1 // pred_fallthru
      _
    // Predicated region
    $region94: #{gtrans_forward.5} parent=1 // pred_check
      _
    $region95: #{gtrans_forward.5} parent=1 // pred_check_branch
      %217 = sbr.rel (0) target = $region97
    $region96: #{gtrans_forward.5} parent=1 // pred_region
      %s219 = ssub.s32 16, 16
      %220 = vsyncadd [#allocation21], %s219
      %s222 = sshll.u32 [#allocation20], 4
      %s223 = int_to_ptr.vmem [resolvable:$true] %s222
      %225 = dma.hbm_to_vmem [thread:$0]  %s47, 16, %s223, [#allocation21]
    $region97: #{gtrans_forward.5} parent=1 // pred_fallthru
      _
    // Predicated region
    $region98: #{gtrans_forward.5} parent=1 // pred_check
      _
    $region99: #{gtrans_forward.5} parent=1 // pred_check_branch
      %227 = sbr.rel (0) target = $region101
    $region100: #{gtrans_forward.5} parent=1 // pred_region
      _
    $region101: #{gtrans_forward.5} parent=1 // pred_fallthru
      _
    // Predicated region
    $region102: #{gtrans_forward.5} parent=1 // pred_check
      _
    $region103: #{gtrans_forward.5} parent=1 // pred_check_branch
      %229 = sbr.rel (0) target = $region105
    $region104: #{gtrans_forward.5} parent=1 // pred_region
      _
    $region105: #{gtrans_forward.5} parent=1 // pred_fallthru
      _
    // Predicated region
    $region106: #{gtrans_forward.5} parent=1 // pred_check
      _
    $region107: #{gtrans_forward.5} parent=1 // pred_check_branch
      %231 = sbr.rel (0) target = $region109
    $region108: #{gtrans_forward.5} parent=1 // pred_region
      _
    $region109: #{gtrans_forward.5} parent=1 // pred_fallthru
      _
    // Predicated region
    $region110: #{gtrans_forward.5} parent=1 // pred_check
      _
    $region111: #{gtrans_forward.5} parent=1 // pred_check_branch
      %233 = sbr.rel (0) target = $region113
    $region112: #{gtrans_forward.5} parent=1 // pred_region
      %s235 = ssub.s32 16, 16
      %236 = vsyncadd [#allocation21], %s235
      %s238 = sshll.u32 [#allocation22], 4
      %s239 = int_to_ptr.vmem [resolvable:$true] %s238
      %241 = dma.hbm_to_vmem [thread:$0]  %s55, 16, %s239, [#allocation21]
    $region113: #{gtrans_forward.5} parent=1 // pred_fallthru
      _
    // Predicated region
    $region114: #{gtrans_forward.5} parent=1 // pred_check
      _
    $region115: #{gtrans_forward.5} parent=1 // pred_check_branch
      %243 = sbr.rel (0) target = $region117
    $region116: #{gtrans_forward.5} parent=1 // pred_region
      %s245 = ssub.s32 16, 16
      %246 = vsyncadd [#allocation24], %s245
      %s248 = sshll.u32 [#allocation23], 4
      %s249 = int_to_ptr.vmem [resolvable:$true] %s248
      %251 = dma.hbm_to_vmem [thread:$0]  %s57, 16, %s249, [#allocation24]
    $region117: #{gtrans_forward.5} parent=1 // pred_fallthru
      _
    // Predicated region
    $region118: #{gtrans_forward.5} parent=1 // pred_check
      _
    $region119: #{gtrans_forward.5} parent=1 // pred_check_branch
      %253 = sbr.rel (0) target = $region121
    $region120: #{gtrans_forward.5} parent=1 // pred_region
      %s255 = ssub.s32 16, 16
      %256 = vsyncadd [#allocation24], %s255
      %s258 = sshll.u32 [#allocation25], 4
      %s259 = int_to_ptr.vmem [resolvable:$true] %s258
      %261 = dma.hbm_to_vmem [thread:$0]  %s59, 16, %s259, [#allocation24]
    $region121: #{gtrans_forward.5} parent=1 // pred_fallthru
      _
    // Predicated region
    $region122: #{gtrans_forward.5} parent=1 // pred_check
      _
    $region123: #{gtrans_forward.5} parent=1 // pred_check_branch
      %263 = sbr.rel (0) target = $region125
    $region124: #{gtrans_forward.5} parent=1 // pred_region
      %264 = dma.done [#allocation4], 16
    $region125: #{gtrans_forward.5} parent=1 // pred_fallthru
      _
    // Predicated region
    $region126: #{gtrans_forward.5} parent=1 // pred_check
      _
    $region127: #{gtrans_forward.5} parent=1 // pred_check_branch
      %266 = sbr.rel (0) target = $region129
    $region128: #{gtrans_forward.5} parent=1 // pred_region
      %267 = dma.done [#allocation6], 16
    $region129: #{gtrans_forward.5} parent=1 // pred_fallthru
      _
    // Predicated region
    $region130: #{gtrans_forward.5} parent=1 // pred_check
      _
    $region131: #{gtrans_forward.5} parent=1 // pred_check_branch
      %269 = sbr.rel (0) target = $region133
    $region132: #{gtrans_forward.5} parent=1 // pred_region
      %270 = dma.done [#allocation6], 256
    $region133: #{gtrans_forward.5} parent=1 // pred_fallthru
      _
    // Predicated region
    $region134: #{gtrans_forward.5} parent=1 // pred_check
      _
    $region135: #{gtrans_forward.5} parent=1 // pred_check_branch
      %272 = sbr.rel (0) target = $region137
    $region136: #{gtrans_forward.5} parent=1 // pred_region
      %273 = dma.done [#allocation9], 16
    $region137: #{gtrans_forward.5} parent=1 // pred_fallthru
      _
    // Predicated region
    $region138: #{gtrans_forward.5} parent=1 // pred_check
      _
    $region139: #{gtrans_forward.5} parent=1 // pred_check_branch
      %275 = sbr.rel (0) target = $region141
    $region140: #{gtrans_forward.5} parent=1 // pred_region
      %276 = dma.done [#allocation9], 16
    $region141: #{gtrans_forward.5} parent=1 // pred_fallthru
      _
    // Predicated region
    $region142: #{gtrans_forward.5} parent=1 // pred_check
      _
    $region143: #{gtrans_forward.5} parent=1 // pred_check_branch
      %278 = sbr.rel (0) target = $region145
    $region144: #{gtrans_forward.5} parent=1 // pred_region
      %279 = dma.done [#allocation12], 16
    $region145: #{gtrans_forward.5} parent=1 // pred_fallthru
      _
    // Predicated region
    $region146: #{gtrans_forward.5} parent=1 // pred_check
      _
    $region147: #{gtrans_forward.5} parent=1 // pred_check_branch
      %281 = sbr.rel (0) target = $region149
    $region148: #{gtrans_forward.5} parent=1 // pred_region
      %282 = dma.done [#allocation12], 16
    $region149: #{gtrans_forward.5} parent=1 // pred_fallthru
      _
    // Predicated region
    $region150: #{gtrans_forward.5} parent=1 // pred_check
      _
    $region151: #{gtrans_forward.5} parent=1 // pred_check_branch
      %284 = sbr.rel (0) target = $region153
    $region152: #{gtrans_forward.5} parent=1 // pred_region
      %285 = dma.done [#allocation15], 256
    $region153: #{gtrans_forward.5} parent=1 // pred_fallthru
      _
    // Predicated region
    $region154: #{gtrans_forward.5} parent=1 // pred_check
      _
    $region155: #{gtrans_forward.5} parent=1 // pred_check_branch
      %287 = sbr.rel (0) target = $region157
    $region156: #{gtrans_forward.5} parent=1 // pred_region
      %288 = dma.done [#allocation15], 16
    $region157: #{gtrans_forward.5} parent=1 // pred_fallthru
      _
    // Predicated region
    $region158: #{gtrans_forward.5} parent=1 // pred_check
      _
    $region159: #{gtrans_forward.5} parent=1 // pred_check_branch
      %290 = sbr.rel (0) target = $region161
    $region160: #{gtrans_forward.5} parent=1 // pred_region
      %291 = dma.done [#allocation18], 256
    $region161: #{gtrans_forward.5} parent=1 // pred_fallthru
      _
    // Predicated region
    $region162: #{gtrans_forward.5} parent=1 // pred_check
      _
    $region163: #{gtrans_forward.5} parent=1 // pred_check_branch
      %293 = sbr.rel (0) target = $region165
    $region164: #{gtrans_forward.5} parent=1 // pred_region
      %294 = dma.done [#allocation18], 16
    $region165: #{gtrans_forward.5} parent=1 // pred_fallthru
      _
    // Predicated region
    $region166: #{gtrans_forward.5} parent=1 // pred_check
      _
    $region167: #{gtrans_forward.5} parent=1 // pred_check_branch
      %296 = sbr.rel (0) target = $region169
    $region168: #{gtrans_forward.5} parent=1 // pred_region
      %297 = dma.done [#allocation21], 16
    $region169: #{gtrans_forward.5} parent=1 // pred_fallthru
      _
    // Predicated region
    $region170: #{gtrans_forward.5} parent=1 // pred_check
      _
    $region171: #{gtrans_forward.5} parent=1 // pred_check_branch
      %299 = sbr.rel (0) target = $region173
    $region172: #{gtrans_forward.5} parent=1 // pred_region
      %300 = dma.done [#allocation21], 16
    $region173: #{gtrans_forward.5} parent=1 // pred_fallthru
      _
    // Predicated region
    $region174: #{gtrans_forward.5} parent=1 // pred_check
      _
    $region175: #{gtrans_forward.5} parent=1 // pred_check_branch
      %302 = sbr.rel (0) target = $region177
    $region176: #{gtrans_forward.5} parent=1 // pred_region
      %303 = dma.done [#allocation24], 16
    $region177: #{gtrans_forward.5} parent=1 // pred_fallthru
      _
    // Predicated region
    $region178: #{gtrans_forward.5} parent=1 // pred_check
      _
    $region179: #{gtrans_forward.5} parent=1 // pred_check_branch
      %305 = sbr.rel (0) target = $region181
    $region180: #{gtrans_forward.5} parent=1 // pred_region
      %306 = dma.done [#allocation24], 16
    $region181: #{gtrans_forward.5} parent=1 // pred_fallthru
      _
    %v307 = vld [vmem:[%s1] sm:$0xff]
    %v308 = vld [vmem:[%s1 + $0x8] sm:$0xff]
    %v309 = vld [vmem:[%s3] sm:$0xff]
    %v310 = vld [vmem:[%s3 + $0x8] sm:$0xff]
    %v311 = vld [vmem:[%s3 + $0x10] sm:$0xff]
    %v312 = vld [vmem:[%s3 + $0x18] sm:$0xff]
    %v313 = vld [vmem:[%s3 + $0x20] sm:$0xff]
    %v314 = vld [vmem:[%s3 + $0x28] sm:$0xff]
    %v315 = vld [vmem:[%s3 + $0x30] sm:$0xff]
    %v316 = vld [vmem:[%s3 + $0x38] sm:$0xff]
    %vm317 = vcmask 523264
    %v319 = vsel %vm317, %v307, 0
    %v322 = vsel %vm317, %v308, 0
    %324 = vmatprep.subr.mxu0 0.0
    %325 = vmatpush1.msra.mxu0 0.0
    %326 = vmatprep.subr.mxu0 0.0
    %327 = vmatpush1.msra.mxu0 0.0
    %328 = vmatprep.subr.mxu0 0.0
    %329 = vmatpush1.msra.mxu0 0.0
    %330 = vmatprep.subr.mxu0 0.0
    %331 = vmatpush1.msra.mxu0 0.0
    %332 = vmatprep.subr.mxu0 0.0
    %333 = vmatpush1.msra.mxu0 0.0
    %334 = vmatprep.subr.mxu0 0.0
    %335 = vmatpush1.msra.mxu0 0.0
    %336 = vmatprep.subr.mxu0 0.0
    %337 = vmatpush1.msra.mxu0 0.0
    %338 = vmatprep.subr.mxu0 0.0
    %339 = vmatpush1.msra.mxu0 0.0
    %340 = vmatprep.subr.mxu0 0.0
    %341 = vmatpush1.msra.mxu0 %v316
    %342 = vmatprep.subr.mxu0 0.0
    %343 = vmatpush1.msra.mxu0 %v315
    %344 = vmatprep.subr.mxu0 0.0
    %345 = vmatpush1.msra.mxu0 %v314
    %346 = vmatprep.subr.mxu0 0.0
    %347 = vmatpush1.msra.mxu0 %v313
    %348 = vmatprep.subr.mxu0 0.0
    %349 = vmatpush1.msra.mxu0 %v312
    %350 = vmatprep.subr.mxu0 0.0
    %351 = vmatpush1.msra.mxu0 %v311
    %352 = vmatprep.subr.mxu0 0.0
    %353 = vmatpush1.msra.mxu0 %v310
    %354 = vmatprep.subr.mxu0 0.0
    %355 = vmatpush1.msra.mxu0 %v309
    %356 = vmatprep.subr.mxu0 0.0
    %357 = vmatpush2.msra.mxu0 0.0
    %358 = vmatprep.subr.mxu0 0.0
    %359 = vmatpush2.msra.mxu0 0.0
    %360 = vmatprep.subr.mxu0 0.0
    %361 = vmatpush2.msra.mxu0 0.0
    %362 = vmatprep.subr.mxu0 0.0
    %363 = vmatpush2.msra.mxu0 0.0
    %364 = vmatprep.subr.mxu0 0.0
    %365 = vmatpush2.msra.mxu0 0.0
    %366 = vmatprep.subr.mxu0 0.0
    %367 = vmatpush2.msra.mxu0 0.0
    %368 = vmatprep.subr.mxu0 0.0
    %369 = vmatpush2.msra.mxu0 0.0
    %370 = vmatprep.subr.mxu0 0.0
    %371 = vmatpush2.msra.mxu0 0.0
    %372 = vmatprep.subr.mxu0 0.0
    %373 = vmatpush2.msra.mxu0 0.0
    %374 = vmatprep.subr.mxu0 0.0
    %375 = vmatpush2.msra.mxu0 0.0
    %376 = vmatprep.subr.mxu0 0.0
    %377 = vmatpush2.msra.mxu0 0.0
    %378 = vmatprep.subr.mxu0 0.0
    %379 = vmatpush2.msra.mxu0 0.0
    %380 = vmatprep.subr.mxu0 0.0
    %381 = vmatpush2.msra.mxu0 0.0
    %382 = vmatprep.subr.mxu0 0.0
    %383 = vmatpush2.msra.mxu0 0.0
    %384 = vmatprep.subr.mxu0 0.0
    %385 = vmatpush2.msra.mxu0 0.0
    %386 = vmatprep.subr.mxu0 0.0
    %387 = vmatpush2.msra.mxu0 0.0
    %388 = vmatprep.mubr.f32.mxu0 0.0
    %389 = vmatmul.mubr.f32.gmra.mxu0 %v319
    %v390 = vpop.f32.mrf.mxu0
    %v391 = vadd.f32 0.0, %v390
    %v392 = vpop.f32.mrf.mxu0
    %393 = vmatprep.mubr.f32.mxu0 0.0
    %394 = vmatmul.mubr.f32.gmra.mxu0 %v322
    %v395 = vpop.f32.mrf.mxu0
    %v396 = vadd.f32 0.0, %v395
    %v397 = vpop.f32.mrf.mxu0
    %398 = vdwg.mxu0
    %v399 = vld [vmem:[%s9] sm:$0xff]
    %v400 = vld [vmem:[%s9 + $0x8] sm:$0xff]
    %v401 = vld [vmem:[%s9 + $0x10] sm:$0xff]
    %v402 = vld [vmem:[%s9 + $0x18] sm:$0xff]
    %v403 = vld [vmem:[%s9 + $0x20] sm:$0xff]
    %v404 = vld [vmem:[%s9 + $0x28] sm:$0xff]
    %v405 = vld [vmem:[%s9 + $0x30] sm:$0xff]
    %v406 = vld [vmem:[%s9 + $0x38] sm:$0xff]
    %v407 = vld [vmem:[%s9 + $0x40] sm:$0xff]
    %v408 = vld [vmem:[%s9 + $0x48] sm:$0xff]
    %v409 = vld [vmem:[%s9 + $0x50] sm:$0xff]
    %v410 = vld [vmem:[%s9 + $0x58] sm:$0xff]
    %v411 = vld [vmem:[%s9 + $0x60] sm:$0xff]
    %v412 = vld [vmem:[%s9 + $0x68] sm:$0xff]
    %v413 = vld [vmem:[%s9 + $0x70] sm:$0xff]
    %v414 = vld [vmem:[%s9 + $0x78] sm:$0xff]
    %v415 = vld [vmem:[%s11] sm:$0x1]
    %v417 = vlaneseq
    %v418 = vshrl.u32 %v417, 7
    %v419 = vsub.s32 0, %v418
    %v420 = vrot.slane %v415, %v419
    %422 = vmatprep.subr.mxu0 0.0
    %423 = vmatpush1.msra.mxu0 %v414
    %424 = vmatprep.subr.mxu0 0.0
    %425 = vmatpush1.msra.mxu0 %v413
    %426 = vmatprep.subr.mxu0 0.0
    %427 = vmatpush1.msra.mxu0 %v412
    %428 = vmatprep.subr.mxu0 0.0
    %429 = vmatpush1.msra.mxu0 %v411
    %430 = vmatprep.subr.mxu0 0.0
    %431 = vmatpush1.msra.mxu0 %v410
    %432 = vmatprep.subr.mxu0 0.0
    %433 = vmatpush1.msra.mxu0 %v409
    %434 = vmatprep.subr.mxu0 0.0
    %435 = vmatpush1.msra.mxu0 %v408
    %436 = vmatprep.subr.mxu0 0.0
    %437 = vmatpush1.msra.mxu0 %v407
    %438 = vmatprep.subr.mxu0 0.0
    %439 = vmatpush1.msra.mxu0 %v406
    %440 = vmatprep.subr.mxu0 0.0
    %441 = vmatpush1.msra.mxu0 %v405
    %442 = vmatprep.subr.mxu0 0.0
    %443 = vmatpush1.msra.mxu0 %v404
    %444 = vmatprep.subr.mxu0 0.0
    %445 = vmatpush1.msra.mxu0 %v403
    %446 = vmatprep.subr.mxu0 0.0
    %447 = vmatpush1.msra.mxu0 %v402
    %448 = vmatprep.subr.mxu0 0.0
    %449 = vmatpush1.msra.mxu0 %v401
    %450 = vmatprep.subr.mxu0 0.0
    %451 = vmatpush1.msra.mxu0 %v400
    %452 = vmatprep.subr.mxu0 0.0
    %453 = vmatpush1.msra.mxu0 %v399
    %454 = vmatprep.subr.mxu0 0.0
    %455 = vmatpush2.msra.mxu0 0.0
    %456 = vmatprep.subr.mxu0 0.0
    %457 = vmatpush2.msra.mxu0 0.0
    %458 = vmatprep.subr.mxu0 0.0
    %459 = vmatpush2.msra.mxu0 0.0
    %460 = vmatprep.subr.mxu0 0.0
    %461 = vmatpush2.msra.mxu0 0.0
    %462 = vmatprep.subr.mxu0 0.0
    %463 = vmatpush2.msra.mxu0 0.0
    %464 = vmatprep.subr.mxu0 0.0
    %465 = vmatpush2.msra.mxu0 0.0
    %466 = vmatprep.subr.mxu0 0.0
    %467 = vmatpush2.msra.mxu0 0.0
    %468 = vmatprep.subr.mxu0 0.0
    %469 = vmatpush2.msra.mxu0 0.0
    %470 = vmatprep.subr.mxu0 0.0
    %471 = vmatpush2.msra.mxu0 0.0
    %472 = vmatprep.subr.mxu0 0.0
    %473 = vmatpush2.msra.mxu0 0.0
    %474 = vmatprep.subr.mxu0 0.0
    %475 = vmatpush2.msra.mxu0 0.0
    %476 = vmatprep.subr.mxu0 0.0
    %477 = vmatpush2.msra.mxu0 0.0
    %478 = vmatprep.subr.mxu0 0.0
    %479 = vmatpush2.msra.mxu0 0.0
    %480 = vmatprep.subr.mxu0 0.0
    %481 = vmatpush2.msra.mxu0 0.0
    %482 = vmatprep.subr.mxu0 0.0
    %483 = vmatpush2.msra.mxu0 0.0
    %484 = vmatprep.subr.mxu0 0.0
    %485 = vmatpush2.msra.mxu0 0.0
    %486 = vmatprep.mubr.f32.mxu0 0.0
    %487 = vmatmul.mubr.f32.gmra.mxu0 %v391
    %v488 = vpop.f32.mrf.mxu0
    %v489 = vadd.f32 %v420, %v488
    %v490 = vpop.f32.mrf.mxu0
    %491 = vmatprep.mubr.f32.mxu0 0.0
    %492 = vmatmul.mubr.f32.gmra.mxu0 %v396
    %v493 = vpop.f32.mrf.mxu0
    %v494 = vadd.f32 %v420, %v493
    %v495 = vpop.f32.mrf.mxu0
    %496 = vdwg.mxu0
    %497 = vmatprep.subr.mxu0 0.0
    %498 = vmatpush1.xpose.msra.mxu0 0.0
    %499 = vmatprep.subr.mxu0 0.0
    %500 = vmatpush1.xpose.msra.mxu0 0.0
    %501 = vmatprep.subr.mxu0 0.0
    %502 = vmatpush1.xpose.msra.mxu0 0.0
    %503 = vmatprep.subr.mxu0 0.0
    %504 = vmatpush1.xpose.msra.mxu0 0.0
    %505 = vmatprep.subr.mxu0 0.0
    %506 = vmatpush1.xpose.msra.mxu0 0.0
    %507 = vmatprep.subr.mxu0 0.0
    %508 = vmatpush1.xpose.msra.mxu0 0.0
    %509 = vmatprep.subr.mxu0 0.0
    %510 = vmatpush1.xpose.msra.mxu0 0.0
    %511 = vmatprep.subr.mxu0 0.0
    %512 = vmatpush1.xpose.msra.mxu0 0.0
    %513 = vmatprep.subr.mxu0 0.0
    %514 = vmatpush1.xpose.msra.mxu0 0.0
    %515 = vmatprep.subr.mxu0 0.0
    %516 = vmatpush1.xpose.msra.mxu0 0.0
    %517 = vmatprep.subr.mxu0 0.0
    %518 = vmatpush1.xpose.msra.mxu0 0.0
    %519 = vmatprep.subr.mxu0 0.0
    %520 = vmatpush1.xpose.msra.mxu0 0.0
    %521 = vmatprep.subr.mxu0 0.0
    %522 = vmatpush1.xpose.msra.mxu0 0.0
    %523 = vmatprep.subr.mxu0 0.0
    %524 = vmatpush1.xpose.msra.mxu0 0.0
    %525 = vmatprep.subr.mxu0 0.0
    %526 = vmatpush1.xpose.msra.mxu0 %v494
    %527 = vmatprep.subr.mxu0 0.0
    %528 = vmatpush1.xpose.msra.mxu0 %v489
    %529 = vmatprep.subr.mxu0 0.0
    %530 = vmatpush2.xpose.msra.mxu0 0.0
    %531 = vmatprep.subr.mxu0 0.0
    %532 = vmatpush2.xpose.msra.mxu0 0.0
    %533 = vmatprep.subr.mxu0 0.0
    %534 = vmatpush2.xpose.msra.mxu0 0.0
    %535 = vmatprep.subr.mxu0 0.0
    %536 = vmatpush2.xpose.msra.mxu0 0.0
    %537 = vmatprep.subr.mxu0 0.0
    %538 = vmatpush2.xpose.msra.mxu0 0.0
    %539 = vmatprep.subr.mxu0 0.0
    %540 = vmatpush2.xpose.msra.mxu0 0.0
    %541 = vmatprep.subr.mxu0 0.0
    %542 = vmatpush2.xpose.msra.mxu0 0.0
    %543 = vmatprep.subr.mxu0 0.0
    %544 = vmatpush2.xpose.msra.mxu0 0.0
    %545 = vmatprep.subr.mxu0 0.0
    %546 = vmatpush2.xpose.msra.mxu0 0.0
    %547 = vmatprep.subr.mxu0 0.0
    %548 = vmatpush2.xpose.msra.mxu0 0.0
    %549 = vmatprep.subr.mxu0 0.0
    %550 = vmatpush2.xpose.msra.mxu0 0.0
    %551 = vmatprep.subr.mxu0 0.0
    %552 = vmatpush2.xpose.msra.mxu0 0.0
    %553 = vmatprep.subr.mxu0 0.0
    %554 = vmatpush2.xpose.msra.mxu0 0.0
    %555 = vmatprep.subr.mxu0 0.0
    %556 = vmatpush2.xpose.msra.mxu0 0.0
    %557 = vmatprep.subr.mxu0 0.0
    %558 = vmatpush2.xpose.msra.mxu0 0.0
    %559 = vmatprep.subr.mxu0 0.0
    %560 = vmatpush2.xpose.msra.mxu0 0.0
    %561 = vmatprep.mubr.f32.mxu0 0.0
    %562 = vmatmul.mubr.f32.gmra.mxu0 %v489
    %v563 = vpop.f32.mrf.mxu0
    %v564 = vadd.f32 0.0, %v563
    %v565 = vpop.f32.mrf.mxu0
    %566 = vmatprep.mubr.f32.mxu0 0.0
    %567 = vmatmul.mubr.f32.gmra.mxu0 %v494
    %v568 = vpop.f32.mrf.mxu0
    %v569 = vadd.f32 0.0, %v568
    %v570 = vpop.f32.mrf.mxu0
    %571 = vdwg.mxu0
    %vm572 = vcmask 130048
    %v573 = vsel %vm572, %v564, -inf
    %574 = vmax.xlane.f32.xlu0 %v573
    %v575 = vpop.xlane.xlu0 %574
    %v576 = vsel %vm572, %v569, -inf
    %577 = vmax.xlane.f32.xlu0 %v576
    %v578 = vpop.xlane.xlu0 %577
    %v579 = vsub.f32 %v564, %v575
    %v580 = vsub.f32 %v569, %v578
    %v581 = vmul.f32 %v579, 1.442695
    %v582 = vpow.pop %v581
    %v583 = vmul.f32 %v580, 1.442695
    %v584 = vpow.pop %v583
    %v585 = vsel %vm572, %v582, 0.0
    %586 = vadd.xlane.f32.xlu0 %v585
    %v587 = vpop.xlane.xlu0 %586
    %v588 = vsel %vm572, %v584, 0.0
    %589 = vadd.xlane.f32.xlu0 %v588
    %v590 = vpop.xlane.xlu0 %589
    %v591 = vrcp.pop %v587
    %v592 = vrcp.pop %v590
    %v593 = vmul.f32 %v582, %v591
    %v594 = vmul.f32 %v584, %v592
    %v595 = vlaneseq
    %v596 = vshrl.u32 %v595, 7
    %v597 = vadd.s32 %v596, 8
    %v598 = vlaneseq
    %v599 = vand.u32 %v598, 127
    %vm600 = vcmp.eq.s32.totalorder %v596, %v599
    %vm601 = vcmp.eq.s32.totalorder %v597, %v599
    %v602 = vsel %vm600, 1, 0
    %v603 = vsel %vm601, 1, 0
    %v604 = vcvt.s32.f32 %v602
    %v605 = vcvt.s32.f32 %v603
    %v606 = vld [vmem:[%s5] sm:$0xff]
    %v607 = vld [vmem:[%s5 + $0x8] sm:$0xff]
    %v608 = vmul.f32 %v593, %v606
    %v609 = vmul.f32 %v594, %v607
    %v610 = vld [vmem:[#allocation2] sm:$0x1]
    %s611 = vtos %v610
    %v612 = vstv %s611
    %v613 = vmul.f32 %v612, %v604
    %v614 = vmul.f32 %v612, %v605
    %v615 = vadd.f32 %v608, %v613
    %v616 = vadd.f32 %v609, %v614
    %v617 = vld [vmem:[%s13] sm:$0xff]
    %v618 = vld [vmem:[%s13 + $0x8] sm:$0xff]
    %v619 = vld [vmem:[%s13 + $0x10] sm:$0xff]
    %v620 = vld [vmem:[%s13 + $0x18] sm:$0xff]
    %v621 = vld [vmem:[%s13 + $0x20] sm:$0xff]
    %v622 = vld [vmem:[%s13 + $0x28] sm:$0xff]
    %v623 = vld [vmem:[%s13 + $0x30] sm:$0xff]
    %v624 = vld [vmem:[%s13 + $0x38] sm:$0xff]
    %v625 = vld [vmem:[%s13 + $0x40] sm:$0xff]
    %v626 = vld [vmem:[%s13 + $0x48] sm:$0xff]
    %v627 = vld [vmem:[%s13 + $0x50] sm:$0xff]
    %v628 = vld [vmem:[%s13 + $0x58] sm:$0xff]
    %v629 = vld [vmem:[%s13 + $0x60] sm:$0xff]
    %v630 = vld [vmem:[%s13 + $0x68] sm:$0xff]
    %v631 = vld [vmem:[%s13 + $0x70] sm:$0xff]
    %v632 = vld [vmem:[%s13 + $0x78] sm:$0xff]
    %v633 = vld [vmem:[#allocation3] sm:$0x1]
    %v635 = vlaneseq
    %v636 = vshrl.u32 %v635, 7
    %v637 = vsub.s32 0, %v636
    %v638 = vrot.slane %v633, %v637
    %640 = vmatprep.subr.mxu0 0.0
    %641 = vmatpush1.msra.mxu0 %v632
    %642 = vmatprep.subr.mxu0 0.0
    %643 = vmatpush1.msra.mxu0 %v631
    %644 = vmatprep.subr.mxu0 0.0
    %645 = vmatpush1.msra.mxu0 %v630
    %646 = vmatprep.subr.mxu0 0.0
    %647 = vmatpush1.msra.mxu0 %v629
    %648 = vmatprep.subr.mxu0 0.0
    %649 = vmatpush1.msra.mxu0 %v628
    %650 = vmatprep.subr.mxu0 0.0
    %651 = vmatpush1.msra.mxu0 %v627
    %652 = vmatprep.subr.mxu0 0.0
    %653 = vmatpush1.msra.mxu0 %v626
    %654 = vmatprep.subr.mxu0 0.0
    %655 = vmatpush1.msra.mxu0 %v625
    %656 = vmatprep.subr.mxu0 0.0
    %657 = vmatpush1.msra.mxu0 %v624
    %658 = vmatprep.subr.mxu0 0.0
    %659 = vmatpush1.msra.mxu0 %v623
    %660 = vmatprep.subr.mxu0 0.0
    %661 = vmatpush1.msra.mxu0 %v622
    %662 = vmatprep.subr.mxu0 0.0
    %663 = vmatpush1.msra.mxu0 %v621
    %664 = vmatprep.subr.mxu0 0.0
    %665 = vmatpush1.msra.mxu0 %v620
    %666 = vmatprep.subr.mxu0 0.0
    %667 = vmatpush1.msra.mxu0 %v619
    %668 = vmatprep.subr.mxu0 0.0
    %669 = vmatpush1.msra.mxu0 %v618
    %670 = vmatprep.subr.mxu0 0.0
    %671 = vmatpush1.msra.mxu0 %v617
    %672 = vmatprep.subr.mxu0 0.0
    %673 = vmatpush2.msra.mxu0 0.0
    %674 = vmatprep.subr.mxu0 0.0
    %675 = vmatpush2.msra.mxu0 0.0
    %676 = vmatprep.subr.mxu0 0.0
    %677 = vmatpush2.msra.mxu0 0.0
    %678 = vmatprep.subr.mxu0 0.0
    %679 = vmatpush2.msra.mxu0 0.0
    %680 = vmatprep.subr.mxu0 0.0
    %681 = vmatpush2.msra.mxu0 0.0
    %682 = vmatprep.subr.mxu0 0.0
    %683 = vmatpush2.msra.mxu0 0.0
    %684 = vmatprep.subr.mxu0 0.0
    %685 = vmatpush2.msra.mxu0 0.0
    %686 = vmatprep.subr.mxu0 0.0
    %687 = vmatpush2.msra.mxu0 0.0
    %688 = vmatprep.subr.mxu0 0.0
    %689 = vmatpush2.msra.mxu0 0.0
    %690 = vmatprep.subr.mxu0 0.0
    %691 = vmatpush2.msra.mxu0 0.0
    %692 = vmatprep.subr.mxu0 0.0
    %693 = vmatpush2.msra.mxu0 0.0
    %694 = vmatprep.subr.mxu0 0.0
    %695 = vmatpush2.msra.mxu0 0.0
    %696 = vmatprep.subr.mxu0 0.0
    %697 = vmatpush2.msra.mxu0 0.0
    %698 = vmatprep.subr.mxu0 0.0
    %699 = vmatpush2.msra.mxu0 0.0
    %700 = vmatprep.subr.mxu0 0.0
    %701 = vmatpush2.msra.mxu0 0.0
    %702 = vmatprep.subr.mxu0 0.0
    %703 = vmatpush2.msra.mxu0 0.0
    %704 = vmatprep.mubr.f32.mxu0 0.0
    %705 = vmatmul.mubr.f32.gmra.mxu0 %v391
    %v706 = vpop.f32.mrf.mxu0
    %v707 = vadd.f32 %v638, %v706
    %v708 = vpop.f32.mrf.mxu0
    %709 = vmatprep.mubr.f32.mxu0 0.0
    %710 = vmatmul.mubr.f32.gmra.mxu0 %v396
    %v711 = vpop.f32.mrf.mxu0
    %v712 = vadd.f32 %v638, %v711
    %v713 = vpop.f32.mrf.mxu0
    %714 = vdwg.mxu0
    %v716 = vsel %vm572, %v593, 0
    %v719 = vsel %vm572, %v594, 0
    %721 = vmatprep.subr.mxu0 0.0
    %722 = vmatpush1.msra.mxu0 0.0
    %723 = vmatprep.subr.mxu0 0.0
    %724 = vmatpush1.msra.mxu0 0.0
    %725 = vmatprep.subr.mxu0 0.0
    %726 = vmatpush1.msra.mxu0 0.0
    %727 = vmatprep.subr.mxu0 0.0
    %728 = vmatpush1.msra.mxu0 0.0
    %729 = vmatprep.subr.mxu0 0.0
    %730 = vmatpush1.msra.mxu0 0.0
    %731 = vmatprep.subr.mxu0 0.0
    %732 = vmatpush1.msra.mxu0 0.0
    %733 = vmatprep.subr.mxu0 0.0
    %734 = vmatpush1.msra.mxu0 0.0
    %735 = vmatprep.subr.mxu0 0.0
    %736 = vmatpush1.msra.mxu0 0.0
    %737 = vmatprep.subr.mxu0 0.0
    %738 = vmatpush1.msra.mxu0 0.0
    %739 = vmatprep.subr.mxu0 0.0
    %740 = vmatpush1.msra.mxu0 0.0
    %741 = vmatprep.subr.mxu0 0.0
    %742 = vmatpush1.msra.mxu0 0.0
    %743 = vmatprep.subr.mxu0 0.0
    %744 = vmatpush1.msra.mxu0 0.0
    %745 = vmatprep.subr.mxu0 0.0
    %746 = vmatpush1.msra.mxu0 0.0
    %747 = vmatprep.subr.mxu0 0.0
    %748 = vmatpush1.msra.mxu0 0.0
    %749 = vmatprep.subr.mxu0 0.0
    %750 = vmatpush1.msra.mxu0 %v712
    %751 = vmatprep.subr.mxu0 0.0
    %752 = vmatpush1.msra.mxu0 %v707
    %753 = vmatprep.subr.mxu0 0.0
    %754 = vmatpush2.msra.mxu0 0.0
    %755 = vmatprep.subr.mxu0 0.0
    %756 = vmatpush2.msra.mxu0 0.0
    %757 = vmatprep.subr.mxu0 0.0
    %758 = vmatpush2.msra.mxu0 0.0
    %759 = vmatprep.subr.mxu0 0.0
    %760 = vmatpush2.msra.mxu0 0.0
    %761 = vmatprep.subr.mxu0 0.0
    %762 = vmatpush2.msra.mxu0 0.0
    %763 = vmatprep.subr.mxu0 0.0
    %764 = vmatpush2.msra.mxu0 0.0
    %765 = vmatprep.subr.mxu0 0.0
    %766 = vmatpush2.msra.mxu0 0.0
    %767 = vmatprep.subr.mxu0 0.0
    %768 = vmatpush2.msra.mxu0 0.0
    %769 = vmatprep.subr.mxu0 0.0
    %770 = vmatpush2.msra.mxu0 0.0
    %771 = vmatprep.subr.mxu0 0.0
    %772 = vmatpush2.msra.mxu0 0.0
    %773 = vmatprep.subr.mxu0 0.0
    %774 = vmatpush2.msra.mxu0 0.0
    %775 = vmatprep.subr.mxu0 0.0
    %776 = vmatpush2.msra.mxu0 0.0
    %777 = vmatprep.subr.mxu0 0.0
    %778 = vmatpush2.msra.mxu0 0.0
    %779 = vmatprep.subr.mxu0 0.0
    %780 = vmatpush2.msra.mxu0 0.0
    %781 = vmatprep.subr.mxu0 0.0
    %782 = vmatpush2.msra.mxu0 0.0
    %783 = vmatprep.subr.mxu0 0.0
    %784 = vmatpush2.msra.mxu0 0.0
    %785 = vmatprep.mubr.f32.mxu0 0.0
    %786 = vmatmul.mubr.f32.gmra.mxu0 %v716
    %v787 = vpop.f32.mrf.mxu0
    %v788 = vadd.f32 0.0, %v787
    %v789 = vpop.f32.mrf.mxu0
    %790 = vmatprep.mubr.f32.mxu0 0.0
    %791 = vmatmul.mubr.f32.gmra.mxu0 %v719
    %v792 = vpop.f32.mrf.mxu0
    %v793 = vadd.f32 0.0, %v792
    %v794 = vpop.f32.mrf.mxu0
    %795 = vdwg.mxu0
    %vm796 = vcmp.ge.f32.partialorder %v788, 0.0
    %vm797 = vcmp.ge.f32.partialorder %v793, 0.0
    %v798 = vmul.f32 %v788, 0.01
    %v799 = vmul.f32 %v793, 0.01
    %v800 = vsel %vm796, %v788, %v798
    %v801 = vsel %vm797, %v793, %v799
    %v802 = vld [vmem:[%s17] sm:$0xff]
    %v803 = vld [vmem:[%s17 + $0x8] sm:$0xff]
    %v804 = vld [vmem:[%s17 + $0x10] sm:$0xff]
    %v805 = vld [vmem:[%s17 + $0x18] sm:$0xff]
    %v806 = vld [vmem:[%s17 + $0x20] sm:$0xff]
    %v807 = vld [vmem:[%s17 + $0x28] sm:$0xff]
    %v808 = vld [vmem:[%s17 + $0x30] sm:$0xff]
    %v809 = vld [vmem:[%s17 + $0x38] sm:$0xff]
    %v810 = vld [vmem:[%s17 + $0x40] sm:$0xff]
    %v811 = vld [vmem:[%s17 + $0x48] sm:$0xff]
    %v812 = vld [vmem:[%s17 + $0x50] sm:$0xff]
    %v813 = vld [vmem:[%s17 + $0x58] sm:$0xff]
    %v814 = vld [vmem:[%s17 + $0x60] sm:$0xff]
    %v815 = vld [vmem:[%s17 + $0x68] sm:$0xff]
    %v816 = vld [vmem:[%s17 + $0x70] sm:$0xff]
    %v817 = vld [vmem:[%s17 + $0x78] sm:$0xff]
    %v818 = vld [vmem:[#allocation5] sm:$0x1]
    %v820 = vlaneseq
    %v821 = vshrl.u32 %v820, 7
    %v822 = vsub.s32 0, %v821
    %v823 = vrot.slane %v818, %v822
    %825 = vmatprep.subr.mxu0 0.0
    %826 = vmatpush1.msra.mxu0 %v817
    %827 = vmatprep.subr.mxu0 0.0
    %828 = vmatpush1.msra.mxu0 %v816
    %829 = vmatprep.subr.mxu0 0.0
    %830 = vmatpush1.msra.mxu0 %v815
    %831 = vmatprep.subr.mxu0 0.0
    %832 = vmatpush1.msra.mxu0 %v814
    %833 = vmatprep.subr.mxu0 0.0
    %834 = vmatpush1.msra.mxu0 %v813
    %835 = vmatprep.subr.mxu0 0.0
    %836 = vmatpush1.msra.mxu0 %v812
    %837 = vmatprep.subr.mxu0 0.0
    %838 = vmatpush1.msra.mxu0 %v811
    %839 = vmatprep.subr.mxu0 0.0
    %840 = vmatpush1.msra.mxu0 %v810
    %841 = vmatprep.subr.mxu0 0.0
    %842 = vmatpush1.msra.mxu0 %v809
    %843 = vmatprep.subr.mxu0 0.0
    %844 = vmatpush1.msra.mxu0 %v808
    %845 = vmatprep.subr.mxu0 0.0
    %846 = vmatpush1.msra.mxu0 %v807
    %847 = vmatprep.subr.mxu0 0.0
    %848 = vmatpush1.msra.mxu0 %v806
    %849 = vmatprep.subr.mxu0 0.0
    %850 = vmatpush1.msra.mxu0 %v805
    %851 = vmatprep.subr.mxu0 0.0
    %852 = vmatpush1.msra.mxu0 %v804
    %853 = vmatprep.subr.mxu0 0.0
    %854 = vmatpush1.msra.mxu0 %v803
    %855 = vmatprep.subr.mxu0 0.0
    %856 = vmatpush1.msra.mxu0 %v802
    %857 = vmatprep.subr.mxu0 0.0
    %858 = vmatpush2.msra.mxu0 0.0
    %859 = vmatprep.subr.mxu0 0.0
    %860 = vmatpush2.msra.mxu0 0.0
    %861 = vmatprep.subr.mxu0 0.0
    %862 = vmatpush2.msra.mxu0 0.0
    %863 = vmatprep.subr.mxu0 0.0
    %864 = vmatpush2.msra.mxu0 0.0
    %865 = vmatprep.subr.mxu0 0.0
    %866 = vmatpush2.msra.mxu0 0.0
    %867 = vmatprep.subr.mxu0 0.0
    %868 = vmatpush2.msra.mxu0 0.0
    %869 = vmatprep.subr.mxu0 0.0
    %870 = vmatpush2.msra.mxu0 0.0
    %871 = vmatprep.subr.mxu0 0.0
    %872 = vmatpush2.msra.mxu0 0.0
    %873 = vmatprep.subr.mxu0 0.0
    %874 = vmatpush2.msra.mxu0 0.0
    %875 = vmatprep.subr.mxu0 0.0
    %876 = vmatpush2.msra.mxu0 0.0
    %877 = vmatprep.subr.mxu0 0.0
    %878 = vmatpush2.msra.mxu0 0.0
    %879 = vmatprep.subr.mxu0 0.0
    %880 = vmatpush2.msra.mxu0 0.0
    %881 = vmatprep.subr.mxu0 0.0
    %882 = vmatpush2.msra.mxu0 0.0
    %883 = vmatprep.subr.mxu0 0.0
    %884 = vmatpush2.msra.mxu0 0.0
    %885 = vmatprep.subr.mxu0 0.0
    %886 = vmatpush2.msra.mxu0 0.0
    %887 = vmatprep.subr.mxu0 0.0
    %888 = vmatpush2.msra.mxu0 0.0
    %889 = vmatprep.mubr.f32.mxu0 0.0
    %890 = vmatmul.mubr.f32.gmra.mxu0 %v800
    %v891 = vpop.f32.mrf.mxu0
    %v892 = vadd.f32 %v823, %v891
    %v893 = vpop.f32.mrf.mxu0
    %894 = vmatprep.mubr.f32.mxu0 0.0
    %895 = vmatmul.mubr.f32.gmra.mxu0 %v801
    %v896 = vpop.f32.mrf.mxu0
    %v897 = vadd.f32 %v823, %v896
    %v898 = vpop.f32.mrf.mxu0
    %899 = vdwg.mxu0
    %vm900 = vcmp.ge.f32.partialorder %v892, 0.0
    %vm901 = vcmp.ge.f32.partialorder %v897, 0.0
    %v902 = vmul.f32 %v892, 0.01
    %v903 = vmul.f32 %v897, 0.01
    %v904 = vsel %vm900, %v892, %v902
    %v905 = vsel %vm901, %v897, %v903
    %v906 = vld [vmem:[#allocation7] sm:$0xff]
    %v907 = vld [vmem:[#allocation7 + $0x8] sm:$0xff]
    %v908 = vld [vmem:[#allocation8] sm:$0x1]
    %v910 = vlaneseq
    %v911 = vshrl.u32 %v910, 7
    %v912 = vsub.s32 0, %v911
    %v913 = vrot.slane %v908, %v912
    %v916 = vsel %vm572, %v615, 0
    %v919 = vsel %vm572, %v616, 0
    %921 = vmatprep.subr.mxu0 0.0
    %922 = vmatpush1.msra.mxu0 0.0
    %923 = vmatprep.subr.mxu0 0.0
    %924 = vmatpush1.msra.mxu0 0.0
    %925 = vmatprep.subr.mxu0 0.0
    %926 = vmatpush1.msra.mxu0 0.0
    %927 = vmatprep.subr.mxu0 0.0
    %928 = vmatpush1.msra.mxu0 0.0
    %929 = vmatprep.subr.mxu0 0.0
    %930 = vmatpush1.msra.mxu0 0.0
    %931 = vmatprep.subr.mxu0 0.0
    %932 = vmatpush1.msra.mxu0 0.0
    %933 = vmatprep.subr.mxu0 0.0
    %934 = vmatpush1.msra.mxu0 0.0
    %935 = vmatprep.subr.mxu0 0.0
    %936 = vmatpush1.msra.mxu0 0.0
    %937 = vmatprep.subr.mxu0 0.0
    %938 = vmatpush1.msra.mxu0 0.0
    %939 = vmatprep.subr.mxu0 0.0
    %940 = vmatpush1.msra.mxu0 0.0
    %941 = vmatprep.subr.mxu0 0.0
    %942 = vmatpush1.msra.mxu0 0.0
    %943 = vmatprep.subr.mxu0 0.0
    %944 = vmatpush1.msra.mxu0 0.0
    %945 = vmatprep.subr.mxu0 0.0
    %946 = vmatpush1.msra.mxu0 0.0
    %947 = vmatprep.subr.mxu0 0.0
    %948 = vmatpush1.msra.mxu0 0.0
    %949 = vmatprep.subr.mxu0 0.0
    %950 = vmatpush1.msra.mxu0 %v907
    %951 = vmatprep.subr.mxu0 0.0
    %952 = vmatpush1.msra.mxu0 %v906
    %953 = vmatprep.subr.mxu0 0.0
    %954 = vmatpush2.msra.mxu0 0.0
    %955 = vmatprep.subr.mxu0 0.0
    %956 = vmatpush2.msra.mxu0 0.0
    %957 = vmatprep.subr.mxu0 0.0
    %958 = vmatpush2.msra.mxu0 0.0
    %959 = vmatprep.subr.mxu0 0.0
    %960 = vmatpush2.msra.mxu0 0.0
    %961 = vmatprep.subr.mxu0 0.0
    %962 = vmatpush2.msra.mxu0 0.0
    %963 = vmatprep.subr.mxu0 0.0
    %964 = vmatpush2.msra.mxu0 0.0
    %965 = vmatprep.subr.mxu0 0.0
    %966 = vmatpush2.msra.mxu0 0.0
    %967 = vmatprep.subr.mxu0 0.0
    %968 = vmatpush2.msra.mxu0 0.0
    %969 = vmatprep.subr.mxu0 0.0
    %970 = vmatpush2.msra.mxu0 0.0
    %971 = vmatprep.subr.mxu0 0.0
    %972 = vmatpush2.msra.mxu0 0.0
    %973 = vmatprep.subr.mxu0 0.0
    %974 = vmatpush2.msra.mxu0 0.0
    %975 = vmatprep.subr.mxu0 0.0
    %976 = vmatpush2.msra.mxu0 0.0
    %977 = vmatprep.subr.mxu0 0.0
    %978 = vmatpush2.msra.mxu0 0.0
    %979 = vmatprep.subr.mxu0 0.0
    %980 = vmatpush2.msra.mxu0 0.0
    %981 = vmatprep.subr.mxu0 0.0
    %982 = vmatpush2.msra.mxu0 0.0
    %983 = vmatprep.subr.mxu0 0.0
    %984 = vmatpush2.msra.mxu0 0.0
    %985 = vmatprep.mubr.f32.mxu0 0.0
    %986 = vmatmul.mubr.f32.gmra.mxu0 %v916
    %v987 = vpop.f32.mrf.mxu0
    %v988 = vadd.f32 %v913, %v987
    %v989 = vpop.f32.mrf.mxu0
    %990 = vmatprep.mubr.f32.mxu0 0.0
    %991 = vmatmul.mubr.f32.gmra.mxu0 %v919
    %v992 = vpop.f32.mrf.mxu0
    %v993 = vadd.f32 %v913, %v992
    %v994 = vpop.f32.mrf.mxu0
    %995 = vdwg.mxu0
    %vm996 = vcmp.ge.f32.partialorder %v988, 0.0
    %vm997 = vcmp.ge.f32.partialorder %v993, 0.0
    %v998 = vmul.f32 %v988, 0.01
    %v999 = vmul.f32 %v993, 0.01
    %v1000 = vsel %vm996, %v988, %v998
    %v1001 = vsel %vm997, %v993, %v999
    %v1002 = vld [vmem:[%s25] sm:$0xff]
    %v1003 = vld [vmem:[%s25 + $0x8] sm:$0xff]
    %v1004 = vld [vmem:[%s25 + $0x10] sm:$0xff]
    %v1005 = vld [vmem:[%s25 + $0x18] sm:$0xff]
    %v1006 = vld [vmem:[%s25 + $0x20] sm:$0xff]
    %v1007 = vld [vmem:[%s25 + $0x28] sm:$0xff]
    %v1008 = vld [vmem:[%s25 + $0x30] sm:$0xff]
    %v1009 = vld [vmem:[%s25 + $0x38] sm:$0xff]
    %v1010 = vld [vmem:[%s25 + $0x40] sm:$0xff]
    %v1011 = vld [vmem:[%s25 + $0x48] sm:$0xff]
    %v1012 = vld [vmem:[%s25 + $0x50] sm:$0xff]
    %v1013 = vld [vmem:[%s25 + $0x58] sm:$0xff]
    %v1014 = vld [vmem:[%s25 + $0x60] sm:$0xff]
    %v1015 = vld [vmem:[%s25 + $0x68] sm:$0xff]
    %v1016 = vld [vmem:[%s25 + $0x70] sm:$0xff]
    %v1017 = vld [vmem:[%s25 + $0x78] sm:$0xff]
    %v1018 = vld [vmem:[#allocation10] sm:$0x1]
    %v1020 = vlaneseq
    %v1021 = vshrl.u32 %v1020, 7
    %v1022 = vsub.s32 0, %v1021
    %v1023 = vrot.slane %v1018, %v1022
    %1025 = vmatprep.subr.mxu0 0.0
    %1026 = vmatpush1.msra.mxu0 %v1017
    %1027 = vmatprep.subr.mxu0 0.0
    %1028 = vmatpush1.msra.mxu0 %v1016
    %1029 = vmatprep.subr.mxu0 0.0
    %1030 = vmatpush1.msra.mxu0 %v1015
    %1031 = vmatprep.subr.mxu0 0.0
    %1032 = vmatpush1.msra.mxu0 %v1014
    %1033 = vmatprep.subr.mxu0 0.0
    %1034 = vmatpush1.msra.mxu0 %v1013
    %1035 = vmatprep.subr.mxu0 0.0
    %1036 = vmatpush1.msra.mxu0 %v1012
    %1037 = vmatprep.subr.mxu0 0.0
    %1038 = vmatpush1.msra.mxu0 %v1011
    %1039 = vmatprep.subr.mxu0 0.0
    %1040 = vmatpush1.msra.mxu0 %v1010
    %1041 = vmatprep.subr.mxu0 0.0
    %1042 = vmatpush1.msra.mxu0 %v1009
    %1043 = vmatprep.subr.mxu0 0.0
    %1044 = vmatpush1.msra.mxu0 %v1008
    %1045 = vmatprep.subr.mxu0 0.0
    %1046 = vmatpush1.msra.mxu0 %v1007
    %1047 = vmatprep.subr.mxu0 0.0
    %1048 = vmatpush1.msra.mxu0 %v1006
    %1049 = vmatprep.subr.mxu0 0.0
    %1050 = vmatpush1.msra.mxu0 %v1005
    %1051 = vmatprep.subr.mxu0 0.0
    %1052 = vmatpush1.msra.mxu0 %v1004
    %1053 = vmatprep.subr.mxu0 0.0
    %1054 = vmatpush1.msra.mxu0 %v1003
    %1055 = vmatprep.subr.mxu0 0.0
    %1056 = vmatpush1.msra.mxu0 %v1002
    %1057 = vmatprep.subr.mxu0 0.0
    %1058 = vmatpush2.msra.mxu0 0.0
    %1059 = vmatprep.subr.mxu0 0.0
    %1060 = vmatpush2.msra.mxu0 0.0
    %1061 = vmatprep.subr.mxu0 0.0
    %1062 = vmatpush2.msra.mxu0 0.0
    %1063 = vmatprep.subr.mxu0 0.0
    %1064 = vmatpush2.msra.mxu0 0.0
    %1065 = vmatprep.subr.mxu0 0.0
    %1066 = vmatpush2.msra.mxu0 0.0
    %1067 = vmatprep.subr.mxu0 0.0
    %1068 = vmatpush2.msra.mxu0 0.0
    %1069 = vmatprep.subr.mxu0 0.0
    %1070 = vmatpush2.msra.mxu0 0.0
    %1071 = vmatprep.subr.mxu0 0.0
    %1072 = vmatpush2.msra.mxu0 0.0
    %1073 = vmatprep.subr.mxu0 0.0
    %1074 = vmatpush2.msra.mxu0 0.0
    %1075 = vmatprep.subr.mxu0 0.0
    %1076 = vmatpush2.msra.mxu0 0.0
    %1077 = vmatprep.subr.mxu0 0.0
    %1078 = vmatpush2.msra.mxu0 0.0
    %1079 = vmatprep.subr.mxu0 0.0
    %1080 = vmatpush2.msra.mxu0 0.0
    %1081 = vmatprep.subr.mxu0 0.0
    %1082 = vmatpush2.msra.mxu0 0.0
    %1083 = vmatprep.subr.mxu0 0.0
    %1084 = vmatpush2.msra.mxu0 0.0
    %1085 = vmatprep.subr.mxu0 0.0
    %1086 = vmatpush2.msra.mxu0 0.0
    %1087 = vmatprep.subr.mxu0 0.0
    %1088 = vmatpush2.msra.mxu0 0.0
    %1089 = vmatprep.mubr.f32.mxu0 0.0
    %1090 = vmatmul.mubr.f32.gmra.mxu0 %v904
    %v1091 = vpop.f32.mrf.mxu0
    %v1092 = vadd.f32 %v1023, %v1091
    %v1093 = vpop.f32.mrf.mxu0
    %1094 = vmatprep.mubr.f32.mxu0 0.0
    %1095 = vmatmul.mubr.f32.gmra.mxu0 %v905
    %v1096 = vpop.f32.mrf.mxu0
    %v1097 = vadd.f32 %v1023, %v1096
    %v1098 = vpop.f32.mrf.mxu0
    %1099 = vdwg.mxu0
    %v1100 = vld [vmem:[%s29] sm:$0xff]
    %v1101 = vld [vmem:[%s29 + $0x8] sm:$0xff]
    %v1102 = vld [vmem:[%s29 + $0x10] sm:$0xff]
    %v1103 = vld [vmem:[%s29 + $0x18] sm:$0xff]
    %v1104 = vld [vmem:[%s29 + $0x20] sm:$0xff]
    %v1105 = vld [vmem:[%s29 + $0x28] sm:$0xff]
    %v1106 = vld [vmem:[%s29 + $0x30] sm:$0xff]
    %v1107 = vld [vmem:[%s29 + $0x38] sm:$0xff]
    %v1108 = vld [vmem:[%s29 + $0x40] sm:$0xff]
    %v1109 = vld [vmem:[%s29 + $0x48] sm:$0xff]
    %v1110 = vld [vmem:[%s29 + $0x50] sm:$0xff]
    %v1111 = vld [vmem:[%s29 + $0x58] sm:$0xff]
    %v1112 = vld [vmem:[%s29 + $0x60] sm:$0xff]
    %v1113 = vld [vmem:[%s29 + $0x68] sm:$0xff]
    %v1114 = vld [vmem:[%s29 + $0x70] sm:$0xff]
    %v1115 = vld [vmem:[%s29 + $0x78] sm:$0xff]
    %v1116 = vld [vmem:[#allocation11] sm:$0x1]
    %v1118 = vlaneseq
    %v1119 = vshrl.u32 %v1118, 7
    %v1120 = vsub.s32 0, %v1119
    %v1121 = vrot.slane %v1116, %v1120
    %1123 = vmatprep.subr.mxu0 0.0
    %1124 = vmatpush1.msra.mxu0 %v1115
    %1125 = vmatprep.subr.mxu0 0.0
    %1126 = vmatpush1.msra.mxu0 %v1114
    %1127 = vmatprep.subr.mxu0 0.0
    %1128 = vmatpush1.msra.mxu0 %v1113
    %1129 = vmatprep.subr.mxu0 0.0
    %1130 = vmatpush1.msra.mxu0 %v1112
    %1131 = vmatprep.subr.mxu0 0.0
    %1132 = vmatpush1.msra.mxu0 %v1111
    %1133 = vmatprep.subr.mxu0 0.0
    %1134 = vmatpush1.msra.mxu0 %v1110
    %1135 = vmatprep.subr.mxu0 0.0
    %1136 = vmatpush1.msra.mxu0 %v1109
    %1137 = vmatprep.subr.mxu0 0.0
    %1138 = vmatpush1.msra.mxu0 %v1108
    %1139 = vmatprep.subr.mxu0 0.0
    %1140 = vmatpush1.msra.mxu0 %v1107
    %1141 = vmatprep.subr.mxu0 0.0
    %1142 = vmatpush1.msra.mxu0 %v1106
    %1143 = vmatprep.subr.mxu0 0.0
    %1144 = vmatpush1.msra.mxu0 %v1105
    %1145 = vmatprep.subr.mxu0 0.0
    %1146 = vmatpush1.msra.mxu0 %v1104
    %1147 = vmatprep.subr.mxu0 0.0
    %1148 = vmatpush1.msra.mxu0 %v1103
    %1149 = vmatprep.subr.mxu0 0.0
    %1150 = vmatpush1.msra.mxu0 %v1102
    %1151 = vmatprep.subr.mxu0 0.0
    %1152 = vmatpush1.msra.mxu0 %v1101
    %1153 = vmatprep.subr.mxu0 0.0
    %1154 = vmatpush1.msra.mxu0 %v1100
    %1155 = vmatprep.subr.mxu0 0.0
    %1156 = vmatpush2.msra.mxu0 0.0
    %1157 = vmatprep.subr.mxu0 0.0
    %1158 = vmatpush2.msra.mxu0 0.0
    %1159 = vmatprep.subr.mxu0 0.0
    %1160 = vmatpush2.msra.mxu0 0.0
    %1161 = vmatprep.subr.mxu0 0.0
    %1162 = vmatpush2.msra.mxu0 0.0
    %1163 = vmatprep.subr.mxu0 0.0
    %1164 = vmatpush2.msra.mxu0 0.0
    %1165 = vmatprep.subr.mxu0 0.0
    %1166 = vmatpush2.msra.mxu0 0.0
    %1167 = vmatprep.subr.mxu0 0.0
    %1168 = vmatpush2.msra.mxu0 0.0
    %1169 = vmatprep.subr.mxu0 0.0
    %1170 = vmatpush2.msra.mxu0 0.0
    %1171 = vmatprep.subr.mxu0 0.0
    %1172 = vmatpush2.msra.mxu0 0.0
    %1173 = vmatprep.subr.mxu0 0.0
    %1174 = vmatpush2.msra.mxu0 0.0
    %1175 = vmatprep.subr.mxu0 0.0
    %1176 = vmatpush2.msra.mxu0 0.0
    %1177 = vmatprep.subr.mxu0 0.0
    %1178 = vmatpush2.msra.mxu0 0.0
    %1179 = vmatprep.subr.mxu0 0.0
    %1180 = vmatpush2.msra.mxu0 0.0
    %1181 = vmatprep.subr.mxu0 0.0
    %1182 = vmatpush2.msra.mxu0 0.0
    %1183 = vmatprep.subr.mxu0 0.0
    %1184 = vmatpush2.msra.mxu0 0.0
    %1185 = vmatprep.subr.mxu0 0.0
    %1186 = vmatpush2.msra.mxu0 0.0
    %1187 = vmatprep.mubr.f32.mxu0 0.0
    %1188 = vmatmul.mubr.f32.gmra.mxu0 %v904
    %v1189 = vpop.f32.mrf.mxu0
    %v1190 = vadd.f32 %v1121, %v1189
    %v1191 = vpop.f32.mrf.mxu0
    %1192 = vmatprep.mubr.f32.mxu0 0.0
    %1193 = vmatmul.mubr.f32.gmra.mxu0 %v905
    %v1194 = vpop.f32.mrf.mxu0
    %v1195 = vadd.f32 %v1121, %v1194
    %v1196 = vpop.f32.mrf.mxu0
    %1197 = vdwg.mxu0
    %v1198 = vld [vmem:[%s33] sm:$0xff]
    %v1199 = vld [vmem:[%s33 + $0x8] sm:$0xff]
    %v1200 = vld [vmem:[%s33 + $0x10] sm:$0xff]
    %v1201 = vld [vmem:[%s33 + $0x18] sm:$0xff]
    %v1202 = vld [vmem:[%s33 + $0x20] sm:$0xff]
    %v1203 = vld [vmem:[%s33 + $0x28] sm:$0xff]
    %v1204 = vld [vmem:[%s33 + $0x30] sm:$0xff]
    %v1205 = vld [vmem:[%s33 + $0x38] sm:$0xff]
    %v1206 = vld [vmem:[%s33 + $0x40] sm:$0xff]
    %v1207 = vld [vmem:[%s33 + $0x48] sm:$0xff]
    %v1208 = vld [vmem:[%s33 + $0x50] sm:$0xff]
    %v1209 = vld [vmem:[%s33 + $0x58] sm:$0xff]
    %v1210 = vld [vmem:[%s33 + $0x60] sm:$0xff]
    %v1211 = vld [vmem:[%s33 + $0x68] sm:$0xff]
    %v1212 = vld [vmem:[%s33 + $0x70] sm:$0xff]
    %v1213 = vld [vmem:[%s33 + $0x78] sm:$0xff]
    %v1214 = vld [vmem:[#allocation13] sm:$0x1]
    %v1216 = vlaneseq
    %v1217 = vshrl.u32 %v1216, 7
    %v1218 = vsub.s32 0, %v1217
    %v1219 = vrot.slane %v1214, %v1218
    %1221 = vmatprep.subr.mxu0 0.0
    %1222 = vmatpush1.msra.mxu0 %v1213
    %1223 = vmatprep.subr.mxu0 0.0
    %1224 = vmatpush1.msra.mxu0 %v1212
    %1225 = vmatprep.subr.mxu0 0.0
    %1226 = vmatpush1.msra.mxu0 %v1211
    %1227 = vmatprep.subr.mxu0 0.0
    %1228 = vmatpush1.msra.mxu0 %v1210
    %1229 = vmatprep.subr.mxu0 0.0
    %1230 = vmatpush1.msra.mxu0 %v1209
    %1231 = vmatprep.subr.mxu0 0.0
    %1232 = vmatpush1.msra.mxu0 %v1208
    %1233 = vmatprep.subr.mxu0 0.0
    %1234 = vmatpush1.msra.mxu0 %v1207
    %1235 = vmatprep.subr.mxu0 0.0
    %1236 = vmatpush1.msra.mxu0 %v1206
    %1237 = vmatprep.subr.mxu0 0.0
    %1238 = vmatpush1.msra.mxu0 %v1205
    %1239 = vmatprep.subr.mxu0 0.0
    %1240 = vmatpush1.msra.mxu0 %v1204
    %1241 = vmatprep.subr.mxu0 0.0
    %1242 = vmatpush1.msra.mxu0 %v1203
    %1243 = vmatprep.subr.mxu0 0.0
    %1244 = vmatpush1.msra.mxu0 %v1202
    %1245 = vmatprep.subr.mxu0 0.0
    %1246 = vmatpush1.msra.mxu0 %v1201
    %1247 = vmatprep.subr.mxu0 0.0
    %1248 = vmatpush1.msra.mxu0 %v1200
    %1249 = vmatprep.subr.mxu0 0.0
    %1250 = vmatpush1.msra.mxu0 %v1199
    %1251 = vmatprep.subr.mxu0 0.0
    %1252 = vmatpush1.msra.mxu0 %v1198
    %1253 = vmatprep.subr.mxu0 0.0
    %1254 = vmatpush2.msra.mxu0 0.0
    %1255 = vmatprep.subr.mxu0 0.0
    %1256 = vmatpush2.msra.mxu0 0.0
    %1257 = vmatprep.subr.mxu0 0.0
    %1258 = vmatpush2.msra.mxu0 0.0
    %1259 = vmatprep.subr.mxu0 0.0
    %1260 = vmatpush2.msra.mxu0 0.0
    %1261 = vmatprep.subr.mxu0 0.0
    %1262 = vmatpush2.msra.mxu0 0.0
    %1263 = vmatprep.subr.mxu0 0.0
    %1264 = vmatpush2.msra.mxu0 0.0
    %1265 = vmatprep.subr.mxu0 0.0
    %1266 = vmatpush2.msra.mxu0 0.0
    %1267 = vmatprep.subr.mxu0 0.0
    %1268 = vmatpush2.msra.mxu0 0.0
    %1269 = vmatprep.subr.mxu0 0.0
    %1270 = vmatpush2.msra.mxu0 0.0
    %1271 = vmatprep.subr.mxu0 0.0
    %1272 = vmatpush2.msra.mxu0 0.0
    %1273 = vmatprep.subr.mxu0 0.0
    %1274 = vmatpush2.msra.mxu0 0.0
    %1275 = vmatprep.subr.mxu0 0.0
    %1276 = vmatpush2.msra.mxu0 0.0
    %1277 = vmatprep.subr.mxu0 0.0
    %1278 = vmatpush2.msra.mxu0 0.0
    %1279 = vmatprep.subr.mxu0 0.0
    %1280 = vmatpush2.msra.mxu0 0.0
    %1281 = vmatprep.subr.mxu0 0.0
    %1282 = vmatpush2.msra.mxu0 0.0
    %1283 = vmatprep.subr.mxu0 0.0
    %1284 = vmatpush2.msra.mxu0 0.0
    %1285 = vmatprep.mubr.f32.mxu0 0.0
    %1286 = vmatmul.mubr.f32.gmra.mxu0 %v904
    %v1287 = vpop.f32.mrf.mxu0
    %v1288 = vadd.f32 %v1219, %v1287
    %v1289 = vpop.f32.mrf.mxu0
    %1290 = vmatprep.mubr.f32.mxu0 0.0
    %1291 = vmatmul.mubr.f32.gmra.mxu0 %v905
    %v1292 = vpop.f32.mrf.mxu0
    %v1293 = vadd.f32 %v1219, %v1292
    %v1294 = vpop.f32.mrf.mxu0
    %1295 = vdwg.mxu0
    %v1296 = vld [vmem:[#allocation17] sm:$0xff]
    %v1297 = vld [vmem:[#allocation17 + $0x8] sm:$0xff]
    %v1298 = vld [vmem:[#allocation19] sm:$0x1]
    %v1300 = vlaneseq
    %v1301 = vshrl.u32 %v1300, 7
    %v1302 = vsub.s32 0, %v1301
    %v1303 = vrot.slane %v1298, %v1302
    %v1306 = vsel %vm572, %v1000, 0
    %v1309 = vsel %vm572, %v1001, 0
    %1311 = vmatprep.subr.mxu0 0.0
    %1312 = vmatpush1.msra.mxu0 0.0
    %1313 = vmatprep.subr.mxu0 0.0
    %1314 = vmatpush1.msra.mxu0 0.0
    %1315 = vmatprep.subr.mxu0 0.0
    %1316 = vmatpush1.msra.mxu0 0.0
    %1317 = vmatprep.subr.mxu0 0.0
    %1318 = vmatpush1.msra.mxu0 0.0
    %1319 = vmatprep.subr.mxu0 0.0
    %1320 = vmatpush1.msra.mxu0 0.0
    %1321 = vmatprep.subr.mxu0 0.0
    %1322 = vmatpush1.msra.mxu0 0.0
    %1323 = vmatprep.subr.mxu0 0.0
    %1324 = vmatpush1.msra.mxu0 0.0
    %1325 = vmatprep.subr.mxu0 0.0
    %1326 = vmatpush1.msra.mxu0 0.0
    %1327 = vmatprep.subr.mxu0 0.0
    %1328 = vmatpush1.msra.mxu0 0.0
    %1329 = vmatprep.subr.mxu0 0.0
    %1330 = vmatpush1.msra.mxu0 0.0
    %1331 = vmatprep.subr.mxu0 0.0
    %1332 = vmatpush1.msra.mxu0 0.0
    %1333 = vmatprep.subr.mxu0 0.0
    %1334 = vmatpush1.msra.mxu0 0.0
    %1335 = vmatprep.subr.mxu0 0.0
    %1336 = vmatpush1.msra.mxu0 0.0
    %1337 = vmatprep.subr.mxu0 0.0
    %1338 = vmatpush1.msra.mxu0 0.0
    %1339 = vmatprep.subr.mxu0 0.0
    %1340 = vmatpush1.msra.mxu0 %v1297
    %1341 = vmatprep.subr.mxu0 0.0
    %1342 = vmatpush1.msra.mxu0 %v1296
    %1343 = vmatprep.subr.mxu0 0.0
    %1344 = vmatpush2.msra.mxu0 0.0
    %1345 = vmatprep.subr.mxu0 0.0
    %1346 = vmatpush2.msra.mxu0 0.0
    %1347 = vmatprep.subr.mxu0 0.0
    %1348 = vmatpush2.msra.mxu0 0.0
    %1349 = vmatprep.subr.mxu0 0.0
    %1350 = vmatpush2.msra.mxu0 0.0
    %1351 = vmatprep.subr.mxu0 0.0
    %1352 = vmatpush2.msra.mxu0 0.0
    %1353 = vmatprep.subr.mxu0 0.0
    %1354 = vmatpush2.msra.mxu0 0.0
    %1355 = vmatprep.subr.mxu0 0.0
    %1356 = vmatpush2.msra.mxu0 0.0
    %1357 = vmatprep.subr.mxu0 0.0
    %1358 = vmatpush2.msra.mxu0 0.0
    %1359 = vmatprep.subr.mxu0 0.0
    %1360 = vmatpush2.msra.mxu0 0.0
    %1361 = vmatprep.subr.mxu0 0.0
    %1362 = vmatpush2.msra.mxu0 0.0
    %1363 = vmatprep.subr.mxu0 0.0
    %1364 = vmatpush2.msra.mxu0 0.0
    %1365 = vmatprep.subr.mxu0 0.0
    %1366 = vmatpush2.msra.mxu0 0.0
    %1367 = vmatprep.subr.mxu0 0.0
    %1368 = vmatpush2.msra.mxu0 0.0
    %1369 = vmatprep.subr.mxu0 0.0
    %1370 = vmatpush2.msra.mxu0 0.0
    %1371 = vmatprep.subr.mxu0 0.0
    %1372 = vmatpush2.msra.mxu0 0.0
    %1373 = vmatprep.subr.mxu0 0.0
    %1374 = vmatpush2.msra.mxu0 0.0
    %1375 = vmatprep.mubr.f32.mxu0 0.0
    %1376 = vmatmul.mubr.f32.gmra.mxu0 %v1306
    %v1377 = vpop.f32.mrf.mxu0
    %v1378 = vadd.f32 %v1303, %v1377
    %v1379 = vpop.f32.mrf.mxu0
    %1380 = vmatprep.mubr.f32.mxu0 0.0
    %1381 = vmatmul.mubr.f32.gmra.mxu0 %v1309
    %v1382 = vpop.f32.mrf.mxu0
    %v1383 = vadd.f32 %v1303, %v1382
    %v1384 = vpop.f32.mrf.mxu0
    %1385 = vdwg.mxu0
    %v1386 = vxor.u32 %v1378, 2147483648
    %v1387 = vxor.u32 %v1383, 2147483648
    %v1388 = vmul.f32 %v1386, 1.442695
    %v1389 = vpow.pop %v1388
    %v1390 = vmul.f32 %v1387, 1.442695
    %v1391 = vpow.pop %v1390
    %v1392 = vadd.f32 %v1389, 1.0
    %v1393 = vadd.f32 %v1391, 1.0
    %v1394 = vrcp.pop %v1392
    %v1395 = vmul.f32 1.0, %v1394
    %v1396 = vrcp.pop %v1393
    %v1397 = vmul.f32 1.0, %v1396
    %v1398 = vld [vmem:[#allocation14] sm:$0xff]
    %v1399 = vld [vmem:[#allocation14 + $0x8] sm:$0xff]
    %v1400 = vld [vmem:[#allocation16] sm:$0x1]
    %v1402 = vlaneseq
    %v1403 = vshrl.u32 %v1402, 7
    %v1404 = vsub.s32 0, %v1403
    %v1405 = vrot.slane %v1400, %v1404
    %1407 = vmatprep.subr.mxu0 0.0
    %1408 = vmatpush1.msra.mxu0 0.0
    %1409 = vmatprep.subr.mxu0 0.0
    %1410 = vmatpush1.msra.mxu0 0.0
    %1411 = vmatprep.subr.mxu0 0.0
    %1412 = vmatpush1.msra.mxu0 0.0
    %1413 = vmatprep.subr.mxu0 0.0
    %1414 = vmatpush1.msra.mxu0 0.0
    %1415 = vmatprep.subr.mxu0 0.0
    %1416 = vmatpush1.msra.mxu0 0.0
    %1417 = vmatprep.subr.mxu0 0.0
    %1418 = vmatpush1.msra.mxu0 0.0
    %1419 = vmatprep.subr.mxu0 0.0
    %1420 = vmatpush1.msra.mxu0 0.0
    %1421 = vmatprep.subr.mxu0 0.0
    %1422 = vmatpush1.msra.mxu0 0.0
    %1423 = vmatprep.subr.mxu0 0.0
    %1424 = vmatpush1.msra.mxu0 0.0
    %1425 = vmatprep.subr.mxu0 0.0
    %1426 = vmatpush1.msra.mxu0 0.0
    %1427 = vmatprep.subr.mxu0 0.0
    %1428 = vmatpush1.msra.mxu0 0.0
    %1429 = vmatprep.subr.mxu0 0.0
    %1430 = vmatpush1.msra.mxu0 0.0
    %1431 = vmatprep.subr.mxu0 0.0
    %1432 = vmatpush1.msra.mxu0 0.0
    %1433 = vmatprep.subr.mxu0 0.0
    %1434 = vmatpush1.msra.mxu0 0.0
    %1435 = vmatprep.subr.mxu0 0.0
    %1436 = vmatpush1.msra.mxu0 %v1399
    %1437 = vmatprep.subr.mxu0 0.0
    %1438 = vmatpush1.msra.mxu0 %v1398
    %1439 = vmatprep.subr.mxu0 0.0
    %1440 = vmatpush2.msra.mxu0 0.0
    %1441 = vmatprep.subr.mxu0 0.0
    %1442 = vmatpush2.msra.mxu0 0.0
    %1443 = vmatprep.subr.mxu0 0.0
    %1444 = vmatpush2.msra.mxu0 0.0
    %1445 = vmatprep.subr.mxu0 0.0
    %1446 = vmatpush2.msra.mxu0 0.0
    %1447 = vmatprep.subr.mxu0 0.0
    %1448 = vmatpush2.msra.mxu0 0.0
    %1449 = vmatprep.subr.mxu0 0.0
    %1450 = vmatpush2.msra.mxu0 0.0
    %1451 = vmatprep.subr.mxu0 0.0
    %1452 = vmatpush2.msra.mxu0 0.0
    %1453 = vmatprep.subr.mxu0 0.0
    %1454 = vmatpush2.msra.mxu0 0.0
    %1455 = vmatprep.subr.mxu0 0.0
    %1456 = vmatpush2.msra.mxu0 0.0
    %1457 = vmatprep.subr.mxu0 0.0
    %1458 = vmatpush2.msra.mxu0 0.0
    %1459 = vmatprep.subr.mxu0 0.0
    %1460 = vmatpush2.msra.mxu0 0.0
    %1461 = vmatprep.subr.mxu0 0.0
    %1462 = vmatpush2.msra.mxu0 0.0
    %1463 = vmatprep.subr.mxu0 0.0
    %1464 = vmatpush2.msra.mxu0 0.0
    %1465 = vmatprep.subr.mxu0 0.0
    %1466 = vmatpush2.msra.mxu0 0.0
    %1467 = vmatprep.subr.mxu0 0.0
    %1468 = vmatpush2.msra.mxu0 0.0
    %1469 = vmatprep.subr.mxu0 0.0
    %1470 = vmatpush2.msra.mxu0 0.0
    %1471 = vmatprep.mubr.f32.mxu0 0.0
    %1472 = vmatmul.mubr.f32.gmra.mxu0 %v1306
    %v1473 = vpop.f32.mrf.mxu0
    %v1474 = vadd.f32 %v1405, %v1473
    %v1475 = vpop.f32.mrf.mxu0
    %1476 = vmatprep.mubr.f32.mxu0 0.0
    %1477 = vmatmul.mubr.f32.gmra.mxu0 %v1309
    %v1478 = vpop.f32.mrf.mxu0
    %v1479 = vadd.f32 %v1405, %v1478
    %v1480 = vpop.f32.mrf.mxu0
    %1481 = vdwg.mxu0
    %1482 = vmatprep.subr.mxu0 0.0
    %1483 = vmatpush1.xpose.msra.mxu0 0.0
    %1484 = vmatprep.subr.mxu0 0.0
    %1485 = vmatpush1.xpose.msra.mxu0 0.0
    %1486 = vmatprep.subr.mxu0 0.0
    %1487 = vmatpush1.xpose.msra.mxu0 0.0
    %1488 = vmatprep.subr.mxu0 0.0
    %1489 = vmatpush1.xpose.msra.mxu0 0.0
    %1490 = vmatprep.subr.mxu0 0.0
    %1491 = vmatpush1.xpose.msra.mxu0 0.0
    %1492 = vmatprep.subr.mxu0 0.0
    %1493 = vmatpush1.xpose.msra.mxu0 0.0
    %1494 = vmatprep.subr.mxu0 0.0
    %1495 = vmatpush1.xpose.msra.mxu0 0.0
    %1496 = vmatprep.subr.mxu0 0.0
    %1497 = vmatpush1.xpose.msra.mxu0 0.0
    %1498 = vmatprep.subr.mxu0 0.0
    %1499 = vmatpush1.xpose.msra.mxu0 0.0
    %1500 = vmatprep.subr.mxu0 0.0
    %1501 = vmatpush1.xpose.msra.mxu0 0.0
    %1502 = vmatprep.subr.mxu0 0.0
    %1503 = vmatpush1.xpose.msra.mxu0 0.0
    %1504 = vmatprep.subr.mxu0 0.0
    %1505 = vmatpush1.xpose.msra.mxu0 0.0
    %1506 = vmatprep.subr.mxu0 0.0
    %1507 = vmatpush1.xpose.msra.mxu0 0.0
    %1508 = vmatprep.subr.mxu0 0.0
    %1509 = vmatpush1.xpose.msra.mxu0 0.0
    %1510 = vmatprep.subr.mxu0 0.0
    %1511 = vmatpush1.xpose.msra.mxu0 %v1195
    %1512 = vmatprep.subr.mxu0 0.0
    %1513 = vmatpush1.xpose.msra.mxu0 %v1190
    %1514 = vmatprep.subr.mxu0 0.0
    %1515 = vmatpush2.xpose.msra.mxu0 0.0
    %1516 = vmatprep.subr.mxu0 0.0
    %1517 = vmatpush2.xpose.msra.mxu0 0.0
    %1518 = vmatprep.subr.mxu0 0.0
    %1519 = vmatpush2.xpose.msra.mxu0 0.0
    %1520 = vmatprep.subr.mxu0 0.0
    %1521 = vmatpush2.xpose.msra.mxu0 0.0
    %1522 = vmatprep.subr.mxu0 0.0
    %1523 = vmatpush2.xpose.msra.mxu0 0.0
    %1524 = vmatprep.subr.mxu0 0.0
    %1525 = vmatpush2.xpose.msra.mxu0 0.0
    %1526 = vmatprep.subr.mxu0 0.0
    %1527 = vmatpush2.xpose.msra.mxu0 0.0
    %1528 = vmatprep.subr.mxu0 0.0
    %1529 = vmatpush2.xpose.msra.mxu0 0.0
    %1530 = vmatprep.subr.mxu0 0.0
    %1531 = vmatpush2.xpose.msra.mxu0 0.0
    %1532 = vmatprep.subr.mxu0 0.0
    %1533 = vmatpush2.xpose.msra.mxu0 0.0
    %1534 = vmatprep.subr.mxu0 0.0
    %1535 = vmatpush2.xpose.msra.mxu0 0.0
    %1536 = vmatprep.subr.mxu0 0.0
    %1537 = vmatpush2.xpose.msra.mxu0 0.0
    %1538 = vmatprep.subr.mxu0 0.0
    %1539 = vmatpush2.xpose.msra.mxu0 0.0
    %1540 = vmatprep.subr.mxu0 0.0
    %1541 = vmatpush2.xpose.msra.mxu0 0.0
    %1542 = vmatprep.subr.mxu0 0.0
    %1543 = vmatpush2.xpose.msra.mxu0 0.0
    %1544 = vmatprep.subr.mxu0 0.0
    %1545 = vmatpush2.xpose.msra.mxu0 0.0
    %1546 = vmatprep.mubr.f32.mxu0 0.0
    %1547 = vmatmul.mubr.f32.gmra.mxu0 %v1092
    %v1548 = vpop.f32.mrf.mxu0
    %v1549 = vadd.f32 0.0, %v1548
    %v1550 = vpop.f32.mrf.mxu0
    %1551 = vmatprep.mubr.f32.mxu0 0.0
    %1552 = vmatmul.mubr.f32.gmra.mxu0 %v1097
    %v1553 = vpop.f32.mrf.mxu0
    %v1554 = vadd.f32 0.0, %v1553
    %v1555 = vpop.f32.mrf.mxu0
    %1556 = vdwg.mxu0
    %v1557 = vmul.f32 %v1549, 0.088388346
    %v1558 = vmul.f32 %v1554, 0.088388346
    %v1559 = vadd.f32 %v1557, %v1474
    %v1560 = vadd.f32 %v1558, %v1479
    %v1561 = vsel %vm572, %v1559, -inf
    %1562 = vmax.xlane.f32.xlu0 %v1561
    %v1563 = vpop.xlane.xlu0 %1562
    %v1564 = vsel %vm572, %v1560, -inf
    %1565 = vmax.xlane.f32.xlu0 %v1564
    %v1566 = vpop.xlane.xlu0 %1565
    %v1567 = vsub.f32 %v1559, %v1563
    %v1568 = vsub.f32 %v1560, %v1566
    %v1569 = vmul.f32 %v1567, 1.442695
    %v1570 = vpow.pop %v1569
    %v1571 = vmul.f32 %v1568, 1.442695
    %v1572 = vpow.pop %v1571
    %v1573 = vsel %vm572, %v1570, 0.0
    %1574 = vadd.xlane.f32.xlu0 %v1573
    %v1575 = vpop.xlane.xlu0 %1574
    %v1576 = vsel %vm572, %v1572, 0.0
    %1577 = vadd.xlane.f32.xlu0 %v1576
    %v1578 = vpop.xlane.xlu0 %1577
    %v1579 = vrcp.pop %v1575
    %v1580 = vrcp.pop %v1578
    %v1581 = vmul.f32 %v1570, %v1579
    %v1582 = vmul.f32 %v1572, %v1580
    %v1583 = vmul.f32 %v1395, %v1581
    %v1584 = vmul.f32 %v1397, %v1582
    %v1586 = vsel %vm572, %v1583, 0
    %v1589 = vsel %vm572, %v1584, 0
    %1591 = vmatprep.subr.mxu0 0.0
    %1592 = vmatpush1.msra.mxu0 0.0
    %1593 = vmatprep.subr.mxu0 0.0
    %1594 = vmatpush1.msra.mxu0 0.0
    %1595 = vmatprep.subr.mxu0 0.0
    %1596 = vmatpush1.msra.mxu0 0.0
    %1597 = vmatprep.subr.mxu0 0.0
    %1598 = vmatpush1.msra.mxu0 0.0
    %1599 = vmatprep.subr.mxu0 0.0
    %1600 = vmatpush1.msra.mxu0 0.0
    %1601 = vmatprep.subr.mxu0 0.0
    %1602 = vmatpush1.msra.mxu0 0.0
    %1603 = vmatprep.subr.mxu0 0.0
    %1604 = vmatpush1.msra.mxu0 0.0
    %1605 = vmatprep.subr.mxu0 0.0
    %1606 = vmatpush1.msra.mxu0 0.0
    %1607 = vmatprep.subr.mxu0 0.0
    %1608 = vmatpush1.msra.mxu0 0.0
    %1609 = vmatprep.subr.mxu0 0.0
    %1610 = vmatpush1.msra.mxu0 0.0
    %1611 = vmatprep.subr.mxu0 0.0
    %1612 = vmatpush1.msra.mxu0 0.0
    %1613 = vmatprep.subr.mxu0 0.0
    %1614 = vmatpush1.msra.mxu0 0.0
    %1615 = vmatprep.subr.mxu0 0.0
    %1616 = vmatpush1.msra.mxu0 0.0
    %1617 = vmatprep.subr.mxu0 0.0
    %1618 = vmatpush1.msra.mxu0 0.0
    %1619 = vmatprep.subr.mxu0 0.0
    %1620 = vmatpush1.msra.mxu0 %v1293
    %1621 = vmatprep.subr.mxu0 0.0
    %1622 = vmatpush1.msra.mxu0 %v1288
    %1623 = vmatprep.subr.mxu0 0.0
    %1624 = vmatpush2.msra.mxu0 0.0
    %1625 = vmatprep.subr.mxu0 0.0
    %1626 = vmatpush2.msra.mxu0 0.0
    %1627 = vmatprep.subr.mxu0 0.0
    %1628 = vmatpush2.msra.mxu0 0.0
    %1629 = vmatprep.subr.mxu0 0.0
    %1630 = vmatpush2.msra.mxu0 0.0
    %1631 = vmatprep.subr.mxu0 0.0
    %1632 = vmatpush2.msra.mxu0 0.0
    %1633 = vmatprep.subr.mxu0 0.0
    %1634 = vmatpush2.msra.mxu0 0.0
    %1635 = vmatprep.subr.mxu0 0.0
    %1636 = vmatpush2.msra.mxu0 0.0
    %1637 = vmatprep.subr.mxu0 0.0
    %1638 = vmatpush2.msra.mxu0 0.0
    %1639 = vmatprep.subr.mxu0 0.0
    %1640 = vmatpush2.msra.mxu0 0.0
    %1641 = vmatprep.subr.mxu0 0.0
    %1642 = vmatpush2.msra.mxu0 0.0
    %1643 = vmatprep.subr.mxu0 0.0
    %1644 = vmatpush2.msra.mxu0 0.0
    %1645 = vmatprep.subr.mxu0 0.0
    %1646 = vmatpush2.msra.mxu0 0.0
    %1647 = vmatprep.subr.mxu0 0.0
    %1648 = vmatpush2.msra.mxu0 0.0
    %1649 = vmatprep.subr.mxu0 0.0
    %1650 = vmatpush2.msra.mxu0 0.0
    %1651 = vmatprep.subr.mxu0 0.0
    %1652 = vmatpush2.msra.mxu0 0.0
    %1653 = vmatprep.subr.mxu0 0.0
    %1654 = vmatpush2.msra.mxu0 0.0
    %1655 = vmatprep.mubr.f32.mxu0 0.0
    %1656 = vmatmul.mubr.f32.gmra.mxu0 %v1586
    %v1657 = vpop.f32.mrf.mxu0
    %v1658 = vadd.f32 0.0, %v1657
    %v1659 = vpop.f32.mrf.mxu0
    %1660 = vmatprep.mubr.f32.mxu0 0.0
    %1661 = vmatmul.mubr.f32.gmra.mxu0 %v1589
    %v1662 = vpop.f32.mrf.mxu0
    %v1663 = vadd.f32 0.0, %v1662
    %v1664 = vpop.f32.mrf.mxu0
    %1665 = vdwg.mxu0
    %v1666 = vld [vmem:[%s45] sm:$0xff]
    %v1667 = vld [vmem:[%s45 + $0x8] sm:$0xff]
    %v1668 = vld [vmem:[%s45 + $0x10] sm:$0xff]
    %v1669 = vld [vmem:[%s45 + $0x18] sm:$0xff]
    %v1670 = vld [vmem:[%s45 + $0x20] sm:$0xff]
    %v1671 = vld [vmem:[%s45 + $0x28] sm:$0xff]
    %v1672 = vld [vmem:[%s45 + $0x30] sm:$0xff]
    %v1673 = vld [vmem:[%s45 + $0x38] sm:$0xff]
    %v1674 = vld [vmem:[%s45 + $0x40] sm:$0xff]
    %v1675 = vld [vmem:[%s45 + $0x48] sm:$0xff]
    %v1676 = vld [vmem:[%s45 + $0x50] sm:$0xff]
    %v1677 = vld [vmem:[%s45 + $0x58] sm:$0xff]
    %v1678 = vld [vmem:[%s45 + $0x60] sm:$0xff]
    %v1679 = vld [vmem:[%s45 + $0x68] sm:$0xff]
    %v1680 = vld [vmem:[%s45 + $0x70] sm:$0xff]
    %v1681 = vld [vmem:[%s45 + $0x78] sm:$0xff]
    %v1682 = vld [vmem:[#allocation20] sm:$0x1]
    %v1684 = vlaneseq
    %v1685 = vshrl.u32 %v1684, 7
    %v1686 = vsub.s32 0, %v1685
    %v1687 = vrot.slane %v1682, %v1686
    %1689 = vmatprep.subr.mxu0 0.0
    %1690 = vmatpush1.msra.mxu0 %v1681
    %1691 = vmatprep.subr.mxu0 0.0
    %1692 = vmatpush1.msra.mxu0 %v1680
    %1693 = vmatprep.subr.mxu0 0.0
    %1694 = vmatpush1.msra.mxu0 %v1679
    %1695 = vmatprep.subr.mxu0 0.0
    %1696 = vmatpush1.msra.mxu0 %v1678
    %1697 = vmatprep.subr.mxu0 0.0
    %1698 = vmatpush1.msra.mxu0 %v1677
    %1699 = vmatprep.subr.mxu0 0.0
    %1700 = vmatpush1.msra.mxu0 %v1676
    %1701 = vmatprep.subr.mxu0 0.0
    %1702 = vmatpush1.msra.mxu0 %v1675
    %1703 = vmatprep.subr.mxu0 0.0
    %1704 = vmatpush1.msra.mxu0 %v1674
    %1705 = vmatprep.subr.mxu0 0.0
    %1706 = vmatpush1.msra.mxu0 %v1673
    %1707 = vmatprep.subr.mxu0 0.0
    %1708 = vmatpush1.msra.mxu0 %v1672
    %1709 = vmatprep.subr.mxu0 0.0
    %1710 = vmatpush1.msra.mxu0 %v1671
    %1711 = vmatprep.subr.mxu0 0.0
    %1712 = vmatpush1.msra.mxu0 %v1670
    %1713 = vmatprep.subr.mxu0 0.0
    %1714 = vmatpush1.msra.mxu0 %v1669
    %1715 = vmatprep.subr.mxu0 0.0
    %1716 = vmatpush1.msra.mxu0 %v1668
    %1717 = vmatprep.subr.mxu0 0.0
    %1718 = vmatpush1.msra.mxu0 %v1667
    %1719 = vmatprep.subr.mxu0 0.0
    %1720 = vmatpush1.msra.mxu0 %v1666
    %1721 = vmatprep.subr.mxu0 0.0
    %1722 = vmatpush2.msra.mxu0 0.0
    %1723 = vmatprep.subr.mxu0 0.0
    %1724 = vmatpush2.msra.mxu0 0.0
    %1725 = vmatprep.subr.mxu0 0.0
    %1726 = vmatpush2.msra.mxu0 0.0
    %1727 = vmatprep.subr.mxu0 0.0
    %1728 = vmatpush2.msra.mxu0 0.0
    %1729 = vmatprep.subr.mxu0 0.0
    %1730 = vmatpush2.msra.mxu0 0.0
    %1731 = vmatprep.subr.mxu0 0.0
    %1732 = vmatpush2.msra.mxu0 0.0
    %1733 = vmatprep.subr.mxu0 0.0
    %1734 = vmatpush2.msra.mxu0 0.0
    %1735 = vmatprep.subr.mxu0 0.0
    %1736 = vmatpush2.msra.mxu0 0.0
    %1737 = vmatprep.subr.mxu0 0.0
    %1738 = vmatpush2.msra.mxu0 0.0
    %1739 = vmatprep.subr.mxu0 0.0
    %1740 = vmatpush2.msra.mxu0 0.0
    %1741 = vmatprep.subr.mxu0 0.0
    %1742 = vmatpush2.msra.mxu0 0.0
    %1743 = vmatprep.subr.mxu0 0.0
    %1744 = vmatpush2.msra.mxu0 0.0
    %1745 = vmatprep.subr.mxu0 0.0
    %1746 = vmatpush2.msra.mxu0 0.0
    %1747 = vmatprep.subr.mxu0 0.0
    %1748 = vmatpush2.msra.mxu0 0.0
    %1749 = vmatprep.subr.mxu0 0.0
    %1750 = vmatpush2.msra.mxu0 0.0
    %1751 = vmatprep.subr.mxu0 0.0
    %1752 = vmatpush2.msra.mxu0 0.0
    %1753 = vmatprep.mubr.f32.mxu0 0.0
    %1754 = vmatmul.mubr.f32.gmra.mxu0 %v1658
    %v1755 = vpop.f32.mrf.mxu0
    %v1756 = vadd.f32 %v1687, %v1755
    %v1757 = vpop.f32.mrf.mxu0
    %1758 = vmatprep.mubr.f32.mxu0 0.0
    %1759 = vmatmul.mubr.f32.gmra.mxu0 %v1663
    %v1760 = vpop.f32.mrf.mxu0
    %v1761 = vadd.f32 %v1687, %v1760
    %v1762 = vpop.f32.mrf.mxu0
    %1763 = vdwg.mxu0
    %v1764 = vadd.f32 %v1658, %v1756
    %v1765 = vadd.f32 %v1663, %v1761
    %v1766 = vld [vmem:[#allocation23] sm:$0x1]
    %v1768 = vlaneseq
    %v1769 = vshrl.u32 %v1768, 7
    %v1770 = vsub.s32 0, %v1769
    %v1771 = vrot.slane %v1766, %v1770
    %v1773 = vmul.f32 %v1764, %v1771
    %v1774 = vmul.f32 %v1765, %v1771
    %v1775 = vld [vmem:[#allocation25] sm:$0x1]
    %v1777 = vlaneseq
    %v1778 = vshrl.u32 %v1777, 7
    %v1779 = vsub.s32 0, %v1778
    %v1780 = vrot.slane %v1775, %v1779
    %v1782 = vadd.f32 %v1773, %v1780
    %v1783 = vadd.f32 %v1774, %v1780
    %v1784 = vld [vmem:[%s49] sm:$0xff]
    %v1785 = vld [vmem:[%s49 + $0x8] sm:$0xff]
    %v1786 = vld [vmem:[%s49 + $0x10] sm:$0xff]
    %v1787 = vld [vmem:[%s49 + $0x18] sm:$0xff]
    %v1788 = vld [vmem:[%s49 + $0x20] sm:$0xff]
    %v1789 = vld [vmem:[%s49 + $0x28] sm:$0xff]
    %v1790 = vld [vmem:[%s49 + $0x30] sm:$0xff]
    %v1791 = vld [vmem:[%s49 + $0x38] sm:$0xff]
    %v1792 = vld [vmem:[%s49 + $0x40] sm:$0xff]
    %v1793 = vld [vmem:[%s49 + $0x48] sm:$0xff]
    %v1794 = vld [vmem:[%s49 + $0x50] sm:$0xff]
    %v1795 = vld [vmem:[%s49 + $0x58] sm:$0xff]
    %v1796 = vld [vmem:[%s49 + $0x60] sm:$0xff]
    %v1797 = vld [vmem:[%s49 + $0x68] sm:$0xff]
    %v1798 = vld [vmem:[%s49 + $0x70] sm:$0xff]
    %v1799 = vld [vmem:[%s49 + $0x78] sm:$0xff]
    %v1800 = vld [vmem:[%s49 + $0x80] sm:$0xff]
    %v1801 = vld [vmem:[%s49 + $0x88] sm:$0xff]
    %v1802 = vld [vmem:[%s49 + $0x90] sm:$0xff]
    %v1803 = vld [vmem:[%s49 + $0x98] sm:$0xff]
    %v1804 = vld [vmem:[%s49 + $0xa0] sm:$0xff]
    %v1805 = vld [vmem:[%s49 + $0xa8] sm:$0xff]
    %v1806 = vld [vmem:[%s49 + $0xb0] sm:$0xff]
    %v1807 = vld [vmem:[%s49 + $0xb8] sm:$0xff]
    %v1808 = vld [vmem:[%s49 + $0xc0] sm:$0xff]
    %v1809 = vld [vmem:[%s49 + $0xc8] sm:$0xff]
    %v1810 = vld [vmem:[%s49 + $0xd0] sm:$0xff]
    %v1811 = vld [vmem:[%s49 + $0xd8] sm:$0xff]
    %v1812 = vld [vmem:[%s49 + $0xe0] sm:$0xff]
    %v1813 = vld [vmem:[%s49 + $0xe8] sm:$0xff]
    %v1814 = vld [vmem:[%s49 + $0xf0] sm:$0xff]
    %v1815 = vld [vmem:[%s49 + $0xf8] sm:$0xff]
    %v1816 = vld [vmem:[%s51] sm:$0x3]
    %v1818 = vlaneseq
    %v1819 = vshrl.u32 %v1818, 7
    %v1820 = vsub.s32 0, %v1819
    %v1821 = vrot.slane %v1816, %v1820
    %v1822 = vlaneseq
    %v1823 = vshrl.u32 %v1822, 7
    %v1824 = vsub.s32 1, %v1823
    %v1825 = vrot.slane %v1816, %v1824
    %1828 = vmatprep.subr.mxu0 %v1815
    %1829 = vmatpush1.msra.mxu0 %v1814
    %1830 = vmatprep.subr.mxu0 %v1813
    %1831 = vmatpush1.msra.mxu0 %v1812
    %1832 = vmatprep.subr.mxu0 %v1811
    %1833 = vmatpush1.msra.mxu0 %v1810
    %1834 = vmatprep.subr.mxu0 %v1809
    %1835 = vmatpush1.msra.mxu0 %v1808
    %1836 = vmatprep.subr.mxu0 %v1807
    %1837 = vmatpush1.msra.mxu0 %v1806
    %1838 = vmatprep.subr.mxu0 %v1805
    %1839 = vmatpush1.msra.mxu0 %v1804
    %1840 = vmatprep.subr.mxu0 %v1803
    %1841 = vmatpush1.msra.mxu0 %v1802
    %1842 = vmatprep.subr.mxu0 %v1801
    %1843 = vmatpush1.msra.mxu0 %v1800
    %1844 = vmatprep.subr.mxu0 %v1799
    %1845 = vmatpush1.msra.mxu0 %v1798
    %1846 = vmatprep.subr.mxu0 %v1797
    %1847 = vmatpush1.msra.mxu0 %v1796
    %1848 = vmatprep.subr.mxu0 %v1795
    %1849 = vmatpush1.msra.mxu0 %v1794
    %1850 = vmatprep.subr.mxu0 %v1793
    %1851 = vmatpush1.msra.mxu0 %v1792
    %1852 = vmatprep.subr.mxu0 %v1791
    %1853 = vmatpush1.msra.mxu0 %v1790
    %1854 = vmatprep.subr.mxu0 %v1789
    %1855 = vmatpush1.msra.mxu0 %v1788
    %1856 = vmatprep.subr.mxu0 %v1787
    %1857 = vmatpush1.msra.mxu0 %v1786
    %1858 = vmatprep.subr.mxu0 %v1785
    %1859 = vmatpush1.msra.mxu0 %v1784
    %1860 = vmatprep.subr.mxu0 0.0
    %1861 = vmatpush2.msra.mxu0 0.0
    %1862 = vmatprep.subr.mxu0 0.0
    %1863 = vmatpush2.msra.mxu0 0.0
    %1864 = vmatprep.subr.mxu0 0.0
    %1865 = vmatpush2.msra.mxu0 0.0
    %1866 = vmatprep.subr.mxu0 0.0
    %1867 = vmatpush2.msra.mxu0 0.0
    %1868 = vmatprep.subr.mxu0 0.0
    %1869 = vmatpush2.msra.mxu0 0.0
    %1870 = vmatprep.subr.mxu0 0.0
    %1871 = vmatpush2.msra.mxu0 0.0
    %1872 = vmatprep.subr.mxu0 0.0
    %1873 = vmatpush2.msra.mxu0 0.0
    %1874 = vmatprep.subr.mxu0 0.0
    %1875 = vmatpush2.msra.mxu0 0.0
    %1876 = vmatprep.subr.mxu0 0.0
    %1877 = vmatpush2.msra.mxu0 0.0
    %1878 = vmatprep.subr.mxu0 0.0
    %1879 = vmatpush2.msra.mxu0 0.0
    %1880 = vmatprep.subr.mxu0 0.0
    %1881 = vmatpush2.msra.mxu0 0.0
    %1882 = vmatprep.subr.mxu0 0.0
    %1883 = vmatpush2.msra.mxu0 0.0
    %1884 = vmatprep.subr.mxu0 0.0
    %1885 = vmatpush2.msra.mxu0 0.0
    %1886 = vmatprep.subr.mxu0 0.0
    %1887 = vmatpush2.msra.mxu0 0.0
    %1888 = vmatprep.subr.mxu0 0.0
    %1889 = vmatpush2.msra.mxu0 0.0
    %1890 = vmatprep.subr.mxu0 0.0
    %1891 = vmatpush2.msra.mxu0 0.0
    %1892 = vmatprep.mubr.f32.mxu0 0.0
    %1893 = vmatmul.mubr.f32.gmra.mxu0 %v1782
    %v1894 = vpop.f32.mrf.mxu0
    %v1895 = vadd.f32 %v1821, %v1894
    %v1896 = vpop.f32.mrf.mxu0
    %v1897 = vadd.f32 %v1825, %v1896
    %1898 = vmatprep.mubr.f32.mxu0 0.0
    %1899 = vmatmul.mubr.f32.gmra.mxu0 %v1783
    %v1900 = vpop.f32.mrf.mxu0
    %v1901 = vadd.f32 %v1821, %v1900
    %v1902 = vpop.f32.mrf.mxu0
    %v1903 = vadd.f32 %v1825, %v1902
    %1904 = vdwg.mxu0
    %v1905 = vmax.f32 %v1895, 0.0
    %v1906 = vmax.f32 %v1897, 0.0
    %v1907 = vmax.f32 %v1901, 0.0
    %v1908 = vmax.f32 %v1903, 0.0
    %v1909 = vld [vmem:[%s53] sm:$0xff]
    %v1910 = vld [vmem:[%s53 + $0x8] sm:$0xff]
    %v1911 = vld [vmem:[%s53 + $0x10] sm:$0xff]
    %v1912 = vld [vmem:[%s53 + $0x18] sm:$0xff]
    %v1913 = vld [vmem:[%s53 + $0x20] sm:$0xff]
    %v1914 = vld [vmem:[%s53 + $0x28] sm:$0xff]
    %v1915 = vld [vmem:[%s53 + $0x30] sm:$0xff]
    %v1916 = vld [vmem:[%s53 + $0x38] sm:$0xff]
    %v1917 = vld [vmem:[%s53 + $0x40] sm:$0xff]
    %v1918 = vld [vmem:[%s53 + $0x48] sm:$0xff]
    %v1919 = vld [vmem:[%s53 + $0x50] sm:$0xff]
    %v1920 = vld [vmem:[%s53 + $0x58] sm:$0xff]
    %v1921 = vld [vmem:[%s53 + $0x60] sm:$0xff]
    %v1922 = vld [vmem:[%s53 + $0x68] sm:$0xff]
    %v1923 = vld [vmem:[%s53 + $0x70] sm:$0xff]
    %v1924 = vld [vmem:[%s53 + $0x78] sm:$0xff]
    %v1925 = vld [vmem:[%s53 + $0x80] sm:$0xff]
    %v1926 = vld [vmem:[%s53 + $0x88] sm:$0xff]
    %v1927 = vld [vmem:[%s53 + $0x90] sm:$0xff]
    %v1928 = vld [vmem:[%s53 + $0x98] sm:$0xff]
    %v1929 = vld [vmem:[%s53 + $0xa0] sm:$0xff]
    %v1930 = vld [vmem:[%s53 + $0xa8] sm:$0xff]
    %v1931 = vld [vmem:[%s53 + $0xb0] sm:$0xff]
    %v1932 = vld [vmem:[%s53 + $0xb8] sm:$0xff]
    %v1933 = vld [vmem:[%s53 + $0xc0] sm:$0xff]
    %v1934 = vld [vmem:[%s53 + $0xc8] sm:$0xff]
    %v1935 = vld [vmem:[%s53 + $0xd0] sm:$0xff]
    %v1936 = vld [vmem:[%s53 + $0xd8] sm:$0xff]
    %v1937 = vld [vmem:[%s53 + $0xe0] sm:$0xff]
    %v1938 = vld [vmem:[%s53 + $0xe8] sm:$0xff]
    %v1939 = vld [vmem:[%s53 + $0xf0] sm:$0xff]
    %v1940 = vld [vmem:[%s53 + $0xf8] sm:$0xff]
    %v1941 = vld [vmem:[#allocation22] sm:$0x1]
    %v1943 = vlaneseq
    %v1944 = vshrl.u32 %v1943, 7
    %v1945 = vsub.s32 0, %v1944
    %v1946 = vrot.slane %v1941, %v1945
    %1948 = vmatprep.subr.mxu0 0.0
    %1949 = vmatpush1.msra.mxu0 %v1924
    %1950 = vmatprep.subr.mxu0 0.0
    %1951 = vmatpush1.msra.mxu0 %v1923
    %1952 = vmatprep.subr.mxu0 0.0
    %1953 = vmatpush1.msra.mxu0 %v1922
    %1954 = vmatprep.subr.mxu0 0.0
    %1955 = vmatpush1.msra.mxu0 %v1921
    %1956 = vmatprep.subr.mxu0 0.0
    %1957 = vmatpush1.msra.mxu0 %v1920
    %1958 = vmatprep.subr.mxu0 0.0
    %1959 = vmatpush1.msra.mxu0 %v1919
    %1960 = vmatprep.subr.mxu0 0.0
    %1961 = vmatpush1.msra.mxu0 %v1918
    %1962 = vmatprep.subr.mxu0 0.0
    %1963 = vmatpush1.msra.mxu0 %v1917
    %1964 = vmatprep.subr.mxu0 0.0
    %1965 = vmatpush1.msra.mxu0 %v1916
    %1966 = vmatprep.subr.mxu0 0.0
    %1967 = vmatpush1.msra.mxu0 %v1915
    %1968 = vmatprep.subr.mxu0 0.0
    %1969 = vmatpush1.msra.mxu0 %v1914
    %1970 = vmatprep.subr.mxu0 0.0
    %1971 = vmatpush1.msra.mxu0 %v1913
    %1972 = vmatprep.subr.mxu0 0.0
    %1973 = vmatpush1.msra.mxu0 %v1912
    %1974 = vmatprep.subr.mxu0 0.0
    %1975 = vmatpush1.msra.mxu0 %v1911
    %1976 = vmatprep.subr.mxu0 0.0
    %1977 = vmatpush1.msra.mxu0 %v1910
    %1978 = vmatprep.subr.mxu0 0.0
    %1979 = vmatpush1.msra.mxu0 %v1909
    %1980 = vmatprep.subr.mxu0 0.0
    %1981 = vmatpush2.msra.mxu0 %v1940
    %1982 = vmatprep.subr.mxu0 0.0
    %1983 = vmatpush2.msra.mxu0 %v1939
    %1984 = vmatprep.subr.mxu0 0.0
    %1985 = vmatpush2.msra.mxu0 %v1938
    %1986 = vmatprep.subr.mxu0 0.0
    %1987 = vmatpush2.msra.mxu0 %v1937
    %1988 = vmatprep.subr.mxu0 0.0
    %1989 = vmatpush2.msra.mxu0 %v1936
    %1990 = vmatprep.subr.mxu0 0.0
    %1991 = vmatpush2.msra.mxu0 %v1935
    %1992 = vmatprep.subr.mxu0 0.0
    %1993 = vmatpush2.msra.mxu0 %v1934
    %1994 = vmatprep.subr.mxu0 0.0
    %1995 = vmatpush2.msra.mxu0 %v1933
    %1996 = vmatprep.subr.mxu0 0.0
    %1997 = vmatpush2.msra.mxu0 %v1932
    %1998 = vmatprep.subr.mxu0 0.0
    %1999 = vmatpush2.msra.mxu0 %v1931
    %2000 = vmatprep.subr.mxu0 0.0
    %2001 = vmatpush2.msra.mxu0 %v1930
    %2002 = vmatprep.subr.mxu0 0.0
    %2003 = vmatpush2.msra.mxu0 %v1929
    %2004 = vmatprep.subr.mxu0 0.0
    %2005 = vmatpush2.msra.mxu0 %v1928
    %2006 = vmatprep.subr.mxu0 0.0
    %2007 = vmatpush2.msra.mxu0 %v1927
    %2008 = vmatprep.subr.mxu0 0.0
    %2009 = vmatpush2.msra.mxu0 %v1926
    %2010 = vmatprep.subr.mxu0 0.0
    %2011 = vmatpush2.msra.mxu0 %v1925
    %2012 = vmatprep.mubr.f32.mxu0 %v1906
    %2013 = vmatmul.mubr.f32.gmra.mxu0 %v1905
    %v2014 = vpop.f32.mrf.mxu0
    %v2015 = vadd.f32 %v1946, %v2014
    %v2016 = vpop.f32.mrf.mxu0
    %2017 = vmatprep.mubr.f32.mxu0 %v1908
    %2018 = vmatmul.mubr.f32.gmra.mxu0 %v1907
    %v2019 = vpop.f32.mrf.mxu0
    %v2020 = vadd.f32 %v1946, %v2019
    %v2021 = vpop.f32.mrf.mxu0
    %2022 = vdwg.mxu0
    %v2023 = vadd.f32 %v1782, %v2015
    %v2024 = vadd.f32 %v1783, %v2020
    %v2025 = vmul.f32 %v2023, %v1771
    %v2026 = vmul.f32 %v2024, %v1771
    %v2027 = vadd.f32 %v2025, %v1780
    %v2028 = vadd.f32 %v2026, %v1780
    %2029 = vst [vmem:[%s61] sm:$0xff] %v2027
    %2030 = vst [vmem:[%s61 + $0x8] sm:$0xff] %v2028
    // Predicated region
    $region182: #{gtrans_forward.5} parent=1 // pred_check
      _
    $region183: #{gtrans_forward.5} parent=1 // pred_check_branch
      %2032 = sbr.rel (0) target = $region185
    $region184: #{gtrans_forward.5} parent=1 // pred_region
      _
    $region185: #{gtrans_forward.5} parent=1 // pred_fallthru
      _
    // Predicated region
    $region186: #{gtrans_forward.5} parent=1 // pred_check
      _
    $region187: #{gtrans_forward.5} parent=1 // pred_check_branch
      %2034 = sbr.rel (0) target = $region189
    $region188: #{gtrans_forward.5} parent=1 // pred_region
      _
    $region189: #{gtrans_forward.5} parent=1 // pred_fallthru
      _
    %2035 = vsyncpa [#allocation4], 1
    %2036 = vsyncpa [#allocation6], 1
    %2037 = vsyncpa [#allocation9], 1
    %2038 = vsyncpa [#allocation12], 1
    %2039 = vsyncpa [#allocation15], 1
    %2040 = vsyncpa [#allocation18], 1
    %2041 = vsyncpa [#allocation21], 1
    %2042 = vsyncpa [#allocation24], 1

// kernel: gtrans_forward.6
$region0: #{gtrans_forward.6}
  #allocation0 [shape = 'u32[]', space=smem, size = 0x4, offset = 0x4, fixed_abs, tag = 'smem constant byte address 0x4 - core index']
  #allocation1 [shape = 'u32[144,128]{1,0:T(1,128)}', space=vmem, size = 0x12000, scoped, tag = 'internal scratch']
  %s0 = inlined_call_operand.vmem [shape: f32[64,16], index: 0, kind: input, shape index: {}]
  %s1 = inlined_call_operand.vmem [shape: f32[64,128], index: 1, kind: input, shape index: {}]
  %s2 = inlined_call_operand.vmem [shape: f32[64,128], index: 2, kind: input, shape index: {}]
  %s3 = inlined_call_operand.vmem [shape: f32[64,128], index: 3, kind: input, shape index: {}]
  %s4 = inlined_call_operand.vmem [shape: f32[16,128], index: 4, kind: input, shape index: {}]
  %s5 = inlined_call_operand.vmem [shape: bf16[512,512], index: 5, kind: input, shape index: {}]
  %s6 = inlined_call_operand.vmem [shape: f32[1,512], index: 6, kind: input, shape index: {}]
  %s7 = inlined_call_operand.vmem [shape: bf16[512,256], index: 7, kind: input, shape index: {}]
  %s8 = inlined_call_operand.vmem [shape: f32[1,256], index: 8, kind: input, shape index: {}]
  %s9 = inlined_call_operand.vmem [shape: f32[64,256], index: 9, kind: output, shape index: {}]
  %s10 = sld [smem:[#allocation0]]
  $region46: #{gtrans_forward.6} parent=0
    _
  %s12 = ssub.s32 1, %s10
  %s13 = scalar_select 0, %s12, %s10
  // Predicated region
  $region2: #{gtrans_forward.6} parent=0 // pred_check
    _
  $region3: #{gtrans_forward.6} parent=0 // pred_check_branch
    %15 = sbr.rel (0) target = $region5
  $region4: #{gtrans_forward.6} parent=0 // pred_region
    _
  $region5: #{gtrans_forward.6} parent=0 // pred_fallthru
    _
  // Predicated region
  $region6: #{gtrans_forward.6} parent=0 // pred_check
    _
  $region7: #{gtrans_forward.6} parent=0 // pred_check_branch
    %17 = sbr.rel (0) target = $region9
  $region8: #{gtrans_forward.6} parent=0 // pred_region
    _
  $region9: #{gtrans_forward.6} parent=0 // pred_fallthru
    _
  // Predicated region
  $region10: #{gtrans_forward.6} parent=0 // pred_check
    _
  $region11: #{gtrans_forward.6} parent=0 // pred_check_branch
    %19 = sbr.rel (0) target = $region13
  $region12: #{gtrans_forward.6} parent=0 // pred_region
    _
  $region13: #{gtrans_forward.6} parent=0 // pred_fallthru
    _
  // Predicated region
  $region14: #{gtrans_forward.6} parent=0 // pred_check
    _
  $region15: #{gtrans_forward.6} parent=0 // pred_check_branch
    %21 = sbr.rel (0) target = $region17
  $region16: #{gtrans_forward.6} parent=0 // pred_region
    _
  $region17: #{gtrans_forward.6} parent=0 // pred_fallthru
    _
  // Predicated region
  $region18: #{gtrans_forward.6} parent=0 // pred_check
    _
  $region19: #{gtrans_forward.6} parent=0 // pred_check_branch
    %23 = sbr.rel (0) target = $region21
  $region20: #{gtrans_forward.6} parent=0 // pred_region
    _
  $region21: #{gtrans_forward.6} parent=0 // pred_fallthru
    _
  // Predicated region
  $region22: #{gtrans_forward.6} parent=0 // pred_check
    _
  $region23: #{gtrans_forward.6} parent=0 // pred_check_branch
    %25 = sbr.rel (0) target = $region25
  $region24: #{gtrans_forward.6} parent=0 // pred_region
    _
  $region25: #{gtrans_forward.6} parent=0 // pred_fallthru
    _
  // Predicated region
  $region26: #{gtrans_forward.6} parent=0 // pred_check
    _
  $region27: #{gtrans_forward.6} parent=0 // pred_check_branch
    %27 = sbr.rel (0) target = $region29
  $region28: #{gtrans_forward.6} parent=0 // pred_region
    _
  $region29: #{gtrans_forward.6} parent=0 // pred_fallthru
    _
  // Predicated region
  $region30: #{gtrans_forward.6} parent=0 // pred_check
    _
  $region31: #{gtrans_forward.6} parent=0 // pred_check_branch
    %29 = sbr.rel (0) target = $region33
  $region32: #{gtrans_forward.6} parent=0 // pred_region
    _
  $region33: #{gtrans_forward.6} parent=0 // pred_fallthru
    _
  // Predicated region
  $region34: #{gtrans_forward.6} parent=0 // pred_check
    _
  $region35: #{gtrans_forward.6} parent=0 // pred_check_branch
    %31 = sbr.rel (0) target = $region37
  $region36: #{gtrans_forward.6} parent=0 // pred_region
    _
  $region37: #{gtrans_forward.6} parent=0 // pred_fallthru
    _
  %v33 = vld [vmem:[%s1] sm:$0xff]
  %v34 = vld [vmem:[%s1 + $0x8] sm:$0xff]
  %v35 = vld [vmem:[%s1 + $0x10] sm:$0xff]
  %v36 = vld [vmem:[%s1 + $0x18] sm:$0xff]
  %v37 = vld [vmem:[%s1 + $0x20] sm:$0xff]
  %v38 = vld [vmem:[%s1 + $0x28] sm:$0xff]
  %v39 = vld [vmem:[%s1 + $0x30] sm:$0xff]
  %v40 = vld [vmem:[%s1 + $0x38] sm:$0xff]
  %v41 = vld [vmem:[%s2] sm:$0xff]
  %v42 = vld [vmem:[%s2 + $0x8] sm:$0xff]
  %v43 = vld [vmem:[%s2 + $0x10] sm:$0xff]
  %v44 = vld [vmem:[%s2 + $0x18] sm:$0xff]
  %v45 = vld [vmem:[%s2 + $0x20] sm:$0xff]
  %v46 = vld [vmem:[%s2 + $0x28] sm:$0xff]
  %v47 = vld [vmem:[%s2 + $0x30] sm:$0xff]
  %v48 = vld [vmem:[%s2 + $0x38] sm:$0xff]
  %v49 = vld [vmem:[%s3] sm:$0xff]
  %v50 = vld [vmem:[%s3 + $0x8] sm:$0xff]
  %v51 = vld [vmem:[%s3 + $0x10] sm:$0xff]
  %v52 = vld [vmem:[%s3 + $0x18] sm:$0xff]
  %v53 = vld [vmem:[%s3 + $0x20] sm:$0xff]
  %v54 = vld [vmem:[%s3 + $0x28] sm:$0xff]
  %v55 = vld [vmem:[%s3 + $0x30] sm:$0xff]
  %v56 = vld [vmem:[%s3 + $0x38] sm:$0xff]
  %v57 = vld [vmem:[%s0] sm:$0xff]
  %v58 = vld [vmem:[%s0 + $0x8] sm:$0xff]
  %v59 = vld [vmem:[%s0 + $0x10] sm:$0xff]
  %v60 = vld [vmem:[%s0 + $0x18] sm:$0xff]
  %v61 = vld [vmem:[%s0 + $0x20] sm:$0xff]
  %v62 = vld [vmem:[%s0 + $0x28] sm:$0xff]
  %v63 = vld [vmem:[%s0 + $0x30] sm:$0xff]
  %v64 = vld [vmem:[%s0 + $0x38] sm:$0xff]
  %v65 = vld [vmem:[%s4] sm:$0xff]
  %v66 = vld [vmem:[%s4 + $0x8] sm:$0xff]
  %v67 = vpack.c.bf16 %v66, %v65
  %v68 = vpack.c.bf16 %v58, %v57
  %v69 = vpack.c.bf16 %v60, %v59
  %v70 = vpack.c.bf16 %v62, %v61
  %v71 = vpack.c.bf16 %v64, %v63
  %vm72 = vcmask 130048
  %v74 = vsel %vm72, %v68, 0
  %v77 = vsel %vm72, %v69, 0
  %v80 = vsel %vm72, %v70, 0
  %v83 = vsel %vm72, %v71, 0
  %85 = vmatprep.subr.bf16.mxu0 0
  %86 = vmatpush1.bf16.msra.mxu0 0
  %87 = vmatprep.subr.bf16.mxu0 0
  %88 = vmatpush1.bf16.msra.mxu0 0
  %89 = vmatprep.subr.bf16.mxu0 0
  %90 = vmatpush1.bf16.msra.mxu0 0
  %91 = vmatprep.subr.bf16.mxu0 0
  %92 = vmatpush1.bf16.msra.mxu0 0
  %93 = vmatprep.subr.bf16.mxu0 0
  %94 = vmatpush1.bf16.msra.mxu0 0
  %95 = vmatprep.subr.bf16.mxu0 0
  %96 = vmatpush1.bf16.msra.mxu0 0
  %97 = vmatprep.subr.bf16.mxu0 0
  %98 = vmatpush1.bf16.msra.mxu0 0
  %99 = vmatprep.subr.bf16.mxu0 0
  %100 = vmatpush1.bf16.msra.mxu0 %v67
  %101 = vmatprep.subr.bf16.mxu0 0
  %102 = vmatpush2.bf16.msra.mxu0 0
  %103 = vmatprep.subr.bf16.mxu0 0
  %104 = vmatpush2.bf16.msra.mxu0 0
  %105 = vmatprep.subr.bf16.mxu0 0
  %106 = vmatpush2.bf16.msra.mxu0 0
  %107 = vmatprep.subr.bf16.mxu0 0
  %108 = vmatpush2.bf16.msra.mxu0 0
  %109 = vmatprep.subr.bf16.mxu0 0
  %110 = vmatpush2.bf16.msra.mxu0 0
  %111 = vmatprep.subr.bf16.mxu0 0
  %112 = vmatpush2.bf16.msra.mxu0 0
  %113 = vmatprep.subr.bf16.mxu0 0
  %114 = vmatpush2.bf16.msra.mxu0 0
  %115 = vmatprep.subr.bf16.mxu0 0
  %116 = vmatpush2.bf16.msra.mxu0 0
  %117 = vmatprep.mubr.bf16.mxu0 0
  %118 = vmatmul.mubr.bf16.gmra.mxu0 %v74
  %v119 = vpop.f32.mrf.mxu0
  %v120 = vadd.f32 0.0, %v119
  %v121 = vpop.f32.mrf.mxu0
  %v122 = vpop.f32.mrf.mxu0
  %v123 = vadd.f32 0.0, %v122
  %v124 = vpop.f32.mrf.mxu0
  %125 = vmatprep.mubr.bf16.mxu0 0
  %126 = vmatmul.mubr.bf16.gmra.mxu0 %v77
  %v127 = vpop.f32.mrf.mxu0
  %v128 = vadd.f32 0.0, %v127
  %v129 = vpop.f32.mrf.mxu0
  %v130 = vpop.f32.mrf.mxu0
  %v131 = vadd.f32 0.0, %v130
  %v132 = vpop.f32.mrf.mxu0
  %133 = vmatprep.mubr.bf16.mxu0 0
  %134 = vmatmul.mubr.bf16.gmra.mxu0 %v80
  %v135 = vpop.f32.mrf.mxu0
  %v136 = vadd.f32 0.0, %v135
  %v137 = vpop.f32.mrf.mxu0
  %v138 = vpop.f32.mrf.mxu0
  %v139 = vadd.f32 0.0, %v138
  %v140 = vpop.f32.mrf.mxu0
  %141 = vmatprep.mubr.bf16.mxu0 0
  %142 = vmatmul.mubr.bf16.gmra.mxu0 %v83
  %v143 = vpop.f32.mrf.mxu0
  %v144 = vadd.f32 0.0, %v143
  %v145 = vpop.f32.mrf.mxu0
  %v146 = vpop.f32.mrf.mxu0
  %v147 = vadd.f32 0.0, %v146
  %v148 = vpop.f32.mrf.mxu0
  %149 = vdwg.mxu0
  %v150 = vld [vmem:[%s5] sm:$0xff]
  %v151 = vld [vmem:[%s5 + $0x8] sm:$0xff]
  %v152 = vld [vmem:[%s5 + $0x10] sm:$0xff]
  %v153 = vld [vmem:[%s5 + $0x18] sm:$0xff]
  %v154 = vld [vmem:[%s5 + $0x20] sm:$0xff]
  %v155 = vld [vmem:[%s5 + $0x28] sm:$0xff]
  %v156 = vld [vmem:[%s5 + $0x30] sm:$0xff]
  %v157 = vld [vmem:[%s5 + $0x38] sm:$0xff]
  %v158 = vld [vmem:[%s5 + $0x40] sm:$0xff]
  %v159 = vld [vmem:[%s5 + $0x48] sm:$0xff]
  %v160 = vld [vmem:[%s5 + $0x50] sm:$0xff]
  %v161 = vld [vmem:[%s5 + $0x58] sm:$0xff]
  %v162 = vld [vmem:[%s5 + $0x60] sm:$0xff]
  %v163 = vld [vmem:[%s5 + $0x68] sm:$0xff]
  %v164 = vld [vmem:[%s5 + $0x70] sm:$0xff]
  %v165 = vld [vmem:[%s5 + $0x78] sm:$0xff]
  %v166 = vld [vmem:[%s5 + $0x80] sm:$0xff]
  %v167 = vld [vmem:[%s5 + $0x88] sm:$0xff]
  %v168 = vld [vmem:[%s5 + $0x90] sm:$0xff]
  %v169 = vld [vmem:[%s5 + $0x98] sm:$0xff]
  %v170 = vld [vmem:[%s5 + $0xa0] sm:$0xff]
  %v171 = vld [vmem:[%s5 + $0xa8] sm:$0xff]
  %v172 = vld [vmem:[%s5 + $0xb0] sm:$0xff]
  %v173 = vld [vmem:[%s5 + $0xb8] sm:$0xff]
  %v174 = vld [vmem:[%s5 + $0xc0] sm:$0xff]
  %v175 = vld [vmem:[%s5 + $0xc8] sm:$0xff]
  %v176 = vld [vmem:[%s5 + $0xd0] sm:$0xff]
  %v177 = vld [vmem:[%s5 + $0xd8] sm:$0xff]
  %v178 = vld [vmem:[%s5 + $0xe0] sm:$0xff]
  %v179 = vld [vmem:[%s5 + $0xe8] sm:$0xff]
  %v180 = vld [vmem:[%s5 + $0xf0] sm:$0xff]
  %v181 = vld [vmem:[%s5 + $0xf8] sm:$0xff]
  %v182 = vpack.c.bf16 %v123, %v120
  %v183 = vpack.c.bf16 %v131, %v128
  %v184 = vpack.c.bf16 %v139, %v136
  %v185 = vpack.c.bf16 %v147, %v144
  %v186 = vld [vmem:[%s5 + $0x100] sm:$0xff]
  %v187 = vld [vmem:[%s5 + $0x108] sm:$0xff]
  %v188 = vld [vmem:[%s5 + $0x110] sm:$0xff]
  %v189 = vld [vmem:[%s5 + $0x118] sm:$0xff]
  %v190 = vld [vmem:[%s5 + $0x120] sm:$0xff]
  %v191 = vld [vmem:[%s5 + $0x128] sm:$0xff]
  %v192 = vld [vmem:[%s5 + $0x130] sm:$0xff]
  %v193 = vld [vmem:[%s5 + $0x138] sm:$0xff]
  %v194 = vld [vmem:[%s5 + $0x140] sm:$0xff]
  %v195 = vld [vmem:[%s5 + $0x148] sm:$0xff]
  %v196 = vld [vmem:[%s5 + $0x150] sm:$0xff]
  %v197 = vld [vmem:[%s5 + $0x158] sm:$0xff]
  %v198 = vld [vmem:[%s5 + $0x160] sm:$0xff]
  %v199 = vld [vmem:[%s5 + $0x168] sm:$0xff]
  %v200 = vld [vmem:[%s5 + $0x170] sm:$0xff]
  %v201 = vld [vmem:[%s5 + $0x178] sm:$0xff]
  %v202 = vld [vmem:[%s5 + $0x180] sm:$0xff]
  %v203 = vld [vmem:[%s5 + $0x188] sm:$0xff]
  %v204 = vld [vmem:[%s5 + $0x190] sm:$0xff]
  %v205 = vld [vmem:[%s5 + $0x198] sm:$0xff]
  %v206 = vld [vmem:[%s5 + $0x1a0] sm:$0xff]
  %v207 = vld [vmem:[%s5 + $0x1a8] sm:$0xff]
  %v208 = vld [vmem:[%s5 + $0x1b0] sm:$0xff]
  %v209 = vld [vmem:[%s5 + $0x1b8] sm:$0xff]
  %v210 = vld [vmem:[%s5 + $0x1c0] sm:$0xff]
  %v211 = vld [vmem:[%s5 + $0x1c8] sm:$0xff]
  %v212 = vld [vmem:[%s5 + $0x1d0] sm:$0xff]
  %v213 = vld [vmem:[%s5 + $0x1d8] sm:$0xff]
  %v214 = vld [vmem:[%s5 + $0x1e0] sm:$0xff]
  %v215 = vld [vmem:[%s5 + $0x1e8] sm:$0xff]
  %v216 = vld [vmem:[%s5 + $0x1f0] sm:$0xff]
  %v217 = vld [vmem:[%s5 + $0x1f8] sm:$0xff]
  %v218 = vpack.c.bf16 %v34, %v33
  %v219 = vpack.c.bf16 %v36, %v35
  %v220 = vpack.c.bf16 %v38, %v37
  %v221 = vpack.c.bf16 %v40, %v39
  %v254 = vunpack.c.l.b16 %v186
  %v255 = vunpack.c.h.b16 %v186
  %v256 = vunpack.c.l.b16 %v187
  %v257 = vunpack.c.h.b16 %v187
  %v258 = vunpack.c.l.b16 %v188
  %v259 = vunpack.c.h.b16 %v188
  %v260 = vunpack.c.l.b16 %v189
  %v261 = vunpack.c.h.b16 %v189
  %v262 = vunpack.c.l.b16 %v190
  %v263 = vunpack.c.h.b16 %v190
  %v264 = vunpack.c.l.b16 %v191
  %v265 = vunpack.c.h.b16 %v191
  %v266 = vunpack.c.l.b16 %v192
  %v267 = vunpack.c.h.b16 %v192
  %v268 = vunpack.c.l.b16 %v193
  %v269 = vunpack.c.h.b16 %v193
  %v270 = vunpack.c.l.b16 %v194
  %v271 = vunpack.c.h.b16 %v194
  %v272 = vunpack.c.l.b16 %v195
  %v273 = vunpack.c.h.b16 %v195
  %v274 = vunpack.c.l.b16 %v196
  %v275 = vunpack.c.h.b16 %v196
  %v276 = vunpack.c.l.b16 %v197
  %v277 = vunpack.c.h.b16 %v197
  %v278 = vunpack.c.l.b16 %v198
  %v279 = vunpack.c.h.b16 %v198
  %v280 = vunpack.c.l.b16 %v199
  %v281 = vunpack.c.h.b16 %v199
  %v282 = vunpack.c.l.b16 %v200
  %v283 = vunpack.c.h.b16 %v200
  %v284 = vunpack.c.l.b16 %v201
  %v285 = vunpack.c.h.b16 %v201
  %v286 = vunpack.c.l.b16 %v202
  %v287 = vunpack.c.h.b16 %v202
  %v288 = vunpack.c.l.b16 %v203
  %v289 = vunpack.c.h.b16 %v203
  %v290 = vunpack.c.l.b16 %v204
  %v291 = vunpack.c.h.b16 %v204
  %v292 = vunpack.c.l.b16 %v205
  %v293 = vunpack.c.h.b16 %v205
  %v294 = vunpack.c.l.b16 %v206
  %v295 = vunpack.c.h.b16 %v206
  %v296 = vunpack.c.l.b16 %v207
  %v297 = vunpack.c.h.b16 %v207
  %v298 = vunpack.c.l.b16 %v208
  %v299 = vunpack.c.h.b16 %v208
  %v300 = vunpack.c.l.b16 %v209
  %v301 = vunpack.c.h.b16 %v209
  %v302 = vunpack.c.l.b16 %v210
  %v303 = vunpack.c.h.b16 %v210
  %v304 = vunpack.c.l.b16 %v211
  %v305 = vunpack.c.h.b16 %v211
  %v306 = vunpack.c.l.b16 %v212
  %v307 = vunpack.c.h.b16 %v212
  %v308 = vunpack.c.l.b16 %v213
  %v309 = vunpack.c.h.b16 %v213
  %v310 = vunpack.c.l.b16 %v214
  %v311 = vunpack.c.h.b16 %v214
  %v312 = vunpack.c.l.b16 %v215
  %v313 = vunpack.c.h.b16 %v215
  %v314 = vunpack.c.l.b16 %v216
  %v315 = vunpack.c.h.b16 %v216
  %v316 = vunpack.c.l.b16 %v217
  %v317 = vunpack.c.h.b16 %v217
  %v318 = vpack.c.b16 %v258, %v254
  %v319 = vpack.c.b16 %v259, %v255
  %v320 = vpack.c.b16 %v260, %v256
  %v321 = vpack.c.b16 %v261, %v257
  %v322 = vpack.c.b16 %v266, %v262
  %v323 = vpack.c.b16 %v267, %v263
  %v324 = vpack.c.b16 %v268, %v264
  %v325 = vpack.c.b16 %v269, %v265
  %v326 = vpack.c.b16 %v274, %v270
  %v327 = vpack.c.b16 %v275, %v271
  %v328 = vpack.c.b16 %v276, %v272
  %v329 = vpack.c.b16 %v277, %v273
  %v330 = vpack.c.b16 %v282, %v278
  %v331 = vpack.c.b16 %v283, %v279
  %v332 = vpack.c.b16 %v284, %v280
  %v333 = vpack.c.b16 %v285, %v281
  %v334 = vpack.c.b16 %v290, %v286
  %v335 = vpack.c.b16 %v291, %v287
  %v336 = vpack.c.b16 %v292, %v288
  %v337 = vpack.c.b16 %v293, %v289
  %v338 = vpack.c.b16 %v298, %v294
  %v339 = vpack.c.b16 %v299, %v295
  %v340 = vpack.c.b16 %v300, %v296
  %v341 = vpack.c.b16 %v301, %v297
  %v342 = vpack.c.b16 %v306, %v302
  %v343 = vpack.c.b16 %v307, %v303
  %v344 = vpack.c.b16 %v308, %v304
  %v345 = vpack.c.b16 %v309, %v305
  %v346 = vpack.c.b16 %v314, %v310
  %v347 = vpack.c.b16 %v315, %v311
  %v348 = vpack.c.b16 %v316, %v312
  %v349 = vpack.c.b16 %v317, %v313
  %382 = vmatprep.subr.bf16.mxu0 %v347
  %383 = vmatpush1.bf16.msra.mxu0 %v346
  %384 = vmatprep.subr.bf16.mxu0 %v343
  %385 = vmatpush1.bf16.msra.mxu0 %v342
  %386 = vmatprep.subr.bf16.mxu0 %v339
  %387 = vmatpush1.bf16.msra.mxu0 %v338
  %388 = vmatprep.subr.bf16.mxu0 %v335
  %389 = vmatpush1.bf16.msra.mxu0 %v334
  %390 = vmatprep.subr.bf16.mxu0 %v331
  %391 = vmatpush1.bf16.msra.mxu0 %v330
  %392 = vmatprep.subr.bf16.mxu0 %v327
  %393 = vmatpush1.bf16.msra.mxu0 %v326
  %394 = vmatprep.subr.bf16.mxu0 %v323
  %395 = vmatpush1.bf16.msra.mxu0 %v322
  %396 = vmatprep.subr.bf16.mxu0 %v319
  %397 = vmatpush1.bf16.msra.mxu0 %v318
  %398 = vmatprep.subr.bf16.mxu0 0
  %399 = vmatpush2.bf16.msra.mxu0 0
  %400 = vmatprep.subr.bf16.mxu0 0
  %401 = vmatpush2.bf16.msra.mxu0 0
  %402 = vmatprep.subr.bf16.mxu0 0
  %403 = vmatpush2.bf16.msra.mxu0 0
  %404 = vmatprep.subr.bf16.mxu0 0
  %405 = vmatpush2.bf16.msra.mxu0 0
  %406 = vmatprep.subr.bf16.mxu0 0
  %407 = vmatpush2.bf16.msra.mxu0 0
  %408 = vmatprep.subr.bf16.mxu0 0
  %409 = vmatpush2.bf16.msra.mxu0 0
  %410 = vmatprep.subr.bf16.mxu0 0
  %411 = vmatpush2.bf16.msra.mxu0 0
  %412 = vmatprep.subr.bf16.mxu0 0
  %413 = vmatpush2.bf16.msra.mxu0 0
  %414 = vmatprep.mubr.bf16.mxu0 0
  %415 = vmatmul.mubr.bf16.gmra.mxu0 %v218
  %v416 = vpop.f32.mrf.mxu0
  %v417 = vadd.f32 0.0, %v416
  %v418 = vpop.f32.mrf.mxu0
  %v419 = vadd.f32 0.0, %v418
  %v420 = vpop.f32.mrf.mxu0
  %v421 = vadd.f32 0.0, %v420
  %v422 = vpop.f32.mrf.mxu0
  %v423 = vadd.f32 0.0, %v422
  %424 = vmatprep.mubr.bf16.mxu0 0
  %425 = vmatmul.mubr.bf16.gmra.mxu0 %v219
  %v426 = vpop.f32.mrf.mxu0
  %v427 = vadd.f32 0.0, %v426
  %v428 = vpop.f32.mrf.mxu0
  %v429 = vadd.f32 0.0, %v428
  %v430 = vpop.f32.mrf.mxu0
  %v431 = vadd.f32 0.0, %v430
  %v432 = vpop.f32.mrf.mxu0
  %v433 = vadd.f32 0.0, %v432
  %434 = vmatprep.mubr.bf16.mxu0 0
  %435 = vmatmul.mubr.bf16.gmra.mxu0 %v220
  %v436 = vpop.f32.mrf.mxu0
  %v437 = vadd.f32 0.0, %v436
  %v438 = vpop.f32.mrf.mxu0
  %v439 = vadd.f32 0.0, %v438
  %v440 = vpop.f32.mrf.mxu0
  %v441 = vadd.f32 0.0, %v440
  %v442 = vpop.f32.mrf.mxu0
  %v443 = vadd.f32 0.0, %v442
  %444 = vmatprep.mubr.bf16.mxu0 0
  %445 = vmatmul.mubr.bf16.gmra.mxu0 %v221
  %v446 = vpop.f32.mrf.mxu0
  %v447 = vadd.f32 0.0, %v446
  %v448 = vpop.f32.mrf.mxu0
  %v449 = vadd.f32 0.0, %v448
  %v450 = vpop.f32.mrf.mxu0
  %v451 = vadd.f32 0.0, %v450
  %v452 = vpop.f32.mrf.mxu0
  %v453 = vadd.f32 0.0, %v452
  %454 = vdwg.mxu0
  %455 = vmatprep.subr.bf16.mxu0 %v349
  %456 = vmatpush1.bf16.msra.mxu0 %v348
  %457 = vmatprep.subr.bf16.mxu0 %v345
  %458 = vmatpush1.bf16.msra.mxu0 %v344
  %459 = vmatprep.subr.bf16.mxu0 %v341
  %460 = vmatpush1.bf16.msra.mxu0 %v340
  %461 = vmatprep.subr.bf16.mxu0 %v337
  %462 = vmatpush1.bf16.msra.mxu0 %v336
  %463 = vmatprep.subr.bf16.mxu0 %v333
  %464 = vmatpush1.bf16.msra.mxu0 %v332
  %465 = vmatprep.subr.bf16.mxu0 %v329
  %466 = vmatpush1.bf16.msra.mxu0 %v328
  %467 = vmatprep.subr.bf16.mxu0 %v325
  %468 = vmatpush1.bf16.msra.mxu0 %v324
  %469 = vmatprep.subr.bf16.mxu0 %v321
  %470 = vmatpush1.bf16.msra.mxu0 %v320
  %471 = vmatprep.subr.bf16.mxu0 0
  %472 = vmatpush2.bf16.msra.mxu0 0
  %473 = vmatprep.subr.bf16.mxu0 0
  %474 = vmatpush2.bf16.msra.mxu0 0
  %475 = vmatprep.subr.bf16.mxu0 0
  %476 = vmatpush2.bf16.msra.mxu0 0
  %477 = vmatprep.subr.bf16.mxu0 0
  %478 = vmatpush2.bf16.msra.mxu0 0
  %479 = vmatprep.subr.bf16.mxu0 0
  %480 = vmatpush2.bf16.msra.mxu0 0
  %481 = vmatprep.subr.bf16.mxu0 0
  %482 = vmatpush2.bf16.msra.mxu0 0
  %483 = vmatprep.subr.bf16.mxu0 0
  %484 = vmatpush2.bf16.msra.mxu0 0
  %485 = vmatprep.subr.bf16.mxu0 0
  %486 = vmatpush2.bf16.msra.mxu0 0
  %487 = vmatprep.mubr.bf16.mxu0 0
  %488 = vmatmul.mubr.bf16.gmra.mxu0 %v218
  %v489 = vpop.f32.mrf.mxu0
  %v490 = vadd.f32 0.0, %v489
  %v491 = vpop.f32.mrf.mxu0
  %v492 = vadd.f32 0.0, %v491
  %v493 = vpop.f32.mrf.mxu0
  %v494 = vadd.f32 0.0, %v493
  %v495 = vpop.f32.mrf.mxu0
  %v496 = vadd.f32 0.0, %v495
  %497 = vmatprep.mubr.bf16.mxu0 0
  %498 = vmatmul.mubr.bf16.gmra.mxu0 %v219
  %v499 = vpop.f32.mrf.mxu0
  %v500 = vadd.f32 0.0, %v499
  %v501 = vpop.f32.mrf.mxu0
  %v502 = vadd.f32 0.0, %v501
  %v503 = vpop.f32.mrf.mxu0
  %v504 = vadd.f32 0.0, %v503
  %v505 = vpop.f32.mrf.mxu0
  %v506 = vadd.f32 0.0, %v505
  %507 = vmatprep.mubr.bf16.mxu0 0
  %508 = vmatmul.mubr.bf16.gmra.mxu0 %v220
  %v509 = vpop.f32.mrf.mxu0
  %v510 = vadd.f32 0.0, %v509
  %v511 = vpop.f32.mrf.mxu0
  %v512 = vadd.f32 0.0, %v511
  %v513 = vpop.f32.mrf.mxu0
  %v514 = vadd.f32 0.0, %v513
  %v515 = vpop.f32.mrf.mxu0
  %v516 = vadd.f32 0.0, %v515
  %517 = vmatprep.mubr.bf16.mxu0 0
  %518 = vmatmul.mubr.bf16.gmra.mxu0 %v221
  %v519 = vpop.f32.mrf.mxu0
  %v520 = vadd.f32 0.0, %v519
  %v521 = vpop.f32.mrf.mxu0
  %v522 = vadd.f32 0.0, %v521
  %v523 = vpop.f32.mrf.mxu0
  %v524 = vadd.f32 0.0, %v523
  %v525 = vpop.f32.mrf.mxu0
  %v526 = vadd.f32 0.0, %v525
  %527 = vdwg.mxu0
  %v560 = vunpack.c.l.b16 %v150
  %v561 = vunpack.c.h.b16 %v150
  %v562 = vunpack.c.l.b16 %v151
  %v563 = vunpack.c.h.b16 %v151
  %v564 = vunpack.c.l.b16 %v152
  %v565 = vunpack.c.h.b16 %v152
  %v566 = vunpack.c.l.b16 %v153
  %v567 = vunpack.c.h.b16 %v153
  %v568 = vunpack.c.l.b16 %v154
  %v569 = vunpack.c.h.b16 %v154
  %v570 = vunpack.c.l.b16 %v155
  %v571 = vunpack.c.h.b16 %v155
  %v572 = vunpack.c.l.b16 %v156
  %v573 = vunpack.c.h.b16 %v156
  %v574 = vunpack.c.l.b16 %v157
  %v575 = vunpack.c.h.b16 %v157
  %v576 = vunpack.c.l.b16 %v158
  %v577 = vunpack.c.h.b16 %v158
  %v578 = vunpack.c.l.b16 %v159
  %v579 = vunpack.c.h.b16 %v159
  %v580 = vunpack.c.l.b16 %v160
  %v581 = vunpack.c.h.b16 %v160
  %v582 = vunpack.c.l.b16 %v161
  %v583 = vunpack.c.h.b16 %v161
  %v584 = vunpack.c.l.b16 %v162
  %v585 = vunpack.c.h.b16 %v162
  %v586 = vunpack.c.l.b16 %v163
  %v587 = vunpack.c.h.b16 %v163
  %v588 = vunpack.c.l.b16 %v164
  %v589 = vunpack.c.h.b16 %v164
  %v590 = vunpack.c.l.b16 %v165
  %v591 = vunpack.c.h.b16 %v165
  %v592 = vunpack.c.l.b16 %v166
  %v593 = vunpack.c.h.b16 %v166
  %v594 = vunpack.c.l.b16 %v167
  %v595 = vunpack.c.h.b16 %v167
  %v596 = vunpack.c.l.b16 %v168
  %v597 = vunpack.c.h.b16 %v168
  %v598 = vunpack.c.l.b16 %v169
  %v599 = vunpack.c.h.b16 %v169
  %v600 = vunpack.c.l.b16 %v170
  %v601 = vunpack.c.h.b16 %v170
  %v602 = vunpack.c.l.b16 %v171
  %v603 = vunpack.c.h.b16 %v171
  %v604 = vunpack.c.l.b16 %v172
  %v605 = vunpack.c.h.b16 %v172
  %v606 = vunpack.c.l.b16 %v173
  %v607 = vunpack.c.h.b16 %v173
  %v608 = vunpack.c.l.b16 %v174
  %v609 = vunpack.c.h.b16 %v174
  %v610 = vunpack.c.l.b16 %v175
  %v611 = vunpack.c.h.b16 %v175
  %v612 = vunpack.c.l.b16 %v176
  %v613 = vunpack.c.h.b16 %v176
  %v614 = vunpack.c.l.b16 %v177
  %v615 = vunpack.c.h.b16 %v177
  %v616 = vunpack.c.l.b16 %v178
  %v617 = vunpack.c.h.b16 %v178
  %v618 = vunpack.c.l.b16 %v179
  %v619 = vunpack.c.h.b16 %v179
  %v620 = vunpack.c.l.b16 %v180
  %v621 = vunpack.c.h.b16 %v180
  %v622 = vunpack.c.l.b16 %v181
  %v623 = vunpack.c.h.b16 %v181
  %v624 = vpack.c.b16 %v564, %v560
  %v625 = vpack.c.b16 %v565, %v561
  %v626 = vpack.c.b16 %v566, %v562
  %v627 = vpack.c.b16 %v567, %v563
  %v628 = vpack.c.b16 %v572, %v568
  %v629 = vpack.c.b16 %v573, %v569
  %v630 = vpack.c.b16 %v574, %v570
  %v631 = vpack.c.b16 %v575, %v571
  %v632 = vpack.c.b16 %v580, %v576
  %v633 = vpack.c.b16 %v581, %v577
  %v634 = vpack.c.b16 %v582, %v578
  %v635 = vpack.c.b16 %v583, %v579
  %v636 = vpack.c.b16 %v588, %v584
  %v637 = vpack.c.b16 %v589, %v585
  %v638 = vpack.c.b16 %v590, %v586
  %v639 = vpack.c.b16 %v591, %v587
  %v640 = vpack.c.b16 %v596, %v592
  %v641 = vpack.c.b16 %v597, %v593
  %v642 = vpack.c.b16 %v598, %v594
  %v643 = vpack.c.b16 %v599, %v595
  %v644 = vpack.c.b16 %v604, %v600
  %v645 = vpack.c.b16 %v605, %v601
  %v646 = vpack.c.b16 %v606, %v602
  %v647 = vpack.c.b16 %v607, %v603
  %v648 = vpack.c.b16 %v612, %v608
  %v649 = vpack.c.b16 %v613, %v609
  %v650 = vpack.c.b16 %v614, %v610
  %v651 = vpack.c.b16 %v615, %v611
  %v652 = vpack.c.b16 %v620, %v616
  %v653 = vpack.c.b16 %v621, %v617
  %v654 = vpack.c.b16 %v622, %v618
  %v655 = vpack.c.b16 %v623, %v619
  %688 = vmatprep.subr.bf16.mxu0 %v653
  %689 = vmatpush1.bf16.msra.mxu0 %v652
  %690 = vmatprep.subr.bf16.mxu0 %v649
  %691 = vmatpush1.bf16.msra.mxu0 %v648
  %692 = vmatprep.subr.bf16.mxu0 %v645
  %693 = vmatpush1.bf16.msra.mxu0 %v644
  %694 = vmatprep.subr.bf16.mxu0 %v641
  %695 = vmatpush1.bf16.msra.mxu0 %v640
  %696 = vmatprep.subr.bf16.mxu0 %v637
  %697 = vmatpush1.bf16.msra.mxu0 %v636
  %698 = vmatprep.subr.bf16.mxu0 %v633
  %699 = vmatpush1.bf16.msra.mxu0 %v632
  %700 = vmatprep.subr.bf16.mxu0 %v629
  %701 = vmatpush1.bf16.msra.mxu0 %v628
  %702 = vmatprep.subr.bf16.mxu0 %v625
  %703 = vmatpush1.bf16.msra.mxu0 %v624
  %704 = vmatprep.subr.bf16.mxu0 0
  %705 = vmatpush2.bf16.msra.mxu0 0
  %706 = vmatprep.subr.bf16.mxu0 0
  %707 = vmatpush2.bf16.msra.mxu0 0
  %708 = vmatprep.subr.bf16.mxu0 0
  %709 = vmatpush2.bf16.msra.mxu0 0
  %710 = vmatprep.subr.bf16.mxu0 0
  %711 = vmatpush2.bf16.msra.mxu0 0
  %712 = vmatprep.subr.bf16.mxu0 0
  %713 = vmatpush2.bf16.msra.mxu0 0
  %714 = vmatprep.subr.bf16.mxu0 0
  %715 = vmatpush2.bf16.msra.mxu0 0
  %716 = vmatprep.subr.bf16.mxu0 0
  %717 = vmatpush2.bf16.msra.mxu0 0
  %718 = vmatprep.subr.bf16.mxu0 0
  %719 = vmatpush2.bf16.msra.mxu0 0
  %720 = vmatprep.mubr.bf16.mxu0 0
  %721 = vmatmul.mubr.bf16.gmra.mxu0 %v182
  %v722 = vpop.f32.mrf.mxu0
  %v723 = vadd.f32 %v417, %v722
  %v724 = vpop.f32.mrf.mxu0
  %v725 = vadd.f32 %v419, %v724
  %v726 = vpop.f32.mrf.mxu0
  %v727 = vadd.f32 %v421, %v726
  %v728 = vpop.f32.mrf.mxu0
  %v729 = vadd.f32 %v423, %v728
  %730 = vmatprep.mubr.bf16.mxu0 0
  %731 = vmatmul.mubr.bf16.gmra.mxu0 %v183
  %v732 = vpop.f32.mrf.mxu0
  %v733 = vadd.f32 %v427, %v732
  %v734 = vpop.f32.mrf.mxu0
  %v735 = vadd.f32 %v429, %v734
  %v736 = vpop.f32.mrf.mxu0
  %v737 = vadd.f32 %v431, %v736
  %v738 = vpop.f32.mrf.mxu0
  %v739 = vadd.f32 %v433, %v738
  %740 = vmatprep.mubr.bf16.mxu0 0
  %741 = vmatmul.mubr.bf16.gmra.mxu0 %v184
  %v742 = vpop.f32.mrf.mxu0
  %v743 = vadd.f32 %v437, %v742
  %v744 = vpop.f32.mrf.mxu0
  %v745 = vadd.f32 %v439, %v744
  %v746 = vpop.f32.mrf.mxu0
  %v747 = vadd.f32 %v441, %v746
  %v748 = vpop.f32.mrf.mxu0
  %v749 = vadd.f32 %v443, %v748
  %750 = vmatprep.mubr.bf16.mxu0 0
  %751 = vmatmul.mubr.bf16.gmra.mxu0 %v185
  %v752 = vpop.f32.mrf.mxu0
  %v753 = vadd.f32 %v447, %v752
  %v754 = vpop.f32.mrf.mxu0
  %v755 = vadd.f32 %v449, %v754
  %v756 = vpop.f32.mrf.mxu0
  %v757 = vadd.f32 %v451, %v756
  %v758 = vpop.f32.mrf.mxu0
  %v759 = vadd.f32 %v453, %v758
  %760 = vdwg.mxu0
  %761 = vmatprep.subr.bf16.mxu0 %v655
  %762 = vmatpush1.bf16.msra.mxu0 %v654
  %763 = vmatprep.subr.bf16.mxu0 %v651
  %764 = vmatpush1.bf16.msra.mxu0 %v650
  %765 = vmatprep.subr.bf16.mxu0 %v647
  %766 = vmatpush1.bf16.msra.mxu0 %v646
  %767 = vmatprep.subr.bf16.mxu0 %v643
  %768 = vmatpush1.bf16.msra.mxu0 %v642
  %769 = vmatprep.subr.bf16.mxu0 %v639
  %770 = vmatpush1.bf16.msra.mxu0 %v638
  %771 = vmatprep.subr.bf16.mxu0 %v635
  %772 = vmatpush1.bf16.msra.mxu0 %v634
  %773 = vmatprep.subr.bf16.mxu0 %v631
  %774 = vmatpush1.bf16.msra.mxu0 %v630
  %775 = vmatprep.subr.bf16.mxu0 %v627
  %776 = vmatpush1.bf16.msra.mxu0 %v626
  %777 = vmatprep.subr.bf16.mxu0 0
  %778 = vmatpush2.bf16.msra.mxu0 0
  %779 = vmatprep.subr.bf16.mxu0 0
  %780 = vmatpush2.bf16.msra.mxu0 0
  %781 = vmatprep.subr.bf16.mxu0 0
  %782 = vmatpush2.bf16.msra.mxu0 0
  %783 = vmatprep.subr.bf16.mxu0 0
  %784 = vmatpush2.bf16.msra.mxu0 0
  %785 = vmatprep.subr.bf16.mxu0 0
  %786 = vmatpush2.bf16.msra.mxu0 0
  %787 = vmatprep.subr.bf16.mxu0 0
  %788 = vmatpush2.bf16.msra.mxu0 0
  %789 = vmatprep.subr.bf16.mxu0 0
  %790 = vmatpush2.bf16.msra.mxu0 0
  %791 = vmatprep.subr.bf16.mxu0 0
  %792 = vmatpush2.bf16.msra.mxu0 0
  %793 = vmatprep.mubr.bf16.mxu0 0
  %794 = vmatmul.mubr.bf16.gmra.mxu0 %v182
  %v795 = vpop.f32.mrf.mxu0
  %v796 = vadd.f32 %v490, %v795
  %v797 = vpop.f32.mrf.mxu0
  %v798 = vadd.f32 %v492, %v797
  %v799 = vpop.f32.mrf.mxu0
  %v800 = vadd.f32 %v494, %v799
  %v801 = vpop.f32.mrf.mxu0
  %v802 = vadd.f32 %v496, %v801
  %803 = vmatprep.mubr.bf16.mxu0 0
  %804 = vmatmul.mubr.bf16.gmra.mxu0 %v183
  %v805 = vpop.f32.mrf.mxu0
  %v806 = vadd.f32 %v500, %v805
  %v807 = vpop.f32.mrf.mxu0
  %v808 = vadd.f32 %v502, %v807
  %v809 = vpop.f32.mrf.mxu0
  %v810 = vadd.f32 %v504, %v809
  %v811 = vpop.f32.mrf.mxu0
  %v812 = vadd.f32 %v506, %v811
  %813 = vmatprep.mubr.bf16.mxu0 0
  %814 = vmatmul.mubr.bf16.gmra.mxu0 %v184
  %v815 = vpop.f32.mrf.mxu0
  %v816 = vadd.f32 %v510, %v815
  %v817 = vpop.f32.mrf.mxu0
  %v818 = vadd.f32 %v512, %v817
  %v819 = vpop.f32.mrf.mxu0
  %v820 = vadd.f32 %v514, %v819
  %v821 = vpop.f32.mrf.mxu0
  %v822 = vadd.f32 %v516, %v821
  %823 = vmatprep.mubr.bf16.mxu0 0
  %824 = vmatmul.mubr.bf16.gmra.mxu0 %v185
  %v825 = vpop.f32.mrf.mxu0
  %v826 = vadd.f32 %v520, %v825
  %v827 = vpop.f32.mrf.mxu0
  %v828 = vadd.f32 %v522, %v827
  %v829 = vpop.f32.mrf.mxu0
  %v830 = vadd.f32 %v524, %v829
  %v831 = vpop.f32.mrf.mxu0
  %v832 = vadd.f32 %v526, %v831
  %833 = vdwg.mxu0
  %v834 = vld [vmem:[%s5 + $0x200] sm:$0xff]
  %v835 = vld [vmem:[%s5 + $0x208] sm:$0xff]
  %v836 = vld [vmem:[%s5 + $0x210] sm:$0xff]
  %v837 = vld [vmem:[%s5 + $0x218] sm:$0xff]
  %v838 = vld [vmem:[%s5 + $0x220] sm:$0xff]
  %v839 = vld [vmem:[%s5 + $0x228] sm:$0xff]
  %v840 = vld [vmem:[%s5 + $0x230] sm:$0xff]
  %v841 = vld [vmem:[%s5 + $0x238] sm:$0xff]
  %v842 = vld [vmem:[%s5 + $0x240] sm:$0xff]
  %v843 = vld [vmem:[%s5 + $0x248] sm:$0xff]
  %v844 = vld [vmem:[%s5 + $0x250] sm:$0xff]
  %v845 = vld [vmem:[%s5 + $0x258] sm:$0xff]
  %v846 = vld [vmem:[%s5 + $0x260] sm:$0xff]
  %v847 = vld [vmem:[%s5 + $0x268] sm:$0xff]
  %v848 = vld [vmem:[%s5 + $0x270] sm:$0xff]
  %v849 = vld [vmem:[%s5 + $0x278] sm:$0xff]
  %v850 = vld [vmem:[%s5 + $0x280] sm:$0xff]
  %v851 = vld [vmem:[%s5 + $0x288] sm:$0xff]
  %v852 = vld [vmem:[%s5 + $0x290] sm:$0xff]
  %v853 = vld [vmem:[%s5 + $0x298] sm:$0xff]
  %v854 = vld [vmem:[%s5 + $0x2a0] sm:$0xff]
  %v855 = vld [vmem:[%s5 + $0x2a8] sm:$0xff]
  %v856 = vld [vmem:[%s5 + $0x2b0] sm:$0xff]
  %v857 = vld [vmem:[%s5 + $0x2b8] sm:$0xff]
  %v858 = vld [vmem:[%s5 + $0x2c0] sm:$0xff]
  %v859 = vld [vmem:[%s5 + $0x2c8] sm:$0xff]
  %v860 = vld [vmem:[%s5 + $0x2d0] sm:$0xff]
  %v861 = vld [vmem:[%s5 + $0x2d8] sm:$0xff]
  %v862 = vld [vmem:[%s5 + $0x2e0] sm:$0xff]
  %v863 = vld [vmem:[%s5 + $0x2e8] sm:$0xff]
  %v864 = vld [vmem:[%s5 + $0x2f0] sm:$0xff]
  %v865 = vld [vmem:[%s5 + $0x2f8] sm:$0xff]
  %v866 = vpack.c.bf16 %v42, %v41
  %v867 = vpack.c.bf16 %v44, %v43
  %v868 = vpack.c.bf16 %v46, %v45
  %v869 = vpack.c.bf16 %v48, %v47
  %v902 = vunpack.c.l.b16 %v834
  %v903 = vunpack.c.h.b16 %v834
  %v904 = vunpack.c.l.b16 %v835
  %v905 = vunpack.c.h.b16 %v835
  %v906 = vunpack.c.l.b16 %v836
  %v907 = vunpack.c.h.b16 %v836
  %v908 = vunpack.c.l.b16 %v837
  %v909 = vunpack.c.h.b16 %v837
  %v910 = vunpack.c.l.b16 %v838
  %v911 = vunpack.c.h.b16 %v838
  %v912 = vunpack.c.l.b16 %v839
  %v913 = vunpack.c.h.b16 %v839
  %v914 = vunpack.c.l.b16 %v840
  %v915 = vunpack.c.h.b16 %v840
  %v916 = vunpack.c.l.b16 %v841
  %v917 = vunpack.c.h.b16 %v841
  %v918 = vunpack.c.l.b16 %v842
  %v919 = vunpack.c.h.b16 %v842
  %v920 = vunpack.c.l.b16 %v843
  %v921 = vunpack.c.h.b16 %v843
  %v922 = vunpack.c.l.b16 %v844
  %v923 = vunpack.c.h.b16 %v844
  %v924 = vunpack.c.l.b16 %v845
  %v925 = vunpack.c.h.b16 %v845
  %v926 = vunpack.c.l.b16 %v846
  %v927 = vunpack.c.h.b16 %v846
  %v928 = vunpack.c.l.b16 %v847
  %v929 = vunpack.c.h.b16 %v847
  %v930 = vunpack.c.l.b16 %v848
  %v931 = vunpack.c.h.b16 %v848
  %v932 = vunpack.c.l.b16 %v849
  %v933 = vunpack.c.h.b16 %v849
  %v934 = vunpack.c.l.b16 %v850
  %v935 = vunpack.c.h.b16 %v850
  %v936 = vunpack.c.l.b16 %v851
  %v937 = vunpack.c.h.b16 %v851
  %v938 = vunpack.c.l.b16 %v852
  %v939 = vunpack.c.h.b16 %v852
  %v940 = vunpack.c.l.b16 %v853
  %v941 = vunpack.c.h.b16 %v853
  %v942 = vunpack.c.l.b16 %v854
  %v943 = vunpack.c.h.b16 %v854
  %v944 = vunpack.c.l.b16 %v855
  %v945 = vunpack.c.h.b16 %v855
  %v946 = vunpack.c.l.b16 %v856
  %v947 = vunpack.c.h.b16 %v856
  %v948 = vunpack.c.l.b16 %v857
  %v949 = vunpack.c.h.b16 %v857
  %v950 = vunpack.c.l.b16 %v858
  %v951 = vunpack.c.h.b16 %v858
  %v952 = vunpack.c.l.b16 %v859
  %v953 = vunpack.c.h.b16 %v859
  %v954 = vunpack.c.l.b16 %v860
  %v955 = vunpack.c.h.b16 %v860
  %v956 = vunpack.c.l.b16 %v861
  %v957 = vunpack.c.h.b16 %v861
  %v958 = vunpack.c.l.b16 %v862
  %v959 = vunpack.c.h.b16 %v862
  %v960 = vunpack.c.l.b16 %v863
  %v961 = vunpack.c.h.b16 %v863
  %v962 = vunpack.c.l.b16 %v864
  %v963 = vunpack.c.h.b16 %v864
  %v964 = vunpack.c.l.b16 %v865
  %v965 = vunpack.c.h.b16 %v865
  %v966 = vpack.c.b16 %v906, %v902
  %v967 = vpack.c.b16 %v907, %v903
  %v968 = vpack.c.b16 %v908, %v904
  %v969 = vpack.c.b16 %v909, %v905
  %v970 = vpack.c.b16 %v914, %v910
  %v971 = vpack.c.b16 %v915, %v911
  %v972 = vpack.c.b16 %v916, %v912
  %v973 = vpack.c.b16 %v917, %v913
  %v974 = vpack.c.b16 %v922, %v918
  %v975 = vpack.c.b16 %v923, %v919
  %v976 = vpack.c.b16 %v924, %v920
  %v977 = vpack.c.b16 %v925, %v921
  %v978 = vpack.c.b16 %v930, %v926
  %v979 = vpack.c.b16 %v931, %v927
  %v980 = vpack.c.b16 %v932, %v928
  %v981 = vpack.c.b16 %v933, %v929
  %v982 = vpack.c.b16 %v938, %v934
  %v983 = vpack.c.b16 %v939, %v935
  %v984 = vpack.c.b16 %v940, %v936
  %v985 = vpack.c.b16 %v941, %v937
  %v986 = vpack.c.b16 %v946, %v942
  %v987 = vpack.c.b16 %v947, %v943
  %v988 = vpack.c.b16 %v948, %v944
  %v989 = vpack.c.b16 %v949, %v945
  %v990 = vpack.c.b16 %v954, %v950
  %v991 = vpack.c.b16 %v955, %v951
  %v992 = vpack.c.b16 %v956, %v952
  %v993 = vpack.c.b16 %v957, %v953
  %v994 = vpack.c.b16 %v962, %v958
  %v995 = vpack.c.b16 %v963, %v959
  %v996 = vpack.c.b16 %v964, %v960
  %v997 = vpack.c.b16 %v965, %v961
  %1030 = vmatprep.subr.bf16.mxu0 %v995
  %1031 = vmatpush1.bf16.msra.mxu0 %v994
  %1032 = vmatprep.subr.bf16.mxu0 %v991
  %1033 = vmatpush1.bf16.msra.mxu0 %v990
  %1034 = vmatprep.subr.bf16.mxu0 %v987
  %1035 = vmatpush1.bf16.msra.mxu0 %v986
  %1036 = vmatprep.subr.bf16.mxu0 %v983
  %1037 = vmatpush1.bf16.msra.mxu0 %v982
  %1038 = vmatprep.subr.bf16.mxu0 %v979
  %1039 = vmatpush1.bf16.msra.mxu0 %v978
  %1040 = vmatprep.subr.bf16.mxu0 %v975
  %1041 = vmatpush1.bf16.msra.mxu0 %v974
  %1042 = vmatprep.subr.bf16.mxu0 %v971
  %1043 = vmatpush1.bf16.msra.mxu0 %v970
  %1044 = vmatprep.subr.bf16.mxu0 %v967
  %1045 = vmatpush1.bf16.msra.mxu0 %v966
  %1046 = vmatprep.subr.bf16.mxu0 0
  %1047 = vmatpush2.bf16.msra.mxu0 0
  %1048 = vmatprep.subr.bf16.mxu0 0
  %1049 = vmatpush2.bf16.msra.mxu0 0
  %1050 = vmatprep.subr.bf16.mxu0 0
  %1051 = vmatpush2.bf16.msra.mxu0 0
  %1052 = vmatprep.subr.bf16.mxu0 0
  %1053 = vmatpush2.bf16.msra.mxu0 0
  %1054 = vmatprep.subr.bf16.mxu0 0
  %1055 = vmatpush2.bf16.msra.mxu0 0
  %1056 = vmatprep.subr.bf16.mxu0 0
  %1057 = vmatpush2.bf16.msra.mxu0 0
  %1058 = vmatprep.subr.bf16.mxu0 0
  %1059 = vmatpush2.bf16.msra.mxu0 0
  %1060 = vmatprep.subr.bf16.mxu0 0
  %1061 = vmatpush2.bf16.msra.mxu0 0
  %1062 = vmatprep.mubr.bf16.mxu0 0
  %1063 = vmatmul.mubr.bf16.gmra.mxu0 %v866
  %v1064 = vpop.f32.mrf.mxu0
  %v1065 = vadd.f32 0.0, %v1064
  %v1066 = vpop.f32.mrf.mxu0
  %v1067 = vadd.f32 0.0, %v1066
  %v1068 = vpop.f32.mrf.mxu0
  %v1069 = vadd.f32 0.0, %v1068
  %v1070 = vpop.f32.mrf.mxu0
  %v1071 = vadd.f32 0.0, %v1070
  %1072 = vmatprep.mubr.bf16.mxu0 0
  %1073 = vmatmul.mubr.bf16.gmra.mxu0 %v867
  %v1074 = vpop.f32.mrf.mxu0
  %v1075 = vadd.f32 0.0, %v1074
  %v1076 = vpop.f32.mrf.mxu0
  %v1077 = vadd.f32 0.0, %v1076
  %v1078 = vpop.f32.mrf.mxu0
  %v1079 = vadd.f32 0.0, %v1078
  %v1080 = vpop.f32.mrf.mxu0
  %v1081 = vadd.f32 0.0, %v1080
  %1082 = vmatprep.mubr.bf16.mxu0 0
  %1083 = vmatmul.mubr.bf16.gmra.mxu0 %v868
  %v1084 = vpop.f32.mrf.mxu0
  %v1085 = vadd.f32 0.0, %v1084
  %v1086 = vpop.f32.mrf.mxu0
  %v1087 = vadd.f32 0.0, %v1086
  %v1088 = vpop.f32.mrf.mxu0
  %v1089 = vadd.f32 0.0, %v1088
  %v1090 = vpop.f32.mrf.mxu0
  %v1091 = vadd.f32 0.0, %v1090
  %1092 = vmatprep.mubr.bf16.mxu0 0
  %1093 = vmatmul.mubr.bf16.gmra.mxu0 %v869
  %v1094 = vpop.f32.mrf.mxu0
  %v1095 = vadd.f32 0.0, %v1094
  %v1096 = vpop.f32.mrf.mxu0
  %v1097 = vadd.f32 0.0, %v1096
  %v1098 = vpop.f32.mrf.mxu0
  %v1099 = vadd.f32 0.0, %v1098
  %v1100 = vpop.f32.mrf.mxu0
  %v1101 = vadd.f32 0.0, %v1100
  %1102 = vdwg.mxu0
  %1103 = vmatprep.subr.bf16.mxu0 %v997
  %1104 = vmatpush1.bf16.msra.mxu0 %v996
  %1105 = vmatprep.subr.bf16.mxu0 %v993
  %1106 = vmatpush1.bf16.msra.mxu0 %v992
  %1107 = vmatprep.subr.bf16.mxu0 %v989
  %1108 = vmatpush1.bf16.msra.mxu0 %v988
  %1109 = vmatprep.subr.bf16.mxu0 %v985
  %1110 = vmatpush1.bf16.msra.mxu0 %v984
  %1111 = vmatprep.subr.bf16.mxu0 %v981
  %1112 = vmatpush1.bf16.msra.mxu0 %v980
  %1113 = vmatprep.subr.bf16.mxu0 %v977
  %1114 = vmatpush1.bf16.msra.mxu0 %v976
  %1115 = vmatprep.subr.bf16.mxu0 %v973
  %1116 = vmatpush1.bf16.msra.mxu0 %v972
  %1117 = vmatprep.subr.bf16.mxu0 %v969
  %1118 = vmatpush1.bf16.msra.mxu0 %v968
  %1119 = vmatprep.subr.bf16.mxu0 0
  %1120 = vmatpush2.bf16.msra.mxu0 0
  %1121 = vmatprep.subr.bf16.mxu0 0
  %1122 = vmatpush2.bf16.msra.mxu0 0
  %1123 = vmatprep.subr.bf16.mxu0 0
  %1124 = vmatpush2.bf16.msra.mxu0 0
  %1125 = vmatprep.subr.bf16.mxu0 0
  %1126 = vmatpush2.bf16.msra.mxu0 0
  %1127 = vmatprep.subr.bf16.mxu0 0
  %1128 = vmatpush2.bf16.msra.mxu0 0
  %1129 = vmatprep.subr.bf16.mxu0 0
  %1130 = vmatpush2.bf16.msra.mxu0 0
  %1131 = vmatprep.subr.bf16.mxu0 0
  %1132 = vmatpush2.bf16.msra.mxu0 0
  %1133 = vmatprep.subr.bf16.mxu0 0
  %1134 = vmatpush2.bf16.msra.mxu0 0
  %1135 = vmatprep.mubr.bf16.mxu0 0
  %1136 = vmatmul.mubr.bf16.gmra.mxu0 %v866
  %v1137 = vpop.f32.mrf.mxu0
  %v1138 = vadd.f32 0.0, %v1137
  %v1139 = vpop.f32.mrf.mxu0
  %v1140 = vadd.f32 0.0, %v1139
  %v1141 = vpop.f32.mrf.mxu0
  %v1142 = vadd.f32 0.0, %v1141
  %v1143 = vpop.f32.mrf.mxu0
  %v1144 = vadd.f32 0.0, %v1143
  %1145 = vmatprep.mubr.bf16.mxu0 0
  %1146 = vmatmul.mubr.bf16.gmra.mxu0 %v867
  %v1147 = vpop.f32.mrf.mxu0
  %v1148 = vadd.f32 0.0, %v1147
  %v1149 = vpop.f32.mrf.mxu0
  %v1150 = vadd.f32 0.0, %v1149
  %v1151 = vpop.f32.mrf.mxu0
  %v1152 = vadd.f32 0.0, %v1151
  %v1153 = vpop.f32.mrf.mxu0
  %v1154 = vadd.f32 0.0, %v1153
  %1155 = vmatprep.mubr.bf16.mxu0 0
  %1156 = vmatmul.mubr.bf16.gmra.mxu0 %v868
  %v1157 = vpop.f32.mrf.mxu0
  %v1158 = vadd.f32 0.0, %v1157
  %v1159 = vpop.f32.mrf.mxu0
  %v1160 = vadd.f32 0.0, %v1159
  %v1161 = vpop.f32.mrf.mxu0
  %v1162 = vadd.f32 0.0, %v1161
  %v1163 = vpop.f32.mrf.mxu0
  %v1164 = vadd.f32 0.0, %v1163
  %1165 = vmatprep.mubr.bf16.mxu0 0
  %1166 = vmatmul.mubr.bf16.gmra.mxu0 %v869
  %v1167 = vpop.f32.mrf.mxu0
  %v1168 = vadd.f32 0.0, %v1167
  %v1169 = vpop.f32.mrf.mxu0
  %v1170 = vadd.f32 0.0, %v1169
  %v1171 = vpop.f32.mrf.mxu0
  %v1172 = vadd.f32 0.0, %v1171
  %v1173 = vpop.f32.mrf.mxu0
  %v1174 = vadd.f32 0.0, %v1173
  %1175 = vdwg.mxu0
  %v1176 = vadd.f32 %v723, %v1065
  %v1177 = vadd.f32 %v725, %v1067
  %v1178 = vadd.f32 %v796, %v1138
  %v1179 = vadd.f32 %v798, %v1140
  %v1180 = vadd.f32 %v727, %v1069
  %v1181 = vadd.f32 %v729, %v1071
  %v1182 = vadd.f32 %v800, %v1142
  %v1183 = vadd.f32 %v802, %v1144
  %v1184 = vadd.f32 %v733, %v1075
  %v1185 = vadd.f32 %v735, %v1077
  %v1186 = vadd.f32 %v806, %v1148
  %v1187 = vadd.f32 %v808, %v1150
  %v1188 = vadd.f32 %v737, %v1079
  %v1189 = vadd.f32 %v739, %v1081
  %v1190 = vadd.f32 %v810, %v1152
  %v1191 = vadd.f32 %v812, %v1154
  %v1192 = vadd.f32 %v743, %v1085
  %v1193 = vadd.f32 %v745, %v1087
  %v1194 = vadd.f32 %v816, %v1158
  %v1195 = vadd.f32 %v818, %v1160
  %v1196 = vadd.f32 %v747, %v1089
  %v1197 = vadd.f32 %v749, %v1091
  %v1198 = vadd.f32 %v820, %v1162
  %v1199 = vadd.f32 %v822, %v1164
  %v1200 = vadd.f32 %v753, %v1095
  %v1201 = vadd.f32 %v755, %v1097
  %v1202 = vadd.f32 %v826, %v1168
  %v1203 = vadd.f32 %v828, %v1170
  %v1204 = vadd.f32 %v757, %v1099
  %v1205 = vadd.f32 %v759, %v1101
  %v1206 = vadd.f32 %v830, %v1172
  %v1207 = vadd.f32 %v832, %v1174
  %v1208 = vld [vmem:[%s5 + $0x300] sm:$0xff]
  %v1209 = vld [vmem:[%s5 + $0x308] sm:$0xff]
  %v1210 = vld [vmem:[%s5 + $0x310] sm:$0xff]
  %v1211 = vld [vmem:[%s5 + $0x318] sm:$0xff]
  %v1212 = vld [vmem:[%s5 + $0x320] sm:$0xff]
  %v1213 = vld [vmem:[%s5 + $0x328] sm:$0xff]
  %v1214 = vld [vmem:[%s5 + $0x330] sm:$0xff]
  %v1215 = vld [vmem:[%s5 + $0x338] sm:$0xff]
  %v1216 = vld [vmem:[%s5 + $0x340] sm:$0xff]
  %v1217 = vld [vmem:[%s5 + $0x348] sm:$0xff]
  %v1218 = vld [vmem:[%s5 + $0x350] sm:$0xff]
  %v1219 = vld [vmem:[%s5 + $0x358] sm:$0xff]
  %v1220 = vld [vmem:[%s5 + $0x360] sm:$0xff]
  %v1221 = vld [vmem:[%s5 + $0x368] sm:$0xff]
  %v1222 = vld [vmem:[%s5 + $0x370] sm:$0xff]
  %v1223 = vld [vmem:[%s5 + $0x378] sm:$0xff]
  %v1224 = vld [vmem:[%s5 + $0x380] sm:$0xff]
  %v1225 = vld [vmem:[%s5 + $0x388] sm:$0xff]
  %v1226 = vld [vmem:[%s5 + $0x390] sm:$0xff]
  %v1227 = vld [vmem:[%s5 + $0x398] sm:$0xff]
  %v1228 = vld [vmem:[%s5 + $0x3a0] sm:$0xff]
  %v1229 = vld [vmem:[%s5 + $0x3a8] sm:$0xff]
  %v1230 = vld [vmem:[%s5 + $0x3b0] sm:$0xff]
  %v1231 = vld [vmem:[%s5 + $0x3b8] sm:$0xff]
  %v1232 = vld [vmem:[%s5 + $0x3c0] sm:$0xff]
  %v1233 = vld [vmem:[%s5 + $0x3c8] sm:$0xff]
  %v1234 = vld [vmem:[%s5 + $0x3d0] sm:$0xff]
  %v1235 = vld [vmem:[%s5 + $0x3d8] sm:$0xff]
  %v1236 = vld [vmem:[%s5 + $0x3e0] sm:$0xff]
  %v1237 = vld [vmem:[%s5 + $0x3e8] sm:$0xff]
  %v1238 = vld [vmem:[%s5 + $0x3f0] sm:$0xff]
  %v1239 = vld [vmem:[%s5 + $0x3f8] sm:$0xff]
  %v1240 = vpack.c.bf16 %v50, %v49
  %v1241 = vpack.c.bf16 %v52, %v51
  %v1242 = vpack.c.bf16 %v54, %v53
  %v1243 = vpack.c.bf16 %v56, %v55
  %v1276 = vunpack.c.l.b16 %v1208
  %v1277 = vunpack.c.h.b16 %v1208
  %v1278 = vunpack.c.l.b16 %v1209
  %v1279 = vunpack.c.h.b16 %v1209
  %v1280 = vunpack.c.l.b16 %v1210
  %v1281 = vunpack.c.h.b16 %v1210
  %v1282 = vunpack.c.l.b16 %v1211
  %v1283 = vunpack.c.h.b16 %v1211
  %v1284 = vunpack.c.l.b16 %v1212
  %v1285 = vunpack.c.h.b16 %v1212
  %v1286 = vunpack.c.l.b16 %v1213
  %v1287 = vunpack.c.h.b16 %v1213
  %v1288 = vunpack.c.l.b16 %v1214
  %v1289 = vunpack.c.h.b16 %v1214
  %v1290 = vunpack.c.l.b16 %v1215
  %v1291 = vunpack.c.h.b16 %v1215
  %v1292 = vunpack.c.l.b16 %v1216
  %v1293 = vunpack.c.h.b16 %v1216
  %v1294 = vunpack.c.l.b16 %v1217
  %v1295 = vunpack.c.h.b16 %v1217
  %v1296 = vunpack.c.l.b16 %v1218
  %v1297 = vunpack.c.h.b16 %v1218
  %v1298 = vunpack.c.l.b16 %v1219
  %v1299 = vunpack.c.h.b16 %v1219
  %v1300 = vunpack.c.l.b16 %v1220
  %v1301 = vunpack.c.h.b16 %v1220
  %v1302 = vunpack.c.l.b16 %v1221
  %v1303 = vunpack.c.h.b16 %v1221
  %v1304 = vunpack.c.l.b16 %v1222
  %v1305 = vunpack.c.h.b16 %v1222
  %v1306 = vunpack.c.l.b16 %v1223
  %v1307 = vunpack.c.h.b16 %v1223
  %v1308 = vunpack.c.l.b16 %v1224
  %v1309 = vunpack.c.h.b16 %v1224
  %v1310 = vunpack.c.l.b16 %v1225
  %v1311 = vunpack.c.h.b16 %v1225
  %v1312 = vunpack.c.l.b16 %v1226
  %v1313 = vunpack.c.h.b16 %v1226
  %v1314 = vunpack.c.l.b16 %v1227
  %v1315 = vunpack.c.h.b16 %v1227
  %v1316 = vunpack.c.l.b16 %v1228
  %v1317 = vunpack.c.h.b16 %v1228
  %v1318 = vunpack.c.l.b16 %v1229
  %v1319 = vunpack.c.h.b16 %v1229
  %v1320 = vunpack.c.l.b16 %v1230
  %v1321 = vunpack.c.h.b16 %v1230
  %v1322 = vunpack.c.l.b16 %v1231
  %v1323 = vunpack.c.h.b16 %v1231
  %v1324 = vunpack.c.l.b16 %v1232
  %v1325 = vunpack.c.h.b16 %v1232
  %v1326 = vunpack.c.l.b16 %v1233
  %v1327 = vunpack.c.h.b16 %v1233
  %v1328 = vunpack.c.l.b16 %v1234
  %v1329 = vunpack.c.h.b16 %v1234
  %v1330 = vunpack.c.l.b16 %v1235
  %v1331 = vunpack.c.h.b16 %v1235
  %v1332 = vunpack.c.l.b16 %v1236
  %v1333 = vunpack.c.h.b16 %v1236
  %v1334 = vunpack.c.l.b16 %v1237
  %v1335 = vunpack.c.h.b16 %v1237
  %v1336 = vunpack.c.l.b16 %v1238
  %v1337 = vunpack.c.h.b16 %v1238
  %v1338 = vunpack.c.l.b16 %v1239
  %v1339 = vunpack.c.h.b16 %v1239
  %v1340 = vpack.c.b16 %v1280, %v1276
  %v1341 = vpack.c.b16 %v1281, %v1277
  %v1342 = vpack.c.b16 %v1282, %v1278
  %v1343 = vpack.c.b16 %v1283, %v1279
  %v1344 = vpack.c.b16 %v1288, %v1284
  %v1345 = vpack.c.b16 %v1289, %v1285
  %v1346 = vpack.c.b16 %v1290, %v1286
  %v1347 = vpack.c.b16 %v1291, %v1287
  %v1348 = vpack.c.b16 %v1296, %v1292
  %v1349 = vpack.c.b16 %v1297, %v1293
  %v1350 = vpack.c.b16 %v1298, %v1294
  %v1351 = vpack.c.b16 %v1299, %v1295
  %v1352 = vpack.c.b16 %v1304, %v1300
  %v1353 = vpack.c.b16 %v1305, %v1301
  %v1354 = vpack.c.b16 %v1306, %v1302
  %v1355 = vpack.c.b16 %v1307, %v1303
  %v1356 = vpack.c.b16 %v1312, %v1308
  %v1357 = vpack.c.b16 %v1313, %v1309
  %v1358 = vpack.c.b16 %v1314, %v1310
  %v1359 = vpack.c.b16 %v1315, %v1311
  %v1360 = vpack.c.b16 %v1320, %v1316
  %v1361 = vpack.c.b16 %v1321, %v1317
  %v1362 = vpack.c.b16 %v1322, %v1318
  %v1363 = vpack.c.b16 %v1323, %v1319
  %v1364 = vpack.c.b16 %v1328, %v1324
  %v1365 = vpack.c.b16 %v1329, %v1325
  %v1366 = vpack.c.b16 %v1330, %v1326
  %v1367 = vpack.c.b16 %v1331, %v1327
  %v1368 = vpack.c.b16 %v1336, %v1332
  %v1369 = vpack.c.b16 %v1337, %v1333
  %v1370 = vpack.c.b16 %v1338, %v1334
  %v1371 = vpack.c.b16 %v1339, %v1335
  %1404 = vmatprep.subr.bf16.mxu0 %v1369
  %1405 = vmatpush1.bf16.msra.mxu0 %v1368
  %1406 = vmatprep.subr.bf16.mxu0 %v1365
  %1407 = vmatpush1.bf16.msra.mxu0 %v1364
  %1408 = vmatprep.subr.bf16.mxu0 %v1361
  %1409 = vmatpush1.bf16.msra.mxu0 %v1360
  %1410 = vmatprep.subr.bf16.mxu0 %v1357
  %1411 = vmatpush1.bf16.msra.mxu0 %v1356
  %1412 = vmatprep.subr.bf16.mxu0 %v1353
  %1413 = vmatpush1.bf16.msra.mxu0 %v1352
  %1414 = vmatprep.subr.bf16.mxu0 %v1349
  %1415 = vmatpush1.bf16.msra.mxu0 %v1348
  %1416 = vmatprep.subr.bf16.mxu0 %v1345
  %1417 = vmatpush1.bf16.msra.mxu0 %v1344
  %1418 = vmatprep.subr.bf16.mxu0 %v1341
  %1419 = vmatpush1.bf16.msra.mxu0 %v1340
  %1420 = vmatprep.subr.bf16.mxu0 0
  %1421 = vmatpush2.bf16.msra.mxu0 0
  %1422 = vmatprep.subr.bf16.mxu0 0
  %1423 = vmatpush2.bf16.msra.mxu0 0
  %1424 = vmatprep.subr.bf16.mxu0 0
  %1425 = vmatpush2.bf16.msra.mxu0 0
  %1426 = vmatprep.subr.bf16.mxu0 0
  %1427 = vmatpush2.bf16.msra.mxu0 0
  %1428 = vmatprep.subr.bf16.mxu0 0
  %1429 = vmatpush2.bf16.msra.mxu0 0
  %1430 = vmatprep.subr.bf16.mxu0 0
  %1431 = vmatpush2.bf16.msra.mxu0 0
  %1432 = vmatprep.subr.bf16.mxu0 0
  %1433 = vmatpush2.bf16.msra.mxu0 0
  %1434 = vmatprep.subr.bf16.mxu0 0
  %1435 = vmatpush2.bf16.msra.mxu0 0
  %1436 = vmatprep.mubr.bf16.mxu0 0
  %1437 = vmatmul.mubr.bf16.gmra.mxu0 %v1240
  %v1438 = vpop.f32.mrf.mxu0
  %v1439 = vadd.f32 0.0, %v1438
  %v1440 = vpop.f32.mrf.mxu0
  %v1441 = vadd.f32 0.0, %v1440
  %v1442 = vpop.f32.mrf.mxu0
  %v1443 = vadd.f32 0.0, %v1442
  %v1444 = vpop.f32.mrf.mxu0
  %v1445 = vadd.f32 0.0, %v1444
  %1446 = vmatprep.mubr.bf16.mxu0 0
  %1447 = vmatmul.mubr.bf16.gmra.mxu0 %v1241
  %v1448 = vpop.f32.mrf.mxu0
  %v1449 = vadd.f32 0.0, %v1448
  %v1450 = vpop.f32.mrf.mxu0
  %v1451 = vadd.f32 0.0, %v1450
  %v1452 = vpop.f32.mrf.mxu0
  %v1453 = vadd.f32 0.0, %v1452
  %v1454 = vpop.f32.mrf.mxu0
  %v1455 = vadd.f32 0.0, %v1454
  %1456 = vmatprep.mubr.bf16.mxu0 0
  %1457 = vmatmul.mubr.bf16.gmra.mxu0 %v1242
  %v1458 = vpop.f32.mrf.mxu0
  %v1459 = vadd.f32 0.0, %v1458
  %v1460 = vpop.f32.mrf.mxu0
  %v1461 = vadd.f32 0.0, %v1460
  %v1462 = vpop.f32.mrf.mxu0
  %v1463 = vadd.f32 0.0, %v1462
  %v1464 = vpop.f32.mrf.mxu0
  %v1465 = vadd.f32 0.0, %v1464
  %1466 = vmatprep.mubr.bf16.mxu0 0
  %1467 = vmatmul.mubr.bf16.gmra.mxu0 %v1243
  %v1468 = vpop.f32.mrf.mxu0
  %v1469 = vadd.f32 0.0, %v1468
  %v1470 = vpop.f32.mrf.mxu0
  %v1471 = vadd.f32 0.0, %v1470
  %v1472 = vpop.f32.mrf.mxu0
  %v1473 = vadd.f32 0.0, %v1472
  %v1474 = vpop.f32.mrf.mxu0
  %v1475 = vadd.f32 0.0, %v1474
  %1476 = vdwg.mxu0
  %1477 = vmatprep.subr.bf16.mxu0 %v1371
  %1478 = vmatpush1.bf16.msra.mxu0 %v1370
  %1479 = vmatprep.subr.bf16.mxu0 %v1367
  %1480 = vmatpush1.bf16.msra.mxu0 %v1366
  %1481 = vmatprep.subr.bf16.mxu0 %v1363
  %1482 = vmatpush1.bf16.msra.mxu0 %v1362
  %1483 = vmatprep.subr.bf16.mxu0 %v1359
  %1484 = vmatpush1.bf16.msra.mxu0 %v1358
  %1485 = vmatprep.subr.bf16.mxu0 %v1355
  %1486 = vmatpush1.bf16.msra.mxu0 %v1354
  %1487 = vmatprep.subr.bf16.mxu0 %v1351
  %1488 = vmatpush1.bf16.msra.mxu0 %v1350
  %1489 = vmatprep.subr.bf16.mxu0 %v1347
  %1490 = vmatpush1.bf16.msra.mxu0 %v1346
  %1491 = vmatprep.subr.bf16.mxu0 %v1343
  %1492 = vmatpush1.bf16.msra.mxu0 %v1342
  %1493 = vmatprep.subr.bf16.mxu0 0
  %1494 = vmatpush2.bf16.msra.mxu0 0
  %1495 = vmatprep.subr.bf16.mxu0 0
  %1496 = vmatpush2.bf16.msra.mxu0 0
  %1497 = vmatprep.subr.bf16.mxu0 0
  %1498 = vmatpush2.bf16.msra.mxu0 0
  %1499 = vmatprep.subr.bf16.mxu0 0
  %1500 = vmatpush2.bf16.msra.mxu0 0
  %1501 = vmatprep.subr.bf16.mxu0 0
  %1502 = vmatpush2.bf16.msra.mxu0 0
  %1503 = vmatprep.subr.bf16.mxu0 0
  %1504 = vmatpush2.bf16.msra.mxu0 0
  %1505 = vmatprep.subr.bf16.mxu0 0
  %1506 = vmatpush2.bf16.msra.mxu0 0
  %1507 = vmatprep.subr.bf16.mxu0 0
  %1508 = vmatpush2.bf16.msra.mxu0 0
  %1509 = vmatprep.mubr.bf16.mxu0 0
  %1510 = vmatmul.mubr.bf16.gmra.mxu0 %v1240
  %v1511 = vpop.f32.mrf.mxu0
  %v1512 = vadd.f32 0.0, %v1511
  %v1513 = vpop.f32.mrf.mxu0
  %v1514 = vadd.f32 0.0, %v1513
  %v1515 = vpop.f32.mrf.mxu0
  %v1516 = vadd.f32 0.0, %v1515
  %v1517 = vpop.f32.mrf.mxu0
  %v1518 = vadd.f32 0.0, %v1517
  %1519 = vmatprep.mubr.bf16.mxu0 0
  %1520 = vmatmul.mubr.bf16.gmra.mxu0 %v1241
  %v1521 = vpop.f32.mrf.mxu0
  %v1522 = vadd.f32 0.0, %v1521
  %v1523 = vpop.f32.mrf.mxu0
  %v1524 = vadd.f32 0.0, %v1523
  %v1525 = vpop.f32.mrf.mxu0
  %v1526 = vadd.f32 0.0, %v1525
  %v1527 = vpop.f32.mrf.mxu0
  %v1528 = vadd.f32 0.0, %v1527
  %1529 = vmatprep.mubr.bf16.mxu0 0
  %1530 = vmatmul.mubr.bf16.gmra.mxu0 %v1242
  %v1531 = vpop.f32.mrf.mxu0
  %v1532 = vadd.f32 0.0, %v1531
  %v1533 = vpop.f32.mrf.mxu0
  %v1534 = vadd.f32 0.0, %v1533
  %v1535 = vpop.f32.mrf.mxu0
  %v1536 = vadd.f32 0.0, %v1535
  %v1537 = vpop.f32.mrf.mxu0
  %v1538 = vadd.f32 0.0, %v1537
  %1539 = vmatprep.mubr.bf16.mxu0 0
  %1540 = vmatmul.mubr.bf16.gmra.mxu0 %v1243
  %v1541 = vpop.f32.mrf.mxu0
  %v1542 = vadd.f32 0.0, %v1541
  %v1543 = vpop.f32.mrf.mxu0
  %v1544 = vadd.f32 0.0, %v1543
  %v1545 = vpop.f32.mrf.mxu0
  %v1546 = vadd.f32 0.0, %v1545
  %v1547 = vpop.f32.mrf.mxu0
  %v1548 = vadd.f32 0.0, %v1547
  %1549 = vdwg.mxu0
  %v1550 = vadd.f32 %v1176, %v1439
  %v1551 = vadd.f32 %v1177, %v1441
  %v1552 = vadd.f32 %v1178, %v1512
  %v1553 = vadd.f32 %v1179, %v1514
  %v1554 = vadd.f32 %v1180, %v1443
  %v1555 = vadd.f32 %v1181, %v1445
  %v1556 = vadd.f32 %v1182, %v1516
  %v1557 = vadd.f32 %v1183, %v1518
  %v1558 = vadd.f32 %v1184, %v1449
  %v1559 = vadd.f32 %v1185, %v1451
  %v1560 = vadd.f32 %v1186, %v1522
  %v1561 = vadd.f32 %v1187, %v1524
  %v1562 = vadd.f32 %v1188, %v1453
  %v1563 = vadd.f32 %v1189, %v1455
  %v1564 = vadd.f32 %v1190, %v1526
  %v1565 = vadd.f32 %v1191, %v1528
  %v1566 = vadd.f32 %v1192, %v1459
  %v1567 = vadd.f32 %v1193, %v1461
  %v1568 = vadd.f32 %v1194, %v1532
  %v1569 = vadd.f32 %v1195, %v1534
  %v1570 = vadd.f32 %v1196, %v1463
  %v1571 = vadd.f32 %v1197, %v1465
  %v1572 = vadd.f32 %v1198, %v1536
  %v1573 = vadd.f32 %v1199, %v1538
  %v1574 = vadd.f32 %v1200, %v1469
  %v1575 = vadd.f32 %v1201, %v1471
  %v1576 = vadd.f32 %v1202, %v1542
  %v1577 = vadd.f32 %v1203, %v1544
  %v1578 = vadd.f32 %v1204, %v1473
  %v1579 = vadd.f32 %v1205, %v1475
  %v1580 = vadd.f32 %v1206, %v1546
  %v1581 = vadd.f32 %v1207, %v1548
  %v1582 = vld [vmem:[%s6] sm:$0xf]
  %v1584 = vlaneseq
  %v1585 = vshrl.u32 %v1584, 7
  %v1586 = vsub.s32 0, %v1585
  %v1587 = vrot.slane %v1582, %v1586
  %v1588 = vlaneseq
  %v1589 = vshrl.u32 %v1588, 7
  %v1590 = vsub.s32 1, %v1589
  %v1591 = vrot.slane %v1582, %v1590
  %v1592 = vlaneseq
  %v1593 = vshrl.u32 %v1592, 7
  %v1594 = vsub.s32 2, %v1593
  %v1595 = vrot.slane %v1582, %v1594
  %v1596 = vlaneseq
  %v1597 = vshrl.u32 %v1596, 7
  %v1598 = vsub.s32 3, %v1597
  %v1599 = vrot.slane %v1582, %v1598
  %v1604 = vadd.f32 %v1550, %v1587
  %v1605 = vadd.f32 %v1551, %v1591
  %v1606 = vadd.f32 %v1552, %v1595
  %v1607 = vadd.f32 %v1553, %v1599
  %v1608 = vadd.f32 %v1554, %v1587
  %v1609 = vadd.f32 %v1555, %v1591
  %v1610 = vadd.f32 %v1556, %v1595
  %v1611 = vadd.f32 %v1557, %v1599
  %v1612 = vadd.f32 %v1558, %v1587
  %v1613 = vadd.f32 %v1559, %v1591
  %v1614 = vadd.f32 %v1560, %v1595
  %v1615 = vadd.f32 %v1561, %v1599
  %v1616 = vadd.f32 %v1562, %v1587
  %v1617 = vadd.f32 %v1563, %v1591
  %v1618 = vadd.f32 %v1564, %v1595
  %v1619 = vadd.f32 %v1565, %v1599
  %v1620 = vadd.f32 %v1566, %v1587
  %v1621 = vadd.f32 %v1567, %v1591
  %v1622 = vadd.f32 %v1568, %v1595
  %v1623 = vadd.f32 %v1569, %v1599
  %v1624 = vadd.f32 %v1570, %v1587
  %v1625 = vadd.f32 %v1571, %v1591
  %v1626 = vadd.f32 %v1572, %v1595
  %v1627 = vadd.f32 %v1573, %v1599
  %v1628 = vadd.f32 %v1574, %v1587
  %v1629 = vadd.f32 %v1575, %v1591
  %v1630 = vadd.f32 %v1576, %v1595
  %v1631 = vadd.f32 %v1577, %v1599
  %v1632 = vadd.f32 %v1578, %v1587
  %v1633 = vadd.f32 %v1579, %v1591
  %v1634 = vadd.f32 %v1580, %v1595
  %v1635 = vadd.f32 %v1581, %v1599
  %v1636 = vxor.u32 %v1604, 2147483648
  %v1637 = vxor.u32 %v1605, 2147483648
  %v1638 = vxor.u32 %v1608, 2147483648
  %v1639 = vxor.u32 %v1609, 2147483648
  %v1640 = vxor.u32 %v1612, 2147483648
  %v1641 = vxor.u32 %v1613, 2147483648
  %v1642 = vxor.u32 %v1616, 2147483648
  %v1643 = vxor.u32 %v1617, 2147483648
  %v1644 = vxor.u32 %v1620, 2147483648
  %v1645 = vxor.u32 %v1621, 2147483648
  %v1646 = vxor.u32 %v1624, 2147483648
  %v1647 = vxor.u32 %v1625, 2147483648
  %v1648 = vxor.u32 %v1628, 2147483648
  %v1649 = vxor.u32 %v1629, 2147483648
  %v1650 = vxor.u32 %v1632, 2147483648
  %v1651 = vxor.u32 %v1633, 2147483648
  %v1652 = vmul.f32 %v1636, 1.442695
  %v1653 = vpow.pop %v1652
  %v1654 = vmul.f32 %v1637, 1.442695
  %v1655 = vpow.pop %v1654
  %v1656 = vmul.f32 %v1638, 1.442695
  %v1657 = vpow.pop %v1656
  %v1658 = vmul.f32 %v1639, 1.442695
  %v1659 = vpow.pop %v1658
  %v1660 = vmul.f32 %v1640, 1.442695
  %v1661 = vpow.pop %v1660
  %v1662 = vmul.f32 %v1641, 1.442695
  %v1663 = vpow.pop %v1662
  %v1664 = vmul.f32 %v1642, 1.442695
  %v1665 = vpow.pop %v1664
  %v1666 = vmul.f32 %v1643, 1.442695
  %v1667 = vpow.pop %v1666
  %v1668 = vmul.f32 %v1644, 1.442695
  %v1669 = vpow.pop %v1668
  %v1670 = vmul.f32 %v1645, 1.442695
  %v1671 = vpow.pop %v1670
  %v1672 = vmul.f32 %v1646, 1.442695
  %v1673 = vpow.pop %v1672
  %v1674 = vmul.f32 %v1647, 1.442695
  %v1675 = vpow.pop %v1674
  %v1676 = vmul.f32 %v1648, 1.442695
  %v1677 = vpow.pop %v1676
  %v1678 = vmul.f32 %v1649, 1.442695
  %v1679 = vpow.pop %v1678
  %v1680 = vmul.f32 %v1650, 1.442695
  %v1681 = vpow.pop %v1680
  %v1682 = vmul.f32 %v1651, 1.442695
  %v1683 = vpow.pop %v1682
  %v1684 = vadd.f32 %v1653, 1.0
  %v1685 = vadd.f32 %v1655, 1.0
  %v1686 = vadd.f32 %v1657, 1.0
  %v1687 = vadd.f32 %v1659, 1.0
  %v1688 = vadd.f32 %v1661, 1.0
  %v1689 = vadd.f32 %v1663, 1.0
  %v1690 = vadd.f32 %v1665, 1.0
  %v1691 = vadd.f32 %v1667, 1.0
  %v1692 = vadd.f32 %v1669, 1.0
  %v1693 = vadd.f32 %v1671, 1.0
  %v1694 = vadd.f32 %v1673, 1.0
  %v1695 = vadd.f32 %v1675, 1.0
  %v1696 = vadd.f32 %v1677, 1.0
  %v1697 = vadd.f32 %v1679, 1.0
  %v1698 = vadd.f32 %v1681, 1.0
  %v1699 = vadd.f32 %v1683, 1.0
  %v1700 = vrcp.pop %v1684
  %v1701 = vmul.f32 1.0, %v1700
  %v1702 = vrcp.pop %v1685
  %v1703 = vmul.f32 1.0, %v1702
  %v1704 = vrcp.pop %v1686
  %v1705 = vmul.f32 1.0, %v1704
  %v1706 = vrcp.pop %v1687
  %v1707 = vmul.f32 1.0, %v1706
  %v1708 = vrcp.pop %v1688
  %v1709 = vmul.f32 1.0, %v1708
  %v1710 = vrcp.pop %v1689
  %v1711 = vmul.f32 1.0, %v1710
  %v1712 = vrcp.pop %v1690
  %v1713 = vmul.f32 1.0, %v1712
  %v1714 = vrcp.pop %v1691
  %v1715 = vmul.f32 1.0, %v1714
  %v1716 = vrcp.pop %v1692
  %v1717 = vmul.f32 1.0, %v1716
  %v1718 = vrcp.pop %v1693
  %v1719 = vmul.f32 1.0, %v1718
  %v1720 = vrcp.pop %v1694
  %v1721 = vmul.f32 1.0, %v1720
  %v1722 = vrcp.pop %v1695
  %v1723 = vmul.f32 1.0, %v1722
  %v1724 = vrcp.pop %v1696
  %v1725 = vmul.f32 1.0, %v1724
  %v1726 = vrcp.pop %v1697
  %v1727 = vmul.f32 1.0, %v1726
  %v1728 = vrcp.pop %v1698
  %v1729 = vmul.f32 1.0, %v1728
  %v1730 = vrcp.pop %v1699
  %v1731 = vmul.f32 1.0, %v1730
  %v1732 = vxor.u32 %v1606, 2147483648
  %v1733 = vxor.u32 %v1607, 2147483648
  %v1734 = vxor.u32 %v1610, 2147483648
  %v1735 = vxor.u32 %v1611, 2147483648
  %v1736 = vxor.u32 %v1614, 2147483648
  %v1737 = vxor.u32 %v1615, 2147483648
  %v1738 = vxor.u32 %v1618, 2147483648
  %v1739 = vxor.u32 %v1619, 2147483648
  %v1740 = vxor.u32 %v1622, 2147483648
  %v1741 = vxor.u32 %v1623, 2147483648
  %v1742 = vxor.u32 %v1626, 2147483648
  %v1743 = vxor.u32 %v1627, 2147483648
  %v1744 = vxor.u32 %v1630, 2147483648
  %v1745 = vxor.u32 %v1631, 2147483648
  %v1746 = vxor.u32 %v1634, 2147483648
  %v1747 = vxor.u32 %v1635, 2147483648
  %v1748 = vmul.f32 %v1732, 1.442695
  %v1749 = vpow.pop %v1748
  %v1750 = vmul.f32 %v1733, 1.442695
  %v1751 = vpow.pop %v1750
  %v1752 = vmul.f32 %v1734, 1.442695
  %v1753 = vpow.pop %v1752
  %v1754 = vmul.f32 %v1735, 1.442695
  %v1755 = vpow.pop %v1754
  %v1756 = vmul.f32 %v1736, 1.442695
  %v1757 = vpow.pop %v1756
  %v1758 = vmul.f32 %v1737, 1.442695
  %v1759 = vpow.pop %v1758
  %v1760 = vmul.f32 %v1738, 1.442695
  %v1761 = vpow.pop %v1760
  %v1762 = vmul.f32 %v1739, 1.442695
  %v1763 = vpow.pop %v1762
  %v1764 = vmul.f32 %v1740, 1.442695
  %v1765 = vpow.pop %v1764
  %v1766 = vmul.f32 %v1741, 1.442695
  %v1767 = vpow.pop %v1766
  %v1768 = vmul.f32 %v1742, 1.442695
  %v1769 = vpow.pop %v1768
  %v1770 = vmul.f32 %v1743, 1.442695
  %v1771 = vpow.pop %v1770
  %v1772 = vmul.f32 %v1744, 1.442695
  %v1773 = vpow.pop %v1772
  %v1774 = vmul.f32 %v1745, 1.442695
  %v1775 = vpow.pop %v1774
  %v1776 = vmul.f32 %v1746, 1.442695
  %v1777 = vpow.pop %v1776
  %v1778 = vmul.f32 %v1747, 1.442695
  %v1779 = vpow.pop %v1778
  %v1780 = vadd.f32 %v1749, 1.0
  %v1781 = vadd.f32 %v1751, 1.0
  %v1782 = vadd.f32 %v1753, 1.0
  %v1783 = vadd.f32 %v1755, 1.0
  %v1784 = vadd.f32 %v1757, 1.0
  %v1785 = vadd.f32 %v1759, 1.0
  %v1786 = vadd.f32 %v1761, 1.0
  %v1787 = vadd.f32 %v1763, 1.0
  %v1788 = vadd.f32 %v1765, 1.0
  %v1789 = vadd.f32 %v1767, 1.0
  %v1790 = vadd.f32 %v1769, 1.0
  %v1791 = vadd.f32 %v1771, 1.0
  %v1792 = vadd.f32 %v1773, 1.0
  %v1793 = vadd.f32 %v1775, 1.0
  %v1794 = vadd.f32 %v1777, 1.0
  %v1795 = vadd.f32 %v1779, 1.0
  %v1796 = vrcp.pop %v1780
  %v1797 = vmul.f32 1.0, %v1796
  %v1798 = vrcp.pop %v1781
  %v1799 = vmul.f32 1.0, %v1798
  %v1800 = vrcp.pop %v1782
  %v1801 = vmul.f32 1.0, %v1800
  %v1802 = vrcp.pop %v1783
  %v1803 = vmul.f32 1.0, %v1802
  %v1804 = vrcp.pop %v1784
  %v1805 = vmul.f32 1.0, %v1804
  %v1806 = vrcp.pop %v1785
  %v1807 = vmul.f32 1.0, %v1806
  %v1808 = vrcp.pop %v1786
  %v1809 = vmul.f32 1.0, %v1808
  %v1810 = vrcp.pop %v1787
  %v1811 = vmul.f32 1.0, %v1810
  %v1812 = vrcp.pop %v1788
  %v1813 = vmul.f32 1.0, %v1812
  %v1814 = vrcp.pop %v1789
  %v1815 = vmul.f32 1.0, %v1814
  %v1816 = vrcp.pop %v1790
  %v1817 = vmul.f32 1.0, %v1816
  %v1818 = vrcp.pop %v1791
  %v1819 = vmul.f32 1.0, %v1818
  %v1820 = vrcp.pop %v1792
  %v1821 = vmul.f32 1.0, %v1820
  %v1822 = vrcp.pop %v1793
  %v1823 = vmul.f32 1.0, %v1822
  %v1824 = vrcp.pop %v1794
  %v1825 = vmul.f32 1.0, %v1824
  %v1826 = vrcp.pop %v1795
  %v1827 = vmul.f32 1.0, %v1826
  %v1828 = vld [vmem:[%s7] sm:$0xff]
  %v1829 = vld [vmem:[%s7 + $0x8] sm:$0xff]
  %v1830 = vld [vmem:[%s7 + $0x10] sm:$0xff]
  %v1831 = vld [vmem:[%s7 + $0x18] sm:$0xff]
  %v1832 = vld [vmem:[%s7 + $0x20] sm:$0xff]
  %v1833 = vld [vmem:[%s7 + $0x28] sm:$0xff]
  %v1834 = vld [vmem:[%s7 + $0x30] sm:$0xff]
  %v1835 = vld [vmem:[%s7 + $0x38] sm:$0xff]
  %v1836 = vld [vmem:[%s7 + $0x40] sm:$0xff]
  %v1837 = vld [vmem:[%s7 + $0x48] sm:$0xff]
  %v1838 = vld [vmem:[%s7 + $0x50] sm:$0xff]
  %v1839 = vld [vmem:[%s7 + $0x58] sm:$0xff]
  %v1840 = vld [vmem:[%s7 + $0x60] sm:$0xff]
  %v1841 = vld [vmem:[%s7 + $0x68] sm:$0xff]
  %v1842 = vld [vmem:[%s7 + $0x70] sm:$0xff]
  %v1843 = vld [vmem:[%s7 + $0x78] sm:$0xff]
  %v1844 = vld [vmem:[%s7 + $0x80] sm:$0xff]
  %v1845 = vld [vmem:[%s7 + $0x88] sm:$0xff]
  %v1846 = vld [vmem:[%s7 + $0x90] sm:$0xff]
  %v1847 = vld [vmem:[%s7 + $0x98] sm:$0xff]
  %v1848 = vld [vmem:[%s7 + $0xa0] sm:$0xff]
  %v1849 = vld [vmem:[%s7 + $0xa8] sm:$0xff]
  %v1850 = vld [vmem:[%s7 + $0xb0] sm:$0xff]
  %v1851 = vld [vmem:[%s7 + $0xb8] sm:$0xff]
  %v1852 = vld [vmem:[%s7 + $0xc0] sm:$0xff]
  %v1853 = vld [vmem:[%s7 + $0xc8] sm:$0xff]
  %v1854 = vld [vmem:[%s7 + $0xd0] sm:$0xff]
  %v1855 = vld [vmem:[%s7 + $0xd8] sm:$0xff]
  %v1856 = vld [vmem:[%s7 + $0xe0] sm:$0xff]
  %v1857 = vld [vmem:[%s7 + $0xe8] sm:$0xff]
  %v1858 = vld [vmem:[%s7 + $0xf0] sm:$0xff]
  %v1859 = vld [vmem:[%s7 + $0xf8] sm:$0xff]
  %v1876 = vunpack.c.l.b16 %v1844
  %v1877 = vunpack.c.h.b16 %v1844
  %v1878 = vunpack.c.l.b16 %v1845
  %v1879 = vunpack.c.h.b16 %v1845
  %v1880 = vunpack.c.l.b16 %v1846
  %v1881 = vunpack.c.h.b16 %v1846
  %v1882 = vunpack.c.l.b16 %v1847
  %v1883 = vunpack.c.h.b16 %v1847
  %v1884 = vunpack.c.l.b16 %v1848
  %v1885 = vunpack.c.h.b16 %v1848
  %v1886 = vunpack.c.l.b16 %v1849
  %v1887 = vunpack.c.h.b16 %v1849
  %v1888 = vunpack.c.l.b16 %v1850
  %v1889 = vunpack.c.h.b16 %v1850
  %v1890 = vunpack.c.l.b16 %v1851
  %v1891 = vunpack.c.h.b16 %v1851
  %v1892 = vunpack.c.l.b16 %v1852
  %v1893 = vunpack.c.h.b16 %v1852
  %v1894 = vunpack.c.l.b16 %v1853
  %v1895 = vunpack.c.h.b16 %v1853
  %v1896 = vunpack.c.l.b16 %v1854
  %v1897 = vunpack.c.h.b16 %v1854
  %v1898 = vunpack.c.l.b16 %v1855
  %v1899 = vunpack.c.h.b16 %v1855
  %v1900 = vunpack.c.l.b16 %v1856
  %v1901 = vunpack.c.h.b16 %v1856
  %v1902 = vunpack.c.l.b16 %v1857
  %v1903 = vunpack.c.h.b16 %v1857
  %v1904 = vunpack.c.l.b16 %v1858
  %v1905 = vunpack.c.h.b16 %v1858
  %v1906 = vunpack.c.l.b16 %v1859
  %v1907 = vunpack.c.h.b16 %v1859
  %v1908 = vpack.c.b16 %v1878, %v1876
  %v1909 = vpack.c.b16 %v1879, %v1877
  %v1910 = vpack.c.b16 %v1882, %v1880
  %v1911 = vpack.c.b16 %v1883, %v1881
  %v1912 = vpack.c.b16 %v1886, %v1884
  %v1913 = vpack.c.b16 %v1887, %v1885
  %v1914 = vpack.c.b16 %v1890, %v1888
  %v1915 = vpack.c.b16 %v1891, %v1889
  %v1916 = vpack.c.b16 %v1894, %v1892
  %v1917 = vpack.c.b16 %v1895, %v1893
  %v1918 = vpack.c.b16 %v1898, %v1896
  %v1919 = vpack.c.b16 %v1899, %v1897
  %v1920 = vpack.c.b16 %v1902, %v1900
  %v1921 = vpack.c.b16 %v1903, %v1901
  %v1922 = vpack.c.b16 %v1906, %v1904
  %v1923 = vpack.c.b16 %v1907, %v1905
  %1940 = vmatprep.subr.bf16.mxu0 %v1923
  %1941 = vmatpush1.bf16.msra.mxu0 %v1922
  %1942 = vmatprep.subr.bf16.mxu0 %v1921
  %1943 = vmatpush1.bf16.msra.mxu0 %v1920
  %1944 = vmatprep.subr.bf16.mxu0 %v1919
  %1945 = vmatpush1.bf16.msra.mxu0 %v1918
  %1946 = vmatprep.subr.bf16.mxu0 %v1917
  %1947 = vmatpush1.bf16.msra.mxu0 %v1916
  %1948 = vmatprep.subr.bf16.mxu0 %v1915
  %1949 = vmatpush1.bf16.msra.mxu0 %v1914
  %1950 = vmatprep.subr.bf16.mxu0 %v1913
  %1951 = vmatpush1.bf16.msra.mxu0 %v1912
  %1952 = vmatprep.subr.bf16.mxu0 %v1911
  %1953 = vmatpush1.bf16.msra.mxu0 %v1910
  %1954 = vmatprep.subr.bf16.mxu0 %v1909
  %1955 = vmatpush1.bf16.msra.mxu0 %v1908
  %1956 = vmatprep.subr.bf16.mxu0 0
  %1957 = vmatpush2.bf16.msra.mxu0 0
  %1958 = vmatprep.subr.bf16.mxu0 0
  %1959 = vmatpush2.bf16.msra.mxu0 0
  %1960 = vmatprep.subr.bf16.mxu0 0
  %1961 = vmatpush2.bf16.msra.mxu0 0
  %1962 = vmatprep.subr.bf16.mxu0 0
  %1963 = vmatpush2.bf16.msra.mxu0 0
  %1964 = vmatprep.subr.bf16.mxu0 0
  %1965 = vmatpush2.bf16.msra.mxu0 0
  %1966 = vmatprep.subr.bf16.mxu0 0
  %1967 = vmatpush2.bf16.msra.mxu0 0
  %1968 = vmatprep.subr.bf16.mxu0 0
  %1969 = vmatpush2.bf16.msra.mxu0 0
  %1970 = vmatprep.subr.bf16.mxu0 0
  %1971 = vmatpush2.bf16.msra.mxu0 0
  %1972 = vmatprep.mubr.bf16.mxu0 0
  %1973 = vmatmul.mubr.bf16.gmra.mxu0 %v218
  %v1974 = vpop.f32.mrf.mxu0
  %v1975 = vadd.f32 0.0, %v1974
  %v1976 = vpop.f32.mrf.mxu0
  %v1977 = vadd.f32 0.0, %v1976
  %v1978 = vpop.f32.mrf.mxu0
  %v1979 = vadd.f32 0.0, %v1978
  %v1980 = vpop.f32.mrf.mxu0
  %v1981 = vadd.f32 0.0, %v1980
  %1982 = vmatprep.mubr.bf16.mxu0 0
  %1983 = vmatmul.mubr.bf16.gmra.mxu0 %v219
  %v1984 = vpop.f32.mrf.mxu0
  %v1985 = vadd.f32 0.0, %v1984
  %v1986 = vpop.f32.mrf.mxu0
  %v1987 = vadd.f32 0.0, %v1986
  %v1988 = vpop.f32.mrf.mxu0
  %v1989 = vadd.f32 0.0, %v1988
  %v1990 = vpop.f32.mrf.mxu0
  %v1991 = vadd.f32 0.0, %v1990
  %1992 = vmatprep.mubr.bf16.mxu0 0
  %1993 = vmatmul.mubr.bf16.gmra.mxu0 %v220
  %v1994 = vpop.f32.mrf.mxu0
  %v1995 = vadd.f32 0.0, %v1994
  %v1996 = vpop.f32.mrf.mxu0
  %v1997 = vadd.f32 0.0, %v1996
  %v1998 = vpop.f32.mrf.mxu0
  %v1999 = vadd.f32 0.0, %v1998
  %v2000 = vpop.f32.mrf.mxu0
  %v2001 = vadd.f32 0.0, %v2000
  %2002 = vmatprep.mubr.bf16.mxu0 0
  %2003 = vmatmul.mubr.bf16.gmra.mxu0 %v221
  %v2004 = vpop.f32.mrf.mxu0
  %v2005 = vadd.f32 0.0, %v2004
  %v2006 = vpop.f32.mrf.mxu0
  %v2007 = vadd.f32 0.0, %v2006
  %v2008 = vpop.f32.mrf.mxu0
  %v2009 = vadd.f32 0.0, %v2008
  %v2010 = vpop.f32.mrf.mxu0
  %v2011 = vadd.f32 0.0, %v2010
  %2012 = vdwg.mxu0
  %v2029 = vunpack.c.l.b16 %v1828
  %v2030 = vunpack.c.h.b16 %v1828
  %v2031 = vunpack.c.l.b16 %v1829
  %v2032 = vunpack.c.h.b16 %v1829
  %v2033 = vunpack.c.l.b16 %v1830
  %v2034 = vunpack.c.h.b16 %v1830
  %v2035 = vunpack.c.l.b16 %v1831
  %v2036 = vunpack.c.h.b16 %v1831
  %v2037 = vunpack.c.l.b16 %v1832
  %v2038 = vunpack.c.h.b16 %v1832
  %v2039 = vunpack.c.l.b16 %v1833
  %v2040 = vunpack.c.h.b16 %v1833
  %v2041 = vunpack.c.l.b16 %v1834
  %v2042 = vunpack.c.h.b16 %v1834
  %v2043 = vunpack.c.l.b16 %v1835
  %v2044 = vunpack.c.h.b16 %v1835
  %v2045 = vunpack.c.l.b16 %v1836
  %v2046 = vunpack.c.h.b16 %v1836
  %v2047 = vunpack.c.l.b16 %v1837
  %v2048 = vunpack.c.h.b16 %v1837
  %v2049 = vunpack.c.l.b16 %v1838
  %v2050 = vunpack.c.h.b16 %v1838
  %v2051 = vunpack.c.l.b16 %v1839
  %v2052 = vunpack.c.h.b16 %v1839
  %v2053 = vunpack.c.l.b16 %v1840
  %v2054 = vunpack.c.h.b16 %v1840
  %v2055 = vunpack.c.l.b16 %v1841
  %v2056 = vunpack.c.h.b16 %v1841
  %v2057 = vunpack.c.l.b16 %v1842
  %v2058 = vunpack.c.h.b16 %v1842
  %v2059 = vunpack.c.l.b16 %v1843
  %v2060 = vunpack.c.h.b16 %v1843
  %v2061 = vpack.c.b16 %v2031, %v2029
  %v2062 = vpack.c.b16 %v2032, %v2030
  %v2063 = vpack.c.b16 %v2035, %v2033
  %v2064 = vpack.c.b16 %v2036, %v2034
  %v2065 = vpack.c.b16 %v2039, %v2037
  %v2066 = vpack.c.b16 %v2040, %v2038
  %v2067 = vpack.c.b16 %v2043, %v2041
  %v2068 = vpack.c.b16 %v2044, %v2042
  %v2069 = vpack.c.b16 %v2047, %v2045
  %v2070 = vpack.c.b16 %v2048, %v2046
  %v2071 = vpack.c.b16 %v2051, %v2049
  %v2072 = vpack.c.b16 %v2052, %v2050
  %v2073 = vpack.c.b16 %v2055, %v2053
  %v2074 = vpack.c.b16 %v2056, %v2054
  %v2075 = vpack.c.b16 %v2059, %v2057
  %v2076 = vpack.c.b16 %v2060, %v2058
  %2093 = vmatprep.subr.bf16.mxu0 %v2076
  %2094 = vmatpush1.bf16.msra.mxu0 %v2075
  %2095 = vmatprep.subr.bf16.mxu0 %v2074
  %2096 = vmatpush1.bf16.msra.mxu0 %v2073
  %2097 = vmatprep.subr.bf16.mxu0 %v2072
  %2098 = vmatpush1.bf16.msra.mxu0 %v2071
  %2099 = vmatprep.subr.bf16.mxu0 %v2070
  %2100 = vmatpush1.bf16.msra.mxu0 %v2069
  %2101 = vmatprep.subr.bf16.mxu0 %v2068
  %2102 = vmatpush1.bf16.msra.mxu0 %v2067
  %2103 = vmatprep.subr.bf16.mxu0 %v2066
  %2104 = vmatpush1.bf16.msra.mxu0 %v2065
  %2105 = vmatprep.subr.bf16.mxu0 %v2064
  %2106 = vmatpush1.bf16.msra.mxu0 %v2063
  %2107 = vmatprep.subr.bf16.mxu0 %v2062
  %2108 = vmatpush1.bf16.msra.mxu0 %v2061
  %2109 = vmatprep.subr.bf16.mxu0 0
  %2110 = vmatpush2.bf16.msra.mxu0 0
  %2111 = vmatprep.subr.bf16.mxu0 0
  %2112 = vmatpush2.bf16.msra.mxu0 0
  %2113 = vmatprep.subr.bf16.mxu0 0
  %2114 = vmatpush2.bf16.msra.mxu0 0
  %2115 = vmatprep.subr.bf16.mxu0 0
  %2116 = vmatpush2.bf16.msra.mxu0 0
  %2117 = vmatprep.subr.bf16.mxu0 0
  %2118 = vmatpush2.bf16.msra.mxu0 0
  %2119 = vmatprep.subr.bf16.mxu0 0
  %2120 = vmatpush2.bf16.msra.mxu0 0
  %2121 = vmatprep.subr.bf16.mxu0 0
  %2122 = vmatpush2.bf16.msra.mxu0 0
  %2123 = vmatprep.subr.bf16.mxu0 0
  %2124 = vmatpush2.bf16.msra.mxu0 0
  %2125 = vmatprep.mubr.bf16.mxu0 0
  %2126 = vmatmul.mubr.bf16.gmra.mxu0 %v182
  %v2127 = vpop.f32.mrf.mxu0
  %v2128 = vadd.f32 %v1975, %v2127
  %v2129 = vpop.f32.mrf.mxu0
  %v2130 = vadd.f32 %v1977, %v2129
  %v2131 = vpop.f32.mrf.mxu0
  %v2132 = vadd.f32 %v1979, %v2131
  %v2133 = vpop.f32.mrf.mxu0
  %v2134 = vadd.f32 %v1981, %v2133
  %2135 = vmatprep.mubr.bf16.mxu0 0
  %2136 = vmatmul.mubr.bf16.gmra.mxu0 %v183
  %v2137 = vpop.f32.mrf.mxu0
  %v2138 = vadd.f32 %v1985, %v2137
  %v2139 = vpop.f32.mrf.mxu0
  %v2140 = vadd.f32 %v1987, %v2139
  %v2141 = vpop.f32.mrf.mxu0
  %v2142 = vadd.f32 %v1989, %v2141
  %v2143 = vpop.f32.mrf.mxu0
  %v2144 = vadd.f32 %v1991, %v2143
  %2145 = vmatprep.mubr.bf16.mxu0 0
  %2146 = vmatmul.mubr.bf16.gmra.mxu0 %v184
  %v2147 = vpop.f32.mrf.mxu0
  %v2148 = vadd.f32 %v1995, %v2147
  %v2149 = vpop.f32.mrf.mxu0
  %v2150 = vadd.f32 %v1997, %v2149
  %v2151 = vpop.f32.mrf.mxu0
  %v2152 = vadd.f32 %v1999, %v2151
  %v2153 = vpop.f32.mrf.mxu0
  %v2154 = vadd.f32 %v2001, %v2153
  %2155 = vmatprep.mubr.bf16.mxu0 0
  %2156 = vmatmul.mubr.bf16.gmra.mxu0 %v185
  %v2157 = vpop.f32.mrf.mxu0
  %v2158 = vadd.f32 %v2005, %v2157
  %v2159 = vpop.f32.mrf.mxu0
  %v2160 = vadd.f32 %v2007, %v2159
  %v2161 = vpop.f32.mrf.mxu0
  %v2162 = vadd.f32 %v2009, %v2161
  %v2163 = vpop.f32.mrf.mxu0
  %v2164 = vadd.f32 %v2011, %v2163
  %2165 = vdwg.mxu0
  %v2166 = vmul.f32 %v1701, %v41
  %v2167 = vmul.f32 %v1705, %v42
  %v2168 = vmul.f32 %v1709, %v43
  %v2169 = vmul.f32 %v1713, %v44
  %v2170 = vmul.f32 %v1717, %v45
  %v2171 = vmul.f32 %v1721, %v46
  %v2172 = vmul.f32 %v1725, %v47
  %v2173 = vmul.f32 %v1729, %v48
  %v2174 = vld [vmem:[%s7 + $0x100] sm:$0xff]
  %v2175 = vld [vmem:[%s7 + $0x108] sm:$0xff]
  %v2176 = vld [vmem:[%s7 + $0x110] sm:$0xff]
  %v2177 = vld [vmem:[%s7 + $0x118] sm:$0xff]
  %v2178 = vld [vmem:[%s7 + $0x120] sm:$0xff]
  %v2179 = vld [vmem:[%s7 + $0x128] sm:$0xff]
  %v2180 = vld [vmem:[%s7 + $0x130] sm:$0xff]
  %v2181 = vld [vmem:[%s7 + $0x138] sm:$0xff]
  %v2182 = vld [vmem:[%s7 + $0x140] sm:$0xff]
  %v2183 = vld [vmem:[%s7 + $0x148] sm:$0xff]
  %v2184 = vld [vmem:[%s7 + $0x150] sm:$0xff]
  %v2185 = vld [vmem:[%s7 + $0x158] sm:$0xff]
  %v2186 = vld [vmem:[%s7 + $0x160] sm:$0xff]
  %v2187 = vld [vmem:[%s7 + $0x168] sm:$0xff]
  %v2188 = vld [vmem:[%s7 + $0x170] sm:$0xff]
  %v2189 = vld [vmem:[%s7 + $0x178] sm:$0xff]
  %v2190 = vpack.c.bf16 %v2167, %v2166
  %v2191 = vpack.c.bf16 %v2169, %v2168
  %v2192 = vpack.c.bf16 %v2171, %v2170
  %v2193 = vpack.c.bf16 %v2173, %v2172
  %v2210 = vunpack.c.l.b16 %v2174
  %v2211 = vunpack.c.h.b16 %v2174
  %v2212 = vunpack.c.l.b16 %v2175
  %v2213 = vunpack.c.h.b16 %v2175
  %v2214 = vunpack.c.l.b16 %v2176
  %v2215 = vunpack.c.h.b16 %v2176
  %v2216 = vunpack.c.l.b16 %v2177
  %v2217 = vunpack.c.h.b16 %v2177
  %v2218 = vunpack.c.l.b16 %v2178
  %v2219 = vunpack.c.h.b16 %v2178
  %v2220 = vunpack.c.l.b16 %v2179
  %v2221 = vunpack.c.h.b16 %v2179
  %v2222 = vunpack.c.l.b16 %v2180
  %v2223 = vunpack.c.h.b16 %v2180
  %v2224 = vunpack.c.l.b16 %v2181
  %v2225 = vunpack.c.h.b16 %v2181
  %v2226 = vunpack.c.l.b16 %v2182
  %v2227 = vunpack.c.h.b16 %v2182
  %v2228 = vunpack.c.l.b16 %v2183
  %v2229 = vunpack.c.h.b16 %v2183
  %v2230 = vunpack.c.l.b16 %v2184
  %v2231 = vunpack.c.h.b16 %v2184
  %v2232 = vunpack.c.l.b16 %v2185
  %v2233 = vunpack.c.h.b16 %v2185
  %v2234 = vunpack.c.l.b16 %v2186
  %v2235 = vunpack.c.h.b16 %v2186
  %v2236 = vunpack.c.l.b16 %v2187
  %v2237 = vunpack.c.h.b16 %v2187
  %v2238 = vunpack.c.l.b16 %v2188
  %v2239 = vunpack.c.h.b16 %v2188
  %v2240 = vunpack.c.l.b16 %v2189
  %v2241 = vunpack.c.h.b16 %v2189
  %v2242 = vpack.c.b16 %v2212, %v2210
  %v2243 = vpack.c.b16 %v2213, %v2211
  %v2244 = vpack.c.b16 %v2216, %v2214
  %v2245 = vpack.c.b16 %v2217, %v2215
  %v2246 = vpack.c.b16 %v2220, %v2218
  %v2247 = vpack.c.b16 %v2221, %v2219
  %v2248 = vpack.c.b16 %v2224, %v2222
  %v2249 = vpack.c.b16 %v2225, %v2223
  %v2250 = vpack.c.b16 %v2228, %v2226
  %v2251 = vpack.c.b16 %v2229, %v2227
  %v2252 = vpack.c.b16 %v2232, %v2230
  %v2253 = vpack.c.b16 %v2233, %v2231
  %v2254 = vpack.c.b16 %v2236, %v2234
  %v2255 = vpack.c.b16 %v2237, %v2235
  %v2256 = vpack.c.b16 %v2240, %v2238
  %v2257 = vpack.c.b16 %v2241, %v2239
  %2274 = vmatprep.subr.bf16.mxu0 %v2257
  %2275 = vmatpush1.bf16.msra.mxu0 %v2256
  %2276 = vmatprep.subr.bf16.mxu0 %v2255
  %2277 = vmatpush1.bf16.msra.mxu0 %v2254
  %2278 = vmatprep.subr.bf16.mxu0 %v2253
  %2279 = vmatpush1.bf16.msra.mxu0 %v2252
  %2280 = vmatprep.subr.bf16.mxu0 %v2251
  %2281 = vmatpush1.bf16.msra.mxu0 %v2250
  %2282 = vmatprep.subr.bf16.mxu0 %v2249
  %2283 = vmatpush1.bf16.msra.mxu0 %v2248
  %2284 = vmatprep.subr.bf16.mxu0 %v2247
  %2285 = vmatpush1.bf16.msra.mxu0 %v2246
  %2286 = vmatprep.subr.bf16.mxu0 %v2245
  %2287 = vmatpush1.bf16.msra.mxu0 %v2244
  %2288 = vmatprep.subr.bf16.mxu0 %v2243
  %2289 = vmatpush1.bf16.msra.mxu0 %v2242
  %2290 = vmatprep.subr.bf16.mxu0 0
  %2291 = vmatpush2.bf16.msra.mxu0 0
  %2292 = vmatprep.subr.bf16.mxu0 0
  %2293 = vmatpush2.bf16.msra.mxu0 0
  %2294 = vmatprep.subr.bf16.mxu0 0
  %2295 = vmatpush2.bf16.msra.mxu0 0
  %2296 = vmatprep.subr.bf16.mxu0 0
  %2297 = vmatpush2.bf16.msra.mxu0 0
  %2298 = vmatprep.subr.bf16.mxu0 0
  %2299 = vmatpush2.bf16.msra.mxu0 0
  %2300 = vmatprep.subr.bf16.mxu0 0
  %2301 = vmatpush2.bf16.msra.mxu0 0
  %2302 = vmatprep.subr.bf16.mxu0 0
  %2303 = vmatpush2.bf16.msra.mxu0 0
  %2304 = vmatprep.subr.bf16.mxu0 0
  %2305 = vmatpush2.bf16.msra.mxu0 0
  %2306 = vmatprep.mubr.bf16.mxu0 0
  %2307 = vmatmul.mubr.bf16.gmra.mxu0 %v2190
  %v2308 = vpop.f32.mrf.mxu0
  %v2309 = vadd.f32 0.0, %v2308
  %v2310 = vpop.f32.mrf.mxu0
  %v2311 = vadd.f32 0.0, %v2310
  %v2312 = vpop.f32.mrf.mxu0
  %v2313 = vadd.f32 0.0, %v2312
  %v2314 = vpop.f32.mrf.mxu0
  %v2315 = vadd.f32 0.0, %v2314
  %2316 = vmatprep.mubr.bf16.mxu0 0
  %2317 = vmatmul.mubr.bf16.gmra.mxu0 %v2191
  %v2318 = vpop.f32.mrf.mxu0
  %v2319 = vadd.f32 0.0, %v2318
  %v2320 = vpop.f32.mrf.mxu0
  %v2321 = vadd.f32 0.0, %v2320
  %v2322 = vpop.f32.mrf.mxu0
  %v2323 = vadd.f32 0.0, %v2322
  %v2324 = vpop.f32.mrf.mxu0
  %v2325 = vadd.f32 0.0, %v2324
  %2326 = vmatprep.mubr.bf16.mxu0 0
  %2327 = vmatmul.mubr.bf16.gmra.mxu0 %v2192
  %v2328 = vpop.f32.mrf.mxu0
  %v2329 = vadd.f32 0.0, %v2328
  %v2330 = vpop.f32.mrf.mxu0
  %v2331 = vadd.f32 0.0, %v2330
  %v2332 = vpop.f32.mrf.mxu0
  %v2333 = vadd.f32 0.0, %v2332
  %v2334 = vpop.f32.mrf.mxu0
  %v2335 = vadd.f32 0.0, %v2334
  %2336 = vmatprep.mubr.bf16.mxu0 0
  %2337 = vmatmul.mubr.bf16.gmra.mxu0 %v2193
  %v2338 = vpop.f32.mrf.mxu0
  %v2339 = vadd.f32 0.0, %v2338
  %v2340 = vpop.f32.mrf.mxu0
  %v2341 = vadd.f32 0.0, %v2340
  %v2342 = vpop.f32.mrf.mxu0
  %v2343 = vadd.f32 0.0, %v2342
  %v2344 = vpop.f32.mrf.mxu0
  %v2345 = vadd.f32 0.0, %v2344
  %2346 = vdwg.mxu0
  %v2347 = vadd.f32 %v2128, %v2309
  %v2348 = vadd.f32 %v2130, %v2311
  %v2349 = vadd.f32 %v2132, %v2313
  %v2350 = vadd.f32 %v2134, %v2315
  %v2351 = vadd.f32 %v2138, %v2319
  %v2352 = vadd.f32 %v2140, %v2321
  %v2353 = vadd.f32 %v2142, %v2323
  %v2354 = vadd.f32 %v2144, %v2325
  %v2355 = vadd.f32 %v2148, %v2329
  %v2356 = vadd.f32 %v2150, %v2331
  %v2357 = vadd.f32 %v2152, %v2333
  %v2358 = vadd.f32 %v2154, %v2335
  %v2359 = vadd.f32 %v2158, %v2339
  %v2360 = vadd.f32 %v2160, %v2341
  %v2361 = vadd.f32 %v2162, %v2343
  %v2362 = vadd.f32 %v2164, %v2345
  %v2363 = vmul.f32 %v1703, %v49
  %v2364 = vmul.f32 %v1707, %v50
  %v2365 = vmul.f32 %v1711, %v51
  %v2366 = vmul.f32 %v1715, %v52
  %v2367 = vmul.f32 %v1719, %v53
  %v2368 = vmul.f32 %v1723, %v54
  %v2369 = vmul.f32 %v1727, %v55
  %v2370 = vmul.f32 %v1731, %v56
  %v2371 = vld [vmem:[%s7 + $0x180] sm:$0xff]
  %v2372 = vld [vmem:[%s7 + $0x188] sm:$0xff]
  %v2373 = vld [vmem:[%s7 + $0x190] sm:$0xff]
  %v2374 = vld [vmem:[%s7 + $0x198] sm:$0xff]
  %v2375 = vld [vmem:[%s7 + $0x1a0] sm:$0xff]
  %v2376 = vld [vmem:[%s7 + $0x1a8] sm:$0xff]
  %v2377 = vld [vmem:[%s7 + $0x1b0] sm:$0xff]
  %v2378 = vld [vmem:[%s7 + $0x1b8] sm:$0xff]
  %v2379 = vld [vmem:[%s7 + $0x1c0] sm:$0xff]
  %v2380 = vld [vmem:[%s7 + $0x1c8] sm:$0xff]
  %v2381 = vld [vmem:[%s7 + $0x1d0] sm:$0xff]
  %v2382 = vld [vmem:[%s7 + $0x1d8] sm:$0xff]
  %v2383 = vld [vmem:[%s7 + $0x1e0] sm:$0xff]
  %v2384 = vld [vmem:[%s7 + $0x1e8] sm:$0xff]
  %v2385 = vld [vmem:[%s7 + $0x1f0] sm:$0xff]
  %v2386 = vld [vmem:[%s7 + $0x1f8] sm:$0xff]
  %v2387 = vpack.c.bf16 %v2364, %v2363
  %v2388 = vpack.c.bf16 %v2366, %v2365
  %v2389 = vpack.c.bf16 %v2368, %v2367
  %v2390 = vpack.c.bf16 %v2370, %v2369
  %v2407 = vunpack.c.l.b16 %v2371
  %v2408 = vunpack.c.h.b16 %v2371
  %v2409 = vunpack.c.l.b16 %v2372
  %v2410 = vunpack.c.h.b16 %v2372
  %v2411 = vunpack.c.l.b16 %v2373
  %v2412 = vunpack.c.h.b16 %v2373
  %v2413 = vunpack.c.l.b16 %v2374
  %v2414 = vunpack.c.h.b16 %v2374
  %v2415 = vunpack.c.l.b16 %v2375
  %v2416 = vunpack.c.h.b16 %v2375
  %v2417 = vunpack.c.l.b16 %v2376
  %v2418 = vunpack.c.h.b16 %v2376
  %v2419 = vunpack.c.l.b16 %v2377
  %v2420 = vunpack.c.h.b16 %v2377
  %v2421 = vunpack.c.l.b16 %v2378
  %v2422 = vunpack.c.h.b16 %v2378
  %v2423 = vunpack.c.l.b16 %v2379
  %v2424 = vunpack.c.h.b16 %v2379
  %v2425 = vunpack.c.l.b16 %v2380
  %v2426 = vunpack.c.h.b16 %v2380
  %v2427 = vunpack.c.l.b16 %v2381
  %v2428 = vunpack.c.h.b16 %v2381
  %v2429 = vunpack.c.l.b16 %v2382
  %v2430 = vunpack.c.h.b16 %v2382
  %v2431 = vunpack.c.l.b16 %v2383
  %v2432 = vunpack.c.h.b16 %v2383
  %v2433 = vunpack.c.l.b16 %v2384
  %v2434 = vunpack.c.h.b16 %v2384
  %v2435 = vunpack.c.l.b16 %v2385
  %v2436 = vunpack.c.h.b16 %v2385
  %v2437 = vunpack.c.l.b16 %v2386
  %v2438 = vunpack.c.h.b16 %v2386
  %v2439 = vpack.c.b16 %v2409, %v2407
  %v2440 = vpack.c.b16 %v2410, %v2408
  %v2441 = vpack.c.b16 %v2413, %v2411
  %v2442 = vpack.c.b16 %v2414, %v2412
  %v2443 = vpack.c.b16 %v2417, %v2415
  %v2444 = vpack.c.b16 %v2418, %v2416
  %v2445 = vpack.c.b16 %v2421, %v2419
  %v2446 = vpack.c.b16 %v2422, %v2420
  %v2447 = vpack.c.b16 %v2425, %v2423
  %v2448 = vpack.c.b16 %v2426, %v2424
  %v2449 = vpack.c.b16 %v2429, %v2427
  %v2450 = vpack.c.b16 %v2430, %v2428
  %v2451 = vpack.c.b16 %v2433, %v2431
  %v2452 = vpack.c.b16 %v2434, %v2432
  %v2453 = vpack.c.b16 %v2437, %v2435
  %v2454 = vpack.c.b16 %v2438, %v2436
  %2471 = vmatprep.subr.bf16.mxu0 %v2454
  %2472 = vmatpush1.bf16.msra.mxu0 %v2453
  %2473 = vmatprep.subr.bf16.mxu0 %v2452
  %2474 = vmatpush1.bf16.msra.mxu0 %v2451
  %2475 = vmatprep.subr.bf16.mxu0 %v2450
  %2476 = vmatpush1.bf16.msra.mxu0 %v2449
  %2477 = vmatprep.subr.bf16.mxu0 %v2448
  %2478 = vmatpush1.bf16.msra.mxu0 %v2447
  %2479 = vmatprep.subr.bf16.mxu0 %v2446
  %2480 = vmatpush1.bf16.msra.mxu0 %v2445
  %2481 = vmatprep.subr.bf16.mxu0 %v2444
  %2482 = vmatpush1.bf16.msra.mxu0 %v2443
  %2483 = vmatprep.subr.bf16.mxu0 %v2442
  %2484 = vmatpush1.bf16.msra.mxu0 %v2441
  %2485 = vmatprep.subr.bf16.mxu0 %v2440
  %2486 = vmatpush1.bf16.msra.mxu0 %v2439
  %2487 = vmatprep.subr.bf16.mxu0 0
  %2488 = vmatpush2.bf16.msra.mxu0 0
  %2489 = vmatprep.subr.bf16.mxu0 0
  %2490 = vmatpush2.bf16.msra.mxu0 0
  %2491 = vmatprep.subr.bf16.mxu0 0
  %2492 = vmatpush2.bf16.msra.mxu0 0
  %2493 = vmatprep.subr.bf16.mxu0 0
  %2494 = vmatpush2.bf16.msra.mxu0 0
  %2495 = vmatprep.subr.bf16.mxu0 0
  %2496 = vmatpush2.bf16.msra.mxu0 0
  %2497 = vmatprep.subr.bf16.mxu0 0
  %2498 = vmatpush2.bf16.msra.mxu0 0
  %2499 = vmatprep.subr.bf16.mxu0 0
  %2500 = vmatpush2.bf16.msra.mxu0 0
  %2501 = vmatprep.subr.bf16.mxu0 0
  %2502 = vmatpush2.bf16.msra.mxu0 0
  %2503 = vmatprep.mubr.bf16.mxu0 0
  %2504 = vmatmul.mubr.bf16.gmra.mxu0 %v2387
  %v2505 = vpop.f32.mrf.mxu0
  %v2506 = vadd.f32 0.0, %v2505
  %v2507 = vpop.f32.mrf.mxu0
  %v2508 = vadd.f32 0.0, %v2507
  %v2509 = vpop.f32.mrf.mxu0
  %v2510 = vadd.f32 0.0, %v2509
  %v2511 = vpop.f32.mrf.mxu0
  %v2512 = vadd.f32 0.0, %v2511
  %2513 = vmatprep.mubr.bf16.mxu0 0
  %2514 = vmatmul.mubr.bf16.gmra.mxu0 %v2388
  %v2515 = vpop.f32.mrf.mxu0
  %v2516 = vadd.f32 0.0, %v2515
  %v2517 = vpop.f32.mrf.mxu0
  %v2518 = vadd.f32 0.0, %v2517
  %v2519 = vpop.f32.mrf.mxu0
  %v2520 = vadd.f32 0.0, %v2519
  %v2521 = vpop.f32.mrf.mxu0
  %v2522 = vadd.f32 0.0, %v2521
  %2523 = vmatprep.mubr.bf16.mxu0 0
  %2524 = vmatmul.mubr.bf16.gmra.mxu0 %v2389
  %v2525 = vpop.f32.mrf.mxu0
  %v2526 = vadd.f32 0.0, %v2525
  %v2527 = vpop.f32.mrf.mxu0
  %v2528 = vadd.f32 0.0, %v2527
  %v2529 = vpop.f32.mrf.mxu0
  %v2530 = vadd.f32 0.0, %v2529
  %v2531 = vpop.f32.mrf.mxu0
  %v2532 = vadd.f32 0.0, %v2531
  %2533 = vmatprep.mubr.bf16.mxu0 0
  %2534 = vmatmul.mubr.bf16.gmra.mxu0 %v2390
  %v2535 = vpop.f32.mrf.mxu0
  %v2536 = vadd.f32 0.0, %v2535
  %v2537 = vpop.f32.mrf.mxu0
  %v2538 = vadd.f32 0.0, %v2537
  %v2539 = vpop.f32.mrf.mxu0
  %v2540 = vadd.f32 0.0, %v2539
  %v2541 = vpop.f32.mrf.mxu0
  %v2542 = vadd.f32 0.0, %v2541
  %2543 = vdwg.mxu0
  %v2544 = vadd.f32 %v2347, %v2506
  %v2545 = vadd.f32 %v2348, %v2508
  %v2546 = vadd.f32 %v2349, %v2510
  %v2547 = vadd.f32 %v2350, %v2512
  %v2548 = vadd.f32 %v2351, %v2516
  %v2549 = vadd.f32 %v2352, %v2518
  %v2550 = vadd.f32 %v2353, %v2520
  %v2551 = vadd.f32 %v2354, %v2522
  %v2552 = vadd.f32 %v2355, %v2526
  %v2553 = vadd.f32 %v2356, %v2528
  %v2554 = vadd.f32 %v2357, %v2530
  %v2555 = vadd.f32 %v2358, %v2532
  %v2556 = vadd.f32 %v2359, %v2536
  %v2557 = vadd.f32 %v2360, %v2538
  %v2558 = vadd.f32 %v2361, %v2540
  %v2559 = vadd.f32 %v2362, %v2542
  %v2560 = vld [vmem:[%s8] sm:$0x3]
  %v2562 = vlaneseq
  %v2563 = vshrl.u32 %v2562, 7
  %v2564 = vsub.s32 0, %v2563
  %v2565 = vrot.slane %v2560, %v2564
  %v2566 = vlaneseq
  %v2567 = vshrl.u32 %v2566, 7
  %v2568 = vsub.s32 1, %v2567
  %v2569 = vrot.slane %v2560, %v2568
  %v2572 = vadd.f32 %v2544, %v2565
  %v2573 = vadd.f32 %v2545, %v2569
  %v2574 = vadd.f32 %v2546, %v2565
  %v2575 = vadd.f32 %v2547, %v2569
  %v2576 = vadd.f32 %v2548, %v2565
  %v2577 = vadd.f32 %v2549, %v2569
  %v2578 = vadd.f32 %v2550, %v2565
  %v2579 = vadd.f32 %v2551, %v2569
  %v2580 = vadd.f32 %v2552, %v2565
  %v2581 = vadd.f32 %v2553, %v2569
  %v2582 = vadd.f32 %v2554, %v2565
  %v2583 = vadd.f32 %v2555, %v2569
  %v2584 = vadd.f32 %v2556, %v2565
  %v2585 = vadd.f32 %v2557, %v2569
  %v2586 = vadd.f32 %v2558, %v2565
  %v2587 = vadd.f32 %v2559, %v2569
  %v2588 = vtanh.pop %v2572
  %v2589 = vtanh.pop %v2573
  %v2590 = vtanh.pop %v2574
  %v2591 = vtanh.pop %v2575
  %v2592 = vtanh.pop %v2576
  %v2593 = vtanh.pop %v2577
  %v2594 = vtanh.pop %v2578
  %v2595 = vtanh.pop %v2579
  %v2596 = vtanh.pop %v2580
  %v2597 = vtanh.pop %v2581
  %v2598 = vtanh.pop %v2582
  %v2599 = vtanh.pop %v2583
  %v2600 = vtanh.pop %v2584
  %v2601 = vtanh.pop %v2585
  %v2602 = vtanh.pop %v2586
  %v2603 = vtanh.pop %v2587
  %v2604 = vsub.f32 1.0, %v1797
  %v2605 = vsub.f32 1.0, %v1801
  %v2606 = vsub.f32 1.0, %v1805
  %v2607 = vsub.f32 1.0, %v1809
  %v2608 = vsub.f32 1.0, %v1813
  %v2609 = vsub.f32 1.0, %v1817
  %v2610 = vsub.f32 1.0, %v1821
  %v2611 = vsub.f32 1.0, %v1825
  %v2612 = vmul.f32 %v2604, %v41
  %v2613 = vmul.f32 %v2605, %v42
  %v2614 = vmul.f32 %v2606, %v43
  %v2615 = vmul.f32 %v2607, %v44
  %v2616 = vmul.f32 %v2608, %v45
  %v2617 = vmul.f32 %v2609, %v46
  %v2618 = vmul.f32 %v2610, %v47
  %v2619 = vmul.f32 %v2611, %v48
  %v2620 = vmul.f32 %v1797, %v2588
  %v2621 = vmul.f32 %v1801, %v2590
  %v2622 = vmul.f32 %v1805, %v2592
  %v2623 = vmul.f32 %v1809, %v2594
  %v2624 = vmul.f32 %v1813, %v2596
  %v2625 = vmul.f32 %v1817, %v2598
  %v2626 = vmul.f32 %v1821, %v2600
  %v2627 = vmul.f32 %v1825, %v2602
  %v2628 = vadd.f32 %v2612, %v2620
  %v2629 = vadd.f32 %v2613, %v2621
  %v2630 = vadd.f32 %v2614, %v2622
  %v2631 = vadd.f32 %v2615, %v2623
  %v2632 = vadd.f32 %v2616, %v2624
  %v2633 = vadd.f32 %v2617, %v2625
  %v2634 = vadd.f32 %v2618, %v2626
  %v2635 = vadd.f32 %v2619, %v2627
  %2636 = vst [vmem:[%s9] sm:$0xff] %v2628
  %2637 = vst [vmem:[%s9 + $0x10] sm:$0xff] %v2629
  %2638 = vst [vmem:[%s9 + $0x20] sm:$0xff] %v2630
  %2639 = vst [vmem:[%s9 + $0x30] sm:$0xff] %v2631
  %2640 = vst [vmem:[%s9 + $0x40] sm:$0xff] %v2632
  %2641 = vst [vmem:[%s9 + $0x50] sm:$0xff] %v2633
  %2642 = vst [vmem:[%s9 + $0x60] sm:$0xff] %v2634
  %2643 = vst [vmem:[%s9 + $0x70] sm:$0xff] %v2635
  %v2644 = vsub.f32 1.0, %v1799
  %v2645 = vsub.f32 1.0, %v1803
  %v2646 = vsub.f32 1.0, %v1807
  %v2647 = vsub.f32 1.0, %v1811
  %v2648 = vsub.f32 1.0, %v1815
  %v2649 = vsub.f32 1.0, %v1819
  %v2650 = vsub.f32 1.0, %v1823
  %v2651 = vsub.f32 1.0, %v1827
  %v2652 = vmul.f32 %v2644, %v49
  %v2653 = vmul.f32 %v2645, %v50
  %v2654 = vmul.f32 %v2646, %v51
  %v2655 = vmul.f32 %v2647, %v52
  %v2656 = vmul.f32 %v2648, %v53
  %v2657 = vmul.f32 %v2649, %v54
  %v2658 = vmul.f32 %v2650, %v55
  %v2659 = vmul.f32 %v2651, %v56
  %v2660 = vmul.f32 %v1799, %v2589
  %v2661 = vmul.f32 %v1803, %v2591
  %v2662 = vmul.f32 %v1807, %v2593
  %v2663 = vmul.f32 %v1811, %v2595
  %v2664 = vmul.f32 %v1815, %v2597
  %v2665 = vmul.f32 %v1819, %v2599
  %v2666 = vmul.f32 %v1823, %v2601
  %v2667 = vmul.f32 %v1827, %v2603
  %v2668 = vadd.f32 %v2652, %v2660
  %v2669 = vadd.f32 %v2653, %v2661
  %v2670 = vadd.f32 %v2654, %v2662
  %v2671 = vadd.f32 %v2655, %v2663
  %v2672 = vadd.f32 %v2656, %v2664
  %v2673 = vadd.f32 %v2657, %v2665
  %v2674 = vadd.f32 %v2658, %v2666
  %v2675 = vadd.f32 %v2659, %v2667
  %2676 = vst [vmem:[%s9 + $0x8] sm:$0xff] %v2668
  %2677 = vst [vmem:[%s9 + $0x18] sm:$0xff] %v2669
  %2678 = vst [vmem:[%s9 + $0x28] sm:$0xff] %v2670
  %2679 = vst [vmem:[%s9 + $0x38] sm:$0xff] %v2671
  %2680 = vst [vmem:[%s9 + $0x48] sm:$0xff] %v2672
  %2681 = vst [vmem:[%s9 + $0x58] sm:$0xff] %v2673
  %2682 = vst [vmem:[%s9 + $0x68] sm:$0xff] %v2674
  %2683 = vst [vmem:[%s9 + $0x78] sm:$0xff] %v2675
  // Predicated region
  $region38: #{gtrans_forward.6} parent=0 // pred_check
    _
  $region39: #{gtrans_forward.6} parent=0 // pred_check_branch
    %2685 = sbr.rel (0) target = $region41
  $region40: #{gtrans_forward.6} parent=0 // pred_region
    _
  $region41: #{gtrans_forward.6} parent=0 // pred_fallthru
    _
  // Predicated region
  $region42: #{gtrans_forward.6} parent=0 // pred_check
    _
  $region43: #{gtrans_forward.6} parent=0 // pred_check_branch
    %2687 = sbr.rel (0) target = $region45
  $region44: #{gtrans_forward.6} parent=0 // pred_region
    _
  $region45: #{gtrans_forward.6} parent=0 // pred_fallthru
    _

// kernel: gtrans_forward.7
$region0: #{gtrans_forward.7}
  #allocation0 [shape = 'u32[]', space=smem, size = 0x4, offset = 0x4, fixed_abs, tag = 'smem constant byte address 0x4 - core index']
  #allocation1 [shape = 'u32[144,128]{1,0:T(1,128)}', space=vmem, size = 0x12000, scoped, tag = 'internal scratch']
  %s0 = inlined_call_operand.vmem [shape: f32[80,256], index: 0, kind: input, shape index: {}]
  %s1 = inlined_call_operand.vmem [shape: f32[80,256], index: 1, kind: input, shape index: {}]
  %s2 = inlined_call_operand.vmem [shape: f32[80,256], index: 2, kind: input, shape index: {}]
  %s3 = inlined_call_operand.vmem [shape: bf16[2304,64], index: 3, kind: input, shape index: {}]
  %s4 = inlined_call_operand.vmem [shape: f32[1,64], index: 4, kind: input, shape index: {}]
  %s5 = inlined_call_operand.vmem [shape: bf16[64,16], index: 5, kind: input, shape index: {}]
  %s6 = inlined_call_operand.vmem [shape: f32[1,16], index: 6, kind: input, shape index: {}]
  %s7 = inlined_call_operand.vmem [shape: bf16[16,5], index: 7, kind: input, shape index: {}]
  %s8 = inlined_call_operand.vmem [shape: f32[1,5], index: 8, kind: input, shape index: {}]
  %s9 = inlined_call_operand.vmem [shape: f32[64,5], index: 9, kind: output, shape index: {}]
  %s10 = sld [smem:[#allocation0]]
  $region46: #{gtrans_forward.7} parent=0
    _
  %s12 = ssub.s32 1, %s10
  %s13 = scalar_select 0, %s12, %s10
  // Predicated region
  $region2: #{gtrans_forward.7} parent=0 // pred_check
    _
  $region3: #{gtrans_forward.7} parent=0 // pred_check_branch
    %15 = sbr.rel (0) target = $region5
  $region4: #{gtrans_forward.7} parent=0 // pred_region
    _
  $region5: #{gtrans_forward.7} parent=0 // pred_fallthru
    _
  // Predicated region
  $region6: #{gtrans_forward.7} parent=0 // pred_check
    _
  $region7: #{gtrans_forward.7} parent=0 // pred_check_branch
    %17 = sbr.rel (0) target = $region9
  $region8: #{gtrans_forward.7} parent=0 // pred_region
    _
  $region9: #{gtrans_forward.7} parent=0 // pred_fallthru
    _
  // Predicated region
  $region10: #{gtrans_forward.7} parent=0 // pred_check
    _
  $region11: #{gtrans_forward.7} parent=0 // pred_check_branch
    %19 = sbr.rel (0) target = $region13
  $region12: #{gtrans_forward.7} parent=0 // pred_region
    _
  $region13: #{gtrans_forward.7} parent=0 // pred_fallthru
    _
  // Predicated region
  $region14: #{gtrans_forward.7} parent=0 // pred_check
    _
  $region15: #{gtrans_forward.7} parent=0 // pred_check_branch
    %21 = sbr.rel (0) target = $region17
  $region16: #{gtrans_forward.7} parent=0 // pred_region
    _
  $region17: #{gtrans_forward.7} parent=0 // pred_fallthru
    _
  // Predicated region
  $region18: #{gtrans_forward.7} parent=0 // pred_check
    _
  $region19: #{gtrans_forward.7} parent=0 // pred_check_branch
    %23 = sbr.rel (0) target = $region21
  $region20: #{gtrans_forward.7} parent=0 // pred_region
    _
  $region21: #{gtrans_forward.7} parent=0 // pred_fallthru
    _
  // Predicated region
  $region22: #{gtrans_forward.7} parent=0 // pred_check
    _
  $region23: #{gtrans_forward.7} parent=0 // pred_check_branch
    %25 = sbr.rel (0) target = $region25
  $region24: #{gtrans_forward.7} parent=0 // pred_region
    _
  $region25: #{gtrans_forward.7} parent=0 // pred_fallthru
    _
  // Predicated region
  $region26: #{gtrans_forward.7} parent=0 // pred_check
    _
  $region27: #{gtrans_forward.7} parent=0 // pred_check_branch
    %27 = sbr.rel (0) target = $region29
  $region28: #{gtrans_forward.7} parent=0 // pred_region
    _
  $region29: #{gtrans_forward.7} parent=0 // pred_fallthru
    _
  // Predicated region
  $region30: #{gtrans_forward.7} parent=0 // pred_check
    _
  $region31: #{gtrans_forward.7} parent=0 // pred_check_branch
    %29 = sbr.rel (0) target = $region33
  $region32: #{gtrans_forward.7} parent=0 // pred_region
    _
  $region33: #{gtrans_forward.7} parent=0 // pred_fallthru
    _
  // Predicated region
  $region34: #{gtrans_forward.7} parent=0 // pred_check
    _
  $region35: #{gtrans_forward.7} parent=0 // pred_check_branch
    %31 = sbr.rel (0) target = $region37
  $region36: #{gtrans_forward.7} parent=0 // pred_region
    _
  $region37: #{gtrans_forward.7} parent=0 // pred_fallthru
    _
  %v33 = vld [vmem:[%s0] sm:$0xff]
  %v34 = vld [vmem:[%s0 + $0x8] sm:$0xff]
  %v35 = vld [vmem:[%s0 + $0x10] sm:$0xff]
  %v36 = vld [vmem:[%s0 + $0x18] sm:$0xff]
  %v37 = vld [vmem:[%s0 + $0x20] sm:$0xff]
  %v38 = vld [vmem:[%s0 + $0x28] sm:$0xff]
  %v39 = vld [vmem:[%s0 + $0x30] sm:$0xff]
  %v40 = vld [vmem:[%s0 + $0x38] sm:$0xff]
  %v41 = vld [vmem:[%s0 + $0x40] sm:$0xff]
  %v42 = vld [vmem:[%s0 + $0x48] sm:$0xff]
  %v43 = vld [vmem:[%s0 + $0x50] sm:$0xff]
  %v44 = vld [vmem:[%s0 + $0x58] sm:$0xff]
  %v45 = vld [vmem:[%s0 + $0x60] sm:$0xff]
  %v46 = vld [vmem:[%s0 + $0x68] sm:$0xff]
  %v47 = vld [vmem:[%s0 + $0x70] sm:$0xff]
  %v48 = vld [vmem:[%s0 + $0x78] sm:$0xff]
  %v49 = vld [vmem:[%s3] sm:$0xf]
  %v50 = vld [vmem:[%s3 + $0x4] sm:$0xf]
  %v51 = vld [vmem:[%s3 + $0x8] sm:$0xf]
  %v52 = vld [vmem:[%s3 + $0xc] sm:$0xf]
  %v53 = vld [vmem:[%s3 + $0x10] sm:$0xf]
  %v54 = vld [vmem:[%s3 + $0x14] sm:$0xf]
  %v55 = vld [vmem:[%s3 + $0x18] sm:$0xf]
  %v56 = vld [vmem:[%s3 + $0x1c] sm:$0xf]
  %v57 = vld [vmem:[%s3 + $0x20] sm:$0xf]
  %v58 = vld [vmem:[%s3 + $0x24] sm:$0xf]
  %v59 = vld [vmem:[%s3 + $0x28] sm:$0xf]
  %v60 = vld [vmem:[%s3 + $0x2c] sm:$0xf]
  %v61 = vld [vmem:[%s3 + $0x30] sm:$0xf]
  %v62 = vld [vmem:[%s3 + $0x34] sm:$0xf]
  %v63 = vld [vmem:[%s3 + $0x38] sm:$0xf]
  %v64 = vld [vmem:[%s3 + $0x3c] sm:$0xf]
  %v65 = vld [vmem:[%s3 + $0x40] sm:$0xf]
  %v66 = vld [vmem:[%s3 + $0x44] sm:$0xf]
  %v67 = vld [vmem:[%s3 + $0x48] sm:$0xf]
  %v68 = vld [vmem:[%s3 + $0x4c] sm:$0xf]
  %v69 = vld [vmem:[%s3 + $0x50] sm:$0xf]
  %v70 = vld [vmem:[%s3 + $0x54] sm:$0xf]
  %v71 = vld [vmem:[%s3 + $0x58] sm:$0xf]
  %v72 = vld [vmem:[%s3 + $0x5c] sm:$0xf]
  %v73 = vld [vmem:[%s3 + $0x60] sm:$0xf]
  %v74 = vld [vmem:[%s3 + $0x64] sm:$0xf]
  %v75 = vld [vmem:[%s3 + $0x68] sm:$0xf]
  %v76 = vld [vmem:[%s3 + $0x6c] sm:$0xf]
  %v77 = vld [vmem:[%s3 + $0x70] sm:$0xf]
  %v78 = vld [vmem:[%s3 + $0x74] sm:$0xf]
  %v79 = vld [vmem:[%s3 + $0x78] sm:$0xf]
  %v80 = vld [vmem:[%s3 + $0x7c] sm:$0xf]
  %v81 = vpack.c.bf16 %v35, %v33
  %v82 = vpack.c.bf16 %v36, %v34
  %v83 = vpack.c.bf16 %v39, %v37
  %v84 = vpack.c.bf16 %v40, %v38
  %v85 = vpack.c.bf16 %v43, %v41
  %v86 = vpack.c.bf16 %v44, %v42
  %v87 = vpack.c.bf16 %v47, %v45
  %v88 = vpack.c.bf16 %v48, %v46
  %v89 = vld [vmem:[%s1] sm:$0xff]
  %v90 = vld [vmem:[%s1 + $0x8] sm:$0xff]
  %v91 = vld [vmem:[%s1 + $0x10] sm:$0xff]
  %v92 = vld [vmem:[%s1 + $0x18] sm:$0xff]
  %v93 = vld [vmem:[%s1 + $0x20] sm:$0xff]
  %v94 = vld [vmem:[%s1 + $0x28] sm:$0xff]
  %v95 = vld [vmem:[%s1 + $0x30] sm:$0xff]
  %v96 = vld [vmem:[%s1 + $0x38] sm:$0xff]
  %v97 = vld [vmem:[%s1 + $0x40] sm:$0xff]
  %v98 = vld [vmem:[%s1 + $0x48] sm:$0xff]
  %v99 = vld [vmem:[%s1 + $0x50] sm:$0xff]
  %v100 = vld [vmem:[%s1 + $0x58] sm:$0xff]
  %v101 = vld [vmem:[%s1 + $0x60] sm:$0xff]
  %v102 = vld [vmem:[%s1 + $0x68] sm:$0xff]
  %v103 = vld [vmem:[%s1 + $0x70] sm:$0xff]
  %v104 = vld [vmem:[%s1 + $0x78] sm:$0xff]
  %v105 = vld [vmem:[%s3 + $0x80] sm:$0xf]
  %v106 = vld [vmem:[%s3 + $0x84] sm:$0xf]
  %v107 = vld [vmem:[%s3 + $0x88] sm:$0xf]
  %v108 = vld [vmem:[%s3 + $0x8c] sm:$0xf]
  %v109 = vld [vmem:[%s3 + $0x90] sm:$0xf]
  %v110 = vld [vmem:[%s3 + $0x94] sm:$0xf]
  %v111 = vld [vmem:[%s3 + $0x98] sm:$0xf]
  %v112 = vld [vmem:[%s3 + $0x9c] sm:$0xf]
  %v113 = vld [vmem:[%s3 + $0xa0] sm:$0xf]
  %v114 = vld [vmem:[%s3 + $0xa4] sm:$0xf]
  %v115 = vld [vmem:[%s3 + $0xa8] sm:$0xf]
  %v116 = vld [vmem:[%s3 + $0xac] sm:$0xf]
  %v117 = vld [vmem:[%s3 + $0xb0] sm:$0xf]
  %v118 = vld [vmem:[%s3 + $0xb4] sm:$0xf]
  %v119 = vld [vmem:[%s3 + $0xb8] sm:$0xf]
  %v120 = vld [vmem:[%s3 + $0xbc] sm:$0xf]
  %v121 = vld [vmem:[%s3 + $0xc0] sm:$0xf]
  %v122 = vld [vmem:[%s3 + $0xc4] sm:$0xf]
  %v123 = vld [vmem:[%s3 + $0xc8] sm:$0xf]
  %v124 = vld [vmem:[%s3 + $0xcc] sm:$0xf]
  %v125 = vld [vmem:[%s3 + $0xd0] sm:$0xf]
  %v126 = vld [vmem:[%s3 + $0xd4] sm:$0xf]
  %v127 = vld [vmem:[%s3 + $0xd8] sm:$0xf]
  %v128 = vld [vmem:[%s3 + $0xdc] sm:$0xf]
  %v129 = vld [vmem:[%s3 + $0xe0] sm:$0xf]
  %v130 = vld [vmem:[%s3 + $0xe4] sm:$0xf]
  %v131 = vld [vmem:[%s3 + $0xe8] sm:$0xf]
  %v132 = vld [vmem:[%s3 + $0xec] sm:$0xf]
  %v133 = vld [vmem:[%s3 + $0xf0] sm:$0xf]
  %v134 = vld [vmem:[%s3 + $0xf4] sm:$0xf]
  %v135 = vld [vmem:[%s3 + $0xf8] sm:$0xf]
  %v136 = vld [vmem:[%s3 + $0xfc] sm:$0xf]
  %v137 = vpack.c.bf16 %v91, %v89
  %v138 = vpack.c.bf16 %v92, %v90
  %v139 = vpack.c.bf16 %v95, %v93
  %v140 = vpack.c.bf16 %v96, %v94
  %v141 = vpack.c.bf16 %v99, %v97
  %v142 = vpack.c.bf16 %v100, %v98
  %v143 = vpack.c.bf16 %v103, %v101
  %v144 = vpack.c.bf16 %v104, %v102
  %v177 = vunpack.c.l.b16 %v105
  %v178 = vunpack.c.l.b16 %v106
  %v179 = vunpack.c.l.b16 %v107
  %v180 = vunpack.c.l.b16 %v108
  %v181 = vunpack.c.l.b16 %v109
  %v182 = vunpack.c.l.b16 %v110
  %v183 = vunpack.c.l.b16 %v111
  %v184 = vunpack.c.l.b16 %v112
  %v185 = vunpack.c.l.b16 %v113
  %v186 = vunpack.c.l.b16 %v114
  %v187 = vunpack.c.l.b16 %v115
  %v188 = vunpack.c.l.b16 %v116
  %v189 = vunpack.c.l.b16 %v117
  %v190 = vunpack.c.l.b16 %v118
  %v191 = vunpack.c.l.b16 %v119
  %v192 = vunpack.c.l.b16 %v120
  %v193 = vunpack.c.l.b16 %v121
  %v194 = vunpack.c.l.b16 %v122
  %v195 = vunpack.c.l.b16 %v123
  %v196 = vunpack.c.l.b16 %v124
  %v197 = vunpack.c.l.b16 %v125
  %v198 = vunpack.c.l.b16 %v126
  %v199 = vunpack.c.l.b16 %v127
  %v200 = vunpack.c.l.b16 %v128
  %v201 = vunpack.c.l.b16 %v129
  %v202 = vunpack.c.l.b16 %v130
  %v203 = vunpack.c.l.b16 %v131
  %v204 = vunpack.c.l.b16 %v132
  %v205 = vunpack.c.l.b16 %v133
  %v206 = vunpack.c.l.b16 %v134
  %v207 = vunpack.c.l.b16 %v135
  %v208 = vunpack.c.l.b16 %v136
  %v209 = vpack.c.b16 %v178, %v177
  %v210 = vpack.c.b16 %v180, %v179
  %v211 = vpack.c.b16 %v182, %v181
  %v212 = vpack.c.b16 %v184, %v183
  %v213 = vpack.c.b16 %v186, %v185
  %v214 = vpack.c.b16 %v188, %v187
  %v215 = vpack.c.b16 %v190, %v189
  %v216 = vpack.c.b16 %v192, %v191
  %v217 = vpack.c.b16 %v194, %v193
  %v218 = vpack.c.b16 %v196, %v195
  %v219 = vpack.c.b16 %v198, %v197
  %v220 = vpack.c.b16 %v200, %v199
  %v221 = vpack.c.b16 %v202, %v201
  %v222 = vpack.c.b16 %v204, %v203
  %v223 = vpack.c.b16 %v206, %v205
  %v224 = vpack.c.b16 %v208, %v207
  %241 = vmatprep.subr.bf16.mxu0 0
  %242 = vmatpush1.bf16.msra.mxu0 %v216
  %243 = vmatprep.subr.bf16.mxu0 0
  %244 = vmatpush1.bf16.msra.mxu0 %v215
  %245 = vmatprep.subr.bf16.mxu0 0
  %246 = vmatpush1.bf16.msra.mxu0 %v214
  %247 = vmatprep.subr.bf16.mxu0 0
  %248 = vmatpush1.bf16.msra.mxu0 %v213
  %249 = vmatprep.subr.bf16.mxu0 0
  %250 = vmatpush1.bf16.msra.mxu0 %v212
  %251 = vmatprep.subr.bf16.mxu0 0
  %252 = vmatpush1.bf16.msra.mxu0 %v211
  %253 = vmatprep.subr.bf16.mxu0 0
  %254 = vmatpush1.bf16.msra.mxu0 %v210
  %255 = vmatprep.subr.bf16.mxu0 0
  %256 = vmatpush1.bf16.msra.mxu0 %v209
  %257 = vmatprep.subr.bf16.mxu0 0
  %258 = vmatpush2.bf16.msra.mxu0 %v224
  %259 = vmatprep.subr.bf16.mxu0 0
  %260 = vmatpush2.bf16.msra.mxu0 %v223
  %261 = vmatprep.subr.bf16.mxu0 0
  %262 = vmatpush2.bf16.msra.mxu0 %v222
  %263 = vmatprep.subr.bf16.mxu0 0
  %264 = vmatpush2.bf16.msra.mxu0 %v221
  %265 = vmatprep.subr.bf16.mxu0 0
  %266 = vmatpush2.bf16.msra.mxu0 %v220
  %267 = vmatprep.subr.bf16.mxu0 0
  %268 = vmatpush2.bf16.msra.mxu0 %v219
  %269 = vmatprep.subr.bf16.mxu0 0
  %270 = vmatpush2.bf16.msra.mxu0 %v218
  %271 = vmatprep.subr.bf16.mxu0 0
  %272 = vmatpush2.bf16.msra.mxu0 %v217
  %273 = vmatprep.mubr.bf16.mxu0 %v138
  %274 = vmatmul.mubr.bf16.gmra.mxu0 %v137
  %v275 = vpop.f32.mrf.mxu0
  %v276 = vadd.f32 0.0, %v275
  %v277 = vpop.f32.mrf.mxu0
  %v278 = vpop.f32.mrf.mxu0
  %v279 = vadd.f32 0.0, %v278
  %v280 = vpop.f32.mrf.mxu0
  %281 = vmatprep.mubr.bf16.mxu0 %v140
  %282 = vmatmul.mubr.bf16.gmra.mxu0 %v139
  %v283 = vpop.f32.mrf.mxu0
  %v284 = vadd.f32 0.0, %v283
  %v285 = vpop.f32.mrf.mxu0
  %v286 = vpop.f32.mrf.mxu0
  %v287 = vadd.f32 0.0, %v286
  %v288 = vpop.f32.mrf.mxu0
  %289 = vmatprep.mubr.bf16.mxu0 %v142
  %290 = vmatmul.mubr.bf16.gmra.mxu0 %v141
  %v291 = vpop.f32.mrf.mxu0
  %v292 = vadd.f32 0.0, %v291
  %v293 = vpop.f32.mrf.mxu0
  %v294 = vpop.f32.mrf.mxu0
  %v295 = vadd.f32 0.0, %v294
  %v296 = vpop.f32.mrf.mxu0
  %297 = vmatprep.mubr.bf16.mxu0 %v144
  %298 = vmatmul.mubr.bf16.gmra.mxu0 %v143
  %v299 = vpop.f32.mrf.mxu0
  %v300 = vadd.f32 0.0, %v299
  %v301 = vpop.f32.mrf.mxu0
  %v302 = vpop.f32.mrf.mxu0
  %v303 = vadd.f32 0.0, %v302
  %v304 = vpop.f32.mrf.mxu0
  %305 = vdwg.mxu0
  %v338 = vunpack.c.l.b16 %v49
  %v339 = vunpack.c.l.b16 %v50
  %v340 = vunpack.c.l.b16 %v51
  %v341 = vunpack.c.l.b16 %v52
  %v342 = vunpack.c.l.b16 %v53
  %v343 = vunpack.c.l.b16 %v54
  %v344 = vunpack.c.l.b16 %v55
  %v345 = vunpack.c.l.b16 %v56
  %v346 = vunpack.c.l.b16 %v57
  %v347 = vunpack.c.l.b16 %v58
  %v348 = vunpack.c.l.b16 %v59
  %v349 = vunpack.c.l.b16 %v60
  %v350 = vunpack.c.l.b16 %v61
  %v351 = vunpack.c.l.b16 %v62
  %v352 = vunpack.c.l.b16 %v63
  %v353 = vunpack.c.l.b16 %v64
  %v354 = vunpack.c.l.b16 %v65
  %v355 = vunpack.c.l.b16 %v66
  %v356 = vunpack.c.l.b16 %v67
  %v357 = vunpack.c.l.b16 %v68
  %v358 = vunpack.c.l.b16 %v69
  %v359 = vunpack.c.l.b16 %v70
  %v360 = vunpack.c.l.b16 %v71
  %v361 = vunpack.c.l.b16 %v72
  %v362 = vunpack.c.l.b16 %v73
  %v363 = vunpack.c.l.b16 %v74
  %v364 = vunpack.c.l.b16 %v75
  %v365 = vunpack.c.l.b16 %v76
  %v366 = vunpack.c.l.b16 %v77
  %v367 = vunpack.c.l.b16 %v78
  %v368 = vunpack.c.l.b16 %v79
  %v369 = vunpack.c.l.b16 %v80
  %v370 = vpack.c.b16 %v339, %v338
  %v371 = vpack.c.b16 %v341, %v340
  %v372 = vpack.c.b16 %v343, %v342
  %v373 = vpack.c.b16 %v345, %v344
  %v374 = vpack.c.b16 %v347, %v346
  %v375 = vpack.c.b16 %v349, %v348
  %v376 = vpack.c.b16 %v351, %v350
  %v377 = vpack.c.b16 %v353, %v352
  %v378 = vpack.c.b16 %v355, %v354
  %v379 = vpack.c.b16 %v357, %v356
  %v380 = vpack.c.b16 %v359, %v358
  %v381 = vpack.c.b16 %v361, %v360
  %v382 = vpack.c.b16 %v363, %v362
  %v383 = vpack.c.b16 %v365, %v364
  %v384 = vpack.c.b16 %v367, %v366
  %v385 = vpack.c.b16 %v369, %v368
  %402 = vmatprep.subr.bf16.mxu0 0
  %403 = vmatpush1.bf16.msra.mxu0 %v377
  %404 = vmatprep.subr.bf16.mxu0 0
  %405 = vmatpush1.bf16.msra.mxu0 %v376
  %406 = vmatprep.subr.bf16.mxu0 0
  %407 = vmatpush1.bf16.msra.mxu0 %v375
  %408 = vmatprep.subr.bf16.mxu0 0
  %409 = vmatpush1.bf16.msra.mxu0 %v374
  %410 = vmatprep.subr.bf16.mxu0 0
  %411 = vmatpush1.bf16.msra.mxu0 %v373
  %412 = vmatprep.subr.bf16.mxu0 0
  %413 = vmatpush1.bf16.msra.mxu0 %v372
  %414 = vmatprep.subr.bf16.mxu0 0
  %415 = vmatpush1.bf16.msra.mxu0 %v371
  %416 = vmatprep.subr.bf16.mxu0 0
  %417 = vmatpush1.bf16.msra.mxu0 %v370
  %418 = vmatprep.subr.bf16.mxu0 0
  %419 = vmatpush2.bf16.msra.mxu0 %v385
  %420 = vmatprep.subr.bf16.mxu0 0
  %421 = vmatpush2.bf16.msra.mxu0 %v384
  %422 = vmatprep.subr.bf16.mxu0 0
  %423 = vmatpush2.bf16.msra.mxu0 %v383
  %424 = vmatprep.subr.bf16.mxu0 0
  %425 = vmatpush2.bf16.msra.mxu0 %v382
  %426 = vmatprep.subr.bf16.mxu0 0
  %427 = vmatpush2.bf16.msra.mxu0 %v381
  %428 = vmatprep.subr.bf16.mxu0 0
  %429 = vmatpush2.bf16.msra.mxu0 %v380
  %430 = vmatprep.subr.bf16.mxu0 0
  %431 = vmatpush2.bf16.msra.mxu0 %v379
  %432 = vmatprep.subr.bf16.mxu0 0
  %433 = vmatpush2.bf16.msra.mxu0 %v378
  %434 = vmatprep.mubr.bf16.mxu0 %v82
  %435 = vmatmul.mubr.bf16.gmra.mxu0 %v81
  %v436 = vpop.f32.mrf.mxu0
  %v437 = vadd.f32 %v276, %v436
  %v438 = vpop.f32.mrf.mxu0
  %v439 = vpop.f32.mrf.mxu0
  %v440 = vadd.f32 %v279, %v439
  %v441 = vpop.f32.mrf.mxu0
  %442 = vmatprep.mubr.bf16.mxu0 %v84
  %443 = vmatmul.mubr.bf16.gmra.mxu0 %v83
  %v444 = vpop.f32.mrf.mxu0
  %v445 = vadd.f32 %v284, %v444
  %v446 = vpop.f32.mrf.mxu0
  %v447 = vpop.f32.mrf.mxu0
  %v448 = vadd.f32 %v287, %v447
  %v449 = vpop.f32.mrf.mxu0
  %450 = vmatprep.mubr.bf16.mxu0 %v86
  %451 = vmatmul.mubr.bf16.gmra.mxu0 %v85
  %v452 = vpop.f32.mrf.mxu0
  %v453 = vadd.f32 %v292, %v452
  %v454 = vpop.f32.mrf.mxu0
  %v455 = vpop.f32.mrf.mxu0
  %v456 = vadd.f32 %v295, %v455
  %v457 = vpop.f32.mrf.mxu0
  %458 = vmatprep.mubr.bf16.mxu0 %v88
  %459 = vmatmul.mubr.bf16.gmra.mxu0 %v87
  %v460 = vpop.f32.mrf.mxu0
  %v461 = vadd.f32 %v300, %v460
  %v462 = vpop.f32.mrf.mxu0
  %v463 = vpop.f32.mrf.mxu0
  %v464 = vadd.f32 %v303, %v463
  %v465 = vpop.f32.mrf.mxu0
  %466 = vdwg.mxu0
  %v467 = vld [vmem:[%s2] sm:$0xff]
  %v468 = vld [vmem:[%s2 + $0x8] sm:$0xff]
  %v469 = vld [vmem:[%s2 + $0x10] sm:$0xff]
  %v470 = vld [vmem:[%s2 + $0x18] sm:$0xff]
  %v471 = vld [vmem:[%s2 + $0x20] sm:$0xff]
  %v472 = vld [vmem:[%s2 + $0x28] sm:$0xff]
  %v473 = vld [vmem:[%s2 + $0x30] sm:$0xff]
  %v474 = vld [vmem:[%s2 + $0x38] sm:$0xff]
  %v475 = vld [vmem:[%s2 + $0x40] sm:$0xff]
  %v476 = vld [vmem:[%s2 + $0x48] sm:$0xff]
  %v477 = vld [vmem:[%s2 + $0x50] sm:$0xff]
  %v478 = vld [vmem:[%s2 + $0x58] sm:$0xff]
  %v479 = vld [vmem:[%s2 + $0x60] sm:$0xff]
  %v480 = vld [vmem:[%s2 + $0x68] sm:$0xff]
  %v481 = vld [vmem:[%s2 + $0x70] sm:$0xff]
  %v482 = vld [vmem:[%s2 + $0x78] sm:$0xff]
  %v483 = vld [vmem:[%s3 + $0x100] sm:$0xf]
  %v484 = vld [vmem:[%s3 + $0x104] sm:$0xf]
  %v485 = vld [vmem:[%s3 + $0x108] sm:$0xf]
  %v486 = vld [vmem:[%s3 + $0x10c] sm:$0xf]
  %v487 = vld [vmem:[%s3 + $0x110] sm:$0xf]
  %v488 = vld [vmem:[%s3 + $0x114] sm:$0xf]
  %v489 = vld [vmem:[%s3 + $0x118] sm:$0xf]
  %v490 = vld [vmem:[%s3 + $0x11c] sm:$0xf]
  %v491 = vld [vmem:[%s3 + $0x120] sm:$0xf]
  %v492 = vld [vmem:[%s3 + $0x124] sm:$0xf]
  %v493 = vld [vmem:[%s3 + $0x128] sm:$0xf]
  %v494 = vld [vmem:[%s3 + $0x12c] sm:$0xf]
  %v495 = vld [vmem:[%s3 + $0x130] sm:$0xf]
  %v496 = vld [vmem:[%s3 + $0x134] sm:$0xf]
  %v497 = vld [vmem:[%s3 + $0x138] sm:$0xf]
  %v498 = vld [vmem:[%s3 + $0x13c] sm:$0xf]
  %v499 = vld [vmem:[%s3 + $0x140] sm:$0xf]
  %v500 = vld [vmem:[%s3 + $0x144] sm:$0xf]
  %v501 = vld [vmem:[%s3 + $0x148] sm:$0xf]
  %v502 = vld [vmem:[%s3 + $0x14c] sm:$0xf]
  %v503 = vld [vmem:[%s3 + $0x150] sm:$0xf]
  %v504 = vld [vmem:[%s3 + $0x154] sm:$0xf]
  %v505 = vld [vmem:[%s3 + $0x158] sm:$0xf]
  %v506 = vld [vmem:[%s3 + $0x15c] sm:$0xf]
  %v507 = vld [vmem:[%s3 + $0x160] sm:$0xf]
  %v508 = vld [vmem:[%s3 + $0x164] sm:$0xf]
  %v509 = vld [vmem:[%s3 + $0x168] sm:$0xf]
  %v510 = vld [vmem:[%s3 + $0x16c] sm:$0xf]
  %v511 = vld [vmem:[%s3 + $0x170] sm:$0xf]
  %v512 = vld [vmem:[%s3 + $0x174] sm:$0xf]
  %v513 = vld [vmem:[%s3 + $0x178] sm:$0xf]
  %v514 = vld [vmem:[%s3 + $0x17c] sm:$0xf]
  %v515 = vpack.c.bf16 %v469, %v467
  %v516 = vpack.c.bf16 %v470, %v468
  %v517 = vpack.c.bf16 %v473, %v471
  %v518 = vpack.c.bf16 %v474, %v472
  %v519 = vpack.c.bf16 %v477, %v475
  %v520 = vpack.c.bf16 %v478, %v476
  %v521 = vpack.c.bf16 %v481, %v479
  %v522 = vpack.c.bf16 %v482, %v480
  %v555 = vunpack.c.l.b16 %v483
  %v556 = vunpack.c.l.b16 %v484
  %v557 = vunpack.c.l.b16 %v485
  %v558 = vunpack.c.l.b16 %v486
  %v559 = vunpack.c.l.b16 %v487
  %v560 = vunpack.c.l.b16 %v488
  %v561 = vunpack.c.l.b16 %v489
  %v562 = vunpack.c.l.b16 %v490
  %v563 = vunpack.c.l.b16 %v491
  %v564 = vunpack.c.l.b16 %v492
  %v565 = vunpack.c.l.b16 %v493
  %v566 = vunpack.c.l.b16 %v494
  %v567 = vunpack.c.l.b16 %v495
  %v568 = vunpack.c.l.b16 %v496
  %v569 = vunpack.c.l.b16 %v497
  %v570 = vunpack.c.l.b16 %v498
  %v571 = vunpack.c.l.b16 %v499
  %v572 = vunpack.c.l.b16 %v500
  %v573 = vunpack.c.l.b16 %v501
  %v574 = vunpack.c.l.b16 %v502
  %v575 = vunpack.c.l.b16 %v503
  %v576 = vunpack.c.l.b16 %v504
  %v577 = vunpack.c.l.b16 %v505
  %v578 = vunpack.c.l.b16 %v506
  %v579 = vunpack.c.l.b16 %v507
  %v580 = vunpack.c.l.b16 %v508
  %v581 = vunpack.c.l.b16 %v509
  %v582 = vunpack.c.l.b16 %v510
  %v583 = vunpack.c.l.b16 %v511
  %v584 = vunpack.c.l.b16 %v512
  %v585 = vunpack.c.l.b16 %v513
  %v586 = vunpack.c.l.b16 %v514
  %v587 = vpack.c.b16 %v556, %v555
  %v588 = vpack.c.b16 %v558, %v557
  %v589 = vpack.c.b16 %v560, %v559
  %v590 = vpack.c.b16 %v562, %v561
  %v591 = vpack.c.b16 %v564, %v563
  %v592 = vpack.c.b16 %v566, %v565
  %v593 = vpack.c.b16 %v568, %v567
  %v594 = vpack.c.b16 %v570, %v569
  %v595 = vpack.c.b16 %v572, %v571
  %v596 = vpack.c.b16 %v574, %v573
  %v597 = vpack.c.b16 %v576, %v575
  %v598 = vpack.c.b16 %v578, %v577
  %v599 = vpack.c.b16 %v580, %v579
  %v600 = vpack.c.b16 %v582, %v581
  %v601 = vpack.c.b16 %v584, %v583
  %v602 = vpack.c.b16 %v586, %v585
  %619 = vmatprep.subr.bf16.mxu0 0
  %620 = vmatpush1.bf16.msra.mxu0 %v594
  %621 = vmatprep.subr.bf16.mxu0 0
  %622 = vmatpush1.bf16.msra.mxu0 %v593
  %623 = vmatprep.subr.bf16.mxu0 0
  %624 = vmatpush1.bf16.msra.mxu0 %v592
  %625 = vmatprep.subr.bf16.mxu0 0
  %626 = vmatpush1.bf16.msra.mxu0 %v591
  %627 = vmatprep.subr.bf16.mxu0 0
  %628 = vmatpush1.bf16.msra.mxu0 %v590
  %629 = vmatprep.subr.bf16.mxu0 0
  %630 = vmatpush1.bf16.msra.mxu0 %v589
  %631 = vmatprep.subr.bf16.mxu0 0
  %632 = vmatpush1.bf16.msra.mxu0 %v588
  %633 = vmatprep.subr.bf16.mxu0 0
  %634 = vmatpush1.bf16.msra.mxu0 %v587
  %635 = vmatprep.subr.bf16.mxu0 0
  %636 = vmatpush2.bf16.msra.mxu0 %v602
  %637 = vmatprep.subr.bf16.mxu0 0
  %638 = vmatpush2.bf16.msra.mxu0 %v601
  %639 = vmatprep.subr.bf16.mxu0 0
  %640 = vmatpush2.bf16.msra.mxu0 %v600
  %641 = vmatprep.subr.bf16.mxu0 0
  %642 = vmatpush2.bf16.msra.mxu0 %v599
  %643 = vmatprep.subr.bf16.mxu0 0
  %644 = vmatpush2.bf16.msra.mxu0 %v598
  %645 = vmatprep.subr.bf16.mxu0 0
  %646 = vmatpush2.bf16.msra.mxu0 %v597
  %647 = vmatprep.subr.bf16.mxu0 0
  %648 = vmatpush2.bf16.msra.mxu0 %v596
  %649 = vmatprep.subr.bf16.mxu0 0
  %650 = vmatpush2.bf16.msra.mxu0 %v595
  %651 = vmatprep.mubr.bf16.mxu0 %v516
  %652 = vmatmul.mubr.bf16.gmra.mxu0 %v515
  %v653 = vpop.f32.mrf.mxu0
  %v654 = vadd.f32 0.0, %v653
  %v655 = vpop.f32.mrf.mxu0
  %v656 = vpop.f32.mrf.mxu0
  %v657 = vadd.f32 0.0, %v656
  %v658 = vpop.f32.mrf.mxu0
  %659 = vmatprep.mubr.bf16.mxu0 %v518
  %660 = vmatmul.mubr.bf16.gmra.mxu0 %v517
  %v661 = vpop.f32.mrf.mxu0
  %v662 = vadd.f32 0.0, %v661
  %v663 = vpop.f32.mrf.mxu0
  %v664 = vpop.f32.mrf.mxu0
  %v665 = vadd.f32 0.0, %v664
  %v666 = vpop.f32.mrf.mxu0
  %667 = vmatprep.mubr.bf16.mxu0 %v520
  %668 = vmatmul.mubr.bf16.gmra.mxu0 %v519
  %v669 = vpop.f32.mrf.mxu0
  %v670 = vadd.f32 0.0, %v669
  %v671 = vpop.f32.mrf.mxu0
  %v672 = vpop.f32.mrf.mxu0
  %v673 = vadd.f32 0.0, %v672
  %v674 = vpop.f32.mrf.mxu0
  %675 = vmatprep.mubr.bf16.mxu0 %v522
  %676 = vmatmul.mubr.bf16.gmra.mxu0 %v521
  %v677 = vpop.f32.mrf.mxu0
  %v678 = vadd.f32 0.0, %v677
  %v679 = vpop.f32.mrf.mxu0
  %v680 = vpop.f32.mrf.mxu0
  %v681 = vadd.f32 0.0, %v680
  %v682 = vpop.f32.mrf.mxu0
  %683 = vdwg.mxu0
  %v684 = vadd.f32 %v437, %v654
  %v685 = vadd.f32 %v440, %v657
  %v686 = vadd.f32 %v445, %v662
  %v687 = vadd.f32 %v448, %v665
  %v688 = vadd.f32 %v453, %v670
  %v689 = vadd.f32 %v456, %v673
  %v690 = vadd.f32 %v461, %v678
  %v691 = vadd.f32 %v464, %v681
  %v692 = vld [vmem:[%s0 + $0x10] sm:$0xff]
  %v693 = vld [vmem:[%s0 + $0x18] sm:$0xff]
  %v694 = vld [vmem:[%s0 + $0x20] sm:$0xff]
  %v695 = vld [vmem:[%s0 + $0x28] sm:$0xff]
  %v696 = vld [vmem:[%s0 + $0x30] sm:$0xff]
  %v697 = vld [vmem:[%s0 + $0x38] sm:$0xff]
  %v698 = vld [vmem:[%s0 + $0x40] sm:$0xff]
  %v699 = vld [vmem:[%s0 + $0x48] sm:$0xff]
  %v700 = vld [vmem:[%s0 + $0x50] sm:$0xff]
  %v701 = vld [vmem:[%s0 + $0x58] sm:$0xff]
  %v702 = vld [vmem:[%s0 + $0x60] sm:$0xff]
  %v703 = vld [vmem:[%s0 + $0x68] sm:$0xff]
  %v704 = vld [vmem:[%s0 + $0x70] sm:$0xff]
  %v705 = vld [vmem:[%s0 + $0x78] sm:$0xff]
  %v706 = vld [vmem:[%s0 + $0x80] sm:$0xff]
  %v707 = vld [vmem:[%s0 + $0x88] sm:$0xff]
  %v708 = vld [vmem:[%s3 + $0x180] sm:$0xf]
  %v709 = vld [vmem:[%s3 + $0x184] sm:$0xf]
  %v710 = vld [vmem:[%s3 + $0x188] sm:$0xf]
  %v711 = vld [vmem:[%s3 + $0x18c] sm:$0xf]
  %v712 = vld [vmem:[%s3 + $0x190] sm:$0xf]
  %v713 = vld [vmem:[%s3 + $0x194] sm:$0xf]
  %v714 = vld [vmem:[%s3 + $0x198] sm:$0xf]
  %v715 = vld [vmem:[%s3 + $0x19c] sm:$0xf]
  %v716 = vld [vmem:[%s3 + $0x1a0] sm:$0xf]
  %v717 = vld [vmem:[%s3 + $0x1a4] sm:$0xf]
  %v718 = vld [vmem:[%s3 + $0x1a8] sm:$0xf]
  %v719 = vld [vmem:[%s3 + $0x1ac] sm:$0xf]
  %v720 = vld [vmem:[%s3 + $0x1b0] sm:$0xf]
  %v721 = vld [vmem:[%s3 + $0x1b4] sm:$0xf]
  %v722 = vld [vmem:[%s3 + $0x1b8] sm:$0xf]
  %v723 = vld [vmem:[%s3 + $0x1bc] sm:$0xf]
  %v724 = vld [vmem:[%s3 + $0x1c0] sm:$0xf]
  %v725 = vld [vmem:[%s3 + $0x1c4] sm:$0xf]
  %v726 = vld [vmem:[%s3 + $0x1c8] sm:$0xf]
  %v727 = vld [vmem:[%s3 + $0x1cc] sm:$0xf]
  %v728 = vld [vmem:[%s3 + $0x1d0] sm:$0xf]
  %v729 = vld [vmem:[%s3 + $0x1d4] sm:$0xf]
  %v730 = vld [vmem:[%s3 + $0x1d8] sm:$0xf]
  %v731 = vld [vmem:[%s3 + $0x1dc] sm:$0xf]
  %v732 = vld [vmem:[%s3 + $0x1e0] sm:$0xf]
  %v733 = vld [vmem:[%s3 + $0x1e4] sm:$0xf]
  %v734 = vld [vmem:[%s3 + $0x1e8] sm:$0xf]
  %v735 = vld [vmem:[%s3 + $0x1ec] sm:$0xf]
  %v736 = vld [vmem:[%s3 + $0x1f0] sm:$0xf]
  %v737 = vld [vmem:[%s3 + $0x1f4] sm:$0xf]
  %v738 = vld [vmem:[%s3 + $0x1f8] sm:$0xf]
  %v739 = vld [vmem:[%s3 + $0x1fc] sm:$0xf]
  %v740 = vpack.c.bf16 %v694, %v692
  %v741 = vpack.c.bf16 %v695, %v693
  %v742 = vpack.c.bf16 %v698, %v696
  %v743 = vpack.c.bf16 %v699, %v697
  %v744 = vpack.c.bf16 %v702, %v700
  %v745 = vpack.c.bf16 %v703, %v701
  %v746 = vpack.c.bf16 %v706, %v704
  %v747 = vpack.c.bf16 %v707, %v705
  %v780 = vunpack.c.l.b16 %v708
  %v781 = vunpack.c.l.b16 %v709
  %v782 = vunpack.c.l.b16 %v710
  %v783 = vunpack.c.l.b16 %v711
  %v784 = vunpack.c.l.b16 %v712
  %v785 = vunpack.c.l.b16 %v713
  %v786 = vunpack.c.l.b16 %v714
  %v787 = vunpack.c.l.b16 %v715
  %v788 = vunpack.c.l.b16 %v716
  %v789 = vunpack.c.l.b16 %v717
  %v790 = vunpack.c.l.b16 %v718
  %v791 = vunpack.c.l.b16 %v719
  %v792 = vunpack.c.l.b16 %v720
  %v793 = vunpack.c.l.b16 %v721
  %v794 = vunpack.c.l.b16 %v722
  %v795 = vunpack.c.l.b16 %v723
  %v796 = vunpack.c.l.b16 %v724
  %v797 = vunpack.c.l.b16 %v725
  %v798 = vunpack.c.l.b16 %v726
  %v799 = vunpack.c.l.b16 %v727
  %v800 = vunpack.c.l.b16 %v728
  %v801 = vunpack.c.l.b16 %v729
  %v802 = vunpack.c.l.b16 %v730
  %v803 = vunpack.c.l.b16 %v731
  %v804 = vunpack.c.l.b16 %v732
  %v805 = vunpack.c.l.b16 %v733
  %v806 = vunpack.c.l.b16 %v734
  %v807 = vunpack.c.l.b16 %v735
  %v808 = vunpack.c.l.b16 %v736
  %v809 = vunpack.c.l.b16 %v737
  %v810 = vunpack.c.l.b16 %v738
  %v811 = vunpack.c.l.b16 %v739
  %v812 = vpack.c.b16 %v781, %v780
  %v813 = vpack.c.b16 %v783, %v782
  %v814 = vpack.c.b16 %v785, %v784
  %v815 = vpack.c.b16 %v787, %v786
  %v816 = vpack.c.b16 %v789, %v788
  %v817 = vpack.c.b16 %v791, %v790
  %v818 = vpack.c.b16 %v793, %v792
  %v819 = vpack.c.b16 %v795, %v794
  %v820 = vpack.c.b16 %v797, %v796
  %v821 = vpack.c.b16 %v799, %v798
  %v822 = vpack.c.b16 %v801, %v800
  %v823 = vpack.c.b16 %v803, %v802
  %v824 = vpack.c.b16 %v805, %v804
  %v825 = vpack.c.b16 %v807, %v806
  %v826 = vpack.c.b16 %v809, %v808
  %v827 = vpack.c.b16 %v811, %v810
  %844 = vmatprep.subr.bf16.mxu0 0
  %845 = vmatpush1.bf16.msra.mxu0 %v819
  %846 = vmatprep.subr.bf16.mxu0 0
  %847 = vmatpush1.bf16.msra.mxu0 %v818
  %848 = vmatprep.subr.bf16.mxu0 0
  %849 = vmatpush1.bf16.msra.mxu0 %v817
  %850 = vmatprep.subr.bf16.mxu0 0
  %851 = vmatpush1.bf16.msra.mxu0 %v816
  %852 = vmatprep.subr.bf16.mxu0 0
  %853 = vmatpush1.bf16.msra.mxu0 %v815
  %854 = vmatprep.subr.bf16.mxu0 0
  %855 = vmatpush1.bf16.msra.mxu0 %v814
  %856 = vmatprep.subr.bf16.mxu0 0
  %857 = vmatpush1.bf16.msra.mxu0 %v813
  %858 = vmatprep.subr.bf16.mxu0 0
  %859 = vmatpush1.bf16.msra.mxu0 %v812
  %860 = vmatprep.subr.bf16.mxu0 0
  %861 = vmatpush2.bf16.msra.mxu0 %v827
  %862 = vmatprep.subr.bf16.mxu0 0
  %863 = vmatpush2.bf16.msra.mxu0 %v826
  %864 = vmatprep.subr.bf16.mxu0 0
  %865 = vmatpush2.bf16.msra.mxu0 %v825
  %866 = vmatprep.subr.bf16.mxu0 0
  %867 = vmatpush2.bf16.msra.mxu0 %v824
  %868 = vmatprep.subr.bf16.mxu0 0
  %869 = vmatpush2.bf16.msra.mxu0 %v823
  %870 = vmatprep.subr.bf16.mxu0 0
  %871 = vmatpush2.bf16.msra.mxu0 %v822
  %872 = vmatprep.subr.bf16.mxu0 0
  %873 = vmatpush2.bf16.msra.mxu0 %v821
  %874 = vmatprep.subr.bf16.mxu0 0
  %875 = vmatpush2.bf16.msra.mxu0 %v820
  %876 = vmatprep.mubr.bf16.mxu0 %v741
  %877 = vmatmul.mubr.bf16.gmra.mxu0 %v740
  %v878 = vpop.f32.mrf.mxu0
  %v879 = vadd.f32 0.0, %v878
  %v880 = vpop.f32.mrf.mxu0
  %v881 = vpop.f32.mrf.mxu0
  %v882 = vadd.f32 0.0, %v881
  %v883 = vpop.f32.mrf.mxu0
  %884 = vmatprep.mubr.bf16.mxu0 %v743
  %885 = vmatmul.mubr.bf16.gmra.mxu0 %v742
  %v886 = vpop.f32.mrf.mxu0
  %v887 = vadd.f32 0.0, %v886
  %v888 = vpop.f32.mrf.mxu0
  %v889 = vpop.f32.mrf.mxu0
  %v890 = vadd.f32 0.0, %v889
  %v891 = vpop.f32.mrf.mxu0
  %892 = vmatprep.mubr.bf16.mxu0 %v745
  %893 = vmatmul.mubr.bf16.gmra.mxu0 %v744
  %v894 = vpop.f32.mrf.mxu0
  %v895 = vadd.f32 0.0, %v894
  %v896 = vpop.f32.mrf.mxu0
  %v897 = vpop.f32.mrf.mxu0
  %v898 = vadd.f32 0.0, %v897
  %v899 = vpop.f32.mrf.mxu0
  %900 = vmatprep.mubr.bf16.mxu0 %v747
  %901 = vmatmul.mubr.bf16.gmra.mxu0 %v746
  %v902 = vpop.f32.mrf.mxu0
  %v903 = vadd.f32 0.0, %v902
  %v904 = vpop.f32.mrf.mxu0
  %v905 = vpop.f32.mrf.mxu0
  %v906 = vadd.f32 0.0, %v905
  %v907 = vpop.f32.mrf.mxu0
  %908 = vdwg.mxu0
  %v909 = vadd.f32 %v684, %v879
  %v910 = vadd.f32 %v685, %v882
  %v911 = vadd.f32 %v686, %v887
  %v912 = vadd.f32 %v687, %v890
  %v913 = vadd.f32 %v688, %v895
  %v914 = vadd.f32 %v689, %v898
  %v915 = vadd.f32 %v690, %v903
  %v916 = vadd.f32 %v691, %v906
  %v917 = vld [vmem:[%s1 + $0x10] sm:$0xff]
  %v918 = vld [vmem:[%s1 + $0x18] sm:$0xff]
  %v919 = vld [vmem:[%s1 + $0x20] sm:$0xff]
  %v920 = vld [vmem:[%s1 + $0x28] sm:$0xff]
  %v921 = vld [vmem:[%s1 + $0x30] sm:$0xff]
  %v922 = vld [vmem:[%s1 + $0x38] sm:$0xff]
  %v923 = vld [vmem:[%s1 + $0x40] sm:$0xff]
  %v924 = vld [vmem:[%s1 + $0x48] sm:$0xff]
  %v925 = vld [vmem:[%s1 + $0x50] sm:$0xff]
  %v926 = vld [vmem:[%s1 + $0x58] sm:$0xff]
  %v927 = vld [vmem:[%s1 + $0x60] sm:$0xff]
  %v928 = vld [vmem:[%s1 + $0x68] sm:$0xff]
  %v929 = vld [vmem:[%s1 + $0x70] sm:$0xff]
  %v930 = vld [vmem:[%s1 + $0x78] sm:$0xff]
  %v931 = vld [vmem:[%s1 + $0x80] sm:$0xff]
  %v932 = vld [vmem:[%s1 + $0x88] sm:$0xff]
  %v933 = vld [vmem:[%s3 + $0x200] sm:$0xf]
  %v934 = vld [vmem:[%s3 + $0x204] sm:$0xf]
  %v935 = vld [vmem:[%s3 + $0x208] sm:$0xf]
  %v936 = vld [vmem:[%s3 + $0x20c] sm:$0xf]
  %v937 = vld [vmem:[%s3 + $0x210] sm:$0xf]
  %v938 = vld [vmem:[%s3 + $0x214] sm:$0xf]
  %v939 = vld [vmem:[%s3 + $0x218] sm:$0xf]
  %v940 = vld [vmem:[%s3 + $0x21c] sm:$0xf]
  %v941 = vld [vmem:[%s3 + $0x220] sm:$0xf]
  %v942 = vld [vmem:[%s3 + $0x224] sm:$0xf]
  %v943 = vld [vmem:[%s3 + $0x228] sm:$0xf]
  %v944 = vld [vmem:[%s3 + $0x22c] sm:$0xf]
  %v945 = vld [vmem:[%s3 + $0x230] sm:$0xf]
  %v946 = vld [vmem:[%s3 + $0x234] sm:$0xf]
  %v947 = vld [vmem:[%s3 + $0x238] sm:$0xf]
  %v948 = vld [vmem:[%s3 + $0x23c] sm:$0xf]
  %v949 = vld [vmem:[%s3 + $0x240] sm:$0xf]
  %v950 = vld [vmem:[%s3 + $0x244] sm:$0xf]
  %v951 = vld [vmem:[%s3 + $0x248] sm:$0xf]
  %v952 = vld [vmem:[%s3 + $0x24c] sm:$0xf]
  %v953 = vld [vmem:[%s3 + $0x250] sm:$0xf]
  %v954 = vld [vmem:[%s3 + $0x254] sm:$0xf]
  %v955 = vld [vmem:[%s3 + $0x258] sm:$0xf]
  %v956 = vld [vmem:[%s3 + $0x25c] sm:$0xf]
  %v957 = vld [vmem:[%s3 + $0x260] sm:$0xf]
  %v958 = vld [vmem:[%s3 + $0x264] sm:$0xf]
  %v959 = vld [vmem:[%s3 + $0x268] sm:$0xf]
  %v960 = vld [vmem:[%s3 + $0x26c] sm:$0xf]
  %v961 = vld [vmem:[%s3 + $0x270] sm:$0xf]
  %v962 = vld [vmem:[%s3 + $0x274] sm:$0xf]
  %v963 = vld [vmem:[%s3 + $0x278] sm:$0xf]
  %v964 = vld [vmem:[%s3 + $0x27c] sm:$0xf]
  %v965 = vpack.c.bf16 %v919, %v917
  %v966 = vpack.c.bf16 %v920, %v918
  %v967 = vpack.c.bf16 %v923, %v921
  %v968 = vpack.c.bf16 %v924, %v922
  %v969 = vpack.c.bf16 %v927, %v925
  %v970 = vpack.c.bf16 %v928, %v926
  %v971 = vpack.c.bf16 %v931, %v929
  %v972 = vpack.c.bf16 %v932, %v930
  %v1005 = vunpack.c.l.b16 %v933
  %v1006 = vunpack.c.l.b16 %v934
  %v1007 = vunpack.c.l.b16 %v935
  %v1008 = vunpack.c.l.b16 %v936
  %v1009 = vunpack.c.l.b16 %v937
  %v1010 = vunpack.c.l.b16 %v938
  %v1011 = vunpack.c.l.b16 %v939
  %v1012 = vunpack.c.l.b16 %v940
  %v1013 = vunpack.c.l.b16 %v941
  %v1014 = vunpack.c.l.b16 %v942
  %v1015 = vunpack.c.l.b16 %v943
  %v1016 = vunpack.c.l.b16 %v944
  %v1017 = vunpack.c.l.b16 %v945
  %v1018 = vunpack.c.l.b16 %v946
  %v1019 = vunpack.c.l.b16 %v947
  %v1020 = vunpack.c.l.b16 %v948
  %v1021 = vunpack.c.l.b16 %v949
  %v1022 = vunpack.c.l.b16 %v950
  %v1023 = vunpack.c.l.b16 %v951
  %v1024 = vunpack.c.l.b16 %v952
  %v1025 = vunpack.c.l.b16 %v953
  %v1026 = vunpack.c.l.b16 %v954
  %v1027 = vunpack.c.l.b16 %v955
  %v1028 = vunpack.c.l.b16 %v956
  %v1029 = vunpack.c.l.b16 %v957
  %v1030 = vunpack.c.l.b16 %v958
  %v1031 = vunpack.c.l.b16 %v959
  %v1032 = vunpack.c.l.b16 %v960
  %v1033 = vunpack.c.l.b16 %v961
  %v1034 = vunpack.c.l.b16 %v962
  %v1035 = vunpack.c.l.b16 %v963
  %v1036 = vunpack.c.l.b16 %v964
  %v1037 = vpack.c.b16 %v1006, %v1005
  %v1038 = vpack.c.b16 %v1008, %v1007
  %v1039 = vpack.c.b16 %v1010, %v1009
  %v1040 = vpack.c.b16 %v1012, %v1011
  %v1041 = vpack.c.b16 %v1014, %v1013
  %v1042 = vpack.c.b16 %v1016, %v1015
  %v1043 = vpack.c.b16 %v1018, %v1017
  %v1044 = vpack.c.b16 %v1020, %v1019
  %v1045 = vpack.c.b16 %v1022, %v1021
  %v1046 = vpack.c.b16 %v1024, %v1023
  %v1047 = vpack.c.b16 %v1026, %v1025
  %v1048 = vpack.c.b16 %v1028, %v1027
  %v1049 = vpack.c.b16 %v1030, %v1029
  %v1050 = vpack.c.b16 %v1032, %v1031
  %v1051 = vpack.c.b16 %v1034, %v1033
  %v1052 = vpack.c.b16 %v1036, %v1035
  %1069 = vmatprep.subr.bf16.mxu0 0
  %1070 = vmatpush1.bf16.msra.mxu0 %v1044
  %1071 = vmatprep.subr.bf16.mxu0 0
  %1072 = vmatpush1.bf16.msra.mxu0 %v1043
  %1073 = vmatprep.subr.bf16.mxu0 0
  %1074 = vmatpush1.bf16.msra.mxu0 %v1042
  %1075 = vmatprep.subr.bf16.mxu0 0
  %1076 = vmatpush1.bf16.msra.mxu0 %v1041
  %1077 = vmatprep.subr.bf16.mxu0 0
  %1078 = vmatpush1.bf16.msra.mxu0 %v1040
  %1079 = vmatprep.subr.bf16.mxu0 0
  %1080 = vmatpush1.bf16.msra.mxu0 %v1039
  %1081 = vmatprep.subr.bf16.mxu0 0
  %1082 = vmatpush1.bf16.msra.mxu0 %v1038
  %1083 = vmatprep.subr.bf16.mxu0 0
  %1084 = vmatpush1.bf16.msra.mxu0 %v1037
  %1085 = vmatprep.subr.bf16.mxu0 0
  %1086 = vmatpush2.bf16.msra.mxu0 %v1052
  %1087 = vmatprep.subr.bf16.mxu0 0
  %1088 = vmatpush2.bf16.msra.mxu0 %v1051
  %1089 = vmatprep.subr.bf16.mxu0 0
  %1090 = vmatpush2.bf16.msra.mxu0 %v1050
  %1091 = vmatprep.subr.bf16.mxu0 0
  %1092 = vmatpush2.bf16.msra.mxu0 %v1049
  %1093 = vmatprep.subr.bf16.mxu0 0
  %1094 = vmatpush2.bf16.msra.mxu0 %v1048
  %1095 = vmatprep.subr.bf16.mxu0 0
  %1096 = vmatpush2.bf16.msra.mxu0 %v1047
  %1097 = vmatprep.subr.bf16.mxu0 0
  %1098 = vmatpush2.bf16.msra.mxu0 %v1046
  %1099 = vmatprep.subr.bf16.mxu0 0
  %1100 = vmatpush2.bf16.msra.mxu0 %v1045
  %1101 = vmatprep.mubr.bf16.mxu0 %v966
  %1102 = vmatmul.mubr.bf16.gmra.mxu0 %v965
  %v1103 = vpop.f32.mrf.mxu0
  %v1104 = vadd.f32 0.0, %v1103
  %v1105 = vpop.f32.mrf.mxu0
  %v1106 = vpop.f32.mrf.mxu0
  %v1107 = vadd.f32 0.0, %v1106
  %v1108 = vpop.f32.mrf.mxu0
  %1109 = vmatprep.mubr.bf16.mxu0 %v968
  %1110 = vmatmul.mubr.bf16.gmra.mxu0 %v967
  %v1111 = vpop.f32.mrf.mxu0
  %v1112 = vadd.f32 0.0, %v1111
  %v1113 = vpop.f32.mrf.mxu0
  %v1114 = vpop.f32.mrf.mxu0
  %v1115 = vadd.f32 0.0, %v1114
  %v1116 = vpop.f32.mrf.mxu0
  %1117 = vmatprep.mubr.bf16.mxu0 %v970
  %1118 = vmatmul.mubr.bf16.gmra.mxu0 %v969
  %v1119 = vpop.f32.mrf.mxu0
  %v1120 = vadd.f32 0.0, %v1119
  %v1121 = vpop.f32.mrf.mxu0
  %v1122 = vpop.f32.mrf.mxu0
  %v1123 = vadd.f32 0.0, %v1122
  %v1124 = vpop.f32.mrf.mxu0
  %1125 = vmatprep.mubr.bf16.mxu0 %v972
  %1126 = vmatmul.mubr.bf16.gmra.mxu0 %v971
  %v1127 = vpop.f32.mrf.mxu0
  %v1128 = vadd.f32 0.0, %v1127
  %v1129 = vpop.f32.mrf.mxu0
  %v1130 = vpop.f32.mrf.mxu0
  %v1131 = vadd.f32 0.0, %v1130
  %v1132 = vpop.f32.mrf.mxu0
  %1133 = vdwg.mxu0
  %v1134 = vadd.f32 %v909, %v1104
  %v1135 = vadd.f32 %v910, %v1107
  %v1136 = vadd.f32 %v911, %v1112
  %v1137 = vadd.f32 %v912, %v1115
  %v1138 = vadd.f32 %v913, %v1120
  %v1139 = vadd.f32 %v914, %v1123
  %v1140 = vadd.f32 %v915, %v1128
  %v1141 = vadd.f32 %v916, %v1131
  %v1142 = vld [vmem:[%s2 + $0x10] sm:$0xff]
  %v1143 = vld [vmem:[%s2 + $0x18] sm:$0xff]
  %v1144 = vld [vmem:[%s2 + $0x20] sm:$0xff]
  %v1145 = vld [vmem:[%s2 + $0x28] sm:$0xff]
  %v1146 = vld [vmem:[%s2 + $0x30] sm:$0xff]
  %v1147 = vld [vmem:[%s2 + $0x38] sm:$0xff]
  %v1148 = vld [vmem:[%s2 + $0x40] sm:$0xff]
  %v1149 = vld [vmem:[%s2 + $0x48] sm:$0xff]
  %v1150 = vld [vmem:[%s2 + $0x50] sm:$0xff]
  %v1151 = vld [vmem:[%s2 + $0x58] sm:$0xff]
  %v1152 = vld [vmem:[%s2 + $0x60] sm:$0xff]
  %v1153 = vld [vmem:[%s2 + $0x68] sm:$0xff]
  %v1154 = vld [vmem:[%s2 + $0x70] sm:$0xff]
  %v1155 = vld [vmem:[%s2 + $0x78] sm:$0xff]
  %v1156 = vld [vmem:[%s2 + $0x80] sm:$0xff]
  %v1157 = vld [vmem:[%s2 + $0x88] sm:$0xff]
  %v1158 = vld [vmem:[%s3 + $0x280] sm:$0xf]
  %v1159 = vld [vmem:[%s3 + $0x284] sm:$0xf]
  %v1160 = vld [vmem:[%s3 + $0x288] sm:$0xf]
  %v1161 = vld [vmem:[%s3 + $0x28c] sm:$0xf]
  %v1162 = vld [vmem:[%s3 + $0x290] sm:$0xf]
  %v1163 = vld [vmem:[%s3 + $0x294] sm:$0xf]
  %v1164 = vld [vmem:[%s3 + $0x298] sm:$0xf]
  %v1165 = vld [vmem:[%s3 + $0x29c] sm:$0xf]
  %v1166 = vld [vmem:[%s3 + $0x2a0] sm:$0xf]
  %v1167 = vld [vmem:[%s3 + $0x2a4] sm:$0xf]
  %v1168 = vld [vmem:[%s3 + $0x2a8] sm:$0xf]
  %v1169 = vld [vmem:[%s3 + $0x2ac] sm:$0xf]
  %v1170 = vld [vmem:[%s3 + $0x2b0] sm:$0xf]
  %v1171 = vld [vmem:[%s3 + $0x2b4] sm:$0xf]
  %v1172 = vld [vmem:[%s3 + $0x2b8] sm:$0xf]
  %v1173 = vld [vmem:[%s3 + $0x2bc] sm:$0xf]
  %v1174 = vld [vmem:[%s3 + $0x2c0] sm:$0xf]
  %v1175 = vld [vmem:[%s3 + $0x2c4] sm:$0xf]
  %v1176 = vld [vmem:[%s3 + $0x2c8] sm:$0xf]
  %v1177 = vld [vmem:[%s3 + $0x2cc] sm:$0xf]
  %v1178 = vld [vmem:[%s3 + $0x2d0] sm:$0xf]
  %v1179 = vld [vmem:[%s3 + $0x2d4] sm:$0xf]
  %v1180 = vld [vmem:[%s3 + $0x2d8] sm:$0xf]
  %v1181 = vld [vmem:[%s3 + $0x2dc] sm:$0xf]
  %v1182 = vld [vmem:[%s3 + $0x2e0] sm:$0xf]
  %v1183 = vld [vmem:[%s3 + $0x2e4] sm:$0xf]
  %v1184 = vld [vmem:[%s3 + $0x2e8] sm:$0xf]
  %v1185 = vld [vmem:[%s3 + $0x2ec] sm:$0xf]
  %v1186 = vld [vmem:[%s3 + $0x2f0] sm:$0xf]
  %v1187 = vld [vmem:[%s3 + $0x2f4] sm:$0xf]
  %v1188 = vld [vmem:[%s3 + $0x2f8] sm:$0xf]
  %v1189 = vld [vmem:[%s3 + $0x2fc] sm:$0xf]
  %v1190 = vpack.c.bf16 %v1144, %v1142
  %v1191 = vpack.c.bf16 %v1145, %v1143
  %v1192 = vpack.c.bf16 %v1148, %v1146
  %v1193 = vpack.c.bf16 %v1149, %v1147
  %v1194 = vpack.c.bf16 %v1152, %v1150
  %v1195 = vpack.c.bf16 %v1153, %v1151
  %v1196 = vpack.c.bf16 %v1156, %v1154
  %v1197 = vpack.c.bf16 %v1157, %v1155
  %v1230 = vunpack.c.l.b16 %v1158
  %v1231 = vunpack.c.l.b16 %v1159
  %v1232 = vunpack.c.l.b16 %v1160
  %v1233 = vunpack.c.l.b16 %v1161
  %v1234 = vunpack.c.l.b16 %v1162
  %v1235 = vunpack.c.l.b16 %v1163
  %v1236 = vunpack.c.l.b16 %v1164
  %v1237 = vunpack.c.l.b16 %v1165
  %v1238 = vunpack.c.l.b16 %v1166
  %v1239 = vunpack.c.l.b16 %v1167
  %v1240 = vunpack.c.l.b16 %v1168
  %v1241 = vunpack.c.l.b16 %v1169
  %v1242 = vunpack.c.l.b16 %v1170
  %v1243 = vunpack.c.l.b16 %v1171
  %v1244 = vunpack.c.l.b16 %v1172
  %v1245 = vunpack.c.l.b16 %v1173
  %v1246 = vunpack.c.l.b16 %v1174
  %v1247 = vunpack.c.l.b16 %v1175
  %v1248 = vunpack.c.l.b16 %v1176
  %v1249 = vunpack.c.l.b16 %v1177
  %v1250 = vunpack.c.l.b16 %v1178
  %v1251 = vunpack.c.l.b16 %v1179
  %v1252 = vunpack.c.l.b16 %v1180
  %v1253 = vunpack.c.l.b16 %v1181
  %v1254 = vunpack.c.l.b16 %v1182
  %v1255 = vunpack.c.l.b16 %v1183
  %v1256 = vunpack.c.l.b16 %v1184
  %v1257 = vunpack.c.l.b16 %v1185
  %v1258 = vunpack.c.l.b16 %v1186
  %v1259 = vunpack.c.l.b16 %v1187
  %v1260 = vunpack.c.l.b16 %v1188
  %v1261 = vunpack.c.l.b16 %v1189
  %v1262 = vpack.c.b16 %v1231, %v1230
  %v1263 = vpack.c.b16 %v1233, %v1232
  %v1264 = vpack.c.b16 %v1235, %v1234
  %v1265 = vpack.c.b16 %v1237, %v1236
  %v1266 = vpack.c.b16 %v1239, %v1238
  %v1267 = vpack.c.b16 %v1241, %v1240
  %v1268 = vpack.c.b16 %v1243, %v1242
  %v1269 = vpack.c.b16 %v1245, %v1244
  %v1270 = vpack.c.b16 %v1247, %v1246
  %v1271 = vpack.c.b16 %v1249, %v1248
  %v1272 = vpack.c.b16 %v1251, %v1250
  %v1273 = vpack.c.b16 %v1253, %v1252
  %v1274 = vpack.c.b16 %v1255, %v1254
  %v1275 = vpack.c.b16 %v1257, %v1256
  %v1276 = vpack.c.b16 %v1259, %v1258
  %v1277 = vpack.c.b16 %v1261, %v1260
  %1294 = vmatprep.subr.bf16.mxu0 0
  %1295 = vmatpush1.bf16.msra.mxu0 %v1269
  %1296 = vmatprep.subr.bf16.mxu0 0
  %1297 = vmatpush1.bf16.msra.mxu0 %v1268
  %1298 = vmatprep.subr.bf16.mxu0 0
  %1299 = vmatpush1.bf16.msra.mxu0 %v1267
  %1300 = vmatprep.subr.bf16.mxu0 0
  %1301 = vmatpush1.bf16.msra.mxu0 %v1266
  %1302 = vmatprep.subr.bf16.mxu0 0
  %1303 = vmatpush1.bf16.msra.mxu0 %v1265
  %1304 = vmatprep.subr.bf16.mxu0 0
  %1305 = vmatpush1.bf16.msra.mxu0 %v1264
  %1306 = vmatprep.subr.bf16.mxu0 0
  %1307 = vmatpush1.bf16.msra.mxu0 %v1263
  %1308 = vmatprep.subr.bf16.mxu0 0
  %1309 = vmatpush1.bf16.msra.mxu0 %v1262
  %1310 = vmatprep.subr.bf16.mxu0 0
  %1311 = vmatpush2.bf16.msra.mxu0 %v1277
  %1312 = vmatprep.subr.bf16.mxu0 0
  %1313 = vmatpush2.bf16.msra.mxu0 %v1276
  %1314 = vmatprep.subr.bf16.mxu0 0
  %1315 = vmatpush2.bf16.msra.mxu0 %v1275
  %1316 = vmatprep.subr.bf16.mxu0 0
  %1317 = vmatpush2.bf16.msra.mxu0 %v1274
  %1318 = vmatprep.subr.bf16.mxu0 0
  %1319 = vmatpush2.bf16.msra.mxu0 %v1273
  %1320 = vmatprep.subr.bf16.mxu0 0
  %1321 = vmatpush2.bf16.msra.mxu0 %v1272
  %1322 = vmatprep.subr.bf16.mxu0 0
  %1323 = vmatpush2.bf16.msra.mxu0 %v1271
  %1324 = vmatprep.subr.bf16.mxu0 0
  %1325 = vmatpush2.bf16.msra.mxu0 %v1270
  %1326 = vmatprep.mubr.bf16.mxu0 %v1191
  %1327 = vmatmul.mubr.bf16.gmra.mxu0 %v1190
  %v1328 = vpop.f32.mrf.mxu0
  %v1329 = vadd.f32 0.0, %v1328
  %v1330 = vpop.f32.mrf.mxu0
  %v1331 = vpop.f32.mrf.mxu0
  %v1332 = vadd.f32 0.0, %v1331
  %v1333 = vpop.f32.mrf.mxu0
  %1334 = vmatprep.mubr.bf16.mxu0 %v1193
  %1335 = vmatmul.mubr.bf16.gmra.mxu0 %v1192
  %v1336 = vpop.f32.mrf.mxu0
  %v1337 = vadd.f32 0.0, %v1336
  %v1338 = vpop.f32.mrf.mxu0
  %v1339 = vpop.f32.mrf.mxu0
  %v1340 = vadd.f32 0.0, %v1339
  %v1341 = vpop.f32.mrf.mxu0
  %1342 = vmatprep.mubr.bf16.mxu0 %v1195
  %1343 = vmatmul.mubr.bf16.gmra.mxu0 %v1194
  %v1344 = vpop.f32.mrf.mxu0
  %v1345 = vadd.f32 0.0, %v1344
  %v1346 = vpop.f32.mrf.mxu0
  %v1347 = vpop.f32.mrf.mxu0
  %v1348 = vadd.f32 0.0, %v1347
  %v1349 = vpop.f32.mrf.mxu0
  %1350 = vmatprep.mubr.bf16.mxu0 %v1197
  %1351 = vmatmul.mubr.bf16.gmra.mxu0 %v1196
  %v1352 = vpop.f32.mrf.mxu0
  %v1353 = vadd.f32 0.0, %v1352
  %v1354 = vpop.f32.mrf.mxu0
  %v1355 = vpop.f32.mrf.mxu0
  %v1356 = vadd.f32 0.0, %v1355
  %v1357 = vpop.f32.mrf.mxu0
  %1358 = vdwg.mxu0
  %v1359 = vadd.f32 %v1134, %v1329
  %v1360 = vadd.f32 %v1135, %v1332
  %v1361 = vadd.f32 %v1136, %v1337
  %v1362 = vadd.f32 %v1137, %v1340
  %v1363 = vadd.f32 %v1138, %v1345
  %v1364 = vadd.f32 %v1139, %v1348
  %v1365 = vadd.f32 %v1140, %v1353
  %v1366 = vadd.f32 %v1141, %v1356
  %v1367 = vld [vmem:[%s0 + $0x20] sm:$0xff]
  %v1368 = vld [vmem:[%s0 + $0x28] sm:$0xff]
  %v1369 = vld [vmem:[%s0 + $0x30] sm:$0xff]
  %v1370 = vld [vmem:[%s0 + $0x38] sm:$0xff]
  %v1371 = vld [vmem:[%s0 + $0x40] sm:$0xff]
  %v1372 = vld [vmem:[%s0 + $0x48] sm:$0xff]
  %v1373 = vld [vmem:[%s0 + $0x50] sm:$0xff]
  %v1374 = vld [vmem:[%s0 + $0x58] sm:$0xff]
  %v1375 = vld [vmem:[%s0 + $0x60] sm:$0xff]
  %v1376 = vld [vmem:[%s0 + $0x68] sm:$0xff]
  %v1377 = vld [vmem:[%s0 + $0x70] sm:$0xff]
  %v1378 = vld [vmem:[%s0 + $0x78] sm:$0xff]
  %v1379 = vld [vmem:[%s0 + $0x80] sm:$0xff]
  %v1380 = vld [vmem:[%s0 + $0x88] sm:$0xff]
  %v1381 = vld [vmem:[%s0 + $0x90] sm:$0xff]
  %v1382 = vld [vmem:[%s0 + $0x98] sm:$0xff]
  %v1383 = vld [vmem:[%s3 + $0x300] sm:$0xf]
  %v1384 = vld [vmem:[%s3 + $0x304] sm:$0xf]
  %v1385 = vld [vmem:[%s3 + $0x308] sm:$0xf]
  %v1386 = vld [vmem:[%s3 + $0x30c] sm:$0xf]
  %v1387 = vld [vmem:[%s3 + $0x310] sm:$0xf]
  %v1388 = vld [vmem:[%s3 + $0x314] sm:$0xf]
  %v1389 = vld [vmem:[%s3 + $0x318] sm:$0xf]
  %v1390 = vld [vmem:[%s3 + $0x31c] sm:$0xf]
  %v1391 = vld [vmem:[%s3 + $0x320] sm:$0xf]
  %v1392 = vld [vmem:[%s3 + $0x324] sm:$0xf]
  %v1393 = vld [vmem:[%s3 + $0x328] sm:$0xf]
  %v1394 = vld [vmem:[%s3 + $0x32c] sm:$0xf]
  %v1395 = vld [vmem:[%s3 + $0x330] sm:$0xf]
  %v1396 = vld [vmem:[%s3 + $0x334] sm:$0xf]
  %v1397 = vld [vmem:[%s3 + $0x338] sm:$0xf]
  %v1398 = vld [vmem:[%s3 + $0x33c] sm:$0xf]
  %v1399 = vld [vmem:[%s3 + $0x340] sm:$0xf]
  %v1400 = vld [vmem:[%s3 + $0x344] sm:$0xf]
  %v1401 = vld [vmem:[%s3 + $0x348] sm:$0xf]
  %v1402 = vld [vmem:[%s3 + $0x34c] sm:$0xf]
  %v1403 = vld [vmem:[%s3 + $0x350] sm:$0xf]
  %v1404 = vld [vmem:[%s3 + $0x354] sm:$0xf]
  %v1405 = vld [vmem:[%s3 + $0x358] sm:$0xf]
  %v1406 = vld [vmem:[%s3 + $0x35c] sm:$0xf]
  %v1407 = vld [vmem:[%s3 + $0x360] sm:$0xf]
  %v1408 = vld [vmem:[%s3 + $0x364] sm:$0xf]
  %v1409 = vld [vmem:[%s3 + $0x368] sm:$0xf]
  %v1410 = vld [vmem:[%s3 + $0x36c] sm:$0xf]
  %v1411 = vld [vmem:[%s3 + $0x370] sm:$0xf]
  %v1412 = vld [vmem:[%s3 + $0x374] sm:$0xf]
  %v1413 = vld [vmem:[%s3 + $0x378] sm:$0xf]
  %v1414 = vld [vmem:[%s3 + $0x37c] sm:$0xf]
  %v1415 = vpack.c.bf16 %v1369, %v1367
  %v1416 = vpack.c.bf16 %v1370, %v1368
  %v1417 = vpack.c.bf16 %v1373, %v1371
  %v1418 = vpack.c.bf16 %v1374, %v1372
  %v1419 = vpack.c.bf16 %v1377, %v1375
  %v1420 = vpack.c.bf16 %v1378, %v1376
  %v1421 = vpack.c.bf16 %v1381, %v1379
  %v1422 = vpack.c.bf16 %v1382, %v1380
  %v1455 = vunpack.c.l.b16 %v1383
  %v1456 = vunpack.c.l.b16 %v1384
  %v1457 = vunpack.c.l.b16 %v1385
  %v1458 = vunpack.c.l.b16 %v1386
  %v1459 = vunpack.c.l.b16 %v1387
  %v1460 = vunpack.c.l.b16 %v1388
  %v1461 = vunpack.c.l.b16 %v1389
  %v1462 = vunpack.c.l.b16 %v1390
  %v1463 = vunpack.c.l.b16 %v1391
  %v1464 = vunpack.c.l.b16 %v1392
  %v1465 = vunpack.c.l.b16 %v1393
  %v1466 = vunpack.c.l.b16 %v1394
  %v1467 = vunpack.c.l.b16 %v1395
  %v1468 = vunpack.c.l.b16 %v1396
  %v1469 = vunpack.c.l.b16 %v1397
  %v1470 = vunpack.c.l.b16 %v1398
  %v1471 = vunpack.c.l.b16 %v1399
  %v1472 = vunpack.c.l.b16 %v1400
  %v1473 = vunpack.c.l.b16 %v1401
  %v1474 = vunpack.c.l.b16 %v1402
  %v1475 = vunpack.c.l.b16 %v1403
  %v1476 = vunpack.c.l.b16 %v1404
  %v1477 = vunpack.c.l.b16 %v1405
  %v1478 = vunpack.c.l.b16 %v1406
  %v1479 = vunpack.c.l.b16 %v1407
  %v1480 = vunpack.c.l.b16 %v1408
  %v1481 = vunpack.c.l.b16 %v1409
  %v1482 = vunpack.c.l.b16 %v1410
  %v1483 = vunpack.c.l.b16 %v1411
  %v1484 = vunpack.c.l.b16 %v1412
  %v1485 = vunpack.c.l.b16 %v1413
  %v1486 = vunpack.c.l.b16 %v1414
  %v1487 = vpack.c.b16 %v1456, %v1455
  %v1488 = vpack.c.b16 %v1458, %v1457
  %v1489 = vpack.c.b16 %v1460, %v1459
  %v1490 = vpack.c.b16 %v1462, %v1461
  %v1491 = vpack.c.b16 %v1464, %v1463
  %v1492 = vpack.c.b16 %v1466, %v1465
  %v1493 = vpack.c.b16 %v1468, %v1467
  %v1494 = vpack.c.b16 %v1470, %v1469
  %v1495 = vpack.c.b16 %v1472, %v1471
  %v1496 = vpack.c.b16 %v1474, %v1473
  %v1497 = vpack.c.b16 %v1476, %v1475
  %v1498 = vpack.c.b16 %v1478, %v1477
  %v1499 = vpack.c.b16 %v1480, %v1479
  %v1500 = vpack.c.b16 %v1482, %v1481
  %v1501 = vpack.c.b16 %v1484, %v1483
  %v1502 = vpack.c.b16 %v1486, %v1485
  %1519 = vmatprep.subr.bf16.mxu0 0
  %1520 = vmatpush1.bf16.msra.mxu0 %v1494
  %1521 = vmatprep.subr.bf16.mxu0 0
  %1522 = vmatpush1.bf16.msra.mxu0 %v1493
  %1523 = vmatprep.subr.bf16.mxu0 0
  %1524 = vmatpush1.bf16.msra.mxu0 %v1492
  %1525 = vmatprep.subr.bf16.mxu0 0
  %1526 = vmatpush1.bf16.msra.mxu0 %v1491
  %1527 = vmatprep.subr.bf16.mxu0 0
  %1528 = vmatpush1.bf16.msra.mxu0 %v1490
  %1529 = vmatprep.subr.bf16.mxu0 0
  %1530 = vmatpush1.bf16.msra.mxu0 %v1489
  %1531 = vmatprep.subr.bf16.mxu0 0
  %1532 = vmatpush1.bf16.msra.mxu0 %v1488
  %1533 = vmatprep.subr.bf16.mxu0 0
  %1534 = vmatpush1.bf16.msra.mxu0 %v1487
  %1535 = vmatprep.subr.bf16.mxu0 0
  %1536 = vmatpush2.bf16.msra.mxu0 %v1502
  %1537 = vmatprep.subr.bf16.mxu0 0
  %1538 = vmatpush2.bf16.msra.mxu0 %v1501
  %1539 = vmatprep.subr.bf16.mxu0 0
  %1540 = vmatpush2.bf16.msra.mxu0 %v1500
  %1541 = vmatprep.subr.bf16.mxu0 0
  %1542 = vmatpush2.bf16.msra.mxu0 %v1499
  %1543 = vmatprep.subr.bf16.mxu0 0
  %1544 = vmatpush2.bf16.msra.mxu0 %v1498
  %1545 = vmatprep.subr.bf16.mxu0 0
  %1546 = vmatpush2.bf16.msra.mxu0 %v1497
  %1547 = vmatprep.subr.bf16.mxu0 0
  %1548 = vmatpush2.bf16.msra.mxu0 %v1496
  %1549 = vmatprep.subr.bf16.mxu0 0
  %1550 = vmatpush2.bf16.msra.mxu0 %v1495
  %1551 = vmatprep.mubr.bf16.mxu0 %v1416
  %1552 = vmatmul.mubr.bf16.gmra.mxu0 %v1415
  %v1553 = vpop.f32.mrf.mxu0
  %v1554 = vadd.f32 0.0, %v1553
  %v1555 = vpop.f32.mrf.mxu0
  %v1556 = vpop.f32.mrf.mxu0
  %v1557 = vadd.f32 0.0, %v1556
  %v1558 = vpop.f32.mrf.mxu0
  %1559 = vmatprep.mubr.bf16.mxu0 %v1418
  %1560 = vmatmul.mubr.bf16.gmra.mxu0 %v1417
  %v1561 = vpop.f32.mrf.mxu0
  %v1562 = vadd.f32 0.0, %v1561
  %v1563 = vpop.f32.mrf.mxu0
  %v1564 = vpop.f32.mrf.mxu0
  %v1565 = vadd.f32 0.0, %v1564
  %v1566 = vpop.f32.mrf.mxu0
  %1567 = vmatprep.mubr.bf16.mxu0 %v1420
  %1568 = vmatmul.mubr.bf16.gmra.mxu0 %v1419
  %v1569 = vpop.f32.mrf.mxu0
  %v1570 = vadd.f32 0.0, %v1569
  %v1571 = vpop.f32.mrf.mxu0
  %v1572 = vpop.f32.mrf.mxu0
  %v1573 = vadd.f32 0.0, %v1572
  %v1574 = vpop.f32.mrf.mxu0
  %1575 = vmatprep.mubr.bf16.mxu0 %v1422
  %1576 = vmatmul.mubr.bf16.gmra.mxu0 %v1421
  %v1577 = vpop.f32.mrf.mxu0
  %v1578 = vadd.f32 0.0, %v1577
  %v1579 = vpop.f32.mrf.mxu0
  %v1580 = vpop.f32.mrf.mxu0
  %v1581 = vadd.f32 0.0, %v1580
  %v1582 = vpop.f32.mrf.mxu0
  %1583 = vdwg.mxu0
  %v1584 = vadd.f32 %v1359, %v1554
  %v1585 = vadd.f32 %v1360, %v1557
  %v1586 = vadd.f32 %v1361, %v1562
  %v1587 = vadd.f32 %v1362, %v1565
  %v1588 = vadd.f32 %v1363, %v1570
  %v1589 = vadd.f32 %v1364, %v1573
  %v1590 = vadd.f32 %v1365, %v1578
  %v1591 = vadd.f32 %v1366, %v1581
  %v1592 = vld [vmem:[%s1 + $0x20] sm:$0xff]
  %v1593 = vld [vmem:[%s1 + $0x28] sm:$0xff]
  %v1594 = vld [vmem:[%s1 + $0x30] sm:$0xff]
  %v1595 = vld [vmem:[%s1 + $0x38] sm:$0xff]
  %v1596 = vld [vmem:[%s1 + $0x40] sm:$0xff]
  %v1597 = vld [vmem:[%s1 + $0x48] sm:$0xff]
  %v1598 = vld [vmem:[%s1 + $0x50] sm:$0xff]
  %v1599 = vld [vmem:[%s1 + $0x58] sm:$0xff]
  %v1600 = vld [vmem:[%s1 + $0x60] sm:$0xff]
  %v1601 = vld [vmem:[%s1 + $0x68] sm:$0xff]
  %v1602 = vld [vmem:[%s1 + $0x70] sm:$0xff]
  %v1603 = vld [vmem:[%s1 + $0x78] sm:$0xff]
  %v1604 = vld [vmem:[%s1 + $0x80] sm:$0xff]
  %v1605 = vld [vmem:[%s1 + $0x88] sm:$0xff]
  %v1606 = vld [vmem:[%s1 + $0x90] sm:$0xff]
  %v1607 = vld [vmem:[%s1 + $0x98] sm:$0xff]
  %v1608 = vld [vmem:[%s3 + $0x380] sm:$0xf]
  %v1609 = vld [vmem:[%s3 + $0x384] sm:$0xf]
  %v1610 = vld [vmem:[%s3 + $0x388] sm:$0xf]
  %v1611 = vld [vmem:[%s3 + $0x38c] sm:$0xf]
  %v1612 = vld [vmem:[%s3 + $0x390] sm:$0xf]
  %v1613 = vld [vmem:[%s3 + $0x394] sm:$0xf]
  %v1614 = vld [vmem:[%s3 + $0x398] sm:$0xf]
  %v1615 = vld [vmem:[%s3 + $0x39c] sm:$0xf]
  %v1616 = vld [vmem:[%s3 + $0x3a0] sm:$0xf]
  %v1617 = vld [vmem:[%s3 + $0x3a4] sm:$0xf]
  %v1618 = vld [vmem:[%s3 + $0x3a8] sm:$0xf]
  %v1619 = vld [vmem:[%s3 + $0x3ac] sm:$0xf]
  %v1620 = vld [vmem:[%s3 + $0x3b0] sm:$0xf]
  %v1621 = vld [vmem:[%s3 + $0x3b4] sm:$0xf]
  %v1622 = vld [vmem:[%s3 + $0x3b8] sm:$0xf]
  %v1623 = vld [vmem:[%s3 + $0x3bc] sm:$0xf]
  %v1624 = vld [vmem:[%s3 + $0x3c0] sm:$0xf]
  %v1625 = vld [vmem:[%s3 + $0x3c4] sm:$0xf]
  %v1626 = vld [vmem:[%s3 + $0x3c8] sm:$0xf]
  %v1627 = vld [vmem:[%s3 + $0x3cc] sm:$0xf]
  %v1628 = vld [vmem:[%s3 + $0x3d0] sm:$0xf]
  %v1629 = vld [vmem:[%s3 + $0x3d4] sm:$0xf]
  %v1630 = vld [vmem:[%s3 + $0x3d8] sm:$0xf]
  %v1631 = vld [vmem:[%s3 + $0x3dc] sm:$0xf]
  %v1632 = vld [vmem:[%s3 + $0x3e0] sm:$0xf]
  %v1633 = vld [vmem:[%s3 + $0x3e4] sm:$0xf]
  %v1634 = vld [vmem:[%s3 + $0x3e8] sm:$0xf]
  %v1635 = vld [vmem:[%s3 + $0x3ec] sm:$0xf]
  %v1636 = vld [vmem:[%s3 + $0x3f0] sm:$0xf]
  %v1637 = vld [vmem:[%s3 + $0x3f4] sm:$0xf]
  %v1638 = vld [vmem:[%s3 + $0x3f8] sm:$0xf]
  %v1639 = vld [vmem:[%s3 + $0x3fc] sm:$0xf]
  %v1640 = vpack.c.bf16 %v1594, %v1592
  %v1641 = vpack.c.bf16 %v1595, %v1593
  %v1642 = vpack.c.bf16 %v1598, %v1596
  %v1643 = vpack.c.bf16 %v1599, %v1597
  %v1644 = vpack.c.bf16 %v1602, %v1600
  %v1645 = vpack.c.bf16 %v1603, %v1601
  %v1646 = vpack.c.bf16 %v1606, %v1604
  %v1647 = vpack.c.bf16 %v1607, %v1605
  %v1680 = vunpack.c.l.b16 %v1608
  %v1681 = vunpack.c.l.b16 %v1609
  %v1682 = vunpack.c.l.b16 %v1610
  %v1683 = vunpack.c.l.b16 %v1611
  %v1684 = vunpack.c.l.b16 %v1612
  %v1685 = vunpack.c.l.b16 %v1613
  %v1686 = vunpack.c.l.b16 %v1614
  %v1687 = vunpack.c.l.b16 %v1615
  %v1688 = vunpack.c.l.b16 %v1616
  %v1689 = vunpack.c.l.b16 %v1617
  %v1690 = vunpack.c.l.b16 %v1618
  %v1691 = vunpack.c.l.b16 %v1619
  %v1692 = vunpack.c.l.b16 %v1620
  %v1693 = vunpack.c.l.b16 %v1621
  %v1694 = vunpack.c.l.b16 %v1622
  %v1695 = vunpack.c.l.b16 %v1623
  %v1696 = vunpack.c.l.b16 %v1624
  %v1697 = vunpack.c.l.b16 %v1625
  %v1698 = vunpack.c.l.b16 %v1626
  %v1699 = vunpack.c.l.b16 %v1627
  %v1700 = vunpack.c.l.b16 %v1628
  %v1701 = vunpack.c.l.b16 %v1629
  %v1702 = vunpack.c.l.b16 %v1630
  %v1703 = vunpack.c.l.b16 %v1631
  %v1704 = vunpack.c.l.b16 %v1632
  %v1705 = vunpack.c.l.b16 %v1633
  %v1706 = vunpack.c.l.b16 %v1634
  %v1707 = vunpack.c.l.b16 %v1635
  %v1708 = vunpack.c.l.b16 %v1636
  %v1709 = vunpack.c.l.b16 %v1637
  %v1710 = vunpack.c.l.b16 %v1638
  %v1711 = vunpack.c.l.b16 %v1639
  %v1712 = vpack.c.b16 %v1681, %v1680
  %v1713 = vpack.c.b16 %v1683, %v1682
  %v1714 = vpack.c.b16 %v1685, %v1684
  %v1715 = vpack.c.b16 %v1687, %v1686
  %v1716 = vpack.c.b16 %v1689, %v1688
  %v1717 = vpack.c.b16 %v1691, %v1690
  %v1718 = vpack.c.b16 %v1693, %v1692
  %v1719 = vpack.c.b16 %v1695, %v1694
  %v1720 = vpack.c.b16 %v1697, %v1696
  %v1721 = vpack.c.b16 %v1699, %v1698
  %v1722 = vpack.c.b16 %v1701, %v1700
  %v1723 = vpack.c.b16 %v1703, %v1702
  %v1724 = vpack.c.b16 %v1705, %v1704
  %v1725 = vpack.c.b16 %v1707, %v1706
  %v1726 = vpack.c.b16 %v1709, %v1708
  %v1727 = vpack.c.b16 %v1711, %v1710
  %1744 = vmatprep.subr.bf16.mxu0 0
  %1745 = vmatpush1.bf16.msra.mxu0 %v1719
  %1746 = vmatprep.subr.bf16.mxu0 0
  %1747 = vmatpush1.bf16.msra.mxu0 %v1718
  %1748 = vmatprep.subr.bf16.mxu0 0
  %1749 = vmatpush1.bf16.msra.mxu0 %v1717
  %1750 = vmatprep.subr.bf16.mxu0 0
  %1751 = vmatpush1.bf16.msra.mxu0 %v1716
  %1752 = vmatprep.subr.bf16.mxu0 0
  %1753 = vmatpush1.bf16.msra.mxu0 %v1715
  %1754 = vmatprep.subr.bf16.mxu0 0
  %1755 = vmatpush1.bf16.msra.mxu0 %v1714
  %1756 = vmatprep.subr.bf16.mxu0 0
  %1757 = vmatpush1.bf16.msra.mxu0 %v1713
  %1758 = vmatprep.subr.bf16.mxu0 0
  %1759 = vmatpush1.bf16.msra.mxu0 %v1712
  %1760 = vmatprep.subr.bf16.mxu0 0
  %1761 = vmatpush2.bf16.msra.mxu0 %v1727
  %1762 = vmatprep.subr.bf16.mxu0 0
  %1763 = vmatpush2.bf16.msra.mxu0 %v1726
  %1764 = vmatprep.subr.bf16.mxu0 0
  %1765 = vmatpush2.bf16.msra.mxu0 %v1725
  %1766 = vmatprep.subr.bf16.mxu0 0
  %1767 = vmatpush2.bf16.msra.mxu0 %v1724
  %1768 = vmatprep.subr.bf16.mxu0 0
  %1769 = vmatpush2.bf16.msra.mxu0 %v1723
  %1770 = vmatprep.subr.bf16.mxu0 0
  %1771 = vmatpush2.bf16.msra.mxu0 %v1722
  %1772 = vmatprep.subr.bf16.mxu0 0
  %1773 = vmatpush2.bf16.msra.mxu0 %v1721
  %1774 = vmatprep.subr.bf16.mxu0 0
  %1775 = vmatpush2.bf16.msra.mxu0 %v1720
  %1776 = vmatprep.mubr.bf16.mxu0 %v1641
  %1777 = vmatmul.mubr.bf16.gmra.mxu0 %v1640
  %v1778 = vpop.f32.mrf.mxu0
  %v1779 = vadd.f32 0.0, %v1778
  %v1780 = vpop.f32.mrf.mxu0
  %v1781 = vpop.f32.mrf.mxu0
  %v1782 = vadd.f32 0.0, %v1781
  %v1783 = vpop.f32.mrf.mxu0
  %1784 = vmatprep.mubr.bf16.mxu0 %v1643
  %1785 = vmatmul.mubr.bf16.gmra.mxu0 %v1642
  %v1786 = vpop.f32.mrf.mxu0
  %v1787 = vadd.f32 0.0, %v1786
  %v1788 = vpop.f32.mrf.mxu0
  %v1789 = vpop.f32.mrf.mxu0
  %v1790 = vadd.f32 0.0, %v1789
  %v1791 = vpop.f32.mrf.mxu0
  %1792 = vmatprep.mubr.bf16.mxu0 %v1645
  %1793 = vmatmul.mubr.bf16.gmra.mxu0 %v1644
  %v1794 = vpop.f32.mrf.mxu0
  %v1795 = vadd.f32 0.0, %v1794
  %v1796 = vpop.f32.mrf.mxu0
  %v1797 = vpop.f32.mrf.mxu0
  %v1798 = vadd.f32 0.0, %v1797
  %v1799 = vpop.f32.mrf.mxu0
  %1800 = vmatprep.mubr.bf16.mxu0 %v1647
  %1801 = vmatmul.mubr.bf16.gmra.mxu0 %v1646
  %v1802 = vpop.f32.mrf.mxu0
  %v1803 = vadd.f32 0.0, %v1802
  %v1804 = vpop.f32.mrf.mxu0
  %v1805 = vpop.f32.mrf.mxu0
  %v1806 = vadd.f32 0.0, %v1805
  %v1807 = vpop.f32.mrf.mxu0
  %1808 = vdwg.mxu0
  %v1809 = vadd.f32 %v1584, %v1779
  %v1810 = vadd.f32 %v1585, %v1782
  %v1811 = vadd.f32 %v1586, %v1787
  %v1812 = vadd.f32 %v1587, %v1790
  %v1813 = vadd.f32 %v1588, %v1795
  %v1814 = vadd.f32 %v1589, %v1798
  %v1815 = vadd.f32 %v1590, %v1803
  %v1816 = vadd.f32 %v1591, %v1806
  %v1817 = vld [vmem:[%s2 + $0x20] sm:$0xff]
  %v1818 = vld [vmem:[%s2 + $0x28] sm:$0xff]
  %v1819 = vld [vmem:[%s2 + $0x30] sm:$0xff]
  %v1820 = vld [vmem:[%s2 + $0x38] sm:$0xff]
  %v1821 = vld [vmem:[%s2 + $0x40] sm:$0xff]
  %v1822 = vld [vmem:[%s2 + $0x48] sm:$0xff]
  %v1823 = vld [vmem:[%s2 + $0x50] sm:$0xff]
  %v1824 = vld [vmem:[%s2 + $0x58] sm:$0xff]
  %v1825 = vld [vmem:[%s2 + $0x60] sm:$0xff]
  %v1826 = vld [vmem:[%s2 + $0x68] sm:$0xff]
  %v1827 = vld [vmem:[%s2 + $0x70] sm:$0xff]
  %v1828 = vld [vmem:[%s2 + $0x78] sm:$0xff]
  %v1829 = vld [vmem:[%s2 + $0x80] sm:$0xff]
  %v1830 = vld [vmem:[%s2 + $0x88] sm:$0xff]
  %v1831 = vld [vmem:[%s2 + $0x90] sm:$0xff]
  %v1832 = vld [vmem:[%s2 + $0x98] sm:$0xff]
  %v1833 = vld [vmem:[%s3 + $0x400] sm:$0xf]
  %v1834 = vld [vmem:[%s3 + $0x404] sm:$0xf]
  %v1835 = vld [vmem:[%s3 + $0x408] sm:$0xf]
  %v1836 = vld [vmem:[%s3 + $0x40c] sm:$0xf]
  %v1837 = vld [vmem:[%s3 + $0x410] sm:$0xf]
  %v1838 = vld [vmem:[%s3 + $0x414] sm:$0xf]
  %v1839 = vld [vmem:[%s3 + $0x418] sm:$0xf]
  %v1840 = vld [vmem:[%s3 + $0x41c] sm:$0xf]
  %v1841 = vld [vmem:[%s3 + $0x420] sm:$0xf]
  %v1842 = vld [vmem:[%s3 + $0x424] sm:$0xf]
  %v1843 = vld [vmem:[%s3 + $0x428] sm:$0xf]
  %v1844 = vld [vmem:[%s3 + $0x42c] sm:$0xf]
  %v1845 = vld [vmem:[%s3 + $0x430] sm:$0xf]
  %v1846 = vld [vmem:[%s3 + $0x434] sm:$0xf]
  %v1847 = vld [vmem:[%s3 + $0x438] sm:$0xf]
  %v1848 = vld [vmem:[%s3 + $0x43c] sm:$0xf]
  %v1849 = vld [vmem:[%s3 + $0x440] sm:$0xf]
  %v1850 = vld [vmem:[%s3 + $0x444] sm:$0xf]
  %v1851 = vld [vmem:[%s3 + $0x448] sm:$0xf]
  %v1852 = vld [vmem:[%s3 + $0x44c] sm:$0xf]
  %v1853 = vld [vmem:[%s3 + $0x450] sm:$0xf]
  %v1854 = vld [vmem:[%s3 + $0x454] sm:$0xf]
  %v1855 = vld [vmem:[%s3 + $0x458] sm:$0xf]
  %v1856 = vld [vmem:[%s3 + $0x45c] sm:$0xf]
  %v1857 = vld [vmem:[%s3 + $0x460] sm:$0xf]
  %v1858 = vld [vmem:[%s3 + $0x464] sm:$0xf]
  %v1859 = vld [vmem:[%s3 + $0x468] sm:$0xf]
  %v1860 = vld [vmem:[%s3 + $0x46c] sm:$0xf]
  %v1861 = vld [vmem:[%s3 + $0x470] sm:$0xf]
  %v1862 = vld [vmem:[%s3 + $0x474] sm:$0xf]
  %v1863 = vld [vmem:[%s3 + $0x478] sm:$0xf]
  %v1864 = vld [vmem:[%s3 + $0x47c] sm:$0xf]
  %v1865 = vpack.c.bf16 %v1819, %v1817
  %v1866 = vpack.c.bf16 %v1820, %v1818
  %v1867 = vpack.c.bf16 %v1823, %v1821
  %v1868 = vpack.c.bf16 %v1824, %v1822
  %v1869 = vpack.c.bf16 %v1827, %v1825
  %v1870 = vpack.c.bf16 %v1828, %v1826
  %v1871 = vpack.c.bf16 %v1831, %v1829
  %v1872 = vpack.c.bf16 %v1832, %v1830
  %v1905 = vunpack.c.l.b16 %v1833
  %v1906 = vunpack.c.l.b16 %v1834
  %v1907 = vunpack.c.l.b16 %v1835
  %v1908 = vunpack.c.l.b16 %v1836
  %v1909 = vunpack.c.l.b16 %v1837
  %v1910 = vunpack.c.l.b16 %v1838
  %v1911 = vunpack.c.l.b16 %v1839
  %v1912 = vunpack.c.l.b16 %v1840
  %v1913 = vunpack.c.l.b16 %v1841
  %v1914 = vunpack.c.l.b16 %v1842
  %v1915 = vunpack.c.l.b16 %v1843
  %v1916 = vunpack.c.l.b16 %v1844
  %v1917 = vunpack.c.l.b16 %v1845
  %v1918 = vunpack.c.l.b16 %v1846
  %v1919 = vunpack.c.l.b16 %v1847
  %v1920 = vunpack.c.l.b16 %v1848
  %v1921 = vunpack.c.l.b16 %v1849
  %v1922 = vunpack.c.l.b16 %v1850
  %v1923 = vunpack.c.l.b16 %v1851
  %v1924 = vunpack.c.l.b16 %v1852
  %v1925 = vunpack.c.l.b16 %v1853
  %v1926 = vunpack.c.l.b16 %v1854
  %v1927 = vunpack.c.l.b16 %v1855
  %v1928 = vunpack.c.l.b16 %v1856
  %v1929 = vunpack.c.l.b16 %v1857
  %v1930 = vunpack.c.l.b16 %v1858
  %v1931 = vunpack.c.l.b16 %v1859
  %v1932 = vunpack.c.l.b16 %v1860
  %v1933 = vunpack.c.l.b16 %v1861
  %v1934 = vunpack.c.l.b16 %v1862
  %v1935 = vunpack.c.l.b16 %v1863
  %v1936 = vunpack.c.l.b16 %v1864
  %v1937 = vpack.c.b16 %v1906, %v1905
  %v1938 = vpack.c.b16 %v1908, %v1907
  %v1939 = vpack.c.b16 %v1910, %v1909
  %v1940 = vpack.c.b16 %v1912, %v1911
  %v1941 = vpack.c.b16 %v1914, %v1913
  %v1942 = vpack.c.b16 %v1916, %v1915
  %v1943 = vpack.c.b16 %v1918, %v1917
  %v1944 = vpack.c.b16 %v1920, %v1919
  %v1945 = vpack.c.b16 %v1922, %v1921
  %v1946 = vpack.c.b16 %v1924, %v1923
  %v1947 = vpack.c.b16 %v1926, %v1925
  %v1948 = vpack.c.b16 %v1928, %v1927
  %v1949 = vpack.c.b16 %v1930, %v1929
  %v1950 = vpack.c.b16 %v1932, %v1931
  %v1951 = vpack.c.b16 %v1934, %v1933
  %v1952 = vpack.c.b16 %v1936, %v1935
  %1969 = vmatprep.subr.bf16.mxu0 0
  %1970 = vmatpush1.bf16.msra.mxu0 %v1944
  %1971 = vmatprep.subr.bf16.mxu0 0
  %1972 = vmatpush1.bf16.msra.mxu0 %v1943
  %1973 = vmatprep.subr.bf16.mxu0 0
  %1974 = vmatpush1.bf16.msra.mxu0 %v1942
  %1975 = vmatprep.subr.bf16.mxu0 0
  %1976 = vmatpush1.bf16.msra.mxu0 %v1941
  %1977 = vmatprep.subr.bf16.mxu0 0
  %1978 = vmatpush1.bf16.msra.mxu0 %v1940
  %1979 = vmatprep.subr.bf16.mxu0 0
  %1980 = vmatpush1.bf16.msra.mxu0 %v1939
  %1981 = vmatprep.subr.bf16.mxu0 0
  %1982 = vmatpush1.bf16.msra.mxu0 %v1938
  %1983 = vmatprep.subr.bf16.mxu0 0
  %1984 = vmatpush1.bf16.msra.mxu0 %v1937
  %1985 = vmatprep.subr.bf16.mxu0 0
  %1986 = vmatpush2.bf16.msra.mxu0 %v1952
  %1987 = vmatprep.subr.bf16.mxu0 0
  %1988 = vmatpush2.bf16.msra.mxu0 %v1951
  %1989 = vmatprep.subr.bf16.mxu0 0
  %1990 = vmatpush2.bf16.msra.mxu0 %v1950
  %1991 = vmatprep.subr.bf16.mxu0 0
  %1992 = vmatpush2.bf16.msra.mxu0 %v1949
  %1993 = vmatprep.subr.bf16.mxu0 0
  %1994 = vmatpush2.bf16.msra.mxu0 %v1948
  %1995 = vmatprep.subr.bf16.mxu0 0
  %1996 = vmatpush2.bf16.msra.mxu0 %v1947
  %1997 = vmatprep.subr.bf16.mxu0 0
  %1998 = vmatpush2.bf16.msra.mxu0 %v1946
  %1999 = vmatprep.subr.bf16.mxu0 0
  %2000 = vmatpush2.bf16.msra.mxu0 %v1945
  %2001 = vmatprep.mubr.bf16.mxu0 %v1866
  %2002 = vmatmul.mubr.bf16.gmra.mxu0 %v1865
  %v2003 = vpop.f32.mrf.mxu0
  %v2004 = vadd.f32 0.0, %v2003
  %v2005 = vpop.f32.mrf.mxu0
  %v2006 = vpop.f32.mrf.mxu0
  %v2007 = vadd.f32 0.0, %v2006
  %v2008 = vpop.f32.mrf.mxu0
  %2009 = vmatprep.mubr.bf16.mxu0 %v1868
  %2010 = vmatmul.mubr.bf16.gmra.mxu0 %v1867
  %v2011 = vpop.f32.mrf.mxu0
  %v2012 = vadd.f32 0.0, %v2011
  %v2013 = vpop.f32.mrf.mxu0
  %v2014 = vpop.f32.mrf.mxu0
  %v2015 = vadd.f32 0.0, %v2014
  %v2016 = vpop.f32.mrf.mxu0
  %2017 = vmatprep.mubr.bf16.mxu0 %v1870
  %2018 = vmatmul.mubr.bf16.gmra.mxu0 %v1869
  %v2019 = vpop.f32.mrf.mxu0
  %v2020 = vadd.f32 0.0, %v2019
  %v2021 = vpop.f32.mrf.mxu0
  %v2022 = vpop.f32.mrf.mxu0
  %v2023 = vadd.f32 0.0, %v2022
  %v2024 = vpop.f32.mrf.mxu0
  %2025 = vmatprep.mubr.bf16.mxu0 %v1872
  %2026 = vmatmul.mubr.bf16.gmra.mxu0 %v1871
  %v2027 = vpop.f32.mrf.mxu0
  %v2028 = vadd.f32 0.0, %v2027
  %v2029 = vpop.f32.mrf.mxu0
  %v2030 = vpop.f32.mrf.mxu0
  %v2031 = vadd.f32 0.0, %v2030
  %v2032 = vpop.f32.mrf.mxu0
  %2033 = vdwg.mxu0
  %v2034 = vadd.f32 %v1809, %v2004
  %v2035 = vadd.f32 %v1810, %v2007
  %v2036 = vadd.f32 %v1811, %v2012
  %v2037 = vadd.f32 %v1812, %v2015
  %v2038 = vadd.f32 %v1813, %v2020
  %v2039 = vadd.f32 %v1814, %v2023
  %v2040 = vadd.f32 %v1815, %v2028
  %v2041 = vadd.f32 %v1816, %v2031
  %v2042 = vld [vmem:[%s4] sm:$0x1]
  %v2044 = vlaneseq
  %v2045 = vshrl.u32 %v2044, 7
  %v2046 = vsub.s32 0, %v2045
  %v2047 = vrot.slane %v2042, %v2046
  %v2049 = vadd.f32 %v2034, %v2047
  %v2050 = vadd.f32 %v2035, %v2047
  %v2051 = vadd.f32 %v2036, %v2047
  %v2052 = vadd.f32 %v2037, %v2047
  %v2053 = vadd.f32 %v2038, %v2047
  %v2054 = vadd.f32 %v2039, %v2047
  %v2055 = vadd.f32 %v2040, %v2047
  %v2056 = vadd.f32 %v2041, %v2047
  %v2057 = vmax.f32 %v2049, 0.0
  %v2058 = vmax.f32 %v2050, 0.0
  %v2059 = vmax.f32 %v2051, 0.0
  %v2060 = vmax.f32 %v2052, 0.0
  %v2061 = vmax.f32 %v2053, 0.0
  %v2062 = vmax.f32 %v2054, 0.0
  %v2063 = vmax.f32 %v2055, 0.0
  %v2064 = vmax.f32 %v2056, 0.0
  %v2065 = vpack.c.bf16 %v2058, %v2057
  %v2066 = vpack.c.bf16 %v2060, %v2059
  %v2067 = vpack.c.bf16 %v2062, %v2061
  %v2068 = vpack.c.bf16 %v2064, %v2063
  %v2069 = vld [vmem:[%s5] sm:$0xf]
  %v2070 = vld [vmem:[%s5 + $0x4] sm:$0xf]
  %v2071 = vld [vmem:[%s5 + $0x8] sm:$0xf]
  %v2072 = vld [vmem:[%s5 + $0xc] sm:$0xf]
  %v2073 = vld [vmem:[%s5 + $0x10] sm:$0xf]
  %v2074 = vld [vmem:[%s5 + $0x14] sm:$0xf]
  %v2075 = vld [vmem:[%s5 + $0x18] sm:$0xf]
  %v2076 = vld [vmem:[%s5 + $0x1c] sm:$0xf]
  %v2077 = vld [vmem:[%s6] sm:$0x1]
  %v2079 = vlaneseq
  %v2080 = vshrl.u32 %v2079, 7
  %v2081 = vsub.s32 0, %v2080
  %v2082 = vrot.slane %v2077, %v2081
  %v2092 = vunpack.c.l.b16 %v2069
  %v2093 = vunpack.c.l.b16 %v2070
  %v2094 = vunpack.c.l.b16 %v2071
  %v2095 = vunpack.c.l.b16 %v2072
  %v2096 = vunpack.c.l.b16 %v2073
  %v2097 = vunpack.c.l.b16 %v2074
  %v2098 = vunpack.c.l.b16 %v2075
  %v2099 = vunpack.c.l.b16 %v2076
  %v2100 = vpack.c.b16 %v2093, %v2092
  %v2101 = vpack.c.b16 %v2095, %v2094
  %v2102 = vpack.c.b16 %v2097, %v2096
  %v2103 = vpack.c.b16 %v2099, %v2098
  %vm2108 = vcmask 523264
  %v2110 = vsel %vm2108, %v2065, 0
  %v2113 = vsel %vm2108, %v2066, 0
  %v2116 = vsel %vm2108, %v2067, 0
  %v2119 = vsel %vm2108, %v2068, 0
  %2121 = vmatprep.subr.bf16.mxu0 0
  %2122 = vmatpush1.bf16.msra.mxu0 0
  %2123 = vmatprep.subr.bf16.mxu0 0
  %2124 = vmatpush1.bf16.msra.mxu0 0
  %2125 = vmatprep.subr.bf16.mxu0 0
  %2126 = vmatpush1.bf16.msra.mxu0 0
  %2127 = vmatprep.subr.bf16.mxu0 0
  %2128 = vmatpush1.bf16.msra.mxu0 0
  %2129 = vmatprep.subr.bf16.mxu0 0
  %2130 = vmatpush1.bf16.msra.mxu0 %v2103
  %2131 = vmatprep.subr.bf16.mxu0 0
  %2132 = vmatpush1.bf16.msra.mxu0 %v2102
  %2133 = vmatprep.subr.bf16.mxu0 0
  %2134 = vmatpush1.bf16.msra.mxu0 %v2101
  %2135 = vmatprep.subr.bf16.mxu0 0
  %2136 = vmatpush1.bf16.msra.mxu0 %v2100
  %2137 = vmatprep.subr.bf16.mxu0 0
  %2138 = vmatpush2.bf16.msra.mxu0 0
  %2139 = vmatprep.subr.bf16.mxu0 0
  %2140 = vmatpush2.bf16.msra.mxu0 0
  %2141 = vmatprep.subr.bf16.mxu0 0
  %2142 = vmatpush2.bf16.msra.mxu0 0
  %2143 = vmatprep.subr.bf16.mxu0 0
  %2144 = vmatpush2.bf16.msra.mxu0 0
  %2145 = vmatprep.subr.bf16.mxu0 0
  %2146 = vmatpush2.bf16.msra.mxu0 0
  %2147 = vmatprep.subr.bf16.mxu0 0
  %2148 = vmatpush2.bf16.msra.mxu0 0
  %2149 = vmatprep.subr.bf16.mxu0 0
  %2150 = vmatpush2.bf16.msra.mxu0 0
  %2151 = vmatprep.subr.bf16.mxu0 0
  %2152 = vmatpush2.bf16.msra.mxu0 0
  %2153 = vmatprep.mubr.bf16.mxu0 0
  %2154 = vmatmul.mubr.bf16.gmra.mxu0 %v2110
  %v2155 = vpop.f32.mrf.mxu0
  %v2156 = vadd.f32 %v2082, %v2155
  %v2157 = vpop.f32.mrf.mxu0
  %v2158 = vpop.f32.mrf.mxu0
  %v2159 = vadd.f32 %v2082, %v2158
  %v2160 = vpop.f32.mrf.mxu0
  %2161 = vmatprep.mubr.bf16.mxu0 0
  %2162 = vmatmul.mubr.bf16.gmra.mxu0 %v2113
  %v2163 = vpop.f32.mrf.mxu0
  %v2164 = vadd.f32 %v2082, %v2163
  %v2165 = vpop.f32.mrf.mxu0
  %v2166 = vpop.f32.mrf.mxu0
  %v2167 = vadd.f32 %v2082, %v2166
  %v2168 = vpop.f32.mrf.mxu0
  %2169 = vmatprep.mubr.bf16.mxu0 0
  %2170 = vmatmul.mubr.bf16.gmra.mxu0 %v2116
  %v2171 = vpop.f32.mrf.mxu0
  %v2172 = vadd.f32 %v2082, %v2171
  %v2173 = vpop.f32.mrf.mxu0
  %v2174 = vpop.f32.mrf.mxu0
  %v2175 = vadd.f32 %v2082, %v2174
  %v2176 = vpop.f32.mrf.mxu0
  %2177 = vmatprep.mubr.bf16.mxu0 0
  %2178 = vmatmul.mubr.bf16.gmra.mxu0 %v2119
  %v2179 = vpop.f32.mrf.mxu0
  %v2180 = vadd.f32 %v2082, %v2179
  %v2181 = vpop.f32.mrf.mxu0
  %v2182 = vpop.f32.mrf.mxu0
  %v2183 = vadd.f32 %v2082, %v2182
  %v2184 = vpop.f32.mrf.mxu0
  %2185 = vdwg.mxu0
  %v2186 = vpack.c.bf16 %v2159, %v2156
  %v2187 = vpack.c.bf16 %v2167, %v2164
  %v2188 = vpack.c.bf16 %v2175, %v2172
  %v2189 = vpack.c.bf16 %v2183, %v2180
  %v2190 = vld [vmem:[%s7] sm:$0xf]
  %v2191 = vld [vmem:[%s7 + $0x4] sm:$0xf]
  %v2192 = vld [vmem:[%s8] sm:$0x1]
  %v2194 = vlaneseq
  %v2195 = vshrl.u32 %v2194, 7
  %v2196 = vsub.s32 0, %v2195
  %v2197 = vrot.slane %v2192, %v2196
  %v2201 = vunpack.c.l.b16 %v2190
  %v2202 = vunpack.c.l.b16 %v2191
  %v2203 = vpack.c.b16 %v2202, %v2201
  %vm2205 = vcmask 130048
  %v2207 = vsel %vm2205, %v2186, 0
  %v2210 = vsel %vm2205, %v2187, 0
  %v2213 = vsel %vm2205, %v2188, 0
  %v2216 = vsel %vm2205, %v2189, 0
  %2218 = vmatprep.subr.bf16.mxu0 0
  %2219 = vmatpush1.bf16.msra.mxu0 0
  %2220 = vmatprep.subr.bf16.mxu0 0
  %2221 = vmatpush1.bf16.msra.mxu0 0
  %2222 = vmatprep.subr.bf16.mxu0 0
  %2223 = vmatpush1.bf16.msra.mxu0 0
  %2224 = vmatprep.subr.bf16.mxu0 0
  %2225 = vmatpush1.bf16.msra.mxu0 0
  %2226 = vmatprep.subr.bf16.mxu0 0
  %2227 = vmatpush1.bf16.msra.mxu0 0
  %2228 = vmatprep.subr.bf16.mxu0 0
  %2229 = vmatpush1.bf16.msra.mxu0 0
  %2230 = vmatprep.subr.bf16.mxu0 0
  %2231 = vmatpush1.bf16.msra.mxu0 0
  %2232 = vmatprep.subr.bf16.mxu0 0
  %2233 = vmatpush1.bf16.msra.mxu0 %v2203
  %2234 = vmatprep.subr.bf16.mxu0 0
  %2235 = vmatpush2.bf16.msra.mxu0 0
  %2236 = vmatprep.subr.bf16.mxu0 0
  %2237 = vmatpush2.bf16.msra.mxu0 0
  %2238 = vmatprep.subr.bf16.mxu0 0
  %2239 = vmatpush2.bf16.msra.mxu0 0
  %2240 = vmatprep.subr.bf16.mxu0 0
  %2241 = vmatpush2.bf16.msra.mxu0 0
  %2242 = vmatprep.subr.bf16.mxu0 0
  %2243 = vmatpush2.bf16.msra.mxu0 0
  %2244 = vmatprep.subr.bf16.mxu0 0
  %2245 = vmatpush2.bf16.msra.mxu0 0
  %2246 = vmatprep.subr.bf16.mxu0 0
  %2247 = vmatpush2.bf16.msra.mxu0 0
  %2248 = vmatprep.subr.bf16.mxu0 0
  %2249 = vmatpush2.bf16.msra.mxu0 0
  %2250 = vmatprep.mubr.bf16.mxu0 0
  %2251 = vmatmul.mubr.bf16.gmra.mxu0 %v2207
  %v2252 = vpop.f32.mrf.mxu0
  %v2253 = vadd.f32 %v2197, %v2252
  %v2254 = vpop.f32.mrf.mxu0
  %v2255 = vpop.f32.mrf.mxu0
  %v2256 = vadd.f32 %v2197, %v2255
  %v2257 = vpop.f32.mrf.mxu0
  %2258 = vmatprep.mubr.bf16.mxu0 0
  %2259 = vmatmul.mubr.bf16.gmra.mxu0 %v2210
  %v2260 = vpop.f32.mrf.mxu0
  %v2261 = vadd.f32 %v2197, %v2260
  %v2262 = vpop.f32.mrf.mxu0
  %v2263 = vpop.f32.mrf.mxu0
  %v2264 = vadd.f32 %v2197, %v2263
  %v2265 = vpop.f32.mrf.mxu0
  %2266 = vmatprep.mubr.bf16.mxu0 0
  %2267 = vmatmul.mubr.bf16.gmra.mxu0 %v2213
  %v2268 = vpop.f32.mrf.mxu0
  %v2269 = vadd.f32 %v2197, %v2268
  %v2270 = vpop.f32.mrf.mxu0
  %v2271 = vpop.f32.mrf.mxu0
  %v2272 = vadd.f32 %v2197, %v2271
  %v2273 = vpop.f32.mrf.mxu0
  %2274 = vmatprep.mubr.bf16.mxu0 0
  %2275 = vmatmul.mubr.bf16.gmra.mxu0 %v2216
  %v2276 = vpop.f32.mrf.mxu0
  %v2277 = vadd.f32 %v2197, %v2276
  %v2278 = vpop.f32.mrf.mxu0
  %v2279 = vpop.f32.mrf.mxu0
  %v2280 = vadd.f32 %v2197, %v2279
  %v2281 = vpop.f32.mrf.mxu0
  %2282 = vdwg.mxu0
  %vm2283 = vcmask 39936
  %v2284 = vsel %vm2283, %v2253, -inf
  %2285 = vmax.xlane.f32.xlu0 %v2284
  %v2286 = vpop.xlane.xlu0 %2285
  %v2287 = vsel %vm2283, %v2256, -inf
  %2288 = vmax.xlane.f32.xlu0 %v2287
  %v2289 = vpop.xlane.xlu0 %2288
  %v2290 = vsel %vm2283, %v2261, -inf
  %2291 = vmax.xlane.f32.xlu0 %v2290
  %v2292 = vpop.xlane.xlu0 %2291
  %v2293 = vsel %vm2283, %v2264, -inf
  %2294 = vmax.xlane.f32.xlu0 %v2293
  %v2295 = vpop.xlane.xlu0 %2294
  %v2296 = vsel %vm2283, %v2269, -inf
  %2297 = vmax.xlane.f32.xlu0 %v2296
  %v2298 = vpop.xlane.xlu0 %2297
  %v2299 = vsel %vm2283, %v2272, -inf
  %2300 = vmax.xlane.f32.xlu0 %v2299
  %v2301 = vpop.xlane.xlu0 %2300
  %v2302 = vsel %vm2283, %v2277, -inf
  %2303 = vmax.xlane.f32.xlu0 %v2302
  %v2304 = vpop.xlane.xlu0 %2303
  %v2305 = vsel %vm2283, %v2280, -inf
  %2306 = vmax.xlane.f32.xlu0 %v2305
  %v2307 = vpop.xlane.xlu0 %2306
  %v2308 = vsub.f32 %v2253, %v2286
  %v2309 = vsub.f32 %v2256, %v2289
  %v2310 = vsub.f32 %v2261, %v2292
  %v2311 = vsub.f32 %v2264, %v2295
  %v2312 = vsub.f32 %v2269, %v2298
  %v2313 = vsub.f32 %v2272, %v2301
  %v2314 = vsub.f32 %v2277, %v2304
  %v2315 = vsub.f32 %v2280, %v2307
  %v2316 = vmul.f32 %v2308, 1.442695
  %v2317 = vpow.pop %v2316
  %v2318 = vmul.f32 %v2309, 1.442695
  %v2319 = vpow.pop %v2318
  %v2320 = vmul.f32 %v2310, 1.442695
  %v2321 = vpow.pop %v2320
  %v2322 = vmul.f32 %v2311, 1.442695
  %v2323 = vpow.pop %v2322
  %v2324 = vmul.f32 %v2312, 1.442695
  %v2325 = vpow.pop %v2324
  %v2326 = vmul.f32 %v2313, 1.442695
  %v2327 = vpow.pop %v2326
  %v2328 = vmul.f32 %v2314, 1.442695
  %v2329 = vpow.pop %v2328
  %v2330 = vmul.f32 %v2315, 1.442695
  %v2331 = vpow.pop %v2330
  %v2332 = vsel %vm2283, %v2317, 0.0
  %2333 = vadd.xlane.f32.xlu0 %v2332
  %v2334 = vpop.xlane.xlu0 %2333
  %v2335 = vsel %vm2283, %v2319, 0.0
  %2336 = vadd.xlane.f32.xlu0 %v2335
  %v2337 = vpop.xlane.xlu0 %2336
  %v2338 = vsel %vm2283, %v2321, 0.0
  %2339 = vadd.xlane.f32.xlu0 %v2338
  %v2340 = vpop.xlane.xlu0 %2339
  %v2341 = vsel %vm2283, %v2323, 0.0
  %2342 = vadd.xlane.f32.xlu0 %v2341
  %v2343 = vpop.xlane.xlu0 %2342
  %v2344 = vsel %vm2283, %v2325, 0.0
  %2345 = vadd.xlane.f32.xlu0 %v2344
  %v2346 = vpop.xlane.xlu0 %2345
  %v2347 = vsel %vm2283, %v2327, 0.0
  %2348 = vadd.xlane.f32.xlu0 %v2347
  %v2349 = vpop.xlane.xlu0 %2348
  %v2350 = vsel %vm2283, %v2329, 0.0
  %2351 = vadd.xlane.f32.xlu0 %v2350
  %v2352 = vpop.xlane.xlu0 %2351
  %v2353 = vsel %vm2283, %v2331, 0.0
  %2354 = vadd.xlane.f32.xlu0 %v2353
  %v2355 = vpop.xlane.xlu0 %2354
  %v2356 = vrcp.pop %v2334
  %v2357 = vrcp.pop %v2337
  %v2358 = vrcp.pop %v2340
  %v2359 = vrcp.pop %v2343
  %v2360 = vrcp.pop %v2346
  %v2361 = vrcp.pop %v2349
  %v2362 = vrcp.pop %v2352
  %v2363 = vrcp.pop %v2355
  %v2364 = vmul.f32 %v2317, %v2356
  %v2365 = vmul.f32 %v2319, %v2357
  %v2366 = vmul.f32 %v2321, %v2358
  %v2367 = vmul.f32 %v2323, %v2359
  %v2368 = vmul.f32 %v2325, %v2360
  %v2369 = vmul.f32 %v2327, %v2361
  %v2370 = vmul.f32 %v2329, %v2362
  %v2371 = vmul.f32 %v2331, %v2363
  %2372 = vst.msk [vmem:[%s9] sm:$0xff] %vm2283, %v2364
  %2373 = vst.msk [vmem:[%s9 + $0x8] sm:$0xff] %vm2283, %v2365
  %2374 = vst.msk [vmem:[%s9 + $0x10] sm:$0xff] %vm2283, %v2366
  %2375 = vst.msk [vmem:[%s9 + $0x18] sm:$0xff] %vm2283, %v2367
  %2376 = vst.msk [vmem:[%s9 + $0x20] sm:$0xff] %vm2283, %v2368
  %2377 = vst.msk [vmem:[%s9 + $0x28] sm:$0xff] %vm2283, %v2369
  %2378 = vst.msk [vmem:[%s9 + $0x30] sm:$0xff] %vm2283, %v2370
  %2379 = vst.msk [vmem:[%s9 + $0x38] sm:$0xff] %vm2283, %v2371
  // Predicated region
  $region38: #{gtrans_forward.7} parent=0 // pred_check
    _
  $region39: #{gtrans_forward.7} parent=0 // pred_check_branch
    %2381 = sbr.rel (0) target = $region41
  $region40: #{gtrans_forward.7} parent=0 // pred_region
    _
  $region41: #{gtrans_forward.7} parent=0 // pred_fallthru
    _
  // Predicated region
  $region42: #{gtrans_forward.7} parent=0 // pred_check
    _
  $region43: #{gtrans_forward.7} parent=0 // pred_check_branch
    %2383 = sbr.rel (0) target = $region45
  $region44: #{gtrans_forward.7} parent=0 // pred_region
    _
  $region45: #{gtrans_forward.7} parent=0 // pred_fallthru
    _

</llo_original>
